<compile_context>
chip_gen: v7x
topology: tpu7x:2x2x1
jax: 0.10.0
libtpu: 0.0.40
codegen_flags: <defaults>
</compile_context>

<pallas_src>
import jax
import jax.numpy as jnp
from jax.experimental import pallas as pl
from jax.experimental.pallas import tpu as pltpu

_EPS = 1e-5


# ---------------------------------------------------------------------------
# helpers
# ---------------------------------------------------------------------------
def _pick_spatial_tile(s, max_tile=2048):
    """Largest multiple-of-128 divisor of `s` that is <= max_tile.

    Falls back to the full extent when s is not a multiple of 128 (a block
    equal to the full array dim is always legal)."""
    if s % 128 != 0:
        return s
    ts = 128
    while ts * 2 <= max_tile and s % (ts * 2) == 0:
        ts *= 2
    return ts


def _conv_rows(x, w_ref, w_off, cin, cout):
    """1x1 conv as unrolled scalar-broadcast FMAs on the VPU (no MXU).

    x     : (N, cin, TS) array, spatial on the lane axis
    w_ref : 1-D SMEM ref holding the flattened (cout, cin) weight at offset w_off
    Returns a list of `cout` float32 arrays of shape (N, TS)."""
    rows = []
    for co in range(cout):
        acc = x[:, 0, :] * w_ref[w_off + co * cin]          # promotes to f32
        for ci in range(1, cin):
            acc = acc + x[:, ci, :] * w_ref[w_off + co * cin + ci]
        rows.append(acc)
    return rows


# ---------------------------------------------------------------------------
# pass A: per-channel sum / sumsq of the two 1x1 convs (for BatchNorm stats)
# ---------------------------------------------------------------------------
def _make_stats_gx_kernel(cg, cx, cout):
    def kernel(g_ref, x_ref, w_ref, stats_ref):
        @pl.when(pl.program_id(0) == 0)
        def _init():
            for i in range(4 * cout):
                stats_ref[i] = 0.0

        g_rows = _conv_rows(g_ref[...], w_ref, 0, cg, cout)
        x_rows = _conv_rows(x_ref[...], w_ref, cout * cg, cx, cout)
        for co in range(cout):
            rg = g_rows[co]
            rx = x_rows[co]
            stats_ref[0 * cout + co] += jnp.sum(rg)
            stats_ref[1 * cout + co] += jnp.sum(rg * rg)
            stats_ref[2 * cout + co] += jnp.sum(rx)
            stats_ref[3 * cout + co] += jnp.sum(rx * rx)

    return kernel


# ---------------------------------------------------------------------------
# pass B: p = conv_psi(relu(BN(conv_g g) + BN(conv_x x)))  + global stats of p
# ---------------------------------------------------------------------------
def _make_p_kernel(cg, cx, cout):
    off_wx = cout * cg
    off_wp = off_wx + cout * cx
    off_sg = off_wp + cout
    off_hg = off_sg + cout
    off_sx = off_hg + cout
    off_hx = off_sx + cout

    def kernel(g_ref, x_ref, par_ref, p_ref, pstats_ref):
        @pl.when(pl.program_id(0) == 0)
        def _init():
            pstats_ref[0] = 0.0
            pstats_ref[1] = 0.0

        g_rows = _conv_rows(g_ref[...], par_ref, 0, cg, cout)
        x_rows = _conv_rows(x_ref[...], par_ref, off_wx, cx, cout)
        p = None
        for co in range(cout):
            # BatchNorm folded into one scale*z + shift FMA per channel.
            g1 = g_rows[co] * par_ref[off_sg + co] + par_ref[off_hg + co]
            x1 = x_rows[co] * par_ref[off_sx + co] + par_ref[off_hx + co]
            a = jnp.maximum(g1 + x1, 0.0)                    # ReLU
            term = a * par_ref[off_wp + co]                  # psi 1x1 conv (1 out ch)
            p = term if p is None else p + term
        p_ref[...] = p.astype(p_ref.dtype)
        pstats_ref[0] += jnp.sum(p)
        pstats_ref[1] += jnp.sum(p * p)

    return kernel


# ---------------------------------------------------------------------------
# pass C: psi = sigmoid(scale_p * p + shift_p); out = x * psi (lane-dense store)
# ---------------------------------------------------------------------------
def _gate_kernel(x_ref, p_ref, par_ref, o_ref):
    scale_p = par_ref[0]
    shift_p = par_ref[1]
    z = p_ref[...].astype(jnp.float32) * scale_p + shift_p   # (N, TS)
    # exact sigmoid (exp runs on the EUP); pl.reciprocal(..., approx=True) would
    # also work but is kept exact so the tolerance check stays tight.
    psi = 1.0 / (1.0 + jnp.exp(-z))
    o_ref[...] = (x_ref[...] * psi[:, None, :]).astype(o_ref.dtype)


# ---------------------------------------------------------------------------
# wrapper
# ---------------------------------------------------------------------------
def attention_gate(g_nchw, x_nchw, params, *, act_dtype=jnp.float32):
    """Attention_Gate forward pass (training-mode BatchNorm).  NCHW in, NCHW out.

    act_dtype: dtype of the streamed activations.  float32 (default) is correct on
    all generations (use it on v5e); pass jnp.bfloat16 on v6e/v7x to halve HBM
    bytes -- the BN statistics are still accumulated in float32."""
    N, Cg, H, W = g_nchw.shape
    Nx, Cx, Hx, Wx = x_nchw.shape
    assert (N, H, W) == (Nx, Hx, Wx)
    cout = Cx
    S = H * W
    inv_cnt = 1.0 / float(N * S)
    f32 = jnp.float32

    # Channel-major views: NCHW -> (N, C, H*W) is a free reshape (no transposes);
    # the spatial axis sits on lanes, so vregs and stores are lane-dense.
    g3 = g_nchw.reshape(N, Cg, S).astype(act_dtype)
    x3 = x_nchw.reshape(N, Cx, S).astype(act_dtype)

    TS = _pick_spatial_tile(S)
    NT = S // TS

    # Explicit VMEM budget: double-buffered tiles of g, x, p, out (+ headroom),
    # floored at 16 MiB (v5e default scoped limit) and capped below v7x's 64 MiB.
    bpe = jnp.dtype(act_dtype).itemsize
    tile_bytes = 2 * N * TS * ((Cg + Cx + 1 + Cx) * bpe + Cx * 4)
    vmem_limit = int(min(60 * 2**20, max(16 * 2**20, 4 * tile_bytes)))

    wg = params["wg"].astype(f32).reshape(-1)   # (cout*Cg,)
    wx = params["wx"].astype(f32).reshape(-1)   # (cout*Cx,)
    wp = params["wp"].astype(f32).reshape(-1)   # (cout,)
    # NOTE: conv biases (bg, bx, bp) are intentionally dropped -- a bias followed
    # by training-mode BatchNorm is exactly cancelled by the mean subtraction.

    spec_g = pl.BlockSpec((N, Cg, TS), lambda t: (0, 0, t))
    spec_x = pl.BlockSpec((N, Cx, TS), lambda t: (0, 0, t))
    spec_p = pl.BlockSpec((N, TS), lambda t: (0, t))
    smem_spec = pl.BlockSpec(memory_space=pltpu.MemorySpace.SMEM)

    # ---- pass A ------------------------------------------------------------
    stats = pl.pallas_call(
        _make_stats_gx_kernel(Cg, Cx, cout),
        grid=(NT,),
        in_specs=[spec_g, spec_x, smem_spec],
        out_specs=smem_spec,
        out_shape=jax.ShapeDtypeStruct((4 * cout,), f32),
        compiler_params=pltpu.CompilerParams(
            dimension_semantics=("arbitrary",),      # sequential accumulation
            vmem_limit_bytes=vmem_limit),
    )(g3, x3, jnp.concatenate([wg, wx]))

    sum_g = stats[0 * cout:1 * cout]
    sq_g = stats[1 * cout:2 * cout]
    sum_x = stats[2 * cout:3 * cout]
    sq_x = stats[3 * cout:4 * cout]
    mean_g = sum_g * inv_cnt
    var_g = jnp.maximum(sq_g * inv_cnt - mean_g * mean_g, 0.0)  # clamp: no NaN from cancellation
    scale_g = params["gam_g"].astype(f32) * jax.lax.rsqrt(var_g + _EPS)
    shift_g = params["bet_g"].astype(f32) - scale_g * mean_g
    mean_x = sum_x * inv_cnt
    var_x = jnp.maximum(sq_x * inv_cnt - mean_x * mean_x, 0.0)
    scale_x = params["gam_x"].astype(f32) * jax.lax.rsqrt(var_x + _EPS)
    shift_x = params["bet_x"].astype(f32) - scale_x * mean_x

    # ---- pass B ------------------------------------------------------------
    par_b = jnp.concatenate([wg, wx, wp, scale_g, shift_g, scale_x, shift_x])
    p_pre, pstats = pl.pallas_call(
        _make_p_kernel(Cg, Cx, cout),
        grid=(NT,),
        in_specs=[spec_g, spec_x, smem_spec],
        out_specs=[spec_p, smem_spec],
        out_shape=[jax.ShapeDtypeStruct((N, S), act_dtype),
                   jax.ShapeDtypeStruct((2,), f32)],
        compiler_params=pltpu.CompilerParams(
            dimension_semantics=("arbitrary",),
            vmem_limit_bytes=vmem_limit),
    )(g3, x3, par_b)

    mean_p = pstats[0] * inv_cnt
    var_p = jnp.maximum(pstats[1] * inv_cnt - mean_p * mean_p, 0.0)
    scale_p = params["gam_p"].astype(f32)[0] * jax.lax.rsqrt(var_p + _EPS)
    shift_p = params["bet_p"].astype(f32)[0] - scale_p * mean_p

    # ---- pass C ------------------------------------------------------------
    out3 = pl.pallas_call(
        _gate_kernel,
        grid=(NT,),
        in_specs=[spec_x, spec_p, smem_spec],
        out_specs=pl.BlockSpec((N, Cx, TS), lambda t: (0, 0, t)),
        out_shape=jax.ShapeDtypeStruct((N, Cx, S), x_nchw.dtype),
        compiler_params=pltpu.CompilerParams(
            dimension_semantics=("parallel",),       # independent tiles -> megacore (v7x)
            vmem_limit_bytes=vmem_limit),
    )(x3, p_pre, jnp.stack([scale_p, shift_p]))

    return out3.reshape(N, Cx, H, W)


# ---------------------------------------------------------------------------
# pure-JAX reference (faithful to the PyTorch module in training mode)
# ---------------------------------------------------------------------------
def _reference(g, x, params):
    hi = jax.lax.Precision.HIGHEST

    def bn(z, gamma, beta):
        mean = jnp.mean(z, axis=(0, 2, 3), keepdims=True)
        var = jnp.mean((z - mean) ** 2, axis=(0, 2, 3), keepdims=True)  # biased
        return (gamma.reshape(1, -1, 1, 1) * (z - mean) * jax.lax.rsqrt(var + _EPS)
                + beta.reshape(1, -1, 1, 1))

    g1 = jnp.einsum("oc,nchw->nohw", params["wg"], g, precision=hi) \
        + params["bg"].reshape(1, -1, 1, 1)
    g1 = bn(g1, params["gam_g"], params["bet_g"])
    x1 = jnp.einsum("oc,nchw->nohw", params["wx"], x, precision=hi) \
        + params["bx"].reshape(1, -1, 1, 1)
    x1 = bn(x1, params["gam_x"], params["bet_x"])
    a = jnp.maximum(g1 + x1, 0.0)
    p = jnp.einsum("c,nchw->nhw", params["wp"], a, precision=hi)[:, None, :, :] \
        + params["bp"].reshape(1, 1, 1, 1)
    p = bn(p, params["gam_p"], params["bet_p"])
    psi = jax.nn.sigmoid(p)
    return x * psi


def make_params(key, c_g, c_x):
    """Deterministic synthetic parameters (shapes follow Attention_Gate.__init__)."""
    c_out = c_x
    ks = jax.random.split(key, 10)
    f32 = jnp.float32
    return {
        # W_g: Conv2d(c_g, c_out, 1, bias=True) + BatchNorm2d(c_out)
        "wg":    0.1 * jax.random.normal(ks[0], (c_out, c_g), f32),
        "bg":    0.1 * jax.random.normal(ks[1], (c_out,), f32),
        "gam_g": 1.0 + 0.1 * jax.random.normal(ks[2], (c_out,), f32),
        "bet_g": 0.1 * jax.random.normal(ks[3], (c_out,), f32),
        # W_x: Conv2d(c_x, c_out, 1, bias=True) + BatchNorm2d(c_out)
        "wx":    0.1 * jax.random.normal(ks[4], (c_out, c_x), f32),
        "bx":    0.1 * jax.random.normal(ks[5], (c_out,), f32),
        "gam_x": 1.0 + 0.1 * jax.random.normal(ks[6], (c_out,), f32),
        "bet_x": 0.1 * jax.random.normal(ks[7], (c_out,), f32),
        # psi: Conv2d(c_out, 1, 1, bias=True) + BatchNorm2d(1) + Sigmoid
        "wp":    0.1 * jax.random.normal(ks[8], (c_out,), f32),
        "bp":    0.1 * jax.random.normal(ks[9], (1,), f32),
        "gam_p": jnp.ones((1,), f32),
        "bet_p": jnp.zeros((1,), f32),
    }


if __name__ == "__main__":
    # in_c = (8, 4): g has 8 channels, x (and the gate) has 4 channels.
    N, Cg, Cx, H, W = 2, 8, 4, 64, 64      # S = 4096 -> 2 spatial tiles of 2048

    key = jax.random.PRNGKey(0)
    kg, kx, kp = jax.random.split(key, 3)
    g = jax.random.normal(kg, (N, Cg, H, W), dtype=jnp.float32)
    x = jax.random.normal(kx, (N, Cx, H, W), dtype=jnp.float32)
    params = make_params(kp, Cg, Cx)

    out = jax.block_until_ready(attention_gate(g, x, params))
    ref = jax.block_until_ready(_reference(g, x, params))

    assert out.shape == (N, Cx, H, W)
    err = float(jnp.max(jnp.abs(out - ref)))
    assert jnp.allclose(out, ref, atol=2e-4, rtol=2e-4), f"mismatch vs reference, max|err|={err}"

    print("KERNEL_OK")
</pallas_src>

<mosaic_0001>
module attributes {stable_mosaic.version = 11 : i64} {
  func.func @kernel(%arg0: i32, %arg1: memref<2x8x2048xf32, #tpu.memory_space<vmem>>, %arg2: memref<2x4x2048xf32, #tpu.memory_space<vmem>>, %arg3: memref<48xf32, #tpu.memory_space<smem>>, %arg4: memref<16xf32, #tpu.memory_space<smem>>) attributes {dimension_semantics = [#tpu.dimension_semantics<arbitrary>], iteration_bounds = array<i64: 2>, scalar_prefetch = 0 : i64, scratch_operands = 0 : i64, tpu.core_type = #tpu.core_type<tc>, window_params = [{transform_indices = @transform_0, window_bounds = array<i64: 2, 8, 2048>}, {transform_indices = @transform_1, window_bounds = array<i64: 2, 4, 2048>}, {transform_indices = @transform_2, window_bounds = array<i64: 48>}, {transform_indices = @transform_3, window_bounds = array<i64: 16>}]} {
    %c0_i32 = arith.constant 0 : i32
    %0 = arith.cmpi eq, %arg0, %c0_i32 : i32
    %1 = arith.extui %0 : i1 to i32
    %c0_i32_0 = arith.constant 0 : i32
    %2 = arith.cmpi ne, %1, %c0_i32_0 : i32
    scf.if %2 {
      %cst_54 = arith.constant 0.000000e+00 : f32
      %c0_55 = arith.constant 0 : index
      %405 = memref.load %arg4[%c0_55] : memref<16xf32, #tpu.memory_space<smem>>
      memref.store %cst_54, %arg4[%c0_55] : memref<16xf32, #tpu.memory_space<smem>>
      %cst_56 = arith.constant 0.000000e+00 : f32
      %c1_57 = arith.constant 1 : index
      %406 = memref.load %arg4[%c1_57] : memref<16xf32, #tpu.memory_space<smem>>
      memref.store %cst_56, %arg4[%c1_57] : memref<16xf32, #tpu.memory_space<smem>>
      %cst_58 = arith.constant 0.000000e+00 : f32
      %c2_59 = arith.constant 2 : index
      %407 = memref.load %arg4[%c2_59] : memref<16xf32, #tpu.memory_space<smem>>
      memref.store %cst_58, %arg4[%c2_59] : memref<16xf32, #tpu.memory_space<smem>>
      %cst_60 = arith.constant 0.000000e+00 : f32
      %c3_61 = arith.constant 3 : index
      %408 = memref.load %arg4[%c3_61] : memref<16xf32, #tpu.memory_space<smem>>
      memref.store %cst_60, %arg4[%c3_61] : memref<16xf32, #tpu.memory_space<smem>>
      %cst_62 = arith.constant 0.000000e+00 : f32
      %c4_63 = arith.constant 4 : index
      %409 = memref.load %arg4[%c4_63] : memref<16xf32, #tpu.memory_space<smem>>
      memref.store %cst_62, %arg4[%c4_63] : memref<16xf32, #tpu.memory_space<smem>>
      %cst_64 = arith.constant 0.000000e+00 : f32
      %c5_65 = arith.constant 5 : index
      %410 = memref.load %arg4[%c5_65] : memref<16xf32, #tpu.memory_space<smem>>
      memref.store %cst_64, %arg4[%c5_65] : memref<16xf32, #tpu.memory_space<smem>>
      %cst_66 = arith.constant 0.000000e+00 : f32
      %c6_67 = arith.constant 6 : index
      %411 = memref.load %arg4[%c6_67] : memref<16xf32, #tpu.memory_space<smem>>
      memref.store %cst_66, %arg4[%c6_67] : memref<16xf32, #tpu.memory_space<smem>>
      %cst_68 = arith.constant 0.000000e+00 : f32
      %c7_69 = arith.constant 7 : index
      %412 = memref.load %arg4[%c7_69] : memref<16xf32, #tpu.memory_space<smem>>
      memref.store %cst_68, %arg4[%c7_69] : memref<16xf32, #tpu.memory_space<smem>>
      %cst_70 = arith.constant 0.000000e+00 : f32
      %c8_71 = arith.constant 8 : index
      %413 = memref.load %arg4[%c8_71] : memref<16xf32, #tpu.memory_space<smem>>
      memref.store %cst_70, %arg4[%c8_71] : memref<16xf32, #tpu.memory_space<smem>>
      %cst_72 = arith.constant 0.000000e+00 : f32
      %c9_73 = arith.constant 9 : index
      %414 = memref.load %arg4[%c9_73] : memref<16xf32, #tpu.memory_space<smem>>
      memref.store %cst_72, %arg4[%c9_73] : memref<16xf32, #tpu.memory_space<smem>>
      %cst_74 = arith.constant 0.000000e+00 : f32
      %c10_75 = arith.constant 10 : index
      %415 = memref.load %arg4[%c10_75] : memref<16xf32, #tpu.memory_space<smem>>
      memref.store %cst_74, %arg4[%c10_75] : memref<16xf32, #tpu.memory_space<smem>>
      %cst_76 = arith.constant 0.000000e+00 : f32
      %c11_77 = arith.constant 11 : index
      %416 = memref.load %arg4[%c11_77] : memref<16xf32, #tpu.memory_space<smem>>
      memref.store %cst_76, %arg4[%c11_77] : memref<16xf32, #tpu.memory_space<smem>>
      %cst_78 = arith.constant 0.000000e+00 : f32
      %c12_79 = arith.constant 12 : index
      %417 = memref.load %arg4[%c12_79] : memref<16xf32, #tpu.memory_space<smem>>
      memref.store %cst_78, %arg4[%c12_79] : memref<16xf32, #tpu.memory_space<smem>>
      %cst_80 = arith.constant 0.000000e+00 : f32
      %c13_81 = arith.constant 13 : index
      %418 = memref.load %arg4[%c13_81] : memref<16xf32, #tpu.memory_space<smem>>
      memref.store %cst_80, %arg4[%c13_81] : memref<16xf32, #tpu.memory_space<smem>>
      %cst_82 = arith.constant 0.000000e+00 : f32
      %c14_83 = arith.constant 14 : index
      %419 = memref.load %arg4[%c14_83] : memref<16xf32, #tpu.memory_space<smem>>
      memref.store %cst_82, %arg4[%c14_83] : memref<16xf32, #tpu.memory_space<smem>>
      %cst_84 = arith.constant 0.000000e+00 : f32
      %c15_85 = arith.constant 15 : index
      %420 = memref.load %arg4[%c15_85] : memref<16xf32, #tpu.memory_space<smem>>
      memref.store %cst_84, %arg4[%c15_85] : memref<16xf32, #tpu.memory_space<smem>>
    } else {
    }
    %c0 = arith.constant 0 : index
    %c0_1 = arith.constant 0 : index
    %c0_2 = arith.constant 0 : index
    %3 = vector.load %arg1[%c0, %c0_1, %c0_2] : memref<2x8x2048xf32, #tpu.memory_space<vmem>>, vector<2x8x2048xf32>
    %4 = vector.extract_strided_slice %3 {offsets = [0, 0, 0], sizes = [2, 1, 2048], strides = [1, 1, 1]} : vector<2x8x2048xf32> to vector<2x1x2048xf32>
    %5 = vector.shape_cast %4 : vector<2x1x2048xf32> to vector<2x2048xf32>
    %c0_3 = arith.constant 0 : index
    %6 = memref.load %arg3[%c0_3] : memref<48xf32, #tpu.memory_space<smem>>
    %7 = vector.broadcast %6 : f32 to vector<2x2048xf32>
    %8 = arith.mulf %5, %7 : vector<2x2048xf32>
    %9 = vector.extract_strided_slice %3 {offsets = [0, 1, 0], sizes = [2, 1, 2048], strides = [1, 1, 1]} : vector<2x8x2048xf32> to vector<2x1x2048xf32>
    %10 = vector.shape_cast %9 : vector<2x1x2048xf32> to vector<2x2048xf32>
    %c1 = arith.constant 1 : index
    %11 = memref.load %arg3[%c1] : memref<48xf32, #tpu.memory_space<smem>>
    %12 = vector.broadcast %11 : f32 to vector<2x2048xf32>
    %13 = arith.mulf %10, %12 : vector<2x2048xf32>
    %14 = arith.addf %8, %13 : vector<2x2048xf32>
    %15 = vector.extract_strided_slice %3 {offsets = [0, 2, 0], sizes = [2, 1, 2048], strides = [1, 1, 1]} : vector<2x8x2048xf32> to vector<2x1x2048xf32>
    %16 = vector.shape_cast %15 : vector<2x1x2048xf32> to vector<2x2048xf32>
    %c2 = arith.constant 2 : index
    %17 = memref.load %arg3[%c2] : memref<48xf32, #tpu.memory_space<smem>>
    %18 = vector.broadcast %17 : f32 to vector<2x2048xf32>
    %19 = arith.mulf %16, %18 : vector<2x2048xf32>
    %20 = arith.addf %14, %19 : vector<2x2048xf32>
    %21 = vector.extract_strided_slice %3 {offsets = [0, 3, 0], sizes = [2, 1, 2048], strides = [1, 1, 1]} : vector<2x8x2048xf32> to vector<2x1x2048xf32>
    %22 = vector.shape_cast %21 : vector<2x1x2048xf32> to vector<2x2048xf32>
    %c3 = arith.constant 3 : index
    %23 = memref.load %arg3[%c3] : memref<48xf32, #tpu.memory_space<smem>>
    %24 = vector.broadcast %23 : f32 to vector<2x2048xf32>
    %25 = arith.mulf %22, %24 : vector<2x2048xf32>
    %26 = arith.addf %20, %25 : vector<2x2048xf32>
    %27 = vector.extract_strided_slice %3 {offsets = [0, 4, 0], sizes = [2, 1, 2048], strides = [1, 1, 1]} : vector<2x8x2048xf32> to vector<2x1x2048xf32>
    %28 = vector.shape_cast %27 : vector<2x1x2048xf32> to vector<2x2048xf32>
    %c4 = arith.constant 4 : index
    %29 = memref.load %arg3[%c4] : memref<48xf32, #tpu.memory_space<smem>>
    %30 = vector.broadcast %29 : f32 to vector<2x2048xf32>
    %31 = arith.mulf %28, %30 : vector<2x2048xf32>
    %32 = arith.addf %26, %31 : vector<2x2048xf32>
    %33 = vector.extract_strided_slice %3 {offsets = [0, 5, 0], sizes = [2, 1, 2048], strides = [1, 1, 1]} : vector<2x8x2048xf32> to vector<2x1x2048xf32>
    %34 = vector.shape_cast %33 : vector<2x1x2048xf32> to vector<2x2048xf32>
    %c5 = arith.constant 5 : index
    %35 = memref.load %arg3[%c5] : memref<48xf32, #tpu.memory_space<smem>>
    %36 = vector.broadcast %35 : f32 to vector<2x2048xf32>
    %37 = arith.mulf %34, %36 : vector<2x2048xf32>
    %38 = arith.addf %32, %37 : vector<2x2048xf32>
    %39 = vector.extract_strided_slice %3 {offsets = [0, 6, 0], sizes = [2, 1, 2048], strides = [1, 1, 1]} : vector<2x8x2048xf32> to vector<2x1x2048xf32>
    %40 = vector.shape_cast %39 : vector<2x1x2048xf32> to vector<2x2048xf32>
    %c6 = arith.constant 6 : index
    %41 = memref.load %arg3[%c6] : memref<48xf32, #tpu.memory_space<smem>>
    %42 = vector.broadcast %41 : f32 to vector<2x2048xf32>
    %43 = arith.mulf %40, %42 : vector<2x2048xf32>
    %44 = arith.addf %38, %43 : vector<2x2048xf32>
    %45 = vector.extract_strided_slice %3 {offsets = [0, 7, 0], sizes = [2, 1, 2048], strides = [1, 1, 1]} : vector<2x8x2048xf32> to vector<2x1x2048xf32>
    %46 = vector.shape_cast %45 : vector<2x1x2048xf32> to vector<2x2048xf32>
    %c7 = arith.constant 7 : index
    %47 = memref.load %arg3[%c7] : memref<48xf32, #tpu.memory_space<smem>>
    %48 = vector.broadcast %47 : f32 to vector<2x2048xf32>
    %49 = arith.mulf %46, %48 : vector<2x2048xf32>
    %50 = arith.addf %44, %49 : vector<2x2048xf32>
    %51 = vector.extract_strided_slice %3 {offsets = [0, 0, 0], sizes = [2, 1, 2048], strides = [1, 1, 1]} : vector<2x8x2048xf32> to vector<2x1x2048xf32>
    %52 = vector.shape_cast %51 : vector<2x1x2048xf32> to vector<2x2048xf32>
    %c8 = arith.constant 8 : index
    %53 = memref.load %arg3[%c8] : memref<48xf32, #tpu.memory_space<smem>>
    %54 = vector.broadcast %53 : f32 to vector<2x2048xf32>
    %55 = arith.mulf %52, %54 : vector<2x2048xf32>
    %56 = vector.extract_strided_slice %3 {offsets = [0, 1, 0], sizes = [2, 1, 2048], strides = [1, 1, 1]} : vector<2x8x2048xf32> to vector<2x1x2048xf32>
    %57 = vector.shape_cast %56 : vector<2x1x2048xf32> to vector<2x2048xf32>
    %c9 = arith.constant 9 : index
    %58 = memref.load %arg3[%c9] : memref<48xf32, #tpu.memory_space<smem>>
    %59 = vector.broadcast %58 : f32 to vector<2x2048xf32>
    %60 = arith.mulf %57, %59 : vector<2x2048xf32>
    %61 = arith.addf %55, %60 : vector<2x2048xf32>
    %62 = vector.extract_strided_slice %3 {offsets = [0, 2, 0], sizes = [2, 1, 2048], strides = [1, 1, 1]} : vector<2x8x2048xf32> to vector<2x1x2048xf32>
    %63 = vector.shape_cast %62 : vector<2x1x2048xf32> to vector<2x2048xf32>
    %c10 = arith.constant 10 : index
    %64 = memref.load %arg3[%c10] : memref<48xf32, #tpu.memory_space<smem>>
    %65 = vector.broadcast %64 : f32 to vector<2x2048xf32>
    %66 = arith.mulf %63, %65 : vector<2x2048xf32>
    %67 = arith.addf %61, %66 : vector<2x2048xf32>
    %68 = vector.extract_strided_slice %3 {offsets = [0, 3, 0], sizes = [2, 1, 2048], strides = [1, 1, 1]} : vector<2x8x2048xf32> to vector<2x1x2048xf32>
    %69 = vector.shape_cast %68 : vector<2x1x2048xf32> to vector<2x2048xf32>
    %c11 = arith.constant 11 : index
    %70 = memref.load %arg3[%c11] : memref<48xf32, #tpu.memory_space<smem>>
    %71 = vector.broadcast %70 : f32 to vector<2x2048xf32>
    %72 = arith.mulf %69, %71 : vector<2x2048xf32>
    %73 = arith.addf %67, %72 : vector<2x2048xf32>
    %74 = vector.extract_strided_slice %3 {offsets = [0, 4, 0], sizes = [2, 1, 2048], strides = [1, 1, 1]} : vector<2x8x2048xf32> to vector<2x1x2048xf32>
    %75 = vector.shape_cast %74 : vector<2x1x2048xf32> to vector<2x2048xf32>
    %c12 = arith.constant 12 : index
    %76 = memref.load %arg3[%c12] : memref<48xf32, #tpu.memory_space<smem>>
    %77 = vector.broadcast %76 : f32 to vector<2x2048xf32>
    %78 = arith.mulf %75, %77 : vector<2x2048xf32>
    %79 = arith.addf %73, %78 : vector<2x2048xf32>
    %80 = vector.extract_strided_slice %3 {offsets = [0, 5, 0], sizes = [2, 1, 2048], strides = [1, 1, 1]} : vector<2x8x2048xf32> to vector<2x1x2048xf32>
    %81 = vector.shape_cast %80 : vector<2x1x2048xf32> to vector<2x2048xf32>
    %c13 = arith.constant 13 : index
    %82 = memref.load %arg3[%c13] : memref<48xf32, #tpu.memory_space<smem>>
    %83 = vector.broadcast %82 : f32 to vector<2x2048xf32>
    %84 = arith.mulf %81, %83 : vector<2x2048xf32>
    %85 = arith.addf %79, %84 : vector<2x2048xf32>
    %86 = vector.extract_strided_slice %3 {offsets = [0, 6, 0], sizes = [2, 1, 2048], strides = [1, 1, 1]} : vector<2x8x2048xf32> to vector<2x1x2048xf32>
    %87 = vector.shape_cast %86 : vector<2x1x2048xf32> to vector<2x2048xf32>
    %c14 = arith.constant 14 : index
    %88 = memref.load %arg3[%c14] : memref<48xf32, #tpu.memory_space<smem>>
    %89 = vector.broadcast %88 : f32 to vector<2x2048xf32>
    %90 = arith.mulf %87, %89 : vector<2x2048xf32>
    %91 = arith.addf %85, %90 : vector<2x2048xf32>
    %92 = vector.extract_strided_slice %3 {offsets = [0, 7, 0], sizes = [2, 1, 2048], strides = [1, 1, 1]} : vector<2x8x2048xf32> to vector<2x1x2048xf32>
    %93 = vector.shape_cast %92 : vector<2x1x2048xf32> to vector<2x2048xf32>
    %c15 = arith.constant 15 : index
    %94 = memref.load %arg3[%c15] : memref<48xf32, #tpu.memory_space<smem>>
    %95 = vector.broadcast %94 : f32 to vector<2x2048xf32>
    %96 = arith.mulf %93, %95 : vector<2x2048xf32>
    %97 = arith.addf %91, %96 : vector<2x2048xf32>
    %98 = vector.extract_strided_slice %3 {offsets = [0, 0, 0], sizes = [2, 1, 2048], strides = [1, 1, 1]} : vector<2x8x2048xf32> to vector<2x1x2048xf32>
    %99 = vector.shape_cast %98 : vector<2x1x2048xf32> to vector<2x2048xf32>
    %c16 = arith.constant 16 : index
    %100 = memref.load %arg3[%c16] : memref<48xf32, #tpu.memory_space<smem>>
    %101 = vector.broadcast %100 : f32 to vector<2x2048xf32>
    %102 = arith.mulf %99, %101 : vector<2x2048xf32>
    %103 = vector.extract_strided_slice %3 {offsets = [0, 1, 0], sizes = [2, 1, 2048], strides = [1, 1, 1]} : vector<2x8x2048xf32> to vector<2x1x2048xf32>
    %104 = vector.shape_cast %103 : vector<2x1x2048xf32> to vector<2x2048xf32>
    %c17 = arith.constant 17 : index
    %105 = memref.load %arg3[%c17] : memref<48xf32, #tpu.memory_space<smem>>
    %106 = vector.broadcast %105 : f32 to vector<2x2048xf32>
    %107 = arith.mulf %104, %106 : vector<2x2048xf32>
    %108 = arith.addf %102, %107 : vector<2x2048xf32>
    %109 = vector.extract_strided_slice %3 {offsets = [0, 2, 0], sizes = [2, 1, 2048], strides = [1, 1, 1]} : vector<2x8x2048xf32> to vector<2x1x2048xf32>
    %110 = vector.shape_cast %109 : vector<2x1x2048xf32> to vector<2x2048xf32>
    %c18 = arith.constant 18 : index
    %111 = memref.load %arg3[%c18] : memref<48xf32, #tpu.memory_space<smem>>
    %112 = vector.broadcast %111 : f32 to vector<2x2048xf32>
    %113 = arith.mulf %110, %112 : vector<2x2048xf32>
    %114 = arith.addf %108, %113 : vector<2x2048xf32>
    %115 = vector.extract_strided_slice %3 {offsets = [0, 3, 0], sizes = [2, 1, 2048], strides = [1, 1, 1]} : vector<2x8x2048xf32> to vector<2x1x2048xf32>
    %116 = vector.shape_cast %115 : vector<2x1x2048xf32> to vector<2x2048xf32>
    %c19 = arith.constant 19 : index
    %117 = memref.load %arg3[%c19] : memref<48xf32, #tpu.memory_space<smem>>
    %118 = vector.broadcast %117 : f32 to vector<2x2048xf32>
    %119 = arith.mulf %116, %118 : vector<2x2048xf32>
    %120 = arith.addf %114, %119 : vector<2x2048xf32>
    %121 = vector.extract_strided_slice %3 {offsets = [0, 4, 0], sizes = [2, 1, 2048], strides = [1, 1, 1]} : vector<2x8x2048xf32> to vector<2x1x2048xf32>
    %122 = vector.shape_cast %121 : vector<2x1x2048xf32> to vector<2x2048xf32>
    %c20 = arith.constant 20 : index
    %123 = memref.load %arg3[%c20] : memref<48xf32, #tpu.memory_space<smem>>
    %124 = vector.broadcast %123 : f32 to vector<2x2048xf32>
    %125 = arith.mulf %122, %124 : vector<2x2048xf32>
    %126 = arith.addf %120, %125 : vector<2x2048xf32>
    %127 = vector.extract_strided_slice %3 {offsets = [0, 5, 0], sizes = [2, 1, 2048], strides = [1, 1, 1]} : vector<2x8x2048xf32> to vector<2x1x2048xf32>
    %128 = vector.shape_cast %127 : vector<2x1x2048xf32> to vector<2x2048xf32>
    %c21 = arith.constant 21 : index
    %129 = memref.load %arg3[%c21] : memref<48xf32, #tpu.memory_space<smem>>
    %130 = vector.broadcast %129 : f32 to vector<2x2048xf32>
    %131 = arith.mulf %128, %130 : vector<2x2048xf32>
    %132 = arith.addf %126, %131 : vector<2x2048xf32>
    %133 = vector.extract_strided_slice %3 {offsets = [0, 6, 0], sizes = [2, 1, 2048], strides = [1, 1, 1]} : vector<2x8x2048xf32> to vector<2x1x2048xf32>
    %134 = vector.shape_cast %133 : vector<2x1x2048xf32> to vector<2x2048xf32>
    %c22 = arith.constant 22 : index
    %135 = memref.load %arg3[%c22] : memref<48xf32, #tpu.memory_space<smem>>
    %136 = vector.broadcast %135 : f32 to vector<2x2048xf32>
    %137 = arith.mulf %134, %136 : vector<2x2048xf32>
    %138 = arith.addf %132, %137 : vector<2x2048xf32>
    %139 = vector.extract_strided_slice %3 {offsets = [0, 7, 0], sizes = [2, 1, 2048], strides = [1, 1, 1]} : vector<2x8x2048xf32> to vector<2x1x2048xf32>
    %140 = vector.shape_cast %139 : vector<2x1x2048xf32> to vector<2x2048xf32>
    %c23 = arith.constant 23 : index
    %141 = memref.load %arg3[%c23] : memref<48xf32, #tpu.memory_space<smem>>
    %142 = vector.broadcast %141 : f32 to vector<2x2048xf32>
    %143 = arith.mulf %140, %142 : vector<2x2048xf32>
    %144 = arith.addf %138, %143 : vector<2x2048xf32>
    %145 = vector.extract_strided_slice %3 {offsets = [0, 0, 0], sizes = [2, 1, 2048], strides = [1, 1, 1]} : vector<2x8x2048xf32> to vector<2x1x2048xf32>
    %146 = vector.shape_cast %145 : vector<2x1x2048xf32> to vector<2x2048xf32>
    %c24 = arith.constant 24 : index
    %147 = memref.load %arg3[%c24] : memref<48xf32, #tpu.memory_space<smem>>
    %148 = vector.broadcast %147 : f32 to vector<2x2048xf32>
    %149 = arith.mulf %146, %148 : vector<2x2048xf32>
    %150 = vector.extract_strided_slice %3 {offsets = [0, 1, 0], sizes = [2, 1, 2048], strides = [1, 1, 1]} : vector<2x8x2048xf32> to vector<2x1x2048xf32>
    %151 = vector.shape_cast %150 : vector<2x1x2048xf32> to vector<2x2048xf32>
    %c25 = arith.constant 25 : index
    %152 = memref.load %arg3[%c25] : memref<48xf32, #tpu.memory_space<smem>>
    %153 = vector.broadcast %152 : f32 to vector<2x2048xf32>
    %154 = arith.mulf %151, %153 : vector<2x2048xf32>
    %155 = arith.addf %149, %154 : vector<2x2048xf32>
    %156 = vector.extract_strided_slice %3 {offsets = [0, 2, 0], sizes = [2, 1, 2048], strides = [1, 1, 1]} : vector<2x8x2048xf32> to vector<2x1x2048xf32>
    %157 = vector.shape_cast %156 : vector<2x1x2048xf32> to vector<2x2048xf32>
    %c26 = arith.constant 26 : index
    %158 = memref.load %arg3[%c26] : memref<48xf32, #tpu.memory_space<smem>>
    %159 = vector.broadcast %158 : f32 to vector<2x2048xf32>
    %160 = arith.mulf %157, %159 : vector<2x2048xf32>
    %161 = arith.addf %155, %160 : vector<2x2048xf32>
    %162 = vector.extract_strided_slice %3 {offsets = [0, 3, 0], sizes = [2, 1, 2048], strides = [1, 1, 1]} : vector<2x8x2048xf32> to vector<2x1x2048xf32>
    %163 = vector.shape_cast %162 : vector<2x1x2048xf32> to vector<2x2048xf32>
    %c27 = arith.constant 27 : index
    %164 = memref.load %arg3[%c27] : memref<48xf32, #tpu.memory_space<smem>>
    %165 = vector.broadcast %164 : f32 to vector<2x2048xf32>
    %166 = arith.mulf %163, %165 : vector<2x2048xf32>
    %167 = arith.addf %161, %166 : vector<2x2048xf32>
    %168 = vector.extract_strided_slice %3 {offsets = [0, 4, 0], sizes = [2, 1, 2048], strides = [1, 1, 1]} : vector<2x8x2048xf32> to vector<2x1x2048xf32>
    %169 = vector.shape_cast %168 : vector<2x1x2048xf32> to vector<2x2048xf32>
    %c28 = arith.constant 28 : index
    %170 = memref.load %arg3[%c28] : memref<48xf32, #tpu.memory_space<smem>>
    %171 = vector.broadcast %170 : f32 to vector<2x2048xf32>
    %172 = arith.mulf %169, %171 : vector<2x2048xf32>
    %173 = arith.addf %167, %172 : vector<2x2048xf32>
    %174 = vector.extract_strided_slice %3 {offsets = [0, 5, 0], sizes = [2, 1, 2048], strides = [1, 1, 1]} : vector<2x8x2048xf32> to vector<2x1x2048xf32>
    %175 = vector.shape_cast %174 : vector<2x1x2048xf32> to vector<2x2048xf32>
    %c29 = arith.constant 29 : index
    %176 = memref.load %arg3[%c29] : memref<48xf32, #tpu.memory_space<smem>>
    %177 = vector.broadcast %176 : f32 to vector<2x2048xf32>
    %178 = arith.mulf %175, %177 : vector<2x2048xf32>
    %179 = arith.addf %173, %178 : vector<2x2048xf32>
    %180 = vector.extract_strided_slice %3 {offsets = [0, 6, 0], sizes = [2, 1, 2048], strides = [1, 1, 1]} : vector<2x8x2048xf32> to vector<2x1x2048xf32>
    %181 = vector.shape_cast %180 : vector<2x1x2048xf32> to vector<2x2048xf32>
    %c30 = arith.constant 30 : index
    %182 = memref.load %arg3[%c30] : memref<48xf32, #tpu.memory_space<smem>>
    %183 = vector.broadcast %182 : f32 to vector<2x2048xf32>
    %184 = arith.mulf %181, %183 : vector<2x2048xf32>
    %185 = arith.addf %179, %184 : vector<2x2048xf32>
    %186 = vector.extract_strided_slice %3 {offsets = [0, 7, 0], sizes = [2, 1, 2048], strides = [1, 1, 1]} : vector<2x8x2048xf32> to vector<2x1x2048xf32>
    %187 = vector.shape_cast %186 : vector<2x1x2048xf32> to vector<2x2048xf32>
    %c31 = arith.constant 31 : index
    %188 = memref.load %arg3[%c31] : memref<48xf32, #tpu.memory_space<smem>>
    %189 = vector.broadcast %188 : f32 to vector<2x2048xf32>
    %190 = arith.mulf %187, %189 : vector<2x2048xf32>
    %191 = arith.addf %185, %190 : vector<2x2048xf32>
    %c0_4 = arith.constant 0 : index
    %c0_5 = arith.constant 0 : index
    %c0_6 = arith.constant 0 : index
    %192 = vector.load %arg2[%c0_4, %c0_5, %c0_6] : memref<2x4x2048xf32, #tpu.memory_space<vmem>>, vector<2x4x2048xf32>
    %193 = vector.extract_strided_slice %192 {offsets = [0, 0, 0], sizes = [2, 1, 2048], strides = [1, 1, 1]} : vector<2x4x2048xf32> to vector<2x1x2048xf32>
    %194 = vector.shape_cast %193 : vector<2x1x2048xf32> to vector<2x2048xf32>
    %c32 = arith.constant 32 : index
    %195 = memref.load %arg3[%c32] : memref<48xf32, #tpu.memory_space<smem>>
    %196 = vector.broadcast %195 : f32 to vector<2x2048xf32>
    %197 = arith.mulf %194, %196 : vector<2x2048xf32>
    %198 = vector.extract_strided_slice %192 {offsets = [0, 1, 0], sizes = [2, 1, 2048], strides = [1, 1, 1]} : vector<2x4x2048xf32> to vector<2x1x2048xf32>
    %199 = vector.shape_cast %198 : vector<2x1x2048xf32> to vector<2x2048xf32>
    %c33 = arith.constant 33 : index
    %200 = memref.load %arg3[%c33] : memref<48xf32, #tpu.memory_space<smem>>
    %201 = vector.broadcast %200 : f32 to vector<2x2048xf32>
    %202 = arith.mulf %199, %201 : vector<2x2048xf32>
    %203 = arith.addf %197, %202 : vector<2x2048xf32>
    %204 = vector.extract_strided_slice %192 {offsets = [0, 2, 0], sizes = [2, 1, 2048], strides = [1, 1, 1]} : vector<2x4x2048xf32> to vector<2x1x2048xf32>
    %205 = vector.shape_cast %204 : vector<2x1x2048xf32> to vector<2x2048xf32>
    %c34 = arith.constant 34 : index
    %206 = memref.load %arg3[%c34] : memref<48xf32, #tpu.memory_space<smem>>
    %207 = vector.broadcast %206 : f32 to vector<2x2048xf32>
    %208 = arith.mulf %205, %207 : vector<2x2048xf32>
    %209 = arith.addf %203, %208 : vector<2x2048xf32>
    %210 = vector.extract_strided_slice %192 {offsets = [0, 3, 0], sizes = [2, 1, 2048], strides = [1, 1, 1]} : vector<2x4x2048xf32> to vector<2x1x2048xf32>
    %211 = vector.shape_cast %210 : vector<2x1x2048xf32> to vector<2x2048xf32>
    %c35 = arith.constant 35 : index
    %212 = memref.load %arg3[%c35] : memref<48xf32, #tpu.memory_space<smem>>
    %213 = vector.broadcast %212 : f32 to vector<2x2048xf32>
    %214 = arith.mulf %211, %213 : vector<2x2048xf32>
    %215 = arith.addf %209, %214 : vector<2x2048xf32>
    %216 = vector.extract_strided_slice %192 {offsets = [0, 0, 0], sizes = [2, 1, 2048], strides = [1, 1, 1]} : vector<2x4x2048xf32> to vector<2x1x2048xf32>
    %217 = vector.shape_cast %216 : vector<2x1x2048xf32> to vector<2x2048xf32>
    %c36 = arith.constant 36 : index
    %218 = memref.load %arg3[%c36] : memref<48xf32, #tpu.memory_space<smem>>
    %219 = vector.broadcast %218 : f32 to vector<2x2048xf32>
    %220 = arith.mulf %217, %219 : vector<2x2048xf32>
    %221 = vector.extract_strided_slice %192 {offsets = [0, 1, 0], sizes = [2, 1, 2048], strides = [1, 1, 1]} : vector<2x4x2048xf32> to vector<2x1x2048xf32>
    %222 = vector.shape_cast %221 : vector<2x1x2048xf32> to vector<2x2048xf32>
    %c37 = arith.constant 37 : index
    %223 = memref.load %arg3[%c37] : memref<48xf32, #tpu.memory_space<smem>>
    %224 = vector.broadcast %223 : f32 to vector<2x2048xf32>
    %225 = arith.mulf %222, %224 : vector<2x2048xf32>
    %226 = arith.addf %220, %225 : vector<2x2048xf32>
    %227 = vector.extract_strided_slice %192 {offsets = [0, 2, 0], sizes = [2, 1, 2048], strides = [1, 1, 1]} : vector<2x4x2048xf32> to vector<2x1x2048xf32>
    %228 = vector.shape_cast %227 : vector<2x1x2048xf32> to vector<2x2048xf32>
    %c38 = arith.constant 38 : index
    %229 = memref.load %arg3[%c38] : memref<48xf32, #tpu.memory_space<smem>>
    %230 = vector.broadcast %229 : f32 to vector<2x2048xf32>
    %231 = arith.mulf %228, %230 : vector<2x2048xf32>
    %232 = arith.addf %226, %231 : vector<2x2048xf32>
    %233 = vector.extract_strided_slice %192 {offsets = [0, 3, 0], sizes = [2, 1, 2048], strides = [1, 1, 1]} : vector<2x4x2048xf32> to vector<2x1x2048xf32>
    %234 = vector.shape_cast %233 : vector<2x1x2048xf32> to vector<2x2048xf32>
    %c39 = arith.constant 39 : index
    %235 = memref.load %arg3[%c39] : memref<48xf32, #tpu.memory_space<smem>>
    %236 = vector.broadcast %235 : f32 to vector<2x2048xf32>
    %237 = arith.mulf %234, %236 : vector<2x2048xf32>
    %238 = arith.addf %232, %237 : vector<2x2048xf32>
    %239 = vector.extract_strided_slice %192 {offsets = [0, 0, 0], sizes = [2, 1, 2048], strides = [1, 1, 1]} : vector<2x4x2048xf32> to vector<2x1x2048xf32>
    %240 = vector.shape_cast %239 : vector<2x1x2048xf32> to vector<2x2048xf32>
    %c40 = arith.constant 40 : index
    %241 = memref.load %arg3[%c40] : memref<48xf32, #tpu.memory_space<smem>>
    %242 = vector.broadcast %241 : f32 to vector<2x2048xf32>
    %243 = arith.mulf %240, %242 : vector<2x2048xf32>
    %244 = vector.extract_strided_slice %192 {offsets = [0, 1, 0], sizes = [2, 1, 2048], strides = [1, 1, 1]} : vector<2x4x2048xf32> to vector<2x1x2048xf32>
    %245 = vector.shape_cast %244 : vector<2x1x2048xf32> to vector<2x2048xf32>
    %c41 = arith.constant 41 : index
    %246 = memref.load %arg3[%c41] : memref<48xf32, #tpu.memory_space<smem>>
    %247 = vector.broadcast %246 : f32 to vector<2x2048xf32>
    %248 = arith.mulf %245, %247 : vector<2x2048xf32>
    %249 = arith.addf %243, %248 : vector<2x2048xf32>
    %250 = vector.extract_strided_slice %192 {offsets = [0, 2, 0], sizes = [2, 1, 2048], strides = [1, 1, 1]} : vector<2x4x2048xf32> to vector<2x1x2048xf32>
    %251 = vector.shape_cast %250 : vector<2x1x2048xf32> to vector<2x2048xf32>
    %c42 = arith.constant 42 : index
    %252 = memref.load %arg3[%c42] : memref<48xf32, #tpu.memory_space<smem>>
    %253 = vector.broadcast %252 : f32 to vector<2x2048xf32>
    %254 = arith.mulf %251, %253 : vector<2x2048xf32>
    %255 = arith.addf %249, %254 : vector<2x2048xf32>
    %256 = vector.extract_strided_slice %192 {offsets = [0, 3, 0], sizes = [2, 1, 2048], strides = [1, 1, 1]} : vector<2x4x2048xf32> to vector<2x1x2048xf32>
    %257 = vector.shape_cast %256 : vector<2x1x2048xf32> to vector<2x2048xf32>
    %c43 = arith.constant 43 : index
    %258 = memref.load %arg3[%c43] : memref<48xf32, #tpu.memory_space<smem>>
    %259 = vector.broadcast %258 : f32 to vector<2x2048xf32>
    %260 = arith.mulf %257, %259 : vector<2x2048xf32>
    %261 = arith.addf %255, %260 : vector<2x2048xf32>
    %262 = vector.extract_strided_slice %192 {offsets = [0, 0, 0], sizes = [2, 1, 2048], strides = [1, 1, 1]} : vector<2x4x2048xf32> to vector<2x1x2048xf32>
    %263 = vector.shape_cast %262 : vector<2x1x2048xf32> to vector<2x2048xf32>
    %c44 = arith.constant 44 : index
    %264 = memref.load %arg3[%c44] : memref<48xf32, #tpu.memory_space<smem>>
    %265 = vector.broadcast %264 : f32 to vector<2x2048xf32>
    %266 = arith.mulf %263, %265 : vector<2x2048xf32>
    %267 = vector.extract_strided_slice %192 {offsets = [0, 1, 0], sizes = [2, 1, 2048], strides = [1, 1, 1]} : vector<2x4x2048xf32> to vector<2x1x2048xf32>
    %268 = vector.shape_cast %267 : vector<2x1x2048xf32> to vector<2x2048xf32>
    %c45 = arith.constant 45 : index
    %269 = memref.load %arg3[%c45] : memref<48xf32, #tpu.memory_space<smem>>
    %270 = vector.broadcast %269 : f32 to vector<2x2048xf32>
    %271 = arith.mulf %268, %270 : vector<2x2048xf32>
    %272 = arith.addf %266, %271 : vector<2x2048xf32>
    %273 = vector.extract_strided_slice %192 {offsets = [0, 2, 0], sizes = [2, 1, 2048], strides = [1, 1, 1]} : vector<2x4x2048xf32> to vector<2x1x2048xf32>
    %274 = vector.shape_cast %273 : vector<2x1x2048xf32> to vector<2x2048xf32>
    %c46 = arith.constant 46 : index
    %275 = memref.load %arg3[%c46] : memref<48xf32, #tpu.memory_space<smem>>
    %276 = vector.broadcast %275 : f32 to vector<2x2048xf32>
    %277 = arith.mulf %274, %276 : vector<2x2048xf32>
    %278 = arith.addf %272, %277 : vector<2x2048xf32>
    %279 = vector.extract_strided_slice %192 {offsets = [0, 3, 0], sizes = [2, 1, 2048], strides = [1, 1, 1]} : vector<2x4x2048xf32> to vector<2x1x2048xf32>
    %280 = vector.shape_cast %279 : vector<2x1x2048xf32> to vector<2x2048xf32>
    %c47 = arith.constant 47 : index
    %281 = memref.load %arg3[%c47] : memref<48xf32, #tpu.memory_space<smem>>
    %282 = vector.broadcast %281 : f32 to vector<2x2048xf32>
    %283 = arith.mulf %280, %282 : vector<2x2048xf32>
    %284 = arith.addf %278, %283 : vector<2x2048xf32>
    %c0_7 = arith.constant 0 : index
    %285 = memref.load %arg4[%c0_7] : memref<16xf32, #tpu.memory_space<smem>>
    %286 = vector.shape_cast %50 : vector<2x2048xf32> to vector<1x2x2048xf32>
    %cst = arith.constant dense<0.000000e+00> : vector<1xf32>
    %287 = vector.multi_reduction <add>, %286, %cst [1, 2] : vector<1x2x2048xf32> to vector<1xf32>
    %288 = vector.shape_cast %287 : vector<1xf32> to vector<1x1x1xf32>
    %289 = vector.extract %288[0, 0, 0] : f32 from vector<1x1x1xf32>
    %290 = arith.addf %285, %289 : f32
    %c0_8 = arith.constant 0 : index
    %291 = memref.load %arg4[%c0_8] : memref<16xf32, #tpu.memory_space<smem>>
    memref.store %290, %arg4[%c0_8] : memref<16xf32, #tpu.memory_space<smem>>
    %c4_9 = arith.constant 4 : index
    %292 = memref.load %arg4[%c4_9] : memref<16xf32, #tpu.memory_space<smem>>
    %293 = arith.mulf %50, %50 : vector<2x2048xf32>
    %294 = vector.shape_cast %293 : vector<2x2048xf32> to vector<1x2x2048xf32>
    %cst_10 = arith.constant dense<0.000000e+00> : vector<1xf32>
    %295 = vector.multi_reduction <add>, %294, %cst_10 [1, 2] : vector<1x2x2048xf32> to vector<1xf32>
    %296 = vector.shape_cast %295 : vector<1xf32> to vector<1x1x1xf32>
    %297 = vector.extract %296[0, 0, 0] : f32 from vector<1x1x1xf32>
    %298 = arith.addf %292, %297 : f32
    %c4_11 = arith.constant 4 : index
    %299 = memref.load %arg4[%c4_11] : memref<16xf32, #tpu.memory_space<smem>>
    memref.store %298, %arg4[%c4_11] : memref<16xf32, #tpu.memory_space<smem>>
    %c8_12 = arith.constant 8 : index
    %300 = memref.load %arg4[%c8_12] : memref<16xf32, #tpu.memory_space<smem>>
    %301 = vector.shape_cast %215 : vector<2x2048xf32> to vector<1x2x2048xf32>
    %cst_13 = arith.constant dense<0.000000e+00> : vector<1xf32>
    %302 = vector.multi_reduction <add>, %301, %cst_13 [1, 2] : vector<1x2x2048xf32> to vector<1xf32>
    %303 = vector.shape_cast %302 : vector<1xf32> to vector<1x1x1xf32>
    %304 = vector.extract %303[0, 0, 0] : f32 from vector<1x1x1xf32>
    %305 = arith.addf %300, %304 : f32
    %c8_14 = arith.constant 8 : index
    %306 = memref.load %arg4[%c8_14] : memref<16xf32, #tpu.memory_space<smem>>
    memref.store %305, %arg4[%c8_14] : memref<16xf32, #tpu.memory_space<smem>>
    %c12_15 = arith.constant 12 : index
    %307 = memref.load %arg4[%c12_15] : memref<16xf32, #tpu.memory_space<smem>>
    %308 = arith.mulf %215, %215 : vector<2x2048xf32>
    %309 = vector.shape_cast %308 : vector<2x2048xf32> to vector<1x2x2048xf32>
    %cst_16 = arith.constant dense<0.000000e+00> : vector<1xf32>
    %310 = vector.multi_reduction <add>, %309, %cst_16 [1, 2] : vector<1x2x2048xf32> to vector<1xf32>
    %311 = vector.shape_cast %310 : vector<1xf32> to vector<1x1x1xf32>
    %312 = vector.extract %311[0, 0, 0] : f32 from vector<1x1x1xf32>
    %313 = arith.addf %307, %312 : f32
    %c12_17 = arith.constant 12 : index
    %314 = memref.load %arg4[%c12_17] : memref<16xf32, #tpu.memory_space<smem>>
    memref.store %313, %arg4[%c12_17] : memref<16xf32, #tpu.memory_space<smem>>
    %c1_18 = arith.constant 1 : index
    %315 = memref.load %arg4[%c1_18] : memref<16xf32, #tpu.memory_space<smem>>
    %316 = vector.shape_cast %97 : vector<2x2048xf32> to vector<1x2x2048xf32>
    %cst_19 = arith.constant dense<0.000000e+00> : vector<1xf32>
    %317 = vector.multi_reduction <add>, %316, %cst_19 [1, 2] : vector<1x2x2048xf32> to vector<1xf32>
    %318 = vector.shape_cast %317 : vector<1xf32> to vector<1x1x1xf32>
    %319 = vector.extract %318[0, 0, 0] : f32 from vector<1x1x1xf32>
    %320 = arith.addf %315, %319 : f32
    %c1_20 = arith.constant 1 : index
    %321 = memref.load %arg4[%c1_20] : memref<16xf32, #tpu.memory_space<smem>>
    memref.store %320, %arg4[%c1_20] : memref<16xf32, #tpu.memory_space<smem>>
    %c5_21 = arith.constant 5 : index
    %322 = memref.load %arg4[%c5_21] : memref<16xf32, #tpu.memory_space<smem>>
    %323 = arith.mulf %97, %97 : vector<2x2048xf32>
    %324 = vector.shape_cast %323 : vector<2x2048xf32> to vector<1x2x2048xf32>
    %cst_22 = arith.constant dense<0.000000e+00> : vector<1xf32>
    %325 = vector.multi_reduction <add>, %324, %cst_22 [1, 2] : vector<1x2x2048xf32> to vector<1xf32>
    %326 = vector.shape_cast %325 : vector<1xf32> to vector<1x1x1xf32>
    %327 = vector.extract %326[0, 0, 0] : f32 from vector<1x1x1xf32>
    %328 = arith.addf %322, %327 : f32
    %c5_23 = arith.constant 5 : index
    %329 = memref.load %arg4[%c5_23] : memref<16xf32, #tpu.memory_space<smem>>
    memref.store %328, %arg4[%c5_23] : memref<16xf32, #tpu.memory_space<smem>>
    %c9_24 = arith.constant 9 : index
    %330 = memref.load %arg4[%c9_24] : memref<16xf32, #tpu.memory_space<smem>>
    %331 = vector.shape_cast %238 : vector<2x2048xf32> to vector<1x2x2048xf32>
    %cst_25 = arith.constant dense<0.000000e+00> : vector<1xf32>
    %332 = vector.multi_reduction <add>, %331, %cst_25 [1, 2] : vector<1x2x2048xf32> to vector<1xf32>
    %333 = vector.shape_cast %332 : vector<1xf32> to vector<1x1x1xf32>
    %334 = vector.extract %333[0, 0, 0] : f32 from vector<1x1x1xf32>
    %335 = arith.addf %330, %334 : f32
    %c9_26 = arith.constant 9 : index
    %336 = memref.load %arg4[%c9_26] : memref<16xf32, #tpu.memory_space<smem>>
    memref.store %335, %arg4[%c9_26] : memref<16xf32, #tpu.memory_space<smem>>
    %c13_27 = arith.constant 13 : index
    %337 = memref.load %arg4[%c13_27] : memref<16xf32, #tpu.memory_space<smem>>
    %338 = arith.mulf %238, %238 : vector<2x2048xf32>
    %339 = vector.shape_cast %338 : vector<2x2048xf32> to vector<1x2x2048xf32>
    %cst_28 = arith.constant dense<0.000000e+00> : vector<1xf32>
    %340 = vector.multi_reduction <add>, %339, %cst_28 [1, 2] : vector<1x2x2048xf32> to vector<1xf32>
    %341 = vector.shape_cast %340 : vector<1xf32> to vector<1x1x1xf32>
    %342 = vector.extract %341[0, 0, 0] : f32 from vector<1x1x1xf32>
    %343 = arith.addf %337, %342 : f32
    %c13_29 = arith.constant 13 : index
    %344 = memref.load %arg4[%c13_29] : memref<16xf32, #tpu.memory_space<smem>>
    memref.store %343, %arg4[%c13_29] : memref<16xf32, #tpu.memory_space<smem>>
    %c2_30 = arith.constant 2 : index
    %345 = memref.load %arg4[%c2_30] : memref<16xf32, #tpu.memory_space<smem>>
    %346 = vector.shape_cast %144 : vector<2x2048xf32> to vector<1x2x2048xf32>
    %cst_31 = arith.constant dense<0.000000e+00> : vector<1xf32>
    %347 = vector.multi_reduction <add>, %346, %cst_31 [1, 2] : vector<1x2x2048xf32> to vector<1xf32>
    %348 = vector.shape_cast %347 : vector<1xf32> to vector<1x1x1xf32>
    %349 = vector.extract %348[0, 0, 0] : f32 from vector<1x1x1xf32>
    %350 = arith.addf %345, %349 : f32
    %c2_32 = arith.constant 2 : index
    %351 = memref.load %arg4[%c2_32] : memref<16xf32, #tpu.memory_space<smem>>
    memref.store %350, %arg4[%c2_32] : memref<16xf32, #tpu.memory_space<smem>>
    %c6_33 = arith.constant 6 : index
    %352 = memref.load %arg4[%c6_33] : memref<16xf32, #tpu.memory_space<smem>>
    %353 = arith.mulf %144, %144 : vector<2x2048xf32>
    %354 = vector.shape_cast %353 : vector<2x2048xf32> to vector<1x2x2048xf32>
    %cst_34 = arith.constant dense<0.000000e+00> : vector<1xf32>
    %355 = vector.multi_reduction <add>, %354, %cst_34 [1, 2] : vector<1x2x2048xf32> to vector<1xf32>
    %356 = vector.shape_cast %355 : vector<1xf32> to vector<1x1x1xf32>
    %357 = vector.extract %356[0, 0, 0] : f32 from vector<1x1x1xf32>
    %358 = arith.addf %352, %357 : f32
    %c6_35 = arith.constant 6 : index
    %359 = memref.load %arg4[%c6_35] : memref<16xf32, #tpu.memory_space<smem>>
    memref.store %358, %arg4[%c6_35] : memref<16xf32, #tpu.memory_space<smem>>
    %c10_36 = arith.constant 10 : index
    %360 = memref.load %arg4[%c10_36] : memref<16xf32, #tpu.memory_space<smem>>
    %361 = vector.shape_cast %261 : vector<2x2048xf32> to vector<1x2x2048xf32>
    %cst_37 = arith.constant dense<0.000000e+00> : vector<1xf32>
    %362 = vector.multi_reduction <add>, %361, %cst_37 [1, 2] : vector<1x2x2048xf32> to vector<1xf32>
    %363 = vector.shape_cast %362 : vector<1xf32> to vector<1x1x1xf32>
    %364 = vector.extract %363[0, 0, 0] : f32 from vector<1x1x1xf32>
    %365 = arith.addf %360, %364 : f32
    %c10_38 = arith.constant 10 : index
    %366 = memref.load %arg4[%c10_38] : memref<16xf32, #tpu.memory_space<smem>>
    memref.store %365, %arg4[%c10_38] : memref<16xf32, #tpu.memory_space<smem>>
    %c14_39 = arith.constant 14 : index
    %367 = memref.load %arg4[%c14_39] : memref<16xf32, #tpu.memory_space<smem>>
    %368 = arith.mulf %261, %261 : vector<2x2048xf32>
    %369 = vector.shape_cast %368 : vector<2x2048xf32> to vector<1x2x2048xf32>
    %cst_40 = arith.constant dense<0.000000e+00> : vector<1xf32>
    %370 = vector.multi_reduction <add>, %369, %cst_40 [1, 2] : vector<1x2x2048xf32> to vector<1xf32>
    %371 = vector.shape_cast %370 : vector<1xf32> to vector<1x1x1xf32>
    %372 = vector.extract %371[0, 0, 0] : f32 from vector<1x1x1xf32>
    %373 = arith.addf %367, %372 : f32
    %c14_41 = arith.constant 14 : index
    %374 = memref.load %arg4[%c14_41] : memref<16xf32, #tpu.memory_space<smem>>
    memref.store %373, %arg4[%c14_41] : memref<16xf32, #tpu.memory_space<smem>>
    %c3_42 = arith.constant 3 : index
    %375 = memref.load %arg4[%c3_42] : memref<16xf32, #tpu.memory_space<smem>>
    %376 = vector.shape_cast %191 : vector<2x2048xf32> to vector<1x2x2048xf32>
    %cst_43 = arith.constant dense<0.000000e+00> : vector<1xf32>
    %377 = vector.multi_reduction <add>, %376, %cst_43 [1, 2] : vector<1x2x2048xf32> to vector<1xf32>
    %378 = vector.shape_cast %377 : vector<1xf32> to vector<1x1x1xf32>
    %379 = vector.extract %378[0, 0, 0] : f32 from vector<1x1x1xf32>
    %380 = arith.addf %375, %379 : f32
    %c3_44 = arith.constant 3 : index
    %381 = memref.load %arg4[%c3_44] : memref<16xf32, #tpu.memory_space<smem>>
    memref.store %380, %arg4[%c3_44] : memref<16xf32, #tpu.memory_space<smem>>
    %c7_45 = arith.constant 7 : index
    %382 = memref.load %arg4[%c7_45] : memref<16xf32, #tpu.memory_space<smem>>
    %383 = arith.mulf %191, %191 : vector<2x2048xf32>
    %384 = vector.shape_cast %383 : vector<2x2048xf32> to vector<1x2x2048xf32>
    %cst_46 = arith.constant dense<0.000000e+00> : vector<1xf32>
    %385 = vector.multi_reduction <add>, %384, %cst_46 [1, 2] : vector<1x2x2048xf32> to vector<1xf32>
    %386 = vector.shape_cast %385 : vector<1xf32> to vector<1x1x1xf32>
    %387 = vector.extract %386[0, 0, 0] : f32 from vector<1x1x1xf32>
    %388 = arith.addf %382, %387 : f32
    %c7_47 = arith.constant 7 : index
    %389 = memref.load %arg4[%c7_47] : memref<16xf32, #tpu.memory_space<smem>>
    memref.store %388, %arg4[%c7_47] : memref<16xf32, #tpu.memory_space<smem>>
    %c11_48 = arith.constant 11 : index
    %390 = memref.load %arg4[%c11_48] : memref<16xf32, #tpu.memory_space<smem>>
    %391 = vector.shape_cast %284 : vector<2x2048xf32> to vector<1x2x2048xf32>
    %cst_49 = arith.constant dense<0.000000e+00> : vector<1xf32>
    %392 = vector.multi_reduction <add>, %391, %cst_49 [1, 2] : vector<1x2x2048xf32> to vector<1xf32>
    %393 = vector.shape_cast %392 : vector<1xf32> to vector<1x1x1xf32>
    %394 = vector.extract %393[0, 0, 0] : f32 from vector<1x1x1xf32>
    %395 = arith.addf %390, %394 : f32
    %c11_50 = arith.constant 11 : index
    %396 = memref.load %arg4[%c11_50] : memref<16xf32, #tpu.memory_space<smem>>
    memref.store %395, %arg4[%c11_50] : memref<16xf32, #tpu.memory_space<smem>>
    %c15_51 = arith.constant 15 : index
    %397 = memref.load %arg4[%c15_51] : memref<16xf32, #tpu.memory_space<smem>>
    %398 = arith.mulf %284, %284 : vector<2x2048xf32>
    %399 = vector.shape_cast %398 : vector<2x2048xf32> to vector<1x2x2048xf32>
    %cst_52 = arith.constant dense<0.000000e+00> : vector<1xf32>
    %400 = vector.multi_reduction <add>, %399, %cst_52 [1, 2] : vector<1x2x2048xf32> to vector<1xf32>
    %401 = vector.shape_cast %400 : vector<1xf32> to vector<1x1x1xf32>
    %402 = vector.extract %401[0, 0, 0] : f32 from vector<1x1x1xf32>
    %403 = arith.addf %397, %402 : f32
    %c15_53 = arith.constant 15 : index
    %404 = memref.load %arg4[%c15_53] : memref<16xf32, #tpu.memory_space<smem>>
    memref.store %403, %arg4[%c15_53] : memref<16xf32, #tpu.memory_space<smem>>
    return
  }
  func.func @transform_0(%arg0: i32) -> (i32, i32, i32) {
    %c0_i32 = arith.constant 0 : i32
    %c0_i32_0 = arith.constant 0 : i32
    %c0_i32_1 = arith.constant 0 : i32
    return %c0_i32, %c0_i32_0, %arg0 : i32, i32, i32
  }
  func.func @transform_1(%arg0: i32) -> (i32, i32, i32) {
    %c0_i32 = arith.constant 0 : i32
    %c0_i32_0 = arith.constant 0 : i32
    %c0_i32_1 = arith.constant 0 : i32
    return %c0_i32, %c0_i32_0, %arg0 : i32, i32, i32
  }
  func.func @transform_2(%arg0: i32) -> i32 {
    %c0_i32 = arith.constant 0 : i32
    %c0_i32_0 = arith.constant 0 : i32
    return %c0_i32 : i32
  }
  func.func @transform_3(%arg0: i32) -> i32 {
    %c0_i32 = arith.constant 0 : i32
    %c0_i32_0 = arith.constant 0 : i32
    return %c0_i32 : i32
  }
}

</mosaic_0001>

<llo_original>
// kernel: tpu_custom_call.1
$region0: #{tpu_custom_call.1}
  #allocation0 [shape = 'u32[]', space=smem, size = 0x4, offset = 0x4, fixed_abs, tag = 'smem constant byte address 0x4 - core index']
  #allocation1 [shape = 'u32[144,128]{1,0:T(1,128)}', space=vmem, size = 0x12000, scoped, tag = 'internal scratch']
  %s0 = inlined_call_operand.hbm [shape: f32[2,8,4096], index: 0, kind: input, shape index: {}]
  %s1 = inlined_call_operand.hbm [shape: f32[2,4,4096], index: 1, kind: input, shape index: {}]
  %s2 = inlined_call_operand.vmem [shape: f32[48], index: 2, kind: input, shape index: {}]
  %s3 = inlined_call_operand.hbm [shape: f32[16], index: 3, kind: output, shape index: {}]
  %s4 = sld [smem:[#allocation0]]
  $region61: #{tpu_custom_call.1} parent=0
    _
  %s6 = ssub.s32 1, %s4
  %s7 = scalar_select 0, %s6, %s4
  $region1: #{tpu_custom_call.1} parent=0
    #allocation2 [shape = 'u8[262144]{0}', space=vmem, size = 0x40000, scoped, tag = 'input window, operand 0']
    #allocation3 [shape = 's32[2]{0}', space=sflag, size = 0x8, scoped, tag = 'scoped memory for tpu_custom_call.1']
    #allocation4 [shape = 's32[2]{0}', space=sflag, size = 0x8, scoped, tag = 'scoped memory for tpu_custom_call.1']
    #allocation5 [shape = 's32[2]{0}', space=sflag, size = 0x8, scoped, tag = 'scoped memory for tpu_custom_call.1']
    #allocation6 [shape = 'u8[131072]{0}', space=vmem, size = 0x20000, scoped, tag = 'input window, operand 1']
    #allocation7 [shape = 's32[2]{0}', space=sflag, size = 0x8, scoped, tag = 'scoped memory for tpu_custom_call.1']
    #allocation8 [shape = 'u8[512]{0}', space=smem, size = 0x200, scoped, tag = 'input window, operand 2, single buffered']
    #allocation9 [shape = 'u8[512]{0}', space=smem, size = 0x200, scoped, tag = 'output window, operand 0, single buffered']
    %8 = vsyncpa [#allocation3], 0
    %s9 = scalar_lea.sflag [#allocation3], 1
    %10 = vsyncpa %s9, 0
    %11 = vsyncpa [#allocation7], 0
    %s12 = scalar_lea.sflag [#allocation7], 1
    %13 = vsyncpa %s12, 0
    %14 = vsyncpa [#allocation5], 0
    %15 = vsyncpa [#allocation4], 0
    loop: start=0, step=1, limit=4
    $region2: #{tpu_custom_call.1} parent=1 // loop_pre_header
      _
    $region3: #{tpu_custom_call.1} parent=1 // loop_header
      %s17 = sphi 0, %s21
      %p18 = scmp.ge.s32.totalorder %s17, 4
      %s27 = sphi 0, %s29
      %s30 = sphi 0, %s27
      %s31 = sphi 0, %s30
      %s47 = sphi 0, %s31
      %s53 = sphi 0, %s55
      %s56 = sphi 0, %s53
      %s57 = sphi 0, %s56
      %s73 = sphi 0, %s57
      %s77 = sphi 0, %s77
      %s79 = sphi 0, %s77
      %s80 = sphi 0, %s79
      %s94 = sphi 0, %s80
      %s98 = sphi 0, %s98
      %s100 = sphi 0, %s98
      %s101 = sphi 0, %s100
      %s115 = sphi 0, %s101
    $region4: #{tpu_custom_call.1} parent=1 // loop_header_branch
      %20 = sbr.rel (%p18) target = $region8
    $region5: #{tpu_custom_call.1} parent=1 // loop_body
      %s22 = ssub.s32 %s17, 1
      %s23 = ssub.s32 %s17, 2
      %s24 = sadd.s32 %s17, 1
      %s25 = ssub.s32 %s17, %s24
      %p26 = scmp.eq.s32.totalorder %s25, 0
      %s28 = sadd.s32 %s27, 1
      %s29 = scalar_select %p26, %s27, %s28
      %p32 = pneg %p26
      %p33 = scmp.eq.s32.totalorder %s17, 1
      %p34 = por %p32, %p33
      %p35 = scmp.ne.s32.totalorder %s27, %s30
      %p36 = scmp.eq.s32.totalorder %s17, 0
      %p37 = por %p35, %p36
      %p38 = scmp.ne.s32.totalorder %s27, %s30
      %p39 = scmp.eq.s32.totalorder %s22, 1
      %p40 = por %p38, %p39
      %p41 = scmp.ne.s32.totalorder %s30, %s31
      %p42 = scmp.eq.s32.totalorder %s22, 0
      %p43 = por %p41, %p42
      %p44 = scmp.ne.s32.totalorder %s30, %s31
      %p45 = scmp.eq.s32.totalorder %s23, 1
      %p46 = por %p44, %p45
      %p48 = scmp.ne.s32.totalorder %s31, %s47
      %p49 = scmp.eq.s32.totalorder %s23, 0
      %p50 = por %p48, %p49
      %s51 = ssub.s32 %s17, %s24
      %p52 = scmp.eq.s32.totalorder %s51, 0
      %s54 = sadd.s32 %s53, 1
      %s55 = scalar_select %p52, %s53, %s54
      %p58 = pneg %p52
      %p59 = scmp.eq.s32.totalorder %s17, 1
      %p60 = por %p58, %p59
      %p61 = scmp.ne.s32.totalorder %s53, %s56
      %p62 = scmp.eq.s32.totalorder %s17, 0
      %p63 = por %p61, %p62
      %p64 = scmp.ne.s32.totalorder %s53, %s56
      %p65 = scmp.eq.s32.totalorder %s22, 1
      %p66 = por %p64, %p65
      %p67 = scmp.ne.s32.totalorder %s56, %s57
      %p68 = scmp.eq.s32.totalorder %s22, 0
      %p69 = por %p67, %p68
      %p70 = scmp.ne.s32.totalorder %s56, %s57
      %p71 = scmp.eq.s32.totalorder %s23, 1
      %p72 = por %p70, %p71
      %p74 = scmp.ne.s32.totalorder %s57, %s73
      %p75 = scmp.eq.s32.totalorder %s23, 0
      %p76 = por %p74, %p75
      %s78 = sadd.s32 %s77, 1
      %p81 = scmp.eq.s32.totalorder %s17, 1
      %p82 = scmp.ne.s32.totalorder %s77, %s79
      %p83 = scmp.eq.s32.totalorder %s17, 0
      %p84 = por %p82, %p83
      %p85 = scmp.ne.s32.totalorder %s77, %s79
      %p86 = scmp.eq.s32.totalorder %s22, 1
      %p87 = por %p85, %p86
      %p88 = scmp.ne.s32.totalorder %s79, %s80
      %p89 = scmp.eq.s32.totalorder %s22, 0
      %p90 = por %p88, %p89
      %p91 = scmp.ne.s32.totalorder %s79, %s80
      %p92 = scmp.eq.s32.totalorder %s23, 1
      %p93 = por %p91, %p92
      %p95 = scmp.ne.s32.totalorder %s80, %s94
      %p96 = scmp.eq.s32.totalorder %s23, 0
      %p97 = por %p95, %p96
      %s99 = sadd.s32 %s98, 1
      %p102 = scmp.eq.s32.totalorder %s17, 1
      %p103 = scmp.ne.s32.totalorder %s98, %s100
      %p104 = scmp.eq.s32.totalorder %s17, 0
      %p105 = por %p103, %p104
      %p106 = scmp.ne.s32.totalorder %s98, %s100
      %p107 = scmp.eq.s32.totalorder %s22, 1
      %p108 = por %p106, %p107
      %p109 = scmp.ne.s32.totalorder %s100, %s101
      %p110 = scmp.eq.s32.totalorder %s22, 0
      %p111 = por %p109, %p110
      %p112 = scmp.ne.s32.totalorder %s100, %s101
      %p113 = scmp.eq.s32.totalorder %s23, 1
      %p114 = por %p112, %p113
      %p116 = scmp.ne.s32.totalorder %s101, %s115
      %p117 = scmp.eq.s32.totalorder %s23, 0
      %p118 = por %p116, %p117
      %p119 = scmp.le.s32.totalorder 1, %s17
      %p120 = scmp.lt.s32.totalorder %s17, 3
      %p121 = pnand %p119, %p120
      %p122 = pneg %p121
      // Predicated region
      $region9: #{tpu_custom_call.1} parent=5 // pred_check
        _
      $region10: #{tpu_custom_call.1} parent=5 // pred_check_branch
        %124 = sbr.rel (%p121) target = $region12
      $region11: #{tpu_custom_call.1} parent=5 // pred_region
        %s125 = ssub.s32 %s17, 1
        // Predicated region
        $region13: #{tpu_custom_call.1} parent=11 // pred_check
          %p126 = pneg %p90
        $region14: #{tpu_custom_call.1} parent=11 // pred_check_branch
          %128 = sbr.rel (%p126) target = $region16
        $region15: #{tpu_custom_call.1} parent=11 // pred_region
          %s130 = ssub.s32 16, 16
          %131 = vsyncadd [#allocation5], %s130
          %s133 = sshll.u32 %s2, 4
          %s134 = int_to_ptr.vmem [resolvable:$true] %s133
          %136 = dma.vmem_to_smem %s134, 16, [#allocation8], [#allocation5]
        $region16: #{tpu_custom_call.1} parent=11 // pred_fallthru
          _
      $region12: #{tpu_custom_call.1} parent=5 // pred_fallthru
        _
      %p137 = scmp.lt.s32.totalorder %s17, 2
      // Predicated region
      $region17: #{tpu_custom_call.1} parent=5 // pred_check
        %p138 = pneg %p137
      $region18: #{tpu_custom_call.1} parent=5 // pred_check_branch
        %140 = sbr.rel (%p138) target = $region20
      $region19: #{tpu_custom_call.1} parent=5 // pred_region
        // Predicated region
        $region21: #{tpu_custom_call.1} parent=19 // pred_check
          %p141 = pneg %p37
        $region22: #{tpu_custom_call.1} parent=19 // pred_check_branch
          %143 = sbr.rel (%p141) target = $region24
        $region23: #{tpu_custom_call.1} parent=19 // pred_region
          %s144 = sand.u32 %s27, 1
          %s145 = scalar_lea.sflag [#allocation3], %s144
          %s146 = sand.u32 %s27, 1
          %s147 = smul.addr %s146, 256
          %s148 = scalar_lea.vmem [#allocation2], %s147
          %s149 = smul.u32 16, %s17
          %s151 = ssub.s32 4096, 4096
          %152 = vsyncadd %s145, %s151
          %s153 = smul.addr %s149, 128
          %s154 = scalar_lea.hbm %s0, %s153
          %s155 = sshll.u32 %s148, 4
          %s156 = int_to_ptr.vmem [resolvable:$true] %s155
          %161 = dma.hbm_to_vmem [thread:$0]  %s154, 4096, %s156, %s145, 4096, 2048, 128
        $region24: #{tpu_custom_call.1} parent=19 // pred_fallthru
          _
        // Predicated region
        $region25: #{tpu_custom_call.1} parent=19 // pred_check
          %p162 = pneg %p63
        $region26: #{tpu_custom_call.1} parent=19 // pred_check_branch
          %164 = sbr.rel (%p162) target = $region28
        $region27: #{tpu_custom_call.1} parent=19 // pred_region
          %s165 = sand.u32 %s53, 1
          %s166 = scalar_lea.sflag [#allocation7], %s165
          %s167 = sand.u32 %s53, 1
          %s168 = smul.addr %s167, 128
          %s169 = scalar_lea.vmem [#allocation6], %s168
          %s170 = smul.u32 16, %s17
          %s172 = ssub.s32 2048, 2048
          %173 = vsyncadd %s166, %s172
          %s174 = smul.addr %s170, 64
          %s175 = scalar_lea.hbm %s1, %s174
          %s176 = sshll.u32 %s169, 4
          %s177 = int_to_ptr.vmem [resolvable:$true] %s176
          %182 = dma.hbm_to_vmem [thread:$0]  %s175, 2048, %s177, %s166, 2048, 1024, 64
        $region28: #{tpu_custom_call.1} parent=19 // pred_fallthru
          _
      $region20: #{tpu_custom_call.1} parent=5 // pred_fallthru
        _
      %p183 = scmp.le.s32.totalorder 1, %s17
      %p184 = scmp.lt.s32.totalorder %s17, 3
      %p185 = pnand %p183, %p184
      %p186 = pneg %p185
      // Predicated region
      $region29: #{tpu_custom_call.1} parent=5 // pred_check
        _
      $region30: #{tpu_custom_call.1} parent=5 // pred_check_branch
        %188 = sbr.rel (%p185) target = $region32
      $region31: #{tpu_custom_call.1} parent=5 // pred_region
        %s189 = ssub.s32 %s17, 1
        %s190 = sand.u32 %s30, 1
        %s191 = scalar_lea.sflag [#allocation3], %s190
        %s192 = sand.u32 %s30, 1
        %s193 = smul.addr %s192, 256
        %s194 = scalar_lea.vmem [#allocation2], %s193
        // Predicated region
        $region33: #{tpu_custom_call.1} parent=31 // pred_check
          %p195 = pneg %p43
        $region34: #{tpu_custom_call.1} parent=31 // pred_check_branch
          %197 = sbr.rel (%p195) target = $region36
        $region35: #{tpu_custom_call.1} parent=31 // pred_region
          %198 = dma.done %s191, 4096
        $region36: #{tpu_custom_call.1} parent=31 // pred_fallthru
          _
        %s199 = sand.u32 %s56, 1
        %s200 = scalar_lea.sflag [#allocation7], %s199
        %s201 = sand.u32 %s56, 1
        %s202 = smul.addr %s201, 128
        %s203 = scalar_lea.vmem [#allocation6], %s202
        // Predicated region
        $region37: #{tpu_custom_call.1} parent=31 // pred_check
          %p204 = pneg %p69
        $region38: #{tpu_custom_call.1} parent=31 // pred_check_branch
          %206 = sbr.rel (%p204) target = $region40
        $region39: #{tpu_custom_call.1} parent=31 // pred_region
          %207 = dma.done %s200, 2048
        $region40: #{tpu_custom_call.1} parent=31 // pred_fallthru
          _
        // Predicated region
        $region41: #{tpu_custom_call.1} parent=31 // pred_check
          %p208 = pneg %p90
        $region42: #{tpu_custom_call.1} parent=31 // pred_check_branch
          %210 = sbr.rel (%p208) target = $region44
        $region43: #{tpu_custom_call.1} parent=31 // pred_region
          %211 = dma.done [#allocation5], 16
        $region44: #{tpu_custom_call.1} parent=31 // pred_fallthru
          _
        %212 = sfence
        %s213 = sand.u32 %s30, 1
        %s214 = scalar_lea.sflag [#allocation3], %s213
        %s215 = sand.u32 %s30, 1
        %s216 = smul.addr %s215, 256
        %s217 = scalar_lea.vmem [#allocation2], %s216
        %p218 = pneg %p43
        %p219 = pneg %p40
        %s220 = sand.u32 %s56, 1
        %s221 = scalar_lea.sflag [#allocation7], %s220
        %s222 = sand.u32 %s56, 1
        %s223 = smul.addr %s222, 128
        %s224 = scalar_lea.vmem [#allocation6], %s223
        %p225 = pneg %p69
        %p226 = pneg %p66
        %p227 = pneg %p90
        %p228 = pneg %p87
        %p229 = pneg %p111
        %p230 = pneg %p108
        %s231 = smul.u32 16, %s22
        %s232 = smul.u32 16, %s22
        %p233 = scmp.eq.s32.totalorder %s22, 0
        // Predicated region
        $region45: #{tpu_custom_call.1} parent=31 // pred_check
          %p234 = pneg %p233
        $region46: #{tpu_custom_call.1} parent=31 // pred_check_branch
          %236 = sbr.rel (%p234) target = $region48
        $region47: #{tpu_custom_call.1} parent=31 // pred_region
          %s237 = scalar_lea.smem [#allocation9], 0
          %238 = sst [smem:[%s237]] 0.0
          %s239 = scalar_lea.smem [#allocation9], 1
          %240 = sst [smem:[%s239]] 0.0
          %s241 = scalar_lea.smem [#allocation9], 2
          %242 = sst [smem:[%s241]] 0.0
          %s243 = scalar_lea.smem [#allocation9], 3
          %244 = sst [smem:[%s243]] 0.0
          %s245 = scalar_lea.smem [#allocation9], 4
          %246 = sst [smem:[%s245]] 0.0
          %s247 = scalar_lea.smem [#allocation9], 5
          %248 = sst [smem:[%s247]] 0.0
          %s249 = scalar_lea.smem [#allocation9], 6
          %250 = sst [smem:[%s249]] 0.0
          %s251 = scalar_lea.smem [#allocation9], 7
          %252 = sst [smem:[%s251]] 0.0
          %s253 = scalar_lea.smem [#allocation9], 8
          %254 = sst [smem:[%s253]] 0.0
          %s255 = scalar_lea.smem [#allocation9], 9
          %256 = sst [smem:[%s255]] 0.0
          %s257 = scalar_lea.smem [#allocation9], 10
          %258 = sst [smem:[%s257]] 0.0
          %s259 = scalar_lea.smem [#allocation9], 11
          %260 = sst [smem:[%s259]] 0.0
          %s261 = scalar_lea.smem [#allocation9], 12
          %262 = sst [smem:[%s261]] 0.0
          %s263 = scalar_lea.smem [#allocation9], 13
          %264 = sst [smem:[%s263]] 0.0
          %s265 = scalar_lea.smem [#allocation9], 14
          %266 = sst [smem:[%s265]] 0.0
          %s267 = scalar_lea.smem [#allocation9], 15
          %268 = sst [smem:[%s267]] 0.0
        $region48: #{tpu_custom_call.1} parent=31 // pred_fallthru
          _
        %v269 = vld [vmem:[%s194] sm:$0xff]
        %v270 = vld [vmem:[%s194 + $0x8] sm:$0xff]
        %v271 = vld [vmem:[%s194 + $0x10] sm:$0xff]
        %v272 = vld [vmem:[%s194 + $0x18] sm:$0xff]
        %v273 = vld [vmem:[%s194 + $0x20] sm:$0xff]
        %v274 = vld [vmem:[%s194 + $0x28] sm:$0xff]
        %v275 = vld [vmem:[%s194 + $0x30] sm:$0xff]
        %v276 = vld [vmem:[%s194 + $0x38] sm:$0xff]
        %v277 = vld [vmem:[%s194 + $0x40] sm:$0xff]
        %v278 = vld [vmem:[%s194 + $0x48] sm:$0xff]
        %v279 = vld [vmem:[%s194 + $0x50] sm:$0xff]
        %v280 = vld [vmem:[%s194 + $0x58] sm:$0xff]
        %v281 = vld [vmem:[%s194 + $0x60] sm:$0xff]
        %v282 = vld [vmem:[%s194 + $0x68] sm:$0xff]
        %v283 = vld [vmem:[%s194 + $0x70] sm:$0xff]
        %v284 = vld [vmem:[%s194 + $0x78] sm:$0xff]
        %v285 = vld [vmem:[%s194 + $0x80] sm:$0xff]
        %v286 = vld [vmem:[%s194 + $0x88] sm:$0xff]
        %v287 = vld [vmem:[%s194 + $0x90] sm:$0xff]
        %v288 = vld [vmem:[%s194 + $0x98] sm:$0xff]
        %v289 = vld [vmem:[%s194 + $0xa0] sm:$0xff]
        %v290 = vld [vmem:[%s194 + $0xa8] sm:$0xff]
        %v291 = vld [vmem:[%s194 + $0xb0] sm:$0xff]
        %v292 = vld [vmem:[%s194 + $0xb8] sm:$0xff]
        %v293 = vld [vmem:[%s194 + $0xc0] sm:$0xff]
        %v294 = vld [vmem:[%s194 + $0xc8] sm:$0xff]
        %v295 = vld [vmem:[%s194 + $0xd0] sm:$0xff]
        %v296 = vld [vmem:[%s194 + $0xd8] sm:$0xff]
        %v297 = vld [vmem:[%s194 + $0xe0] sm:$0xff]
        %v298 = vld [vmem:[%s194 + $0xe8] sm:$0xff]
        %v299 = vld [vmem:[%s194 + $0xf0] sm:$0xff]
        %v300 = vld [vmem:[%s194 + $0xf8] sm:$0xff]
        %s301 = sld [smem:[#allocation8]]
        %v302 = vstv %s301
        %v303 = vmul.f32 %v269, %v302
        %v304 = vmul.f32 %v270, %v302
        %v305 = vmul.f32 %v271, %v302
        %v306 = vmul.f32 %v272, %v302
        %v307 = vmul.f32 %v273, %v302
        %v308 = vmul.f32 %v274, %v302
        %v309 = vmul.f32 %v275, %v302
        %v310 = vmul.f32 %v276, %v302
        %v311 = vmul.f32 %v277, %v302
        %v312 = vmul.f32 %v278, %v302
        %v313 = vmul.f32 %v279, %v302
        %v314 = vmul.f32 %v280, %v302
        %v315 = vmul.f32 %v281, %v302
        %v316 = vmul.f32 %v282, %v302
        %v317 = vmul.f32 %v283, %v302
        %v318 = vmul.f32 %v284, %v302
        %v319 = vmul.f32 %v285, %v302
        %v320 = vmul.f32 %v286, %v302
        %v321 = vmul.f32 %v287, %v302
        %v322 = vmul.f32 %v288, %v302
        %v323 = vmul.f32 %v289, %v302
        %v324 = vmul.f32 %v290, %v302
        %v325 = vmul.f32 %v291, %v302
        %v326 = vmul.f32 %v292, %v302
        %v327 = vmul.f32 %v293, %v302
        %v328 = vmul.f32 %v294, %v302
        %v329 = vmul.f32 %v295, %v302
        %v330 = vmul.f32 %v296, %v302
        %v331 = vmul.f32 %v297, %v302
        %v332 = vmul.f32 %v298, %v302
        %v333 = vmul.f32 %v299, %v302
        %v334 = vmul.f32 %v300, %v302
        %s335 = sld [smem:[#allocation8 + $0x1]]
        %v336 = vstv %s335
        %v337 = vmul.f32 %v269, %v336
        %v338 = vmul.f32 %v270, %v336
        %v339 = vmul.f32 %v271, %v336
        %v340 = vmul.f32 %v272, %v336
        %v341 = vmul.f32 %v273, %v336
        %v342 = vmul.f32 %v274, %v336
        %v343 = vmul.f32 %v275, %v336
        %v344 = vmul.f32 %v276, %v336
        %v345 = vmul.f32 %v277, %v336
        %v346 = vmul.f32 %v278, %v336
        %v347 = vmul.f32 %v279, %v336
        %v348 = vmul.f32 %v280, %v336
        %v349 = vmul.f32 %v281, %v336
        %v350 = vmul.f32 %v282, %v336
        %v351 = vmul.f32 %v283, %v336
        %v352 = vmul.f32 %v284, %v336
        %v353 = vmul.f32 %v285, %v336
        %v354 = vmul.f32 %v286, %v336
        %v355 = vmul.f32 %v287, %v336
        %v356 = vmul.f32 %v288, %v336
        %v357 = vmul.f32 %v289, %v336
        %v358 = vmul.f32 %v290, %v336
        %v359 = vmul.f32 %v291, %v336
        %v360 = vmul.f32 %v292, %v336
        %v361 = vmul.f32 %v293, %v336
        %v362 = vmul.f32 %v294, %v336
        %v363 = vmul.f32 %v295, %v336
        %v364 = vmul.f32 %v296, %v336
        %v365 = vmul.f32 %v297, %v336
        %v366 = vmul.f32 %v298, %v336
        %v367 = vmul.f32 %v299, %v336
        %v368 = vmul.f32 %v300, %v336
        %v401 = vrot.slane %v337, 1
        %v402 = vrot.slane %v338, 1
        %v403 = vrot.slane %v339, 1
        %v404 = vrot.slane %v340, 1
        %v405 = vrot.slane %v341, 1
        %v406 = vrot.slane %v342, 1
        %v407 = vrot.slane %v343, 1
        %v408 = vrot.slane %v344, 1
        %v409 = vrot.slane %v345, 1
        %v410 = vrot.slane %v346, 1
        %v411 = vrot.slane %v347, 1
        %v412 = vrot.slane %v348, 1
        %v413 = vrot.slane %v349, 1
        %v414 = vrot.slane %v350, 1
        %v415 = vrot.slane %v351, 1
        %v416 = vrot.slane %v352, 1
        %v417 = vrot.slane %v353, 1
        %v418 = vrot.slane %v354, 1
        %v419 = vrot.slane %v355, 1
        %v420 = vrot.slane %v356, 1
        %v421 = vrot.slane %v357, 1
        %v422 = vrot.slane %v358, 1
        %v423 = vrot.slane %v359, 1
        %v424 = vrot.slane %v360, 1
        %v425 = vrot.slane %v361, 1
        %v426 = vrot.slane %v362, 1
        %v427 = vrot.slane %v363, 1
        %v428 = vrot.slane %v364, 1
        %v429 = vrot.slane %v365, 1
        %v430 = vrot.slane %v366, 1
        %v431 = vrot.slane %v367, 1
        %v432 = vrot.slane %v368, 1
        %v465 = vadd.f32 %v303, %v401
        %v466 = vadd.f32 %v304, %v402
        %v467 = vadd.f32 %v305, %v403
        %v468 = vadd.f32 %v306, %v404
        %v469 = vadd.f32 %v307, %v405
        %v470 = vadd.f32 %v308, %v406
        %v471 = vadd.f32 %v309, %v407
        %v472 = vadd.f32 %v310, %v408
        %v473 = vadd.f32 %v311, %v409
        %v474 = vadd.f32 %v312, %v410
        %v475 = vadd.f32 %v313, %v411
        %v476 = vadd.f32 %v314, %v412
        %v477 = vadd.f32 %v315, %v413
        %v478 = vadd.f32 %v316, %v414
        %v479 = vadd.f32 %v317, %v415
        %v480 = vadd.f32 %v318, %v416
        %v481 = vadd.f32 %v319, %v417
        %v482 = vadd.f32 %v320, %v418
        %v483 = vadd.f32 %v321, %v419
        %v484 = vadd.f32 %v322, %v420
        %v485 = vadd.f32 %v323, %v421
        %v486 = vadd.f32 %v324, %v422
        %v487 = vadd.f32 %v325, %v423
        %v488 = vadd.f32 %v326, %v424
        %v489 = vadd.f32 %v327, %v425
        %v490 = vadd.f32 %v328, %v426
        %v491 = vadd.f32 %v329, %v427
        %v492 = vadd.f32 %v330, %v428
        %v493 = vadd.f32 %v331, %v429
        %v494 = vadd.f32 %v332, %v430
        %v495 = vadd.f32 %v333, %v431
        %v496 = vadd.f32 %v334, %v432
        %s497 = sld [smem:[#allocation8 + $0x2]]
        %v498 = vstv %s497
        %v499 = vmul.f32 %v269, %v498
        %v500 = vmul.f32 %v270, %v498
        %v501 = vmul.f32 %v271, %v498
        %v502 = vmul.f32 %v272, %v498
        %v503 = vmul.f32 %v273, %v498
        %v504 = vmul.f32 %v274, %v498
        %v505 = vmul.f32 %v275, %v498
        %v506 = vmul.f32 %v276, %v498
        %v507 = vmul.f32 %v277, %v498
        %v508 = vmul.f32 %v278, %v498
        %v509 = vmul.f32 %v279, %v498
        %v510 = vmul.f32 %v280, %v498
        %v511 = vmul.f32 %v281, %v498
        %v512 = vmul.f32 %v282, %v498
        %v513 = vmul.f32 %v283, %v498
        %v514 = vmul.f32 %v284, %v498
        %v515 = vmul.f32 %v285, %v498
        %v516 = vmul.f32 %v286, %v498
        %v517 = vmul.f32 %v287, %v498
        %v518 = vmul.f32 %v288, %v498
        %v519 = vmul.f32 %v289, %v498
        %v520 = vmul.f32 %v290, %v498
        %v521 = vmul.f32 %v291, %v498
        %v522 = vmul.f32 %v292, %v498
        %v523 = vmul.f32 %v293, %v498
        %v524 = vmul.f32 %v294, %v498
        %v525 = vmul.f32 %v295, %v498
        %v526 = vmul.f32 %v296, %v498
        %v527 = vmul.f32 %v297, %v498
        %v528 = vmul.f32 %v298, %v498
        %v529 = vmul.f32 %v299, %v498
        %v530 = vmul.f32 %v300, %v498
        %v563 = vrot.slane %v499, 2
        %v564 = vrot.slane %v500, 2
        %v565 = vrot.slane %v501, 2
        %v566 = vrot.slane %v502, 2
        %v567 = vrot.slane %v503, 2
        %v568 = vrot.slane %v504, 2
        %v569 = vrot.slane %v505, 2
        %v570 = vrot.slane %v506, 2
        %v571 = vrot.slane %v507, 2
        %v572 = vrot.slane %v508, 2
        %v573 = vrot.slane %v509, 2
        %v574 = vrot.slane %v510, 2
        %v575 = vrot.slane %v511, 2
        %v576 = vrot.slane %v512, 2
        %v577 = vrot.slane %v513, 2
        %v578 = vrot.slane %v514, 2
        %v579 = vrot.slane %v515, 2
        %v580 = vrot.slane %v516, 2
        %v581 = vrot.slane %v517, 2
        %v582 = vrot.slane %v518, 2
        %v583 = vrot.slane %v519, 2
        %v584 = vrot.slane %v520, 2
        %v585 = vrot.slane %v521, 2
        %v586 = vrot.slane %v522, 2
        %v587 = vrot.slane %v523, 2
        %v588 = vrot.slane %v524, 2
        %v589 = vrot.slane %v525, 2
        %v590 = vrot.slane %v526, 2
        %v591 = vrot.slane %v527, 2
        %v592 = vrot.slane %v528, 2
        %v593 = vrot.slane %v529, 2
        %v594 = vrot.slane %v530, 2
        %v627 = vadd.f32 %v465, %v563
        %v628 = vadd.f32 %v466, %v564
        %v629 = vadd.f32 %v467, %v565
        %v630 = vadd.f32 %v468, %v566
        %v631 = vadd.f32 %v469, %v567
        %v632 = vadd.f32 %v470, %v568
        %v633 = vadd.f32 %v471, %v569
        %v634 = vadd.f32 %v472, %v570
        %v635 = vadd.f32 %v473, %v571
        %v636 = vadd.f32 %v474, %v572
        %v637 = vadd.f32 %v475, %v573
        %v638 = vadd.f32 %v476, %v574
        %v639 = vadd.f32 %v477, %v575
        %v640 = vadd.f32 %v478, %v576
        %v641 = vadd.f32 %v479, %v577
        %v642 = vadd.f32 %v480, %v578
        %v643 = vadd.f32 %v481, %v579
        %v644 = vadd.f32 %v482, %v580
        %v645 = vadd.f32 %v483, %v581
        %v646 = vadd.f32 %v484, %v582
        %v647 = vadd.f32 %v485, %v583
        %v648 = vadd.f32 %v486, %v584
        %v649 = vadd.f32 %v487, %v585
        %v650 = vadd.f32 %v488, %v586
        %v651 = vadd.f32 %v489, %v587
        %v652 = vadd.f32 %v490, %v588
        %v653 = vadd.f32 %v491, %v589
        %v654 = vadd.f32 %v492, %v590
        %v655 = vadd.f32 %v493, %v591
        %v656 = vadd.f32 %v494, %v592
        %v657 = vadd.f32 %v495, %v593
        %v658 = vadd.f32 %v496, %v594
        %s659 = sld [smem:[#allocation8 + $0x3]]
        %v660 = vstv %s659
        %v661 = vmul.f32 %v269, %v660
        %v662 = vmul.f32 %v270, %v660
        %v663 = vmul.f32 %v271, %v660
        %v664 = vmul.f32 %v272, %v660
        %v665 = vmul.f32 %v273, %v660
        %v666 = vmul.f32 %v274, %v660
        %v667 = vmul.f32 %v275, %v660
        %v668 = vmul.f32 %v276, %v660
        %v669 = vmul.f32 %v277, %v660
        %v670 = vmul.f32 %v278, %v660
        %v671 = vmul.f32 %v279, %v660
        %v672 = vmul.f32 %v280, %v660
        %v673 = vmul.f32 %v281, %v660
        %v674 = vmul.f32 %v282, %v660
        %v675 = vmul.f32 %v283, %v660
        %v676 = vmul.f32 %v284, %v660
        %v677 = vmul.f32 %v285, %v660
        %v678 = vmul.f32 %v286, %v660
        %v679 = vmul.f32 %v287, %v660
        %v680 = vmul.f32 %v288, %v660
        %v681 = vmul.f32 %v289, %v660
        %v682 = vmul.f32 %v290, %v660
        %v683 = vmul.f32 %v291, %v660
        %v684 = vmul.f32 %v292, %v660
        %v685 = vmul.f32 %v293, %v660
        %v686 = vmul.f32 %v294, %v660
        %v687 = vmul.f32 %v295, %v660
        %v688 = vmul.f32 %v296, %v660
        %v689 = vmul.f32 %v297, %v660
        %v690 = vmul.f32 %v298, %v660
        %v691 = vmul.f32 %v299, %v660
        %v692 = vmul.f32 %v300, %v660
        %v725 = vrot.slane %v661, 3
        %v726 = vrot.slane %v662, 3
        %v727 = vrot.slane %v663, 3
        %v728 = vrot.slane %v664, 3
        %v729 = vrot.slane %v665, 3
        %v730 = vrot.slane %v666, 3
        %v731 = vrot.slane %v667, 3
        %v732 = vrot.slane %v668, 3
        %v733 = vrot.slane %v669, 3
        %v734 = vrot.slane %v670, 3
        %v735 = vrot.slane %v671, 3
        %v736 = vrot.slane %v672, 3
        %v737 = vrot.slane %v673, 3
        %v738 = vrot.slane %v674, 3
        %v739 = vrot.slane %v675, 3
        %v740 = vrot.slane %v676, 3
        %v741 = vrot.slane %v677, 3
        %v742 = vrot.slane %v678, 3
        %v743 = vrot.slane %v679, 3
        %v744 = vrot.slane %v680, 3
        %v745 = vrot.slane %v681, 3
        %v746 = vrot.slane %v682, 3
        %v747 = vrot.slane %v683, 3
        %v748 = vrot.slane %v684, 3
        %v749 = vrot.slane %v685, 3
        %v750 = vrot.slane %v686, 3
        %v751 = vrot.slane %v687, 3
        %v752 = vrot.slane %v688, 3
        %v753 = vrot.slane %v689, 3
        %v754 = vrot.slane %v690, 3
        %v755 = vrot.slane %v691, 3
        %v756 = vrot.slane %v692, 3
        %v789 = vadd.f32 %v627, %v725
        %v790 = vadd.f32 %v628, %v726
        %v791 = vadd.f32 %v629, %v727
        %v792 = vadd.f32 %v630, %v728
        %v793 = vadd.f32 %v631, %v729
        %v794 = vadd.f32 %v632, %v730
        %v795 = vadd.f32 %v633, %v731
        %v796 = vadd.f32 %v634, %v732
        %v797 = vadd.f32 %v635, %v733
        %v798 = vadd.f32 %v636, %v734
        %v799 = vadd.f32 %v637, %v735
        %v800 = vadd.f32 %v638, %v736
        %v801 = vadd.f32 %v639, %v737
        %v802 = vadd.f32 %v640, %v738
        %v803 = vadd.f32 %v641, %v739
        %v804 = vadd.f32 %v642, %v740
        %v805 = vadd.f32 %v643, %v741
        %v806 = vadd.f32 %v644, %v742
        %v807 = vadd.f32 %v645, %v743
        %v808 = vadd.f32 %v646, %v744
        %v809 = vadd.f32 %v647, %v745
        %v810 = vadd.f32 %v648, %v746
        %v811 = vadd.f32 %v649, %v747
        %v812 = vadd.f32 %v650, %v748
        %v813 = vadd.f32 %v651, %v749
        %v814 = vadd.f32 %v652, %v750
        %v815 = vadd.f32 %v653, %v751
        %v816 = vadd.f32 %v654, %v752
        %v817 = vadd.f32 %v655, %v753
        %v818 = vadd.f32 %v656, %v754
        %v819 = vadd.f32 %v657, %v755
        %v820 = vadd.f32 %v658, %v756
        %s821 = sld [smem:[#allocation8 + $0x4]]
        %v822 = vstv %s821
        %v823 = vmul.f32 %v269, %v822
        %v824 = vmul.f32 %v270, %v822
        %v825 = vmul.f32 %v271, %v822
        %v826 = vmul.f32 %v272, %v822
        %v827 = vmul.f32 %v273, %v822
        %v828 = vmul.f32 %v274, %v822
        %v829 = vmul.f32 %v275, %v822
        %v830 = vmul.f32 %v276, %v822
        %v831 = vmul.f32 %v277, %v822
        %v832 = vmul.f32 %v278, %v822
        %v833 = vmul.f32 %v279, %v822
        %v834 = vmul.f32 %v280, %v822
        %v835 = vmul.f32 %v281, %v822
        %v836 = vmul.f32 %v282, %v822
        %v837 = vmul.f32 %v283, %v822
        %v838 = vmul.f32 %v284, %v822
        %v839 = vmul.f32 %v285, %v822
        %v840 = vmul.f32 %v286, %v822
        %v841 = vmul.f32 %v287, %v822
        %v842 = vmul.f32 %v288, %v822
        %v843 = vmul.f32 %v289, %v822
        %v844 = vmul.f32 %v290, %v822
        %v845 = vmul.f32 %v291, %v822
        %v846 = vmul.f32 %v292, %v822
        %v847 = vmul.f32 %v293, %v822
        %v848 = vmul.f32 %v294, %v822
        %v849 = vmul.f32 %v295, %v822
        %v850 = vmul.f32 %v296, %v822
        %v851 = vmul.f32 %v297, %v822
        %v852 = vmul.f32 %v298, %v822
        %v853 = vmul.f32 %v299, %v822
        %v854 = vmul.f32 %v300, %v822
        %v887 = vrot.slane %v823, 4
        %v888 = vrot.slane %v824, 4
        %v889 = vrot.slane %v825, 4
        %v890 = vrot.slane %v826, 4
        %v891 = vrot.slane %v827, 4
        %v892 = vrot.slane %v828, 4
        %v893 = vrot.slane %v829, 4
        %v894 = vrot.slane %v830, 4
        %v895 = vrot.slane %v831, 4
        %v896 = vrot.slane %v832, 4
        %v897 = vrot.slane %v833, 4
        %v898 = vrot.slane %v834, 4
        %v899 = vrot.slane %v835, 4
        %v900 = vrot.slane %v836, 4
        %v901 = vrot.slane %v837, 4
        %v902 = vrot.slane %v838, 4
        %v903 = vrot.slane %v839, 4
        %v904 = vrot.slane %v840, 4
        %v905 = vrot.slane %v841, 4
        %v906 = vrot.slane %v842, 4
        %v907 = vrot.slane %v843, 4
        %v908 = vrot.slane %v844, 4
        %v909 = vrot.slane %v845, 4
        %v910 = vrot.slane %v846, 4
        %v911 = vrot.slane %v847, 4
        %v912 = vrot.slane %v848, 4
        %v913 = vrot.slane %v849, 4
        %v914 = vrot.slane %v850, 4
        %v915 = vrot.slane %v851, 4
        %v916 = vrot.slane %v852, 4
        %v917 = vrot.slane %v853, 4
        %v918 = vrot.slane %v854, 4
        %v951 = vadd.f32 %v789, %v887
        %v952 = vadd.f32 %v790, %v888
        %v953 = vadd.f32 %v791, %v889
        %v954 = vadd.f32 %v792, %v890
        %v955 = vadd.f32 %v793, %v891
        %v956 = vadd.f32 %v794, %v892
        %v957 = vadd.f32 %v795, %v893
        %v958 = vadd.f32 %v796, %v894
        %v959 = vadd.f32 %v797, %v895
        %v960 = vadd.f32 %v798, %v896
        %v961 = vadd.f32 %v799, %v897
        %v962 = vadd.f32 %v800, %v898
        %v963 = vadd.f32 %v801, %v899
        %v964 = vadd.f32 %v802, %v900
        %v965 = vadd.f32 %v803, %v901
        %v966 = vadd.f32 %v804, %v902
        %v967 = vadd.f32 %v805, %v903
        %v968 = vadd.f32 %v806, %v904
        %v969 = vadd.f32 %v807, %v905
        %v970 = vadd.f32 %v808, %v906
        %v971 = vadd.f32 %v809, %v907
        %v972 = vadd.f32 %v810, %v908
        %v973 = vadd.f32 %v811, %v909
        %v974 = vadd.f32 %v812, %v910
        %v975 = vadd.f32 %v813, %v911
        %v976 = vadd.f32 %v814, %v912
        %v977 = vadd.f32 %v815, %v913
        %v978 = vadd.f32 %v816, %v914
        %v979 = vadd.f32 %v817, %v915
        %v980 = vadd.f32 %v818, %v916
        %v981 = vadd.f32 %v819, %v917
        %v982 = vadd.f32 %v820, %v918
        %s983 = sld [smem:[#allocation8 + $0x5]]
        %v984 = vstv %s983
        %v985 = vmul.f32 %v269, %v984
        %v986 = vmul.f32 %v270, %v984
        %v987 = vmul.f32 %v271, %v984
        %v988 = vmul.f32 %v272, %v984
        %v989 = vmul.f32 %v273, %v984
        %v990 = vmul.f32 %v274, %v984
        %v991 = vmul.f32 %v275, %v984
        %v992 = vmul.f32 %v276, %v984
        %v993 = vmul.f32 %v277, %v984
        %v994 = vmul.f32 %v278, %v984
        %v995 = vmul.f32 %v279, %v984
        %v996 = vmul.f32 %v280, %v984
        %v997 = vmul.f32 %v281, %v984
        %v998 = vmul.f32 %v282, %v984
        %v999 = vmul.f32 %v283, %v984
        %v1000 = vmul.f32 %v284, %v984
        %v1001 = vmul.f32 %v285, %v984
        %v1002 = vmul.f32 %v286, %v984
        %v1003 = vmul.f32 %v287, %v984
        %v1004 = vmul.f32 %v288, %v984
        %v1005 = vmul.f32 %v289, %v984
        %v1006 = vmul.f32 %v290, %v984
        %v1007 = vmul.f32 %v291, %v984
        %v1008 = vmul.f32 %v292, %v984
        %v1009 = vmul.f32 %v293, %v984
        %v1010 = vmul.f32 %v294, %v984
        %v1011 = vmul.f32 %v295, %v984
        %v1012 = vmul.f32 %v296, %v984
        %v1013 = vmul.f32 %v297, %v984
        %v1014 = vmul.f32 %v298, %v984
        %v1015 = vmul.f32 %v299, %v984
        %v1016 = vmul.f32 %v300, %v984
        %v1049 = vrot.slane %v985, 5
        %v1050 = vrot.slane %v986, 5
        %v1051 = vrot.slane %v987, 5
        %v1052 = vrot.slane %v988, 5
        %v1053 = vrot.slane %v989, 5
        %v1054 = vrot.slane %v990, 5
        %v1055 = vrot.slane %v991, 5
        %v1056 = vrot.slane %v992, 5
        %v1057 = vrot.slane %v993, 5
        %v1058 = vrot.slane %v994, 5
        %v1059 = vrot.slane %v995, 5
        %v1060 = vrot.slane %v996, 5
        %v1061 = vrot.slane %v997, 5
        %v1062 = vrot.slane %v998, 5
        %v1063 = vrot.slane %v999, 5
        %v1064 = vrot.slane %v1000, 5
        %v1065 = vrot.slane %v1001, 5
        %v1066 = vrot.slane %v1002, 5
        %v1067 = vrot.slane %v1003, 5
        %v1068 = vrot.slane %v1004, 5
        %v1069 = vrot.slane %v1005, 5
        %v1070 = vrot.slane %v1006, 5
        %v1071 = vrot.slane %v1007, 5
        %v1072 = vrot.slane %v1008, 5
        %v1073 = vrot.slane %v1009, 5
        %v1074 = vrot.slane %v1010, 5
        %v1075 = vrot.slane %v1011, 5
        %v1076 = vrot.slane %v1012, 5
        %v1077 = vrot.slane %v1013, 5
        %v1078 = vrot.slane %v1014, 5
        %v1079 = vrot.slane %v1015, 5
        %v1080 = vrot.slane %v1016, 5
        %v1113 = vadd.f32 %v951, %v1049
        %v1114 = vadd.f32 %v952, %v1050
        %v1115 = vadd.f32 %v953, %v1051
        %v1116 = vadd.f32 %v954, %v1052
        %v1117 = vadd.f32 %v955, %v1053
        %v1118 = vadd.f32 %v956, %v1054
        %v1119 = vadd.f32 %v957, %v1055
        %v1120 = vadd.f32 %v958, %v1056
        %v1121 = vadd.f32 %v959, %v1057
        %v1122 = vadd.f32 %v960, %v1058
        %v1123 = vadd.f32 %v961, %v1059
        %v1124 = vadd.f32 %v962, %v1060
        %v1125 = vadd.f32 %v963, %v1061
        %v1126 = vadd.f32 %v964, %v1062
        %v1127 = vadd.f32 %v965, %v1063
        %v1128 = vadd.f32 %v966, %v1064
        %v1129 = vadd.f32 %v967, %v1065
        %v1130 = vadd.f32 %v968, %v1066
        %v1131 = vadd.f32 %v969, %v1067
        %v1132 = vadd.f32 %v970, %v1068
        %v1133 = vadd.f32 %v971, %v1069
        %v1134 = vadd.f32 %v972, %v1070
        %v1135 = vadd.f32 %v973, %v1071
        %v1136 = vadd.f32 %v974, %v1072
        %v1137 = vadd.f32 %v975, %v1073
        %v1138 = vadd.f32 %v976, %v1074
        %v1139 = vadd.f32 %v977, %v1075
        %v1140 = vadd.f32 %v978, %v1076
        %v1141 = vadd.f32 %v979, %v1077
        %v1142 = vadd.f32 %v980, %v1078
        %v1143 = vadd.f32 %v981, %v1079
        %v1144 = vadd.f32 %v982, %v1080
        %s1145 = sld [smem:[#allocation8 + $0x6]]
        %v1146 = vstv %s1145
        %v1147 = vmul.f32 %v269, %v1146
        %v1148 = vmul.f32 %v270, %v1146
        %v1149 = vmul.f32 %v271, %v1146
        %v1150 = vmul.f32 %v272, %v1146
        %v1151 = vmul.f32 %v273, %v1146
        %v1152 = vmul.f32 %v274, %v1146
        %v1153 = vmul.f32 %v275, %v1146
        %v1154 = vmul.f32 %v276, %v1146
        %v1155 = vmul.f32 %v277, %v1146
        %v1156 = vmul.f32 %v278, %v1146
        %v1157 = vmul.f32 %v279, %v1146
        %v1158 = vmul.f32 %v280, %v1146
        %v1159 = vmul.f32 %v281, %v1146
        %v1160 = vmul.f32 %v282, %v1146
        %v1161 = vmul.f32 %v283, %v1146
        %v1162 = vmul.f32 %v284, %v1146
        %v1163 = vmul.f32 %v285, %v1146
        %v1164 = vmul.f32 %v286, %v1146
        %v1165 = vmul.f32 %v287, %v1146
        %v1166 = vmul.f32 %v288, %v1146
        %v1167 = vmul.f32 %v289, %v1146
        %v1168 = vmul.f32 %v290, %v1146
        %v1169 = vmul.f32 %v291, %v1146
        %v1170 = vmul.f32 %v292, %v1146
        %v1171 = vmul.f32 %v293, %v1146
        %v1172 = vmul.f32 %v294, %v1146
        %v1173 = vmul.f32 %v295, %v1146
        %v1174 = vmul.f32 %v296, %v1146
        %v1175 = vmul.f32 %v297, %v1146
        %v1176 = vmul.f32 %v298, %v1146
        %v1177 = vmul.f32 %v299, %v1146
        %v1178 = vmul.f32 %v300, %v1146
        %v1211 = vrot.slane %v1147, 6
        %v1212 = vrot.slane %v1148, 6
        %v1213 = vrot.slane %v1149, 6
        %v1214 = vrot.slane %v1150, 6
        %v1215 = vrot.slane %v1151, 6
        %v1216 = vrot.slane %v1152, 6
        %v1217 = vrot.slane %v1153, 6
        %v1218 = vrot.slane %v1154, 6
        %v1219 = vrot.slane %v1155, 6
        %v1220 = vrot.slane %v1156, 6
        %v1221 = vrot.slane %v1157, 6
        %v1222 = vrot.slane %v1158, 6
        %v1223 = vrot.slane %v1159, 6
        %v1224 = vrot.slane %v1160, 6
        %v1225 = vrot.slane %v1161, 6
        %v1226 = vrot.slane %v1162, 6
        %v1227 = vrot.slane %v1163, 6
        %v1228 = vrot.slane %v1164, 6
        %v1229 = vrot.slane %v1165, 6
        %v1230 = vrot.slane %v1166, 6
        %v1231 = vrot.slane %v1167, 6
        %v1232 = vrot.slane %v1168, 6
        %v1233 = vrot.slane %v1169, 6
        %v1234 = vrot.slane %v1170, 6
        %v1235 = vrot.slane %v1171, 6
        %v1236 = vrot.slane %v1172, 6
        %v1237 = vrot.slane %v1173, 6
        %v1238 = vrot.slane %v1174, 6
        %v1239 = vrot.slane %v1175, 6
        %v1240 = vrot.slane %v1176, 6
        %v1241 = vrot.slane %v1177, 6
        %v1242 = vrot.slane %v1178, 6
        %v1275 = vadd.f32 %v1113, %v1211
        %v1276 = vadd.f32 %v1114, %v1212
        %v1277 = vadd.f32 %v1115, %v1213
        %v1278 = vadd.f32 %v1116, %v1214
        %v1279 = vadd.f32 %v1117, %v1215
        %v1280 = vadd.f32 %v1118, %v1216
        %v1281 = vadd.f32 %v1119, %v1217
        %v1282 = vadd.f32 %v1120, %v1218
        %v1283 = vadd.f32 %v1121, %v1219
        %v1284 = vadd.f32 %v1122, %v1220
        %v1285 = vadd.f32 %v1123, %v1221
        %v1286 = vadd.f32 %v1124, %v1222
        %v1287 = vadd.f32 %v1125, %v1223
        %v1288 = vadd.f32 %v1126, %v1224
        %v1289 = vadd.f32 %v1127, %v1225
        %v1290 = vadd.f32 %v1128, %v1226
        %v1291 = vadd.f32 %v1129, %v1227
        %v1292 = vadd.f32 %v1130, %v1228
        %v1293 = vadd.f32 %v1131, %v1229
        %v1294 = vadd.f32 %v1132, %v1230
        %v1295 = vadd.f32 %v1133, %v1231
        %v1296 = vadd.f32 %v1134, %v1232
        %v1297 = vadd.f32 %v1135, %v1233
        %v1298 = vadd.f32 %v1136, %v1234
        %v1299 = vadd.f32 %v1137, %v1235
        %v1300 = vadd.f32 %v1138, %v1236
        %v1301 = vadd.f32 %v1139, %v1237
        %v1302 = vadd.f32 %v1140, %v1238
        %v1303 = vadd.f32 %v1141, %v1239
        %v1304 = vadd.f32 %v1142, %v1240
        %v1305 = vadd.f32 %v1143, %v1241
        %v1306 = vadd.f32 %v1144, %v1242
        %s1307 = sld [smem:[#allocation8 + $0x7]]
        %v1308 = vstv %s1307
        %v1309 = vmul.f32 %v269, %v1308
        %v1310 = vmul.f32 %v270, %v1308
        %v1311 = vmul.f32 %v271, %v1308
        %v1312 = vmul.f32 %v272, %v1308
        %v1313 = vmul.f32 %v273, %v1308
        %v1314 = vmul.f32 %v274, %v1308
        %v1315 = vmul.f32 %v275, %v1308
        %v1316 = vmul.f32 %v276, %v1308
        %v1317 = vmul.f32 %v277, %v1308
        %v1318 = vmul.f32 %v278, %v1308
        %v1319 = vmul.f32 %v279, %v1308
        %v1320 = vmul.f32 %v280, %v1308
        %v1321 = vmul.f32 %v281, %v1308
        %v1322 = vmul.f32 %v282, %v1308
        %v1323 = vmul.f32 %v283, %v1308
        %v1324 = vmul.f32 %v284, %v1308
        %v1325 = vmul.f32 %v285, %v1308
        %v1326 = vmul.f32 %v286, %v1308
        %v1327 = vmul.f32 %v287, %v1308
        %v1328 = vmul.f32 %v288, %v1308
        %v1329 = vmul.f32 %v289, %v1308
        %v1330 = vmul.f32 %v290, %v1308
        %v1331 = vmul.f32 %v291, %v1308
        %v1332 = vmul.f32 %v292, %v1308
        %v1333 = vmul.f32 %v293, %v1308
        %v1334 = vmul.f32 %v294, %v1308
        %v1335 = vmul.f32 %v295, %v1308
        %v1336 = vmul.f32 %v296, %v1308
        %v1337 = vmul.f32 %v297, %v1308
        %v1338 = vmul.f32 %v298, %v1308
        %v1339 = vmul.f32 %v299, %v1308
        %v1340 = vmul.f32 %v300, %v1308
        %v1373 = vrot.slane %v1309, 7
        %v1374 = vrot.slane %v1310, 7
        %v1375 = vrot.slane %v1311, 7
        %v1376 = vrot.slane %v1312, 7
        %v1377 = vrot.slane %v1313, 7
        %v1378 = vrot.slane %v1314, 7
        %v1379 = vrot.slane %v1315, 7
        %v1380 = vrot.slane %v1316, 7
        %v1381 = vrot.slane %v1317, 7
        %v1382 = vrot.slane %v1318, 7
        %v1383 = vrot.slane %v1319, 7
        %v1384 = vrot.slane %v1320, 7
        %v1385 = vrot.slane %v1321, 7
        %v1386 = vrot.slane %v1322, 7
        %v1387 = vrot.slane %v1323, 7
        %v1388 = vrot.slane %v1324, 7
        %v1389 = vrot.slane %v1325, 7
        %v1390 = vrot.slane %v1326, 7
        %v1391 = vrot.slane %v1327, 7
        %v1392 = vrot.slane %v1328, 7
        %v1393 = vrot.slane %v1329, 7
        %v1394 = vrot.slane %v1330, 7
        %v1395 = vrot.slane %v1331, 7
        %v1396 = vrot.slane %v1332, 7
        %v1397 = vrot.slane %v1333, 7
        %v1398 = vrot.slane %v1334, 7
        %v1399 = vrot.slane %v1335, 7
        %v1400 = vrot.slane %v1336, 7
        %v1401 = vrot.slane %v1337, 7
        %v1402 = vrot.slane %v1338, 7
        %v1403 = vrot.slane %v1339, 7
        %v1404 = vrot.slane %v1340, 7
        %v1437 = vadd.f32 %v1275, %v1373
        %v1438 = vadd.f32 %v1276, %v1374
        %v1439 = vadd.f32 %v1277, %v1375
        %v1440 = vadd.f32 %v1278, %v1376
        %v1441 = vadd.f32 %v1279, %v1377
        %v1442 = vadd.f32 %v1280, %v1378
        %v1443 = vadd.f32 %v1281, %v1379
        %v1444 = vadd.f32 %v1282, %v1380
        %v1445 = vadd.f32 %v1283, %v1381
        %v1446 = vadd.f32 %v1284, %v1382
        %v1447 = vadd.f32 %v1285, %v1383
        %v1448 = vadd.f32 %v1286, %v1384
        %v1449 = vadd.f32 %v1287, %v1385
        %v1450 = vadd.f32 %v1288, %v1386
        %v1451 = vadd.f32 %v1289, %v1387
        %v1452 = vadd.f32 %v1290, %v1388
        %v1453 = vadd.f32 %v1291, %v1389
        %v1454 = vadd.f32 %v1292, %v1390
        %v1455 = vadd.f32 %v1293, %v1391
        %v1456 = vadd.f32 %v1294, %v1392
        %v1457 = vadd.f32 %v1295, %v1393
        %v1458 = vadd.f32 %v1296, %v1394
        %v1459 = vadd.f32 %v1297, %v1395
        %v1460 = vadd.f32 %v1298, %v1396
        %v1461 = vadd.f32 %v1299, %v1397
        %v1462 = vadd.f32 %v1300, %v1398
        %v1463 = vadd.f32 %v1301, %v1399
        %v1464 = vadd.f32 %v1302, %v1400
        %v1465 = vadd.f32 %v1303, %v1401
        %v1466 = vadd.f32 %v1304, %v1402
        %v1467 = vadd.f32 %v1305, %v1403
        %v1468 = vadd.f32 %v1306, %v1404
        %s1469 = sld [smem:[#allocation8 + $0x8]]
        %v1470 = vstv %s1469
        %v1471 = vmul.f32 %v269, %v1470
        %v1472 = vmul.f32 %v270, %v1470
        %v1473 = vmul.f32 %v271, %v1470
        %v1474 = vmul.f32 %v272, %v1470
        %v1475 = vmul.f32 %v273, %v1470
        %v1476 = vmul.f32 %v274, %v1470
        %v1477 = vmul.f32 %v275, %v1470
        %v1478 = vmul.f32 %v276, %v1470
        %v1479 = vmul.f32 %v277, %v1470
        %v1480 = vmul.f32 %v278, %v1470
        %v1481 = vmul.f32 %v279, %v1470
        %v1482 = vmul.f32 %v280, %v1470
        %v1483 = vmul.f32 %v281, %v1470
        %v1484 = vmul.f32 %v282, %v1470
        %v1485 = vmul.f32 %v283, %v1470
        %v1486 = vmul.f32 %v284, %v1470
        %v1487 = vmul.f32 %v285, %v1470
        %v1488 = vmul.f32 %v286, %v1470
        %v1489 = vmul.f32 %v287, %v1470
        %v1490 = vmul.f32 %v288, %v1470
        %v1491 = vmul.f32 %v289, %v1470
        %v1492 = vmul.f32 %v290, %v1470
        %v1493 = vmul.f32 %v291, %v1470
        %v1494 = vmul.f32 %v292, %v1470
        %v1495 = vmul.f32 %v293, %v1470
        %v1496 = vmul.f32 %v294, %v1470
        %v1497 = vmul.f32 %v295, %v1470
        %v1498 = vmul.f32 %v296, %v1470
        %v1499 = vmul.f32 %v297, %v1470
        %v1500 = vmul.f32 %v298, %v1470
        %v1501 = vmul.f32 %v299, %v1470
        %v1502 = vmul.f32 %v300, %v1470
        %s1503 = sld [smem:[#allocation8 + $0x9]]
        %v1504 = vstv %s1503
        %v1505 = vmul.f32 %v269, %v1504
        %v1506 = vmul.f32 %v270, %v1504
        %v1507 = vmul.f32 %v271, %v1504
        %v1508 = vmul.f32 %v272, %v1504
        %v1509 = vmul.f32 %v273, %v1504
        %v1510 = vmul.f32 %v274, %v1504
        %v1511 = vmul.f32 %v275, %v1504
        %v1512 = vmul.f32 %v276, %v1504
        %v1513 = vmul.f32 %v277, %v1504
        %v1514 = vmul.f32 %v278, %v1504
        %v1515 = vmul.f32 %v279, %v1504
        %v1516 = vmul.f32 %v280, %v1504
        %v1517 = vmul.f32 %v281, %v1504
        %v1518 = vmul.f32 %v282, %v1504
        %v1519 = vmul.f32 %v283, %v1504
        %v1520 = vmul.f32 %v284, %v1504
        %v1521 = vmul.f32 %v285, %v1504
        %v1522 = vmul.f32 %v286, %v1504
        %v1523 = vmul.f32 %v287, %v1504
        %v1524 = vmul.f32 %v288, %v1504
        %v1525 = vmul.f32 %v289, %v1504
        %v1526 = vmul.f32 %v290, %v1504
        %v1527 = vmul.f32 %v291, %v1504
        %v1528 = vmul.f32 %v292, %v1504
        %v1529 = vmul.f32 %v293, %v1504
        %v1530 = vmul.f32 %v294, %v1504
        %v1531 = vmul.f32 %v295, %v1504
        %v1532 = vmul.f32 %v296, %v1504
        %v1533 = vmul.f32 %v297, %v1504
        %v1534 = vmul.f32 %v298, %v1504
        %v1535 = vmul.f32 %v299, %v1504
        %v1536 = vmul.f32 %v300, %v1504
        %v1569 = vrot.slane %v1505, 1
        %v1570 = vrot.slane %v1506, 1
        %v1571 = vrot.slane %v1507, 1
        %v1572 = vrot.slane %v1508, 1
        %v1573 = vrot.slane %v1509, 1
        %v1574 = vrot.slane %v1510, 1
        %v1575 = vrot.slane %v1511, 1
        %v1576 = vrot.slane %v1512, 1
        %v1577 = vrot.slane %v1513, 1
        %v1578 = vrot.slane %v1514, 1
        %v1579 = vrot.slane %v1515, 1
        %v1580 = vrot.slane %v1516, 1
        %v1581 = vrot.slane %v1517, 1
        %v1582 = vrot.slane %v1518, 1
        %v1583 = vrot.slane %v1519, 1
        %v1584 = vrot.slane %v1520, 1
        %v1585 = vrot.slane %v1521, 1
        %v1586 = vrot.slane %v1522, 1
        %v1587 = vrot.slane %v1523, 1
        %v1588 = vrot.slane %v1524, 1
        %v1589 = vrot.slane %v1525, 1
        %v1590 = vrot.slane %v1526, 1
        %v1591 = vrot.slane %v1527, 1
        %v1592 = vrot.slane %v1528, 1
        %v1593 = vrot.slane %v1529, 1
        %v1594 = vrot.slane %v1530, 1
        %v1595 = vrot.slane %v1531, 1
        %v1596 = vrot.slane %v1532, 1
        %v1597 = vrot.slane %v1533, 1
        %v1598 = vrot.slane %v1534, 1
        %v1599 = vrot.slane %v1535, 1
        %v1600 = vrot.slane %v1536, 1
        %v1633 = vadd.f32 %v1471, %v1569
        %v1634 = vadd.f32 %v1472, %v1570
        %v1635 = vadd.f32 %v1473, %v1571
        %v1636 = vadd.f32 %v1474, %v1572
        %v1637 = vadd.f32 %v1475, %v1573
        %v1638 = vadd.f32 %v1476, %v1574
        %v1639 = vadd.f32 %v1477, %v1575
        %v1640 = vadd.f32 %v1478, %v1576
        %v1641 = vadd.f32 %v1479, %v1577
        %v1642 = vadd.f32 %v1480, %v1578
        %v1643 = vadd.f32 %v1481, %v1579
        %v1644 = vadd.f32 %v1482, %v1580
        %v1645 = vadd.f32 %v1483, %v1581
        %v1646 = vadd.f32 %v1484, %v1582
        %v1647 = vadd.f32 %v1485, %v1583
        %v1648 = vadd.f32 %v1486, %v1584
        %v1649 = vadd.f32 %v1487, %v1585
        %v1650 = vadd.f32 %v1488, %v1586
        %v1651 = vadd.f32 %v1489, %v1587
        %v1652 = vadd.f32 %v1490, %v1588
        %v1653 = vadd.f32 %v1491, %v1589
        %v1654 = vadd.f32 %v1492, %v1590
        %v1655 = vadd.f32 %v1493, %v1591
        %v1656 = vadd.f32 %v1494, %v1592
        %v1657 = vadd.f32 %v1495, %v1593
        %v1658 = vadd.f32 %v1496, %v1594
        %v1659 = vadd.f32 %v1497, %v1595
        %v1660 = vadd.f32 %v1498, %v1596
        %v1661 = vadd.f32 %v1499, %v1597
        %v1662 = vadd.f32 %v1500, %v1598
        %v1663 = vadd.f32 %v1501, %v1599
        %v1664 = vadd.f32 %v1502, %v1600
        %s1665 = sld [smem:[#allocation8 + $0xa]]
        %v1666 = vstv %s1665
        %v1667 = vmul.f32 %v269, %v1666
        %v1668 = vmul.f32 %v270, %v1666
        %v1669 = vmul.f32 %v271, %v1666
        %v1670 = vmul.f32 %v272, %v1666
        %v1671 = vmul.f32 %v273, %v1666
        %v1672 = vmul.f32 %v274, %v1666
        %v1673 = vmul.f32 %v275, %v1666
        %v1674 = vmul.f32 %v276, %v1666
        %v1675 = vmul.f32 %v277, %v1666
        %v1676 = vmul.f32 %v278, %v1666
        %v1677 = vmul.f32 %v279, %v1666
        %v1678 = vmul.f32 %v280, %v1666
        %v1679 = vmul.f32 %v281, %v1666
        %v1680 = vmul.f32 %v282, %v1666
        %v1681 = vmul.f32 %v283, %v1666
        %v1682 = vmul.f32 %v284, %v1666
        %v1683 = vmul.f32 %v285, %v1666
        %v1684 = vmul.f32 %v286, %v1666
        %v1685 = vmul.f32 %v287, %v1666
        %v1686 = vmul.f32 %v288, %v1666
        %v1687 = vmul.f32 %v289, %v1666
        %v1688 = vmul.f32 %v290, %v1666
        %v1689 = vmul.f32 %v291, %v1666
        %v1690 = vmul.f32 %v292, %v1666
        %v1691 = vmul.f32 %v293, %v1666
        %v1692 = vmul.f32 %v294, %v1666
        %v1693 = vmul.f32 %v295, %v1666
        %v1694 = vmul.f32 %v296, %v1666
        %v1695 = vmul.f32 %v297, %v1666
        %v1696 = vmul.f32 %v298, %v1666
        %v1697 = vmul.f32 %v299, %v1666
        %v1698 = vmul.f32 %v300, %v1666
        %v1731 = vrot.slane %v1667, 2
        %v1732 = vrot.slane %v1668, 2
        %v1733 = vrot.slane %v1669, 2
        %v1734 = vrot.slane %v1670, 2
        %v1735 = vrot.slane %v1671, 2
        %v1736 = vrot.slane %v1672, 2
        %v1737 = vrot.slane %v1673, 2
        %v1738 = vrot.slane %v1674, 2
        %v1739 = vrot.slane %v1675, 2
        %v1740 = vrot.slane %v1676, 2
        %v1741 = vrot.slane %v1677, 2
        %v1742 = vrot.slane %v1678, 2
        %v1743 = vrot.slane %v1679, 2
        %v1744 = vrot.slane %v1680, 2
        %v1745 = vrot.slane %v1681, 2
        %v1746 = vrot.slane %v1682, 2
        %v1747 = vrot.slane %v1683, 2
        %v1748 = vrot.slane %v1684, 2
        %v1749 = vrot.slane %v1685, 2
        %v1750 = vrot.slane %v1686, 2
        %v1751 = vrot.slane %v1687, 2
        %v1752 = vrot.slane %v1688, 2
        %v1753 = vrot.slane %v1689, 2
        %v1754 = vrot.slane %v1690, 2
        %v1755 = vrot.slane %v1691, 2
        %v1756 = vrot.slane %v1692, 2
        %v1757 = vrot.slane %v1693, 2
        %v1758 = vrot.slane %v1694, 2
        %v1759 = vrot.slane %v1695, 2
        %v1760 = vrot.slane %v1696, 2
        %v1761 = vrot.slane %v1697, 2
        %v1762 = vrot.slane %v1698, 2
        %v1795 = vadd.f32 %v1633, %v1731
        %v1796 = vadd.f32 %v1634, %v1732
        %v1797 = vadd.f32 %v1635, %v1733
        %v1798 = vadd.f32 %v1636, %v1734
        %v1799 = vadd.f32 %v1637, %v1735
        %v1800 = vadd.f32 %v1638, %v1736
        %v1801 = vadd.f32 %v1639, %v1737
        %v1802 = vadd.f32 %v1640, %v1738
        %v1803 = vadd.f32 %v1641, %v1739
        %v1804 = vadd.f32 %v1642, %v1740
        %v1805 = vadd.f32 %v1643, %v1741
        %v1806 = vadd.f32 %v1644, %v1742
        %v1807 = vadd.f32 %v1645, %v1743
        %v1808 = vadd.f32 %v1646, %v1744
        %v1809 = vadd.f32 %v1647, %v1745
        %v1810 = vadd.f32 %v1648, %v1746
        %v1811 = vadd.f32 %v1649, %v1747
        %v1812 = vadd.f32 %v1650, %v1748
        %v1813 = vadd.f32 %v1651, %v1749
        %v1814 = vadd.f32 %v1652, %v1750
        %v1815 = vadd.f32 %v1653, %v1751
        %v1816 = vadd.f32 %v1654, %v1752
        %v1817 = vadd.f32 %v1655, %v1753
        %v1818 = vadd.f32 %v1656, %v1754
        %v1819 = vadd.f32 %v1657, %v1755
        %v1820 = vadd.f32 %v1658, %v1756
        %v1821 = vadd.f32 %v1659, %v1757
        %v1822 = vadd.f32 %v1660, %v1758
        %v1823 = vadd.f32 %v1661, %v1759
        %v1824 = vadd.f32 %v1662, %v1760
        %v1825 = vadd.f32 %v1663, %v1761
        %v1826 = vadd.f32 %v1664, %v1762
        %s1827 = sld [smem:[#allocation8 + $0xb]]
        %v1828 = vstv %s1827
        %v1829 = vmul.f32 %v269, %v1828
        %v1830 = vmul.f32 %v270, %v1828
        %v1831 = vmul.f32 %v271, %v1828
        %v1832 = vmul.f32 %v272, %v1828
        %v1833 = vmul.f32 %v273, %v1828
        %v1834 = vmul.f32 %v274, %v1828
        %v1835 = vmul.f32 %v275, %v1828
        %v1836 = vmul.f32 %v276, %v1828
        %v1837 = vmul.f32 %v277, %v1828
        %v1838 = vmul.f32 %v278, %v1828
        %v1839 = vmul.f32 %v279, %v1828
        %v1840 = vmul.f32 %v280, %v1828
        %v1841 = vmul.f32 %v281, %v1828
        %v1842 = vmul.f32 %v282, %v1828
        %v1843 = vmul.f32 %v283, %v1828
        %v1844 = vmul.f32 %v284, %v1828
        %v1845 = vmul.f32 %v285, %v1828
        %v1846 = vmul.f32 %v286, %v1828
        %v1847 = vmul.f32 %v287, %v1828
        %v1848 = vmul.f32 %v288, %v1828
        %v1849 = vmul.f32 %v289, %v1828
        %v1850 = vmul.f32 %v290, %v1828
        %v1851 = vmul.f32 %v291, %v1828
        %v1852 = vmul.f32 %v292, %v1828
        %v1853 = vmul.f32 %v293, %v1828
        %v1854 = vmul.f32 %v294, %v1828
        %v1855 = vmul.f32 %v295, %v1828
        %v1856 = vmul.f32 %v296, %v1828
        %v1857 = vmul.f32 %v297, %v1828
        %v1858 = vmul.f32 %v298, %v1828
        %v1859 = vmul.f32 %v299, %v1828
        %v1860 = vmul.f32 %v300, %v1828
        %v1893 = vrot.slane %v1829, 3
        %v1894 = vrot.slane %v1830, 3
        %v1895 = vrot.slane %v1831, 3
        %v1896 = vrot.slane %v1832, 3
        %v1897 = vrot.slane %v1833, 3
        %v1898 = vrot.slane %v1834, 3
        %v1899 = vrot.slane %v1835, 3
        %v1900 = vrot.slane %v1836, 3
        %v1901 = vrot.slane %v1837, 3
        %v1902 = vrot.slane %v1838, 3
        %v1903 = vrot.slane %v1839, 3
        %v1904 = vrot.slane %v1840, 3
        %v1905 = vrot.slane %v1841, 3
        %v1906 = vrot.slane %v1842, 3
        %v1907 = vrot.slane %v1843, 3
        %v1908 = vrot.slane %v1844, 3
        %v1909 = vrot.slane %v1845, 3
        %v1910 = vrot.slane %v1846, 3
        %v1911 = vrot.slane %v1847, 3
        %v1912 = vrot.slane %v1848, 3
        %v1913 = vrot.slane %v1849, 3
        %v1914 = vrot.slane %v1850, 3
        %v1915 = vrot.slane %v1851, 3
        %v1916 = vrot.slane %v1852, 3
        %v1917 = vrot.slane %v1853, 3
        %v1918 = vrot.slane %v1854, 3
        %v1919 = vrot.slane %v1855, 3
        %v1920 = vrot.slane %v1856, 3
        %v1921 = vrot.slane %v1857, 3
        %v1922 = vrot.slane %v1858, 3
        %v1923 = vrot.slane %v1859, 3
        %v1924 = vrot.slane %v1860, 3
        %v1957 = vadd.f32 %v1795, %v1893
        %v1958 = vadd.f32 %v1796, %v1894
        %v1959 = vadd.f32 %v1797, %v1895
        %v1960 = vadd.f32 %v1798, %v1896
        %v1961 = vadd.f32 %v1799, %v1897
        %v1962 = vadd.f32 %v1800, %v1898
        %v1963 = vadd.f32 %v1801, %v1899
        %v1964 = vadd.f32 %v1802, %v1900
        %v1965 = vadd.f32 %v1803, %v1901
        %v1966 = vadd.f32 %v1804, %v1902
        %v1967 = vadd.f32 %v1805, %v1903
        %v1968 = vadd.f32 %v1806, %v1904
        %v1969 = vadd.f32 %v1807, %v1905
        %v1970 = vadd.f32 %v1808, %v1906
        %v1971 = vadd.f32 %v1809, %v1907
        %v1972 = vadd.f32 %v1810, %v1908
        %v1973 = vadd.f32 %v1811, %v1909
        %v1974 = vadd.f32 %v1812, %v1910
        %v1975 = vadd.f32 %v1813, %v1911
        %v1976 = vadd.f32 %v1814, %v1912
        %v1977 = vadd.f32 %v1815, %v1913
        %v1978 = vadd.f32 %v1816, %v1914
        %v1979 = vadd.f32 %v1817, %v1915
        %v1980 = vadd.f32 %v1818, %v1916
        %v1981 = vadd.f32 %v1819, %v1917
        %v1982 = vadd.f32 %v1820, %v1918
        %v1983 = vadd.f32 %v1821, %v1919
        %v1984 = vadd.f32 %v1822, %v1920
        %v1985 = vadd.f32 %v1823, %v1921
        %v1986 = vadd.f32 %v1824, %v1922
        %v1987 = vadd.f32 %v1825, %v1923
        %v1988 = vadd.f32 %v1826, %v1924
        %s1989 = sld [smem:[#allocation8 + $0xc]]
        %v1990 = vstv %s1989
        %v1991 = vmul.f32 %v269, %v1990
        %v1992 = vmul.f32 %v270, %v1990
        %v1993 = vmul.f32 %v271, %v1990
        %v1994 = vmul.f32 %v272, %v1990
        %v1995 = vmul.f32 %v273, %v1990
        %v1996 = vmul.f32 %v274, %v1990
        %v1997 = vmul.f32 %v275, %v1990
        %v1998 = vmul.f32 %v276, %v1990
        %v1999 = vmul.f32 %v277, %v1990
        %v2000 = vmul.f32 %v278, %v1990
        %v2001 = vmul.f32 %v279, %v1990
        %v2002 = vmul.f32 %v280, %v1990
        %v2003 = vmul.f32 %v281, %v1990
        %v2004 = vmul.f32 %v282, %v1990
        %v2005 = vmul.f32 %v283, %v1990
        %v2006 = vmul.f32 %v284, %v1990
        %v2007 = vmul.f32 %v285, %v1990
        %v2008 = vmul.f32 %v286, %v1990
        %v2009 = vmul.f32 %v287, %v1990
        %v2010 = vmul.f32 %v288, %v1990
        %v2011 = vmul.f32 %v289, %v1990
        %v2012 = vmul.f32 %v290, %v1990
        %v2013 = vmul.f32 %v291, %v1990
        %v2014 = vmul.f32 %v292, %v1990
        %v2015 = vmul.f32 %v293, %v1990
        %v2016 = vmul.f32 %v294, %v1990
        %v2017 = vmul.f32 %v295, %v1990
        %v2018 = vmul.f32 %v296, %v1990
        %v2019 = vmul.f32 %v297, %v1990
        %v2020 = vmul.f32 %v298, %v1990
        %v2021 = vmul.f32 %v299, %v1990
        %v2022 = vmul.f32 %v300, %v1990
        %v2055 = vrot.slane %v1991, 4
        %v2056 = vrot.slane %v1992, 4
        %v2057 = vrot.slane %v1993, 4
        %v2058 = vrot.slane %v1994, 4
        %v2059 = vrot.slane %v1995, 4
        %v2060 = vrot.slane %v1996, 4
        %v2061 = vrot.slane %v1997, 4
        %v2062 = vrot.slane %v1998, 4
        %v2063 = vrot.slane %v1999, 4
        %v2064 = vrot.slane %v2000, 4
        %v2065 = vrot.slane %v2001, 4
        %v2066 = vrot.slane %v2002, 4
        %v2067 = vrot.slane %v2003, 4
        %v2068 = vrot.slane %v2004, 4
        %v2069 = vrot.slane %v2005, 4
        %v2070 = vrot.slane %v2006, 4
        %v2071 = vrot.slane %v2007, 4
        %v2072 = vrot.slane %v2008, 4
        %v2073 = vrot.slane %v2009, 4
        %v2074 = vrot.slane %v2010, 4
        %v2075 = vrot.slane %v2011, 4
        %v2076 = vrot.slane %v2012, 4
        %v2077 = vrot.slane %v2013, 4
        %v2078 = vrot.slane %v2014, 4
        %v2079 = vrot.slane %v2015, 4
        %v2080 = vrot.slane %v2016, 4
        %v2081 = vrot.slane %v2017, 4
        %v2082 = vrot.slane %v2018, 4
        %v2083 = vrot.slane %v2019, 4
        %v2084 = vrot.slane %v2020, 4
        %v2085 = vrot.slane %v2021, 4
        %v2086 = vrot.slane %v2022, 4
        %v2119 = vadd.f32 %v1957, %v2055
        %v2120 = vadd.f32 %v1958, %v2056
        %v2121 = vadd.f32 %v1959, %v2057
        %v2122 = vadd.f32 %v1960, %v2058
        %v2123 = vadd.f32 %v1961, %v2059
        %v2124 = vadd.f32 %v1962, %v2060
        %v2125 = vadd.f32 %v1963, %v2061
        %v2126 = vadd.f32 %v1964, %v2062
        %v2127 = vadd.f32 %v1965, %v2063
        %v2128 = vadd.f32 %v1966, %v2064
        %v2129 = vadd.f32 %v1967, %v2065
        %v2130 = vadd.f32 %v1968, %v2066
        %v2131 = vadd.f32 %v1969, %v2067
        %v2132 = vadd.f32 %v1970, %v2068
        %v2133 = vadd.f32 %v1971, %v2069
        %v2134 = vadd.f32 %v1972, %v2070
        %v2135 = vadd.f32 %v1973, %v2071
        %v2136 = vadd.f32 %v1974, %v2072
        %v2137 = vadd.f32 %v1975, %v2073
        %v2138 = vadd.f32 %v1976, %v2074
        %v2139 = vadd.f32 %v1977, %v2075
        %v2140 = vadd.f32 %v1978, %v2076
        %v2141 = vadd.f32 %v1979, %v2077
        %v2142 = vadd.f32 %v1980, %v2078
        %v2143 = vadd.f32 %v1981, %v2079
        %v2144 = vadd.f32 %v1982, %v2080
        %v2145 = vadd.f32 %v1983, %v2081
        %v2146 = vadd.f32 %v1984, %v2082
        %v2147 = vadd.f32 %v1985, %v2083
        %v2148 = vadd.f32 %v1986, %v2084
        %v2149 = vadd.f32 %v1987, %v2085
        %v2150 = vadd.f32 %v1988, %v2086
        %s2151 = sld [smem:[#allocation8 + $0xd]]
        %v2152 = vstv %s2151
        %v2153 = vmul.f32 %v269, %v2152
        %v2154 = vmul.f32 %v270, %v2152
        %v2155 = vmul.f32 %v271, %v2152
        %v2156 = vmul.f32 %v272, %v2152
        %v2157 = vmul.f32 %v273, %v2152
        %v2158 = vmul.f32 %v274, %v2152
        %v2159 = vmul.f32 %v275, %v2152
        %v2160 = vmul.f32 %v276, %v2152
        %v2161 = vmul.f32 %v277, %v2152
        %v2162 = vmul.f32 %v278, %v2152
        %v2163 = vmul.f32 %v279, %v2152
        %v2164 = vmul.f32 %v280, %v2152
        %v2165 = vmul.f32 %v281, %v2152
        %v2166 = vmul.f32 %v282, %v2152
        %v2167 = vmul.f32 %v283, %v2152
        %v2168 = vmul.f32 %v284, %v2152
        %v2169 = vmul.f32 %v285, %v2152
        %v2170 = vmul.f32 %v286, %v2152
        %v2171 = vmul.f32 %v287, %v2152
        %v2172 = vmul.f32 %v288, %v2152
        %v2173 = vmul.f32 %v289, %v2152
        %v2174 = vmul.f32 %v290, %v2152
        %v2175 = vmul.f32 %v291, %v2152
        %v2176 = vmul.f32 %v292, %v2152
        %v2177 = vmul.f32 %v293, %v2152
        %v2178 = vmul.f32 %v294, %v2152
        %v2179 = vmul.f32 %v295, %v2152
        %v2180 = vmul.f32 %v296, %v2152
        %v2181 = vmul.f32 %v297, %v2152
        %v2182 = vmul.f32 %v298, %v2152
        %v2183 = vmul.f32 %v299, %v2152
        %v2184 = vmul.f32 %v300, %v2152
        %v2217 = vrot.slane %v2153, 5
        %v2218 = vrot.slane %v2154, 5
        %v2219 = vrot.slane %v2155, 5
        %v2220 = vrot.slane %v2156, 5
        %v2221 = vrot.slane %v2157, 5
        %v2222 = vrot.slane %v2158, 5
        %v2223 = vrot.slane %v2159, 5
        %v2224 = vrot.slane %v2160, 5
        %v2225 = vrot.slane %v2161, 5
        %v2226 = vrot.slane %v2162, 5
        %v2227 = vrot.slane %v2163, 5
        %v2228 = vrot.slane %v2164, 5
        %v2229 = vrot.slane %v2165, 5
        %v2230 = vrot.slane %v2166, 5
        %v2231 = vrot.slane %v2167, 5
        %v2232 = vrot.slane %v2168, 5
        %v2233 = vrot.slane %v2169, 5
        %v2234 = vrot.slane %v2170, 5
        %v2235 = vrot.slane %v2171, 5
        %v2236 = vrot.slane %v2172, 5
        %v2237 = vrot.slane %v2173, 5
        %v2238 = vrot.slane %v2174, 5
        %v2239 = vrot.slane %v2175, 5
        %v2240 = vrot.slane %v2176, 5
        %v2241 = vrot.slane %v2177, 5
        %v2242 = vrot.slane %v2178, 5
        %v2243 = vrot.slane %v2179, 5
        %v2244 = vrot.slane %v2180, 5
        %v2245 = vrot.slane %v2181, 5
        %v2246 = vrot.slane %v2182, 5
        %v2247 = vrot.slane %v2183, 5
        %v2248 = vrot.slane %v2184, 5
        %v2281 = vadd.f32 %v2119, %v2217
        %v2282 = vadd.f32 %v2120, %v2218
        %v2283 = vadd.f32 %v2121, %v2219
        %v2284 = vadd.f32 %v2122, %v2220
        %v2285 = vadd.f32 %v2123, %v2221
        %v2286 = vadd.f32 %v2124, %v2222
        %v2287 = vadd.f32 %v2125, %v2223
        %v2288 = vadd.f32 %v2126, %v2224
        %v2289 = vadd.f32 %v2127, %v2225
        %v2290 = vadd.f32 %v2128, %v2226
        %v2291 = vadd.f32 %v2129, %v2227
        %v2292 = vadd.f32 %v2130, %v2228
        %v2293 = vadd.f32 %v2131, %v2229
        %v2294 = vadd.f32 %v2132, %v2230
        %v2295 = vadd.f32 %v2133, %v2231
        %v2296 = vadd.f32 %v2134, %v2232
        %v2297 = vadd.f32 %v2135, %v2233
        %v2298 = vadd.f32 %v2136, %v2234
        %v2299 = vadd.f32 %v2137, %v2235
        %v2300 = vadd.f32 %v2138, %v2236
        %v2301 = vadd.f32 %v2139, %v2237
        %v2302 = vadd.f32 %v2140, %v2238
        %v2303 = vadd.f32 %v2141, %v2239
        %v2304 = vadd.f32 %v2142, %v2240
        %v2305 = vadd.f32 %v2143, %v2241
        %v2306 = vadd.f32 %v2144, %v2242
        %v2307 = vadd.f32 %v2145, %v2243
        %v2308 = vadd.f32 %v2146, %v2244
        %v2309 = vadd.f32 %v2147, %v2245
        %v2310 = vadd.f32 %v2148, %v2246
        %v2311 = vadd.f32 %v2149, %v2247
        %v2312 = vadd.f32 %v2150, %v2248
        %s2313 = sld [smem:[#allocation8 + $0xe]]
        %v2314 = vstv %s2313
        %v2315 = vmul.f32 %v269, %v2314
        %v2316 = vmul.f32 %v270, %v2314
        %v2317 = vmul.f32 %v271, %v2314
        %v2318 = vmul.f32 %v272, %v2314
        %v2319 = vmul.f32 %v273, %v2314
        %v2320 = vmul.f32 %v274, %v2314
        %v2321 = vmul.f32 %v275, %v2314
        %v2322 = vmul.f32 %v276, %v2314
        %v2323 = vmul.f32 %v277, %v2314
        %v2324 = vmul.f32 %v278, %v2314
        %v2325 = vmul.f32 %v279, %v2314
        %v2326 = vmul.f32 %v280, %v2314
        %v2327 = vmul.f32 %v281, %v2314
        %v2328 = vmul.f32 %v282, %v2314
        %v2329 = vmul.f32 %v283, %v2314
        %v2330 = vmul.f32 %v284, %v2314
        %v2331 = vmul.f32 %v285, %v2314
        %v2332 = vmul.f32 %v286, %v2314
        %v2333 = vmul.f32 %v287, %v2314
        %v2334 = vmul.f32 %v288, %v2314
        %v2335 = vmul.f32 %v289, %v2314
        %v2336 = vmul.f32 %v290, %v2314
        %v2337 = vmul.f32 %v291, %v2314
        %v2338 = vmul.f32 %v292, %v2314
        %v2339 = vmul.f32 %v293, %v2314
        %v2340 = vmul.f32 %v294, %v2314
        %v2341 = vmul.f32 %v295, %v2314
        %v2342 = vmul.f32 %v296, %v2314
        %v2343 = vmul.f32 %v297, %v2314
        %v2344 = vmul.f32 %v298, %v2314
        %v2345 = vmul.f32 %v299, %v2314
        %v2346 = vmul.f32 %v300, %v2314
        %v2379 = vrot.slane %v2315, 6
        %v2380 = vrot.slane %v2316, 6
        %v2381 = vrot.slane %v2317, 6
        %v2382 = vrot.slane %v2318, 6
        %v2383 = vrot.slane %v2319, 6
        %v2384 = vrot.slane %v2320, 6
        %v2385 = vrot.slane %v2321, 6
        %v2386 = vrot.slane %v2322, 6
        %v2387 = vrot.slane %v2323, 6
        %v2388 = vrot.slane %v2324, 6
        %v2389 = vrot.slane %v2325, 6
        %v2390 = vrot.slane %v2326, 6
        %v2391 = vrot.slane %v2327, 6
        %v2392 = vrot.slane %v2328, 6
        %v2393 = vrot.slane %v2329, 6
        %v2394 = vrot.slane %v2330, 6
        %v2395 = vrot.slane %v2331, 6
        %v2396 = vrot.slane %v2332, 6
        %v2397 = vrot.slane %v2333, 6
        %v2398 = vrot.slane %v2334, 6
        %v2399 = vrot.slane %v2335, 6
        %v2400 = vrot.slane %v2336, 6
        %v2401 = vrot.slane %v2337, 6
        %v2402 = vrot.slane %v2338, 6
        %v2403 = vrot.slane %v2339, 6
        %v2404 = vrot.slane %v2340, 6
        %v2405 = vrot.slane %v2341, 6
        %v2406 = vrot.slane %v2342, 6
        %v2407 = vrot.slane %v2343, 6
        %v2408 = vrot.slane %v2344, 6
        %v2409 = vrot.slane %v2345, 6
        %v2410 = vrot.slane %v2346, 6
        %v2443 = vadd.f32 %v2281, %v2379
        %v2444 = vadd.f32 %v2282, %v2380
        %v2445 = vadd.f32 %v2283, %v2381
        %v2446 = vadd.f32 %v2284, %v2382
        %v2447 = vadd.f32 %v2285, %v2383
        %v2448 = vadd.f32 %v2286, %v2384
        %v2449 = vadd.f32 %v2287, %v2385
        %v2450 = vadd.f32 %v2288, %v2386
        %v2451 = vadd.f32 %v2289, %v2387
        %v2452 = vadd.f32 %v2290, %v2388
        %v2453 = vadd.f32 %v2291, %v2389
        %v2454 = vadd.f32 %v2292, %v2390
        %v2455 = vadd.f32 %v2293, %v2391
        %v2456 = vadd.f32 %v2294, %v2392
        %v2457 = vadd.f32 %v2295, %v2393
        %v2458 = vadd.f32 %v2296, %v2394
        %v2459 = vadd.f32 %v2297, %v2395
        %v2460 = vadd.f32 %v2298, %v2396
        %v2461 = vadd.f32 %v2299, %v2397
        %v2462 = vadd.f32 %v2300, %v2398
        %v2463 = vadd.f32 %v2301, %v2399
        %v2464 = vadd.f32 %v2302, %v2400
        %v2465 = vadd.f32 %v2303, %v2401
        %v2466 = vadd.f32 %v2304, %v2402
        %v2467 = vadd.f32 %v2305, %v2403
        %v2468 = vadd.f32 %v2306, %v2404
        %v2469 = vadd.f32 %v2307, %v2405
        %v2470 = vadd.f32 %v2308, %v2406
        %v2471 = vadd.f32 %v2309, %v2407
        %v2472 = vadd.f32 %v2310, %v2408
        %v2473 = vadd.f32 %v2311, %v2409
        %v2474 = vadd.f32 %v2312, %v2410
        %s2475 = sld [smem:[#allocation8 + $0xf]]
        %v2476 = vstv %s2475
        %v2477 = vmul.f32 %v269, %v2476
        %v2478 = vmul.f32 %v270, %v2476
        %v2479 = vmul.f32 %v271, %v2476
        %v2480 = vmul.f32 %v272, %v2476
        %v2481 = vmul.f32 %v273, %v2476
        %v2482 = vmul.f32 %v274, %v2476
        %v2483 = vmul.f32 %v275, %v2476
        %v2484 = vmul.f32 %v276, %v2476
        %v2485 = vmul.f32 %v277, %v2476
        %v2486 = vmul.f32 %v278, %v2476
        %v2487 = vmul.f32 %v279, %v2476
        %v2488 = vmul.f32 %v280, %v2476
        %v2489 = vmul.f32 %v281, %v2476
        %v2490 = vmul.f32 %v282, %v2476
        %v2491 = vmul.f32 %v283, %v2476
        %v2492 = vmul.f32 %v284, %v2476
        %v2493 = vmul.f32 %v285, %v2476
        %v2494 = vmul.f32 %v286, %v2476
        %v2495 = vmul.f32 %v287, %v2476
        %v2496 = vmul.f32 %v288, %v2476
        %v2497 = vmul.f32 %v289, %v2476
        %v2498 = vmul.f32 %v290, %v2476
        %v2499 = vmul.f32 %v291, %v2476
        %v2500 = vmul.f32 %v292, %v2476
        %v2501 = vmul.f32 %v293, %v2476
        %v2502 = vmul.f32 %v294, %v2476
        %v2503 = vmul.f32 %v295, %v2476
        %v2504 = vmul.f32 %v296, %v2476
        %v2505 = vmul.f32 %v297, %v2476
        %v2506 = vmul.f32 %v298, %v2476
        %v2507 = vmul.f32 %v299, %v2476
        %v2508 = vmul.f32 %v300, %v2476
        %v2541 = vrot.slane %v2477, 7
        %v2542 = vrot.slane %v2478, 7
        %v2543 = vrot.slane %v2479, 7
        %v2544 = vrot.slane %v2480, 7
        %v2545 = vrot.slane %v2481, 7
        %v2546 = vrot.slane %v2482, 7
        %v2547 = vrot.slane %v2483, 7
        %v2548 = vrot.slane %v2484, 7
        %v2549 = vrot.slane %v2485, 7
        %v2550 = vrot.slane %v2486, 7
        %v2551 = vrot.slane %v2487, 7
        %v2552 = vrot.slane %v2488, 7
        %v2553 = vrot.slane %v2489, 7
        %v2554 = vrot.slane %v2490, 7
        %v2555 = vrot.slane %v2491, 7
        %v2556 = vrot.slane %v2492, 7
        %v2557 = vrot.slane %v2493, 7
        %v2558 = vrot.slane %v2494, 7
        %v2559 = vrot.slane %v2495, 7
        %v2560 = vrot.slane %v2496, 7
        %v2561 = vrot.slane %v2497, 7
        %v2562 = vrot.slane %v2498, 7
        %v2563 = vrot.slane %v2499, 7
        %v2564 = vrot.slane %v2500, 7
        %v2565 = vrot.slane %v2501, 7
        %v2566 = vrot.slane %v2502, 7
        %v2567 = vrot.slane %v2503, 7
        %v2568 = vrot.slane %v2504, 7
        %v2569 = vrot.slane %v2505, 7
        %v2570 = vrot.slane %v2506, 7
        %v2571 = vrot.slane %v2507, 7
        %v2572 = vrot.slane %v2508, 7
        %v2605 = vadd.f32 %v2443, %v2541
        %v2606 = vadd.f32 %v2444, %v2542
        %v2607 = vadd.f32 %v2445, %v2543
        %v2608 = vadd.f32 %v2446, %v2544
        %v2609 = vadd.f32 %v2447, %v2545
        %v2610 = vadd.f32 %v2448, %v2546
        %v2611 = vadd.f32 %v2449, %v2547
        %v2612 = vadd.f32 %v2450, %v2548
        %v2613 = vadd.f32 %v2451, %v2549
        %v2614 = vadd.f32 %v2452, %v2550
        %v2615 = vadd.f32 %v2453, %v2551
        %v2616 = vadd.f32 %v2454, %v2552
        %v2617 = vadd.f32 %v2455, %v2553
        %v2618 = vadd.f32 %v2456, %v2554
        %v2619 = vadd.f32 %v2457, %v2555
        %v2620 = vadd.f32 %v2458, %v2556
        %v2621 = vadd.f32 %v2459, %v2557
        %v2622 = vadd.f32 %v2460, %v2558
        %v2623 = vadd.f32 %v2461, %v2559
        %v2624 = vadd.f32 %v2462, %v2560
        %v2625 = vadd.f32 %v2463, %v2561
        %v2626 = vadd.f32 %v2464, %v2562
        %v2627 = vadd.f32 %v2465, %v2563
        %v2628 = vadd.f32 %v2466, %v2564
        %v2629 = vadd.f32 %v2467, %v2565
        %v2630 = vadd.f32 %v2468, %v2566
        %v2631 = vadd.f32 %v2469, %v2567
        %v2632 = vadd.f32 %v2470, %v2568
        %v2633 = vadd.f32 %v2471, %v2569
        %v2634 = vadd.f32 %v2472, %v2570
        %v2635 = vadd.f32 %v2473, %v2571
        %v2636 = vadd.f32 %v2474, %v2572
        %s2637 = sld [smem:[#allocation8 + $0x10]]
        %v2638 = vstv %s2637
        %v2639 = vmul.f32 %v269, %v2638
        %v2640 = vmul.f32 %v270, %v2638
        %v2641 = vmul.f32 %v271, %v2638
        %v2642 = vmul.f32 %v272, %v2638
        %v2643 = vmul.f32 %v273, %v2638
        %v2644 = vmul.f32 %v274, %v2638
        %v2645 = vmul.f32 %v275, %v2638
        %v2646 = vmul.f32 %v276, %v2638
        %v2647 = vmul.f32 %v277, %v2638
        %v2648 = vmul.f32 %v278, %v2638
        %v2649 = vmul.f32 %v279, %v2638
        %v2650 = vmul.f32 %v280, %v2638
        %v2651 = vmul.f32 %v281, %v2638
        %v2652 = vmul.f32 %v282, %v2638
        %v2653 = vmul.f32 %v283, %v2638
        %v2654 = vmul.f32 %v284, %v2638
        %v2655 = vmul.f32 %v285, %v2638
        %v2656 = vmul.f32 %v286, %v2638
        %v2657 = vmul.f32 %v287, %v2638
        %v2658 = vmul.f32 %v288, %v2638
        %v2659 = vmul.f32 %v289, %v2638
        %v2660 = vmul.f32 %v290, %v2638
        %v2661 = vmul.f32 %v291, %v2638
        %v2662 = vmul.f32 %v292, %v2638
        %v2663 = vmul.f32 %v293, %v2638
        %v2664 = vmul.f32 %v294, %v2638
        %v2665 = vmul.f32 %v295, %v2638
        %v2666 = vmul.f32 %v296, %v2638
        %v2667 = vmul.f32 %v297, %v2638
        %v2668 = vmul.f32 %v298, %v2638
        %v2669 = vmul.f32 %v299, %v2638
        %v2670 = vmul.f32 %v300, %v2638
        %s2671 = sld [smem:[#allocation8 + $0x11]]
        %v2672 = vstv %s2671
        %v2673 = vmul.f32 %v269, %v2672
        %v2674 = vmul.f32 %v270, %v2672
        %v2675 = vmul.f32 %v271, %v2672
        %v2676 = vmul.f32 %v272, %v2672
        %v2677 = vmul.f32 %v273, %v2672
        %v2678 = vmul.f32 %v274, %v2672
        %v2679 = vmul.f32 %v275, %v2672
        %v2680 = vmul.f32 %v276, %v2672
        %v2681 = vmul.f32 %v277, %v2672
        %v2682 = vmul.f32 %v278, %v2672
        %v2683 = vmul.f32 %v279, %v2672
        %v2684 = vmul.f32 %v280, %v2672
        %v2685 = vmul.f32 %v281, %v2672
        %v2686 = vmul.f32 %v282, %v2672
        %v2687 = vmul.f32 %v283, %v2672
        %v2688 = vmul.f32 %v284, %v2672
        %v2689 = vmul.f32 %v285, %v2672
        %v2690 = vmul.f32 %v286, %v2672
        %v2691 = vmul.f32 %v287, %v2672
        %v2692 = vmul.f32 %v288, %v2672
        %v2693 = vmul.f32 %v289, %v2672
        %v2694 = vmul.f32 %v290, %v2672
        %v2695 = vmul.f32 %v291, %v2672
        %v2696 = vmul.f32 %v292, %v2672
        %v2697 = vmul.f32 %v293, %v2672
        %v2698 = vmul.f32 %v294, %v2672
        %v2699 = vmul.f32 %v295, %v2672
        %v2700 = vmul.f32 %v296, %v2672
        %v2701 = vmul.f32 %v297, %v2672
        %v2702 = vmul.f32 %v298, %v2672
        %v2703 = vmul.f32 %v299, %v2672
        %v2704 = vmul.f32 %v300, %v2672
        %v2737 = vrot.slane %v2673, 1
        %v2738 = vrot.slane %v2674, 1
        %v2739 = vrot.slane %v2675, 1
        %v2740 = vrot.slane %v2676, 1
        %v2741 = vrot.slane %v2677, 1
        %v2742 = vrot.slane %v2678, 1
        %v2743 = vrot.slane %v2679, 1
        %v2744 = vrot.slane %v2680, 1
        %v2745 = vrot.slane %v2681, 1
        %v2746 = vrot.slane %v2682, 1
        %v2747 = vrot.slane %v2683, 1
        %v2748 = vrot.slane %v2684, 1
        %v2749 = vrot.slane %v2685, 1
        %v2750 = vrot.slane %v2686, 1
        %v2751 = vrot.slane %v2687, 1
        %v2752 = vrot.slane %v2688, 1
        %v2753 = vrot.slane %v2689, 1
        %v2754 = vrot.slane %v2690, 1
        %v2755 = vrot.slane %v2691, 1
        %v2756 = vrot.slane %v2692, 1
        %v2757 = vrot.slane %v2693, 1
        %v2758 = vrot.slane %v2694, 1
        %v2759 = vrot.slane %v2695, 1
        %v2760 = vrot.slane %v2696, 1
        %v2761 = vrot.slane %v2697, 1
        %v2762 = vrot.slane %v2698, 1
        %v2763 = vrot.slane %v2699, 1
        %v2764 = vrot.slane %v2700, 1
        %v2765 = vrot.slane %v2701, 1
        %v2766 = vrot.slane %v2702, 1
        %v2767 = vrot.slane %v2703, 1
        %v2768 = vrot.slane %v2704, 1
        %v2801 = vadd.f32 %v2639, %v2737
        %v2802 = vadd.f32 %v2640, %v2738
        %v2803 = vadd.f32 %v2641, %v2739
        %v2804 = vadd.f32 %v2642, %v2740
        %v2805 = vadd.f32 %v2643, %v2741
        %v2806 = vadd.f32 %v2644, %v2742
        %v2807 = vadd.f32 %v2645, %v2743
        %v2808 = vadd.f32 %v2646, %v2744
        %v2809 = vadd.f32 %v2647, %v2745
        %v2810 = vadd.f32 %v2648, %v2746
        %v2811 = vadd.f32 %v2649, %v2747
        %v2812 = vadd.f32 %v2650, %v2748
        %v2813 = vadd.f32 %v2651, %v2749
        %v2814 = vadd.f32 %v2652, %v2750
        %v2815 = vadd.f32 %v2653, %v2751
        %v2816 = vadd.f32 %v2654, %v2752
        %v2817 = vadd.f32 %v2655, %v2753
        %v2818 = vadd.f32 %v2656, %v2754
        %v2819 = vadd.f32 %v2657, %v2755
        %v2820 = vadd.f32 %v2658, %v2756
        %v2821 = vadd.f32 %v2659, %v2757
        %v2822 = vadd.f32 %v2660, %v2758
        %v2823 = vadd.f32 %v2661, %v2759
        %v2824 = vadd.f32 %v2662, %v2760
        %v2825 = vadd.f32 %v2663, %v2761
        %v2826 = vadd.f32 %v2664, %v2762
        %v2827 = vadd.f32 %v2665, %v2763
        %v2828 = vadd.f32 %v2666, %v2764
        %v2829 = vadd.f32 %v2667, %v2765
        %v2830 = vadd.f32 %v2668, %v2766
        %v2831 = vadd.f32 %v2669, %v2767
        %v2832 = vadd.f32 %v2670, %v2768
        %s2833 = sld [smem:[#allocation8 + $0x12]]
        %v2834 = vstv %s2833
        %v2835 = vmul.f32 %v269, %v2834
        %v2836 = vmul.f32 %v270, %v2834
        %v2837 = vmul.f32 %v271, %v2834
        %v2838 = vmul.f32 %v272, %v2834
        %v2839 = vmul.f32 %v273, %v2834
        %v2840 = vmul.f32 %v274, %v2834
        %v2841 = vmul.f32 %v275, %v2834
        %v2842 = vmul.f32 %v276, %v2834
        %v2843 = vmul.f32 %v277, %v2834
        %v2844 = vmul.f32 %v278, %v2834
        %v2845 = vmul.f32 %v279, %v2834
        %v2846 = vmul.f32 %v280, %v2834
        %v2847 = vmul.f32 %v281, %v2834
        %v2848 = vmul.f32 %v282, %v2834
        %v2849 = vmul.f32 %v283, %v2834
        %v2850 = vmul.f32 %v284, %v2834
        %v2851 = vmul.f32 %v285, %v2834
        %v2852 = vmul.f32 %v286, %v2834
        %v2853 = vmul.f32 %v287, %v2834
        %v2854 = vmul.f32 %v288, %v2834
        %v2855 = vmul.f32 %v289, %v2834
        %v2856 = vmul.f32 %v290, %v2834
        %v2857 = vmul.f32 %v291, %v2834
        %v2858 = vmul.f32 %v292, %v2834
        %v2859 = vmul.f32 %v293, %v2834
        %v2860 = vmul.f32 %v294, %v2834
        %v2861 = vmul.f32 %v295, %v2834
        %v2862 = vmul.f32 %v296, %v2834
        %v2863 = vmul.f32 %v297, %v2834
        %v2864 = vmul.f32 %v298, %v2834
        %v2865 = vmul.f32 %v299, %v2834
        %v2866 = vmul.f32 %v300, %v2834
        %v2899 = vrot.slane %v2835, 2
        %v2900 = vrot.slane %v2836, 2
        %v2901 = vrot.slane %v2837, 2
        %v2902 = vrot.slane %v2838, 2
        %v2903 = vrot.slane %v2839, 2
        %v2904 = vrot.slane %v2840, 2
        %v2905 = vrot.slane %v2841, 2
        %v2906 = vrot.slane %v2842, 2
        %v2907 = vrot.slane %v2843, 2
        %v2908 = vrot.slane %v2844, 2
        %v2909 = vrot.slane %v2845, 2
        %v2910 = vrot.slane %v2846, 2
        %v2911 = vrot.slane %v2847, 2
        %v2912 = vrot.slane %v2848, 2
        %v2913 = vrot.slane %v2849, 2
        %v2914 = vrot.slane %v2850, 2
        %v2915 = vrot.slane %v2851, 2
        %v2916 = vrot.slane %v2852, 2
        %v2917 = vrot.slane %v2853, 2
        %v2918 = vrot.slane %v2854, 2
        %v2919 = vrot.slane %v2855, 2
        %v2920 = vrot.slane %v2856, 2
        %v2921 = vrot.slane %v2857, 2
        %v2922 = vrot.slane %v2858, 2
        %v2923 = vrot.slane %v2859, 2
        %v2924 = vrot.slane %v2860, 2
        %v2925 = vrot.slane %v2861, 2
        %v2926 = vrot.slane %v2862, 2
        %v2927 = vrot.slane %v2863, 2
        %v2928 = vrot.slane %v2864, 2
        %v2929 = vrot.slane %v2865, 2
        %v2930 = vrot.slane %v2866, 2
        %v2963 = vadd.f32 %v2801, %v2899
        %v2964 = vadd.f32 %v2802, %v2900
        %v2965 = vadd.f32 %v2803, %v2901
        %v2966 = vadd.f32 %v2804, %v2902
        %v2967 = vadd.f32 %v2805, %v2903
        %v2968 = vadd.f32 %v2806, %v2904
        %v2969 = vadd.f32 %v2807, %v2905
        %v2970 = vadd.f32 %v2808, %v2906
        %v2971 = vadd.f32 %v2809, %v2907
        %v2972 = vadd.f32 %v2810, %v2908
        %v2973 = vadd.f32 %v2811, %v2909
        %v2974 = vadd.f32 %v2812, %v2910
        %v2975 = vadd.f32 %v2813, %v2911
        %v2976 = vadd.f32 %v2814, %v2912
        %v2977 = vadd.f32 %v2815, %v2913
        %v2978 = vadd.f32 %v2816, %v2914
        %v2979 = vadd.f32 %v2817, %v2915
        %v2980 = vadd.f32 %v2818, %v2916
        %v2981 = vadd.f32 %v2819, %v2917
        %v2982 = vadd.f32 %v2820, %v2918
        %v2983 = vadd.f32 %v2821, %v2919
        %v2984 = vadd.f32 %v2822, %v2920
        %v2985 = vadd.f32 %v2823, %v2921
        %v2986 = vadd.f32 %v2824, %v2922
        %v2987 = vadd.f32 %v2825, %v2923
        %v2988 = vadd.f32 %v2826, %v2924
        %v2989 = vadd.f32 %v2827, %v2925
        %v2990 = vadd.f32 %v2828, %v2926
        %v2991 = vadd.f32 %v2829, %v2927
        %v2992 = vadd.f32 %v2830, %v2928
        %v2993 = vadd.f32 %v2831, %v2929
        %v2994 = vadd.f32 %v2832, %v2930
        %s2995 = sld [smem:[#allocation8 + $0x13]]
        %v2996 = vstv %s2995
        %v2997 = vmul.f32 %v269, %v2996
        %v2998 = vmul.f32 %v270, %v2996
        %v2999 = vmul.f32 %v271, %v2996
        %v3000 = vmul.f32 %v272, %v2996
        %v3001 = vmul.f32 %v273, %v2996
        %v3002 = vmul.f32 %v274, %v2996
        %v3003 = vmul.f32 %v275, %v2996
        %v3004 = vmul.f32 %v276, %v2996
        %v3005 = vmul.f32 %v277, %v2996
        %v3006 = vmul.f32 %v278, %v2996
        %v3007 = vmul.f32 %v279, %v2996
        %v3008 = vmul.f32 %v280, %v2996
        %v3009 = vmul.f32 %v281, %v2996
        %v3010 = vmul.f32 %v282, %v2996
        %v3011 = vmul.f32 %v283, %v2996
        %v3012 = vmul.f32 %v284, %v2996
        %v3013 = vmul.f32 %v285, %v2996
        %v3014 = vmul.f32 %v286, %v2996
        %v3015 = vmul.f32 %v287, %v2996
        %v3016 = vmul.f32 %v288, %v2996
        %v3017 = vmul.f32 %v289, %v2996
        %v3018 = vmul.f32 %v290, %v2996
        %v3019 = vmul.f32 %v291, %v2996
        %v3020 = vmul.f32 %v292, %v2996
        %v3021 = vmul.f32 %v293, %v2996
        %v3022 = vmul.f32 %v294, %v2996
        %v3023 = vmul.f32 %v295, %v2996
        %v3024 = vmul.f32 %v296, %v2996
        %v3025 = vmul.f32 %v297, %v2996
        %v3026 = vmul.f32 %v298, %v2996
        %v3027 = vmul.f32 %v299, %v2996
        %v3028 = vmul.f32 %v300, %v2996
        %v3061 = vrot.slane %v2997, 3
        %v3062 = vrot.slane %v2998, 3
        %v3063 = vrot.slane %v2999, 3
        %v3064 = vrot.slane %v3000, 3
        %v3065 = vrot.slane %v3001, 3
        %v3066 = vrot.slane %v3002, 3
        %v3067 = vrot.slane %v3003, 3
        %v3068 = vrot.slane %v3004, 3
        %v3069 = vrot.slane %v3005, 3
        %v3070 = vrot.slane %v3006, 3
        %v3071 = vrot.slane %v3007, 3
        %v3072 = vrot.slane %v3008, 3
        %v3073 = vrot.slane %v3009, 3
        %v3074 = vrot.slane %v3010, 3
        %v3075 = vrot.slane %v3011, 3
        %v3076 = vrot.slane %v3012, 3
        %v3077 = vrot.slane %v3013, 3
        %v3078 = vrot.slane %v3014, 3
        %v3079 = vrot.slane %v3015, 3
        %v3080 = vrot.slane %v3016, 3
        %v3081 = vrot.slane %v3017, 3
        %v3082 = vrot.slane %v3018, 3
        %v3083 = vrot.slane %v3019, 3
        %v3084 = vrot.slane %v3020, 3
        %v3085 = vrot.slane %v3021, 3
        %v3086 = vrot.slane %v3022, 3
        %v3087 = vrot.slane %v3023, 3
        %v3088 = vrot.slane %v3024, 3
        %v3089 = vrot.slane %v3025, 3
        %v3090 = vrot.slane %v3026, 3
        %v3091 = vrot.slane %v3027, 3
        %v3092 = vrot.slane %v3028, 3
        %v3125 = vadd.f32 %v2963, %v3061
        %v3126 = vadd.f32 %v2964, %v3062
        %v3127 = vadd.f32 %v2965, %v3063
        %v3128 = vadd.f32 %v2966, %v3064
        %v3129 = vadd.f32 %v2967, %v3065
        %v3130 = vadd.f32 %v2968, %v3066
        %v3131 = vadd.f32 %v2969, %v3067
        %v3132 = vadd.f32 %v2970, %v3068
        %v3133 = vadd.f32 %v2971, %v3069
        %v3134 = vadd.f32 %v2972, %v3070
        %v3135 = vadd.f32 %v2973, %v3071
        %v3136 = vadd.f32 %v2974, %v3072
        %v3137 = vadd.f32 %v2975, %v3073
        %v3138 = vadd.f32 %v2976, %v3074
        %v3139 = vadd.f32 %v2977, %v3075
        %v3140 = vadd.f32 %v2978, %v3076
        %v3141 = vadd.f32 %v2979, %v3077
        %v3142 = vadd.f32 %v2980, %v3078
        %v3143 = vadd.f32 %v2981, %v3079
        %v3144 = vadd.f32 %v2982, %v3080
        %v3145 = vadd.f32 %v2983, %v3081
        %v3146 = vadd.f32 %v2984, %v3082
        %v3147 = vadd.f32 %v2985, %v3083
        %v3148 = vadd.f32 %v2986, %v3084
        %v3149 = vadd.f32 %v2987, %v3085
        %v3150 = vadd.f32 %v2988, %v3086
        %v3151 = vadd.f32 %v2989, %v3087
        %v3152 = vadd.f32 %v2990, %v3088
        %v3153 = vadd.f32 %v2991, %v3089
        %v3154 = vadd.f32 %v2992, %v3090
        %v3155 = vadd.f32 %v2993, %v3091
        %v3156 = vadd.f32 %v2994, %v3092
        %s3157 = sld [smem:[#allocation8 + $0x14]]
        %v3158 = vstv %s3157
        %v3159 = vmul.f32 %v269, %v3158
        %v3160 = vmul.f32 %v270, %v3158
        %v3161 = vmul.f32 %v271, %v3158
        %v3162 = vmul.f32 %v272, %v3158
        %v3163 = vmul.f32 %v273, %v3158
        %v3164 = vmul.f32 %v274, %v3158
        %v3165 = vmul.f32 %v275, %v3158
        %v3166 = vmul.f32 %v276, %v3158
        %v3167 = vmul.f32 %v277, %v3158
        %v3168 = vmul.f32 %v278, %v3158
        %v3169 = vmul.f32 %v279, %v3158
        %v3170 = vmul.f32 %v280, %v3158
        %v3171 = vmul.f32 %v281, %v3158
        %v3172 = vmul.f32 %v282, %v3158
        %v3173 = vmul.f32 %v283, %v3158
        %v3174 = vmul.f32 %v284, %v3158
        %v3175 = vmul.f32 %v285, %v3158
        %v3176 = vmul.f32 %v286, %v3158
        %v3177 = vmul.f32 %v287, %v3158
        %v3178 = vmul.f32 %v288, %v3158
        %v3179 = vmul.f32 %v289, %v3158
        %v3180 = vmul.f32 %v290, %v3158
        %v3181 = vmul.f32 %v291, %v3158
        %v3182 = vmul.f32 %v292, %v3158
        %v3183 = vmul.f32 %v293, %v3158
        %v3184 = vmul.f32 %v294, %v3158
        %v3185 = vmul.f32 %v295, %v3158
        %v3186 = vmul.f32 %v296, %v3158
        %v3187 = vmul.f32 %v297, %v3158
        %v3188 = vmul.f32 %v298, %v3158
        %v3189 = vmul.f32 %v299, %v3158
        %v3190 = vmul.f32 %v300, %v3158
        %v3223 = vrot.slane %v3159, 4
        %v3224 = vrot.slane %v3160, 4
        %v3225 = vrot.slane %v3161, 4
        %v3226 = vrot.slane %v3162, 4
        %v3227 = vrot.slane %v3163, 4
        %v3228 = vrot.slane %v3164, 4
        %v3229 = vrot.slane %v3165, 4
        %v3230 = vrot.slane %v3166, 4
        %v3231 = vrot.slane %v3167, 4
        %v3232 = vrot.slane %v3168, 4
        %v3233 = vrot.slane %v3169, 4
        %v3234 = vrot.slane %v3170, 4
        %v3235 = vrot.slane %v3171, 4
        %v3236 = vrot.slane %v3172, 4
        %v3237 = vrot.slane %v3173, 4
        %v3238 = vrot.slane %v3174, 4
        %v3239 = vrot.slane %v3175, 4
        %v3240 = vrot.slane %v3176, 4
        %v3241 = vrot.slane %v3177, 4
        %v3242 = vrot.slane %v3178, 4
        %v3243 = vrot.slane %v3179, 4
        %v3244 = vrot.slane %v3180, 4
        %v3245 = vrot.slane %v3181, 4
        %v3246 = vrot.slane %v3182, 4
        %v3247 = vrot.slane %v3183, 4
        %v3248 = vrot.slane %v3184, 4
        %v3249 = vrot.slane %v3185, 4
        %v3250 = vrot.slane %v3186, 4
        %v3251 = vrot.slane %v3187, 4
        %v3252 = vrot.slane %v3188, 4
        %v3253 = vrot.slane %v3189, 4
        %v3254 = vrot.slane %v3190, 4
        %v3287 = vadd.f32 %v3125, %v3223
        %v3288 = vadd.f32 %v3126, %v3224
        %v3289 = vadd.f32 %v3127, %v3225
        %v3290 = vadd.f32 %v3128, %v3226
        %v3291 = vadd.f32 %v3129, %v3227
        %v3292 = vadd.f32 %v3130, %v3228
        %v3293 = vadd.f32 %v3131, %v3229
        %v3294 = vadd.f32 %v3132, %v3230
        %v3295 = vadd.f32 %v3133, %v3231
        %v3296 = vadd.f32 %v3134, %v3232
        %v3297 = vadd.f32 %v3135, %v3233
        %v3298 = vadd.f32 %v3136, %v3234
        %v3299 = vadd.f32 %v3137, %v3235
        %v3300 = vadd.f32 %v3138, %v3236
        %v3301 = vadd.f32 %v3139, %v3237
        %v3302 = vadd.f32 %v3140, %v3238
        %v3303 = vadd.f32 %v3141, %v3239
        %v3304 = vadd.f32 %v3142, %v3240
        %v3305 = vadd.f32 %v3143, %v3241
        %v3306 = vadd.f32 %v3144, %v3242
        %v3307 = vadd.f32 %v3145, %v3243
        %v3308 = vadd.f32 %v3146, %v3244
        %v3309 = vadd.f32 %v3147, %v3245
        %v3310 = vadd.f32 %v3148, %v3246
        %v3311 = vadd.f32 %v3149, %v3247
        %v3312 = vadd.f32 %v3150, %v3248
        %v3313 = vadd.f32 %v3151, %v3249
        %v3314 = vadd.f32 %v3152, %v3250
        %v3315 = vadd.f32 %v3153, %v3251
        %v3316 = vadd.f32 %v3154, %v3252
        %v3317 = vadd.f32 %v3155, %v3253
        %v3318 = vadd.f32 %v3156, %v3254
        %s3319 = sld [smem:[#allocation8 + $0x15]]
        %v3320 = vstv %s3319
        %v3321 = vmul.f32 %v269, %v3320
        %v3322 = vmul.f32 %v270, %v3320
        %v3323 = vmul.f32 %v271, %v3320
        %v3324 = vmul.f32 %v272, %v3320
        %v3325 = vmul.f32 %v273, %v3320
        %v3326 = vmul.f32 %v274, %v3320
        %v3327 = vmul.f32 %v275, %v3320
        %v3328 = vmul.f32 %v276, %v3320
        %v3329 = vmul.f32 %v277, %v3320
        %v3330 = vmul.f32 %v278, %v3320
        %v3331 = vmul.f32 %v279, %v3320
        %v3332 = vmul.f32 %v280, %v3320
        %v3333 = vmul.f32 %v281, %v3320
        %v3334 = vmul.f32 %v282, %v3320
        %v3335 = vmul.f32 %v283, %v3320
        %v3336 = vmul.f32 %v284, %v3320
        %v3337 = vmul.f32 %v285, %v3320
        %v3338 = vmul.f32 %v286, %v3320
        %v3339 = vmul.f32 %v287, %v3320
        %v3340 = vmul.f32 %v288, %v3320
        %v3341 = vmul.f32 %v289, %v3320
        %v3342 = vmul.f32 %v290, %v3320
        %v3343 = vmul.f32 %v291, %v3320
        %v3344 = vmul.f32 %v292, %v3320
        %v3345 = vmul.f32 %v293, %v3320
        %v3346 = vmul.f32 %v294, %v3320
        %v3347 = vmul.f32 %v295, %v3320
        %v3348 = vmul.f32 %v296, %v3320
        %v3349 = vmul.f32 %v297, %v3320
        %v3350 = vmul.f32 %v298, %v3320
        %v3351 = vmul.f32 %v299, %v3320
        %v3352 = vmul.f32 %v300, %v3320
        %v3385 = vrot.slane %v3321, 5
        %v3386 = vrot.slane %v3322, 5
        %v3387 = vrot.slane %v3323, 5
        %v3388 = vrot.slane %v3324, 5
        %v3389 = vrot.slane %v3325, 5
        %v3390 = vrot.slane %v3326, 5
        %v3391 = vrot.slane %v3327, 5
        %v3392 = vrot.slane %v3328, 5
        %v3393 = vrot.slane %v3329, 5
        %v3394 = vrot.slane %v3330, 5
        %v3395 = vrot.slane %v3331, 5
        %v3396 = vrot.slane %v3332, 5
        %v3397 = vrot.slane %v3333, 5
        %v3398 = vrot.slane %v3334, 5
        %v3399 = vrot.slane %v3335, 5
        %v3400 = vrot.slane %v3336, 5
        %v3401 = vrot.slane %v3337, 5
        %v3402 = vrot.slane %v3338, 5
        %v3403 = vrot.slane %v3339, 5
        %v3404 = vrot.slane %v3340, 5
        %v3405 = vrot.slane %v3341, 5
        %v3406 = vrot.slane %v3342, 5
        %v3407 = vrot.slane %v3343, 5
        %v3408 = vrot.slane %v3344, 5
        %v3409 = vrot.slane %v3345, 5
        %v3410 = vrot.slane %v3346, 5
        %v3411 = vrot.slane %v3347, 5
        %v3412 = vrot.slane %v3348, 5
        %v3413 = vrot.slane %v3349, 5
        %v3414 = vrot.slane %v3350, 5
        %v3415 = vrot.slane %v3351, 5
        %v3416 = vrot.slane %v3352, 5
        %v3449 = vadd.f32 %v3287, %v3385
        %v3450 = vadd.f32 %v3288, %v3386
        %v3451 = vadd.f32 %v3289, %v3387
        %v3452 = vadd.f32 %v3290, %v3388
        %v3453 = vadd.f32 %v3291, %v3389
        %v3454 = vadd.f32 %v3292, %v3390
        %v3455 = vadd.f32 %v3293, %v3391
        %v3456 = vadd.f32 %v3294, %v3392
        %v3457 = vadd.f32 %v3295, %v3393
        %v3458 = vadd.f32 %v3296, %v3394
        %v3459 = vadd.f32 %v3297, %v3395
        %v3460 = vadd.f32 %v3298, %v3396
        %v3461 = vadd.f32 %v3299, %v3397
        %v3462 = vadd.f32 %v3300, %v3398
        %v3463 = vadd.f32 %v3301, %v3399
        %v3464 = vadd.f32 %v3302, %v3400
        %v3465 = vadd.f32 %v3303, %v3401
        %v3466 = vadd.f32 %v3304, %v3402
        %v3467 = vadd.f32 %v3305, %v3403
        %v3468 = vadd.f32 %v3306, %v3404
        %v3469 = vadd.f32 %v3307, %v3405
        %v3470 = vadd.f32 %v3308, %v3406
        %v3471 = vadd.f32 %v3309, %v3407
        %v3472 = vadd.f32 %v3310, %v3408
        %v3473 = vadd.f32 %v3311, %v3409
        %v3474 = vadd.f32 %v3312, %v3410
        %v3475 = vadd.f32 %v3313, %v3411
        %v3476 = vadd.f32 %v3314, %v3412
        %v3477 = vadd.f32 %v3315, %v3413
        %v3478 = vadd.f32 %v3316, %v3414
        %v3479 = vadd.f32 %v3317, %v3415
        %v3480 = vadd.f32 %v3318, %v3416
        %s3481 = sld [smem:[#allocation8 + $0x16]]
        %v3482 = vstv %s3481
        %v3483 = vmul.f32 %v269, %v3482
        %v3484 = vmul.f32 %v270, %v3482
        %v3485 = vmul.f32 %v271, %v3482
        %v3486 = vmul.f32 %v272, %v3482
        %v3487 = vmul.f32 %v273, %v3482
        %v3488 = vmul.f32 %v274, %v3482
        %v3489 = vmul.f32 %v275, %v3482
        %v3490 = vmul.f32 %v276, %v3482
        %v3491 = vmul.f32 %v277, %v3482
        %v3492 = vmul.f32 %v278, %v3482
        %v3493 = vmul.f32 %v279, %v3482
        %v3494 = vmul.f32 %v280, %v3482
        %v3495 = vmul.f32 %v281, %v3482
        %v3496 = vmul.f32 %v282, %v3482
        %v3497 = vmul.f32 %v283, %v3482
        %v3498 = vmul.f32 %v284, %v3482
        %v3499 = vmul.f32 %v285, %v3482
        %v3500 = vmul.f32 %v286, %v3482
        %v3501 = vmul.f32 %v287, %v3482
        %v3502 = vmul.f32 %v288, %v3482
        %v3503 = vmul.f32 %v289, %v3482
        %v3504 = vmul.f32 %v290, %v3482
        %v3505 = vmul.f32 %v291, %v3482
        %v3506 = vmul.f32 %v292, %v3482
        %v3507 = vmul.f32 %v293, %v3482
        %v3508 = vmul.f32 %v294, %v3482
        %v3509 = vmul.f32 %v295, %v3482
        %v3510 = vmul.f32 %v296, %v3482
        %v3511 = vmul.f32 %v297, %v3482
        %v3512 = vmul.f32 %v298, %v3482
        %v3513 = vmul.f32 %v299, %v3482
        %v3514 = vmul.f32 %v300, %v3482
        %v3547 = vrot.slane %v3483, 6
        %v3548 = vrot.slane %v3484, 6
        %v3549 = vrot.slane %v3485, 6
        %v3550 = vrot.slane %v3486, 6
        %v3551 = vrot.slane %v3487, 6
        %v3552 = vrot.slane %v3488, 6
        %v3553 = vrot.slane %v3489, 6
        %v3554 = vrot.slane %v3490, 6
        %v3555 = vrot.slane %v3491, 6
        %v3556 = vrot.slane %v3492, 6
        %v3557 = vrot.slane %v3493, 6
        %v3558 = vrot.slane %v3494, 6
        %v3559 = vrot.slane %v3495, 6
        %v3560 = vrot.slane %v3496, 6
        %v3561 = vrot.slane %v3497, 6
        %v3562 = vrot.slane %v3498, 6
        %v3563 = vrot.slane %v3499, 6
        %v3564 = vrot.slane %v3500, 6
        %v3565 = vrot.slane %v3501, 6
        %v3566 = vrot.slane %v3502, 6
        %v3567 = vrot.slane %v3503, 6
        %v3568 = vrot.slane %v3504, 6
        %v3569 = vrot.slane %v3505, 6
        %v3570 = vrot.slane %v3506, 6
        %v3571 = vrot.slane %v3507, 6
        %v3572 = vrot.slane %v3508, 6
        %v3573 = vrot.slane %v3509, 6
        %v3574 = vrot.slane %v3510, 6
        %v3575 = vrot.slane %v3511, 6
        %v3576 = vrot.slane %v3512, 6
        %v3577 = vrot.slane %v3513, 6
        %v3578 = vrot.slane %v3514, 6
        %v3611 = vadd.f32 %v3449, %v3547
        %v3612 = vadd.f32 %v3450, %v3548
        %v3613 = vadd.f32 %v3451, %v3549
        %v3614 = vadd.f32 %v3452, %v3550
        %v3615 = vadd.f32 %v3453, %v3551
        %v3616 = vadd.f32 %v3454, %v3552
        %v3617 = vadd.f32 %v3455, %v3553
        %v3618 = vadd.f32 %v3456, %v3554
        %v3619 = vadd.f32 %v3457, %v3555
        %v3620 = vadd.f32 %v3458, %v3556
        %v3621 = vadd.f32 %v3459, %v3557
        %v3622 = vadd.f32 %v3460, %v3558
        %v3623 = vadd.f32 %v3461, %v3559
        %v3624 = vadd.f32 %v3462, %v3560
        %v3625 = vadd.f32 %v3463, %v3561
        %v3626 = vadd.f32 %v3464, %v3562
        %v3627 = vadd.f32 %v3465, %v3563
        %v3628 = vadd.f32 %v3466, %v3564
        %v3629 = vadd.f32 %v3467, %v3565
        %v3630 = vadd.f32 %v3468, %v3566
        %v3631 = vadd.f32 %v3469, %v3567
        %v3632 = vadd.f32 %v3470, %v3568
        %v3633 = vadd.f32 %v3471, %v3569
        %v3634 = vadd.f32 %v3472, %v3570
        %v3635 = vadd.f32 %v3473, %v3571
        %v3636 = vadd.f32 %v3474, %v3572
        %v3637 = vadd.f32 %v3475, %v3573
        %v3638 = vadd.f32 %v3476, %v3574
        %v3639 = vadd.f32 %v3477, %v3575
        %v3640 = vadd.f32 %v3478, %v3576
        %v3641 = vadd.f32 %v3479, %v3577
        %v3642 = vadd.f32 %v3480, %v3578
        %s3643 = sld [smem:[#allocation8 + $0x17]]
        %v3644 = vstv %s3643
        %v3645 = vmul.f32 %v269, %v3644
        %v3646 = vmul.f32 %v270, %v3644
        %v3647 = vmul.f32 %v271, %v3644
        %v3648 = vmul.f32 %v272, %v3644
        %v3649 = vmul.f32 %v273, %v3644
        %v3650 = vmul.f32 %v274, %v3644
        %v3651 = vmul.f32 %v275, %v3644
        %v3652 = vmul.f32 %v276, %v3644
        %v3653 = vmul.f32 %v277, %v3644
        %v3654 = vmul.f32 %v278, %v3644
        %v3655 = vmul.f32 %v279, %v3644
        %v3656 = vmul.f32 %v280, %v3644
        %v3657 = vmul.f32 %v281, %v3644
        %v3658 = vmul.f32 %v282, %v3644
        %v3659 = vmul.f32 %v283, %v3644
        %v3660 = vmul.f32 %v284, %v3644
        %v3661 = vmul.f32 %v285, %v3644
        %v3662 = vmul.f32 %v286, %v3644
        %v3663 = vmul.f32 %v287, %v3644
        %v3664 = vmul.f32 %v288, %v3644
        %v3665 = vmul.f32 %v289, %v3644
        %v3666 = vmul.f32 %v290, %v3644
        %v3667 = vmul.f32 %v291, %v3644
        %v3668 = vmul.f32 %v292, %v3644
        %v3669 = vmul.f32 %v293, %v3644
        %v3670 = vmul.f32 %v294, %v3644
        %v3671 = vmul.f32 %v295, %v3644
        %v3672 = vmul.f32 %v296, %v3644
        %v3673 = vmul.f32 %v297, %v3644
        %v3674 = vmul.f32 %v298, %v3644
        %v3675 = vmul.f32 %v299, %v3644
        %v3676 = vmul.f32 %v300, %v3644
        %v3709 = vrot.slane %v3645, 7
        %v3710 = vrot.slane %v3646, 7
        %v3711 = vrot.slane %v3647, 7
        %v3712 = vrot.slane %v3648, 7
        %v3713 = vrot.slane %v3649, 7
        %v3714 = vrot.slane %v3650, 7
        %v3715 = vrot.slane %v3651, 7
        %v3716 = vrot.slane %v3652, 7
        %v3717 = vrot.slane %v3653, 7
        %v3718 = vrot.slane %v3654, 7
        %v3719 = vrot.slane %v3655, 7
        %v3720 = vrot.slane %v3656, 7
        %v3721 = vrot.slane %v3657, 7
        %v3722 = vrot.slane %v3658, 7
        %v3723 = vrot.slane %v3659, 7
        %v3724 = vrot.slane %v3660, 7
        %v3725 = vrot.slane %v3661, 7
        %v3726 = vrot.slane %v3662, 7
        %v3727 = vrot.slane %v3663, 7
        %v3728 = vrot.slane %v3664, 7
        %v3729 = vrot.slane %v3665, 7
        %v3730 = vrot.slane %v3666, 7
        %v3731 = vrot.slane %v3667, 7
        %v3732 = vrot.slane %v3668, 7
        %v3733 = vrot.slane %v3669, 7
        %v3734 = vrot.slane %v3670, 7
        %v3735 = vrot.slane %v3671, 7
        %v3736 = vrot.slane %v3672, 7
        %v3737 = vrot.slane %v3673, 7
        %v3738 = vrot.slane %v3674, 7
        %v3739 = vrot.slane %v3675, 7
        %v3740 = vrot.slane %v3676, 7
        %v3773 = vadd.f32 %v3611, %v3709
        %v3774 = vadd.f32 %v3612, %v3710
        %v3775 = vadd.f32 %v3613, %v3711
        %v3776 = vadd.f32 %v3614, %v3712
        %v3777 = vadd.f32 %v3615, %v3713
        %v3778 = vadd.f32 %v3616, %v3714
        %v3779 = vadd.f32 %v3617, %v3715
        %v3780 = vadd.f32 %v3618, %v3716
        %v3781 = vadd.f32 %v3619, %v3717
        %v3782 = vadd.f32 %v3620, %v3718
        %v3783 = vadd.f32 %v3621, %v3719
        %v3784 = vadd.f32 %v3622, %v3720
        %v3785 = vadd.f32 %v3623, %v3721
        %v3786 = vadd.f32 %v3624, %v3722
        %v3787 = vadd.f32 %v3625, %v3723
        %v3788 = vadd.f32 %v3626, %v3724
        %v3789 = vadd.f32 %v3627, %v3725
        %v3790 = vadd.f32 %v3628, %v3726
        %v3791 = vadd.f32 %v3629, %v3727
        %v3792 = vadd.f32 %v3630, %v3728
        %v3793 = vadd.f32 %v3631, %v3729
        %v3794 = vadd.f32 %v3632, %v3730
        %v3795 = vadd.f32 %v3633, %v3731
        %v3796 = vadd.f32 %v3634, %v3732
        %v3797 = vadd.f32 %v3635, %v3733
        %v3798 = vadd.f32 %v3636, %v3734
        %v3799 = vadd.f32 %v3637, %v3735
        %v3800 = vadd.f32 %v3638, %v3736
        %v3801 = vadd.f32 %v3639, %v3737
        %v3802 = vadd.f32 %v3640, %v3738
        %v3803 = vadd.f32 %v3641, %v3739
        %v3804 = vadd.f32 %v3642, %v3740
        %s3805 = sld [smem:[#allocation8 + $0x18]]
        %v3806 = vstv %s3805
        %v3807 = vmul.f32 %v269, %v3806
        %v3808 = vmul.f32 %v270, %v3806
        %v3809 = vmul.f32 %v271, %v3806
        %v3810 = vmul.f32 %v272, %v3806
        %v3811 = vmul.f32 %v273, %v3806
        %v3812 = vmul.f32 %v274, %v3806
        %v3813 = vmul.f32 %v275, %v3806
        %v3814 = vmul.f32 %v276, %v3806
        %v3815 = vmul.f32 %v277, %v3806
        %v3816 = vmul.f32 %v278, %v3806
        %v3817 = vmul.f32 %v279, %v3806
        %v3818 = vmul.f32 %v280, %v3806
        %v3819 = vmul.f32 %v281, %v3806
        %v3820 = vmul.f32 %v282, %v3806
        %v3821 = vmul.f32 %v283, %v3806
        %v3822 = vmul.f32 %v284, %v3806
        %v3823 = vmul.f32 %v285, %v3806
        %v3824 = vmul.f32 %v286, %v3806
        %v3825 = vmul.f32 %v287, %v3806
        %v3826 = vmul.f32 %v288, %v3806
        %v3827 = vmul.f32 %v289, %v3806
        %v3828 = vmul.f32 %v290, %v3806
        %v3829 = vmul.f32 %v291, %v3806
        %v3830 = vmul.f32 %v292, %v3806
        %v3831 = vmul.f32 %v293, %v3806
        %v3832 = vmul.f32 %v294, %v3806
        %v3833 = vmul.f32 %v295, %v3806
        %v3834 = vmul.f32 %v296, %v3806
        %v3835 = vmul.f32 %v297, %v3806
        %v3836 = vmul.f32 %v298, %v3806
        %v3837 = vmul.f32 %v299, %v3806
        %v3838 = vmul.f32 %v300, %v3806
        %s3839 = sld [smem:[#allocation8 + $0x19]]
        %v3840 = vstv %s3839
        %v3841 = vmul.f32 %v269, %v3840
        %v3842 = vmul.f32 %v270, %v3840
        %v3843 = vmul.f32 %v271, %v3840
        %v3844 = vmul.f32 %v272, %v3840
        %v3845 = vmul.f32 %v273, %v3840
        %v3846 = vmul.f32 %v274, %v3840
        %v3847 = vmul.f32 %v275, %v3840
        %v3848 = vmul.f32 %v276, %v3840
        %v3849 = vmul.f32 %v277, %v3840
        %v3850 = vmul.f32 %v278, %v3840
        %v3851 = vmul.f32 %v279, %v3840
        %v3852 = vmul.f32 %v280, %v3840
        %v3853 = vmul.f32 %v281, %v3840
        %v3854 = vmul.f32 %v282, %v3840
        %v3855 = vmul.f32 %v283, %v3840
        %v3856 = vmul.f32 %v284, %v3840
        %v3857 = vmul.f32 %v285, %v3840
        %v3858 = vmul.f32 %v286, %v3840
        %v3859 = vmul.f32 %v287, %v3840
        %v3860 = vmul.f32 %v288, %v3840
        %v3861 = vmul.f32 %v289, %v3840
        %v3862 = vmul.f32 %v290, %v3840
        %v3863 = vmul.f32 %v291, %v3840
        %v3864 = vmul.f32 %v292, %v3840
        %v3865 = vmul.f32 %v293, %v3840
        %v3866 = vmul.f32 %v294, %v3840
        %v3867 = vmul.f32 %v295, %v3840
        %v3868 = vmul.f32 %v296, %v3840
        %v3869 = vmul.f32 %v297, %v3840
        %v3870 = vmul.f32 %v298, %v3840
        %v3871 = vmul.f32 %v299, %v3840
        %v3872 = vmul.f32 %v300, %v3840
        %v3905 = vrot.slane %v3841, 1
        %v3906 = vrot.slane %v3842, 1
        %v3907 = vrot.slane %v3843, 1
        %v3908 = vrot.slane %v3844, 1
        %v3909 = vrot.slane %v3845, 1
        %v3910 = vrot.slane %v3846, 1
        %v3911 = vrot.slane %v3847, 1
        %v3912 = vrot.slane %v3848, 1
        %v3913 = vrot.slane %v3849, 1
        %v3914 = vrot.slane %v3850, 1
        %v3915 = vrot.slane %v3851, 1
        %v3916 = vrot.slane %v3852, 1
        %v3917 = vrot.slane %v3853, 1
        %v3918 = vrot.slane %v3854, 1
        %v3919 = vrot.slane %v3855, 1
        %v3920 = vrot.slane %v3856, 1
        %v3921 = vrot.slane %v3857, 1
        %v3922 = vrot.slane %v3858, 1
        %v3923 = vrot.slane %v3859, 1
        %v3924 = vrot.slane %v3860, 1
        %v3925 = vrot.slane %v3861, 1
        %v3926 = vrot.slane %v3862, 1
        %v3927 = vrot.slane %v3863, 1
        %v3928 = vrot.slane %v3864, 1
        %v3929 = vrot.slane %v3865, 1
        %v3930 = vrot.slane %v3866, 1
        %v3931 = vrot.slane %v3867, 1
        %v3932 = vrot.slane %v3868, 1
        %v3933 = vrot.slane %v3869, 1
        %v3934 = vrot.slane %v3870, 1
        %v3935 = vrot.slane %v3871, 1
        %v3936 = vrot.slane %v3872, 1
        %v3969 = vadd.f32 %v3807, %v3905
        %v3970 = vadd.f32 %v3808, %v3906
        %v3971 = vadd.f32 %v3809, %v3907
        %v3972 = vadd.f32 %v3810, %v3908
        %v3973 = vadd.f32 %v3811, %v3909
        %v3974 = vadd.f32 %v3812, %v3910
        %v3975 = vadd.f32 %v3813, %v3911
        %v3976 = vadd.f32 %v3814, %v3912
        %v3977 = vadd.f32 %v3815, %v3913
        %v3978 = vadd.f32 %v3816, %v3914
        %v3979 = vadd.f32 %v3817, %v3915
        %v3980 = vadd.f32 %v3818, %v3916
        %v3981 = vadd.f32 %v3819, %v3917
        %v3982 = vadd.f32 %v3820, %v3918
        %v3983 = vadd.f32 %v3821, %v3919
        %v3984 = vadd.f32 %v3822, %v3920
        %v3985 = vadd.f32 %v3823, %v3921
        %v3986 = vadd.f32 %v3824, %v3922
        %v3987 = vadd.f32 %v3825, %v3923
        %v3988 = vadd.f32 %v3826, %v3924
        %v3989 = vadd.f32 %v3827, %v3925
        %v3990 = vadd.f32 %v3828, %v3926
        %v3991 = vadd.f32 %v3829, %v3927
        %v3992 = vadd.f32 %v3830, %v3928
        %v3993 = vadd.f32 %v3831, %v3929
        %v3994 = vadd.f32 %v3832, %v3930
        %v3995 = vadd.f32 %v3833, %v3931
        %v3996 = vadd.f32 %v3834, %v3932
        %v3997 = vadd.f32 %v3835, %v3933
        %v3998 = vadd.f32 %v3836, %v3934
        %v3999 = vadd.f32 %v3837, %v3935
        %v4000 = vadd.f32 %v3838, %v3936
        %s4001 = sld [smem:[#allocation8 + $0x1a]]
        %v4002 = vstv %s4001
        %v4003 = vmul.f32 %v269, %v4002
        %v4004 = vmul.f32 %v270, %v4002
        %v4005 = vmul.f32 %v271, %v4002
        %v4006 = vmul.f32 %v272, %v4002
        %v4007 = vmul.f32 %v273, %v4002
        %v4008 = vmul.f32 %v274, %v4002
        %v4009 = vmul.f32 %v275, %v4002
        %v4010 = vmul.f32 %v276, %v4002
        %v4011 = vmul.f32 %v277, %v4002
        %v4012 = vmul.f32 %v278, %v4002
        %v4013 = vmul.f32 %v279, %v4002
        %v4014 = vmul.f32 %v280, %v4002
        %v4015 = vmul.f32 %v281, %v4002
        %v4016 = vmul.f32 %v282, %v4002
        %v4017 = vmul.f32 %v283, %v4002
        %v4018 = vmul.f32 %v284, %v4002
        %v4019 = vmul.f32 %v285, %v4002
        %v4020 = vmul.f32 %v286, %v4002
        %v4021 = vmul.f32 %v287, %v4002
        %v4022 = vmul.f32 %v288, %v4002
        %v4023 = vmul.f32 %v289, %v4002
        %v4024 = vmul.f32 %v290, %v4002
        %v4025 = vmul.f32 %v291, %v4002
        %v4026 = vmul.f32 %v292, %v4002
        %v4027 = vmul.f32 %v293, %v4002
        %v4028 = vmul.f32 %v294, %v4002
        %v4029 = vmul.f32 %v295, %v4002
        %v4030 = vmul.f32 %v296, %v4002
        %v4031 = vmul.f32 %v297, %v4002
        %v4032 = vmul.f32 %v298, %v4002
        %v4033 = vmul.f32 %v299, %v4002
        %v4034 = vmul.f32 %v300, %v4002
        %v4067 = vrot.slane %v4003, 2
        %v4068 = vrot.slane %v4004, 2
        %v4069 = vrot.slane %v4005, 2
        %v4070 = vrot.slane %v4006, 2
        %v4071 = vrot.slane %v4007, 2
        %v4072 = vrot.slane %v4008, 2
        %v4073 = vrot.slane %v4009, 2
        %v4074 = vrot.slane %v4010, 2
        %v4075 = vrot.slane %v4011, 2
        %v4076 = vrot.slane %v4012, 2
        %v4077 = vrot.slane %v4013, 2
        %v4078 = vrot.slane %v4014, 2
        %v4079 = vrot.slane %v4015, 2
        %v4080 = vrot.slane %v4016, 2
        %v4081 = vrot.slane %v4017, 2
        %v4082 = vrot.slane %v4018, 2
        %v4083 = vrot.slane %v4019, 2
        %v4084 = vrot.slane %v4020, 2
        %v4085 = vrot.slane %v4021, 2
        %v4086 = vrot.slane %v4022, 2
        %v4087 = vrot.slane %v4023, 2
        %v4088 = vrot.slane %v4024, 2
        %v4089 = vrot.slane %v4025, 2
        %v4090 = vrot.slane %v4026, 2
        %v4091 = vrot.slane %v4027, 2
        %v4092 = vrot.slane %v4028, 2
        %v4093 = vrot.slane %v4029, 2
        %v4094 = vrot.slane %v4030, 2
        %v4095 = vrot.slane %v4031, 2
        %v4096 = vrot.slane %v4032, 2
        %v4097 = vrot.slane %v4033, 2
        %v4098 = vrot.slane %v4034, 2
        %v4131 = vadd.f32 %v3969, %v4067
        %v4132 = vadd.f32 %v3970, %v4068
        %v4133 = vadd.f32 %v3971, %v4069
        %v4134 = vadd.f32 %v3972, %v4070
        %v4135 = vadd.f32 %v3973, %v4071
        %v4136 = vadd.f32 %v3974, %v4072
        %v4137 = vadd.f32 %v3975, %v4073
        %v4138 = vadd.f32 %v3976, %v4074
        %v4139 = vadd.f32 %v3977, %v4075
        %v4140 = vadd.f32 %v3978, %v4076
        %v4141 = vadd.f32 %v3979, %v4077
        %v4142 = vadd.f32 %v3980, %v4078
        %v4143 = vadd.f32 %v3981, %v4079
        %v4144 = vadd.f32 %v3982, %v4080
        %v4145 = vadd.f32 %v3983, %v4081
        %v4146 = vadd.f32 %v3984, %v4082
        %v4147 = vadd.f32 %v3985, %v4083
        %v4148 = vadd.f32 %v3986, %v4084
        %v4149 = vadd.f32 %v3987, %v4085
        %v4150 = vadd.f32 %v3988, %v4086
        %v4151 = vadd.f32 %v3989, %v4087
        %v4152 = vadd.f32 %v3990, %v4088
        %v4153 = vadd.f32 %v3991, %v4089
        %v4154 = vadd.f32 %v3992, %v4090
        %v4155 = vadd.f32 %v3993, %v4091
        %v4156 = vadd.f32 %v3994, %v4092
        %v4157 = vadd.f32 %v3995, %v4093
        %v4158 = vadd.f32 %v3996, %v4094
        %v4159 = vadd.f32 %v3997, %v4095
        %v4160 = vadd.f32 %v3998, %v4096
        %v4161 = vadd.f32 %v3999, %v4097
        %v4162 = vadd.f32 %v4000, %v4098
        %s4163 = sld [smem:[#allocation8 + $0x1b]]
        %v4164 = vstv %s4163
        %v4165 = vmul.f32 %v269, %v4164
        %v4166 = vmul.f32 %v270, %v4164
        %v4167 = vmul.f32 %v271, %v4164
        %v4168 = vmul.f32 %v272, %v4164
        %v4169 = vmul.f32 %v273, %v4164
        %v4170 = vmul.f32 %v274, %v4164
        %v4171 = vmul.f32 %v275, %v4164
        %v4172 = vmul.f32 %v276, %v4164
        %v4173 = vmul.f32 %v277, %v4164
        %v4174 = vmul.f32 %v278, %v4164
        %v4175 = vmul.f32 %v279, %v4164
        %v4176 = vmul.f32 %v280, %v4164
        %v4177 = vmul.f32 %v281, %v4164
        %v4178 = vmul.f32 %v282, %v4164
        %v4179 = vmul.f32 %v283, %v4164
        %v4180 = vmul.f32 %v284, %v4164
        %v4181 = vmul.f32 %v285, %v4164
        %v4182 = vmul.f32 %v286, %v4164
        %v4183 = vmul.f32 %v287, %v4164
        %v4184 = vmul.f32 %v288, %v4164
        %v4185 = vmul.f32 %v289, %v4164
        %v4186 = vmul.f32 %v290, %v4164
        %v4187 = vmul.f32 %v291, %v4164
        %v4188 = vmul.f32 %v292, %v4164
        %v4189 = vmul.f32 %v293, %v4164
        %v4190 = vmul.f32 %v294, %v4164
        %v4191 = vmul.f32 %v295, %v4164
        %v4192 = vmul.f32 %v296, %v4164
        %v4193 = vmul.f32 %v297, %v4164
        %v4194 = vmul.f32 %v298, %v4164
        %v4195 = vmul.f32 %v299, %v4164
        %v4196 = vmul.f32 %v300, %v4164
        %v4229 = vrot.slane %v4165, 3
        %v4230 = vrot.slane %v4166, 3
        %v4231 = vrot.slane %v4167, 3
        %v4232 = vrot.slane %v4168, 3
        %v4233 = vrot.slane %v4169, 3
        %v4234 = vrot.slane %v4170, 3
        %v4235 = vrot.slane %v4171, 3
        %v4236 = vrot.slane %v4172, 3
        %v4237 = vrot.slane %v4173, 3
        %v4238 = vrot.slane %v4174, 3
        %v4239 = vrot.slane %v4175, 3
        %v4240 = vrot.slane %v4176, 3
        %v4241 = vrot.slane %v4177, 3
        %v4242 = vrot.slane %v4178, 3
        %v4243 = vrot.slane %v4179, 3
        %v4244 = vrot.slane %v4180, 3
        %v4245 = vrot.slane %v4181, 3
        %v4246 = vrot.slane %v4182, 3
        %v4247 = vrot.slane %v4183, 3
        %v4248 = vrot.slane %v4184, 3
        %v4249 = vrot.slane %v4185, 3
        %v4250 = vrot.slane %v4186, 3
        %v4251 = vrot.slane %v4187, 3
        %v4252 = vrot.slane %v4188, 3
        %v4253 = vrot.slane %v4189, 3
        %v4254 = vrot.slane %v4190, 3
        %v4255 = vrot.slane %v4191, 3
        %v4256 = vrot.slane %v4192, 3
        %v4257 = vrot.slane %v4193, 3
        %v4258 = vrot.slane %v4194, 3
        %v4259 = vrot.slane %v4195, 3
        %v4260 = vrot.slane %v4196, 3
        %v4293 = vadd.f32 %v4131, %v4229
        %v4294 = vadd.f32 %v4132, %v4230
        %v4295 = vadd.f32 %v4133, %v4231
        %v4296 = vadd.f32 %v4134, %v4232
        %v4297 = vadd.f32 %v4135, %v4233
        %v4298 = vadd.f32 %v4136, %v4234
        %v4299 = vadd.f32 %v4137, %v4235
        %v4300 = vadd.f32 %v4138, %v4236
        %v4301 = vadd.f32 %v4139, %v4237
        %v4302 = vadd.f32 %v4140, %v4238
        %v4303 = vadd.f32 %v4141, %v4239
        %v4304 = vadd.f32 %v4142, %v4240
        %v4305 = vadd.f32 %v4143, %v4241
        %v4306 = vadd.f32 %v4144, %v4242
        %v4307 = vadd.f32 %v4145, %v4243
        %v4308 = vadd.f32 %v4146, %v4244
        %v4309 = vadd.f32 %v4147, %v4245
        %v4310 = vadd.f32 %v4148, %v4246
        %v4311 = vadd.f32 %v4149, %v4247
        %v4312 = vadd.f32 %v4150, %v4248
        %v4313 = vadd.f32 %v4151, %v4249
        %v4314 = vadd.f32 %v4152, %v4250
        %v4315 = vadd.f32 %v4153, %v4251
        %v4316 = vadd.f32 %v4154, %v4252
        %v4317 = vadd.f32 %v4155, %v4253
        %v4318 = vadd.f32 %v4156, %v4254
        %v4319 = vadd.f32 %v4157, %v4255
        %v4320 = vadd.f32 %v4158, %v4256
        %v4321 = vadd.f32 %v4159, %v4257
        %v4322 = vadd.f32 %v4160, %v4258
        %v4323 = vadd.f32 %v4161, %v4259
        %v4324 = vadd.f32 %v4162, %v4260
        %s4325 = sld [smem:[#allocation8 + $0x1c]]
        %v4326 = vstv %s4325
        %v4327 = vmul.f32 %v269, %v4326
        %v4328 = vmul.f32 %v270, %v4326
        %v4329 = vmul.f32 %v271, %v4326
        %v4330 = vmul.f32 %v272, %v4326
        %v4331 = vmul.f32 %v273, %v4326
        %v4332 = vmul.f32 %v274, %v4326
        %v4333 = vmul.f32 %v275, %v4326
        %v4334 = vmul.f32 %v276, %v4326
        %v4335 = vmul.f32 %v277, %v4326
        %v4336 = vmul.f32 %v278, %v4326
        %v4337 = vmul.f32 %v279, %v4326
        %v4338 = vmul.f32 %v280, %v4326
        %v4339 = vmul.f32 %v281, %v4326
        %v4340 = vmul.f32 %v282, %v4326
        %v4341 = vmul.f32 %v283, %v4326
        %v4342 = vmul.f32 %v284, %v4326
        %v4343 = vmul.f32 %v285, %v4326
        %v4344 = vmul.f32 %v286, %v4326
        %v4345 = vmul.f32 %v287, %v4326
        %v4346 = vmul.f32 %v288, %v4326
        %v4347 = vmul.f32 %v289, %v4326
        %v4348 = vmul.f32 %v290, %v4326
        %v4349 = vmul.f32 %v291, %v4326
        %v4350 = vmul.f32 %v292, %v4326
        %v4351 = vmul.f32 %v293, %v4326
        %v4352 = vmul.f32 %v294, %v4326
        %v4353 = vmul.f32 %v295, %v4326
        %v4354 = vmul.f32 %v296, %v4326
        %v4355 = vmul.f32 %v297, %v4326
        %v4356 = vmul.f32 %v298, %v4326
        %v4357 = vmul.f32 %v299, %v4326
        %v4358 = vmul.f32 %v300, %v4326
        %v4391 = vrot.slane %v4327, 4
        %v4392 = vrot.slane %v4328, 4
        %v4393 = vrot.slane %v4329, 4
        %v4394 = vrot.slane %v4330, 4
        %v4395 = vrot.slane %v4331, 4
        %v4396 = vrot.slane %v4332, 4
        %v4397 = vrot.slane %v4333, 4
        %v4398 = vrot.slane %v4334, 4
        %v4399 = vrot.slane %v4335, 4
        %v4400 = vrot.slane %v4336, 4
        %v4401 = vrot.slane %v4337, 4
        %v4402 = vrot.slane %v4338, 4
        %v4403 = vrot.slane %v4339, 4
        %v4404 = vrot.slane %v4340, 4
        %v4405 = vrot.slane %v4341, 4
        %v4406 = vrot.slane %v4342, 4
        %v4407 = vrot.slane %v4343, 4
        %v4408 = vrot.slane %v4344, 4
        %v4409 = vrot.slane %v4345, 4
        %v4410 = vrot.slane %v4346, 4
        %v4411 = vrot.slane %v4347, 4
        %v4412 = vrot.slane %v4348, 4
        %v4413 = vrot.slane %v4349, 4
        %v4414 = vrot.slane %v4350, 4
        %v4415 = vrot.slane %v4351, 4
        %v4416 = vrot.slane %v4352, 4
        %v4417 = vrot.slane %v4353, 4
        %v4418 = vrot.slane %v4354, 4
        %v4419 = vrot.slane %v4355, 4
        %v4420 = vrot.slane %v4356, 4
        %v4421 = vrot.slane %v4357, 4
        %v4422 = vrot.slane %v4358, 4
        %v4455 = vadd.f32 %v4293, %v4391
        %v4456 = vadd.f32 %v4294, %v4392
        %v4457 = vadd.f32 %v4295, %v4393
        %v4458 = vadd.f32 %v4296, %v4394
        %v4459 = vadd.f32 %v4297, %v4395
        %v4460 = vadd.f32 %v4298, %v4396
        %v4461 = vadd.f32 %v4299, %v4397
        %v4462 = vadd.f32 %v4300, %v4398
        %v4463 = vadd.f32 %v4301, %v4399
        %v4464 = vadd.f32 %v4302, %v4400
        %v4465 = vadd.f32 %v4303, %v4401
        %v4466 = vadd.f32 %v4304, %v4402
        %v4467 = vadd.f32 %v4305, %v4403
        %v4468 = vadd.f32 %v4306, %v4404
        %v4469 = vadd.f32 %v4307, %v4405
        %v4470 = vadd.f32 %v4308, %v4406
        %v4471 = vadd.f32 %v4309, %v4407
        %v4472 = vadd.f32 %v4310, %v4408
        %v4473 = vadd.f32 %v4311, %v4409
        %v4474 = vadd.f32 %v4312, %v4410
        %v4475 = vadd.f32 %v4313, %v4411
        %v4476 = vadd.f32 %v4314, %v4412
        %v4477 = vadd.f32 %v4315, %v4413
        %v4478 = vadd.f32 %v4316, %v4414
        %v4479 = vadd.f32 %v4317, %v4415
        %v4480 = vadd.f32 %v4318, %v4416
        %v4481 = vadd.f32 %v4319, %v4417
        %v4482 = vadd.f32 %v4320, %v4418
        %v4483 = vadd.f32 %v4321, %v4419
        %v4484 = vadd.f32 %v4322, %v4420
        %v4485 = vadd.f32 %v4323, %v4421
        %v4486 = vadd.f32 %v4324, %v4422
        %s4487 = sld [smem:[#allocation8 + $0x1d]]
        %v4488 = vstv %s4487
        %v4489 = vmul.f32 %v269, %v4488
        %v4490 = vmul.f32 %v270, %v4488
        %v4491 = vmul.f32 %v271, %v4488
        %v4492 = vmul.f32 %v272, %v4488
        %v4493 = vmul.f32 %v273, %v4488
        %v4494 = vmul.f32 %v274, %v4488
        %v4495 = vmul.f32 %v275, %v4488
        %v4496 = vmul.f32 %v276, %v4488
        %v4497 = vmul.f32 %v277, %v4488
        %v4498 = vmul.f32 %v278, %v4488
        %v4499 = vmul.f32 %v279, %v4488
        %v4500 = vmul.f32 %v280, %v4488
        %v4501 = vmul.f32 %v281, %v4488
        %v4502 = vmul.f32 %v282, %v4488
        %v4503 = vmul.f32 %v283, %v4488
        %v4504 = vmul.f32 %v284, %v4488
        %v4505 = vmul.f32 %v285, %v4488
        %v4506 = vmul.f32 %v286, %v4488
        %v4507 = vmul.f32 %v287, %v4488
        %v4508 = vmul.f32 %v288, %v4488
        %v4509 = vmul.f32 %v289, %v4488
        %v4510 = vmul.f32 %v290, %v4488
        %v4511 = vmul.f32 %v291, %v4488
        %v4512 = vmul.f32 %v292, %v4488
        %v4513 = vmul.f32 %v293, %v4488
        %v4514 = vmul.f32 %v294, %v4488
        %v4515 = vmul.f32 %v295, %v4488
        %v4516 = vmul.f32 %v296, %v4488
        %v4517 = vmul.f32 %v297, %v4488
        %v4518 = vmul.f32 %v298, %v4488
        %v4519 = vmul.f32 %v299, %v4488
        %v4520 = vmul.f32 %v300, %v4488
        %v4553 = vrot.slane %v4489, 5
        %v4554 = vrot.slane %v4490, 5
        %v4555 = vrot.slane %v4491, 5
        %v4556 = vrot.slane %v4492, 5
        %v4557 = vrot.slane %v4493, 5
        %v4558 = vrot.slane %v4494, 5
        %v4559 = vrot.slane %v4495, 5
        %v4560 = vrot.slane %v4496, 5
        %v4561 = vrot.slane %v4497, 5
        %v4562 = vrot.slane %v4498, 5
        %v4563 = vrot.slane %v4499, 5
        %v4564 = vrot.slane %v4500, 5
        %v4565 = vrot.slane %v4501, 5
        %v4566 = vrot.slane %v4502, 5
        %v4567 = vrot.slane %v4503, 5
        %v4568 = vrot.slane %v4504, 5
        %v4569 = vrot.slane %v4505, 5
        %v4570 = vrot.slane %v4506, 5
        %v4571 = vrot.slane %v4507, 5
        %v4572 = vrot.slane %v4508, 5
        %v4573 = vrot.slane %v4509, 5
        %v4574 = vrot.slane %v4510, 5
        %v4575 = vrot.slane %v4511, 5
        %v4576 = vrot.slane %v4512, 5
        %v4577 = vrot.slane %v4513, 5
        %v4578 = vrot.slane %v4514, 5
        %v4579 = vrot.slane %v4515, 5
        %v4580 = vrot.slane %v4516, 5
        %v4581 = vrot.slane %v4517, 5
        %v4582 = vrot.slane %v4518, 5
        %v4583 = vrot.slane %v4519, 5
        %v4584 = vrot.slane %v4520, 5
        %v4617 = vadd.f32 %v4455, %v4553
        %v4618 = vadd.f32 %v4456, %v4554
        %v4619 = vadd.f32 %v4457, %v4555
        %v4620 = vadd.f32 %v4458, %v4556
        %v4621 = vadd.f32 %v4459, %v4557
        %v4622 = vadd.f32 %v4460, %v4558
        %v4623 = vadd.f32 %v4461, %v4559
        %v4624 = vadd.f32 %v4462, %v4560
        %v4625 = vadd.f32 %v4463, %v4561
        %v4626 = vadd.f32 %v4464, %v4562
        %v4627 = vadd.f32 %v4465, %v4563
        %v4628 = vadd.f32 %v4466, %v4564
        %v4629 = vadd.f32 %v4467, %v4565
        %v4630 = vadd.f32 %v4468, %v4566
        %v4631 = vadd.f32 %v4469, %v4567
        %v4632 = vadd.f32 %v4470, %v4568
        %v4633 = vadd.f32 %v4471, %v4569
        %v4634 = vadd.f32 %v4472, %v4570
        %v4635 = vadd.f32 %v4473, %v4571
        %v4636 = vadd.f32 %v4474, %v4572
        %v4637 = vadd.f32 %v4475, %v4573
        %v4638 = vadd.f32 %v4476, %v4574
        %v4639 = vadd.f32 %v4477, %v4575
        %v4640 = vadd.f32 %v4478, %v4576
        %v4641 = vadd.f32 %v4479, %v4577
        %v4642 = vadd.f32 %v4480, %v4578
        %v4643 = vadd.f32 %v4481, %v4579
        %v4644 = vadd.f32 %v4482, %v4580
        %v4645 = vadd.f32 %v4483, %v4581
        %v4646 = vadd.f32 %v4484, %v4582
        %v4647 = vadd.f32 %v4485, %v4583
        %v4648 = vadd.f32 %v4486, %v4584
        %s4649 = sld [smem:[#allocation8 + $0x1e]]
        %v4650 = vstv %s4649
        %v4651 = vmul.f32 %v269, %v4650
        %v4652 = vmul.f32 %v270, %v4650
        %v4653 = vmul.f32 %v271, %v4650
        %v4654 = vmul.f32 %v272, %v4650
        %v4655 = vmul.f32 %v273, %v4650
        %v4656 = vmul.f32 %v274, %v4650
        %v4657 = vmul.f32 %v275, %v4650
        %v4658 = vmul.f32 %v276, %v4650
        %v4659 = vmul.f32 %v277, %v4650
        %v4660 = vmul.f32 %v278, %v4650
        %v4661 = vmul.f32 %v279, %v4650
        %v4662 = vmul.f32 %v280, %v4650
        %v4663 = vmul.f32 %v281, %v4650
        %v4664 = vmul.f32 %v282, %v4650
        %v4665 = vmul.f32 %v283, %v4650
        %v4666 = vmul.f32 %v284, %v4650
        %v4667 = vmul.f32 %v285, %v4650
        %v4668 = vmul.f32 %v286, %v4650
        %v4669 = vmul.f32 %v287, %v4650
        %v4670 = vmul.f32 %v288, %v4650
        %v4671 = vmul.f32 %v289, %v4650
        %v4672 = vmul.f32 %v290, %v4650
        %v4673 = vmul.f32 %v291, %v4650
        %v4674 = vmul.f32 %v292, %v4650
        %v4675 = vmul.f32 %v293, %v4650
        %v4676 = vmul.f32 %v294, %v4650
        %v4677 = vmul.f32 %v295, %v4650
        %v4678 = vmul.f32 %v296, %v4650
        %v4679 = vmul.f32 %v297, %v4650
        %v4680 = vmul.f32 %v298, %v4650
        %v4681 = vmul.f32 %v299, %v4650
        %v4682 = vmul.f32 %v300, %v4650
        %v4715 = vrot.slane %v4651, 6
        %v4716 = vrot.slane %v4652, 6
        %v4717 = vrot.slane %v4653, 6
        %v4718 = vrot.slane %v4654, 6
        %v4719 = vrot.slane %v4655, 6
        %v4720 = vrot.slane %v4656, 6
        %v4721 = vrot.slane %v4657, 6
        %v4722 = vrot.slane %v4658, 6
        %v4723 = vrot.slane %v4659, 6
        %v4724 = vrot.slane %v4660, 6
        %v4725 = vrot.slane %v4661, 6
        %v4726 = vrot.slane %v4662, 6
        %v4727 = vrot.slane %v4663, 6
        %v4728 = vrot.slane %v4664, 6
        %v4729 = vrot.slane %v4665, 6
        %v4730 = vrot.slane %v4666, 6
        %v4731 = vrot.slane %v4667, 6
        %v4732 = vrot.slane %v4668, 6
        %v4733 = vrot.slane %v4669, 6
        %v4734 = vrot.slane %v4670, 6
        %v4735 = vrot.slane %v4671, 6
        %v4736 = vrot.slane %v4672, 6
        %v4737 = vrot.slane %v4673, 6
        %v4738 = vrot.slane %v4674, 6
        %v4739 = vrot.slane %v4675, 6
        %v4740 = vrot.slane %v4676, 6
        %v4741 = vrot.slane %v4677, 6
        %v4742 = vrot.slane %v4678, 6
        %v4743 = vrot.slane %v4679, 6
        %v4744 = vrot.slane %v4680, 6
        %v4745 = vrot.slane %v4681, 6
        %v4746 = vrot.slane %v4682, 6
        %v4779 = vadd.f32 %v4617, %v4715
        %v4780 = vadd.f32 %v4618, %v4716
        %v4781 = vadd.f32 %v4619, %v4717
        %v4782 = vadd.f32 %v4620, %v4718
        %v4783 = vadd.f32 %v4621, %v4719
        %v4784 = vadd.f32 %v4622, %v4720
        %v4785 = vadd.f32 %v4623, %v4721
        %v4786 = vadd.f32 %v4624, %v4722
        %v4787 = vadd.f32 %v4625, %v4723
        %v4788 = vadd.f32 %v4626, %v4724
        %v4789 = vadd.f32 %v4627, %v4725
        %v4790 = vadd.f32 %v4628, %v4726
        %v4791 = vadd.f32 %v4629, %v4727
        %v4792 = vadd.f32 %v4630, %v4728
        %v4793 = vadd.f32 %v4631, %v4729
        %v4794 = vadd.f32 %v4632, %v4730
        %v4795 = vadd.f32 %v4633, %v4731
        %v4796 = vadd.f32 %v4634, %v4732
        %v4797 = vadd.f32 %v4635, %v4733
        %v4798 = vadd.f32 %v4636, %v4734
        %v4799 = vadd.f32 %v4637, %v4735
        %v4800 = vadd.f32 %v4638, %v4736
        %v4801 = vadd.f32 %v4639, %v4737
        %v4802 = vadd.f32 %v4640, %v4738
        %v4803 = vadd.f32 %v4641, %v4739
        %v4804 = vadd.f32 %v4642, %v4740
        %v4805 = vadd.f32 %v4643, %v4741
        %v4806 = vadd.f32 %v4644, %v4742
        %v4807 = vadd.f32 %v4645, %v4743
        %v4808 = vadd.f32 %v4646, %v4744
        %v4809 = vadd.f32 %v4647, %v4745
        %v4810 = vadd.f32 %v4648, %v4746
        %s4811 = sld [smem:[#allocation8 + $0x1f]]
        %v4812 = vstv %s4811
        %v4813 = vmul.f32 %v269, %v4812
        %v4814 = vmul.f32 %v270, %v4812
        %v4815 = vmul.f32 %v271, %v4812
        %v4816 = vmul.f32 %v272, %v4812
        %v4817 = vmul.f32 %v273, %v4812
        %v4818 = vmul.f32 %v274, %v4812
        %v4819 = vmul.f32 %v275, %v4812
        %v4820 = vmul.f32 %v276, %v4812
        %v4821 = vmul.f32 %v277, %v4812
        %v4822 = vmul.f32 %v278, %v4812
        %v4823 = vmul.f32 %v279, %v4812
        %v4824 = vmul.f32 %v280, %v4812
        %v4825 = vmul.f32 %v281, %v4812
        %v4826 = vmul.f32 %v282, %v4812
        %v4827 = vmul.f32 %v283, %v4812
        %v4828 = vmul.f32 %v284, %v4812
        %v4829 = vmul.f32 %v285, %v4812
        %v4830 = vmul.f32 %v286, %v4812
        %v4831 = vmul.f32 %v287, %v4812
        %v4832 = vmul.f32 %v288, %v4812
        %v4833 = vmul.f32 %v289, %v4812
        %v4834 = vmul.f32 %v290, %v4812
        %v4835 = vmul.f32 %v291, %v4812
        %v4836 = vmul.f32 %v292, %v4812
        %v4837 = vmul.f32 %v293, %v4812
        %v4838 = vmul.f32 %v294, %v4812
        %v4839 = vmul.f32 %v295, %v4812
        %v4840 = vmul.f32 %v296, %v4812
        %v4841 = vmul.f32 %v297, %v4812
        %v4842 = vmul.f32 %v298, %v4812
        %v4843 = vmul.f32 %v299, %v4812
        %v4844 = vmul.f32 %v300, %v4812
        %v4877 = vrot.slane %v4813, 7
        %v4878 = vrot.slane %v4814, 7
        %v4879 = vrot.slane %v4815, 7
        %v4880 = vrot.slane %v4816, 7
        %v4881 = vrot.slane %v4817, 7
        %v4882 = vrot.slane %v4818, 7
        %v4883 = vrot.slane %v4819, 7
        %v4884 = vrot.slane %v4820, 7
        %v4885 = vrot.slane %v4821, 7
        %v4886 = vrot.slane %v4822, 7
        %v4887 = vrot.slane %v4823, 7
        %v4888 = vrot.slane %v4824, 7
        %v4889 = vrot.slane %v4825, 7
        %v4890 = vrot.slane %v4826, 7
        %v4891 = vrot.slane %v4827, 7
        %v4892 = vrot.slane %v4828, 7
        %v4893 = vrot.slane %v4829, 7
        %v4894 = vrot.slane %v4830, 7
        %v4895 = vrot.slane %v4831, 7
        %v4896 = vrot.slane %v4832, 7
        %v4897 = vrot.slane %v4833, 7
        %v4898 = vrot.slane %v4834, 7
        %v4899 = vrot.slane %v4835, 7
        %v4900 = vrot.slane %v4836, 7
        %v4901 = vrot.slane %v4837, 7
        %v4902 = vrot.slane %v4838, 7
        %v4903 = vrot.slane %v4839, 7
        %v4904 = vrot.slane %v4840, 7
        %v4905 = vrot.slane %v4841, 7
        %v4906 = vrot.slane %v4842, 7
        %v4907 = vrot.slane %v4843, 7
        %v4908 = vrot.slane %v4844, 7
        %v4941 = vadd.f32 %v4779, %v4877
        %v4942 = vadd.f32 %v4780, %v4878
        %v4943 = vadd.f32 %v4781, %v4879
        %v4944 = vadd.f32 %v4782, %v4880
        %v4945 = vadd.f32 %v4783, %v4881
        %v4946 = vadd.f32 %v4784, %v4882
        %v4947 = vadd.f32 %v4785, %v4883
        %v4948 = vadd.f32 %v4786, %v4884
        %v4949 = vadd.f32 %v4787, %v4885
        %v4950 = vadd.f32 %v4788, %v4886
        %v4951 = vadd.f32 %v4789, %v4887
        %v4952 = vadd.f32 %v4790, %v4888
        %v4953 = vadd.f32 %v4791, %v4889
        %v4954 = vadd.f32 %v4792, %v4890
        %v4955 = vadd.f32 %v4793, %v4891
        %v4956 = vadd.f32 %v4794, %v4892
        %v4957 = vadd.f32 %v4795, %v4893
        %v4958 = vadd.f32 %v4796, %v4894
        %v4959 = vadd.f32 %v4797, %v4895
        %v4960 = vadd.f32 %v4798, %v4896
        %v4961 = vadd.f32 %v4799, %v4897
        %v4962 = vadd.f32 %v4800, %v4898
        %v4963 = vadd.f32 %v4801, %v4899
        %v4964 = vadd.f32 %v4802, %v4900
        %v4965 = vadd.f32 %v4803, %v4901
        %v4966 = vadd.f32 %v4804, %v4902
        %v4967 = vadd.f32 %v4805, %v4903
        %v4968 = vadd.f32 %v4806, %v4904
        %v4969 = vadd.f32 %v4807, %v4905
        %v4970 = vadd.f32 %v4808, %v4906
        %v4971 = vadd.f32 %v4809, %v4907
        %v4972 = vadd.f32 %v4810, %v4908
        %v4973 = vld [vmem:[%s203] sm:$0xff]
        %v4974 = vld [vmem:[%s203 + $0x8] sm:$0xff]
        %v4975 = vld [vmem:[%s203 + $0x10] sm:$0xff]
        %v4976 = vld [vmem:[%s203 + $0x18] sm:$0xff]
        %v4977 = vld [vmem:[%s203 + $0x20] sm:$0xff]
        %v4978 = vld [vmem:[%s203 + $0x28] sm:$0xff]
        %v4979 = vld [vmem:[%s203 + $0x30] sm:$0xff]
        %v4980 = vld [vmem:[%s203 + $0x38] sm:$0xff]
        %v4981 = vld [vmem:[%s203 + $0x40] sm:$0xff]
        %v4982 = vld [vmem:[%s203 + $0x48] sm:$0xff]
        %v4983 = vld [vmem:[%s203 + $0x50] sm:$0xff]
        %v4984 = vld [vmem:[%s203 + $0x58] sm:$0xff]
        %v4985 = vld [vmem:[%s203 + $0x60] sm:$0xff]
        %v4986 = vld [vmem:[%s203 + $0x68] sm:$0xff]
        %v4987 = vld [vmem:[%s203 + $0x70] sm:$0xff]
        %v4988 = vld [vmem:[%s203 + $0x78] sm:$0xff]
        %s4989 = sld [smem:[#allocation8 + $0x20]]
        %v4990 = vstv %s4989
        %v4991 = vmul.f32 %v4973, %v4990
        %v4992 = vmul.f32 %v4974, %v4990
        %v4993 = vmul.f32 %v4975, %v4990
        %v4994 = vmul.f32 %v4976, %v4990
        %v4995 = vmul.f32 %v4977, %v4990
        %v4996 = vmul.f32 %v4978, %v4990
        %v4997 = vmul.f32 %v4979, %v4990
        %v4998 = vmul.f32 %v4980, %v4990
        %v4999 = vmul.f32 %v4981, %v4990
        %v5000 = vmul.f32 %v4982, %v4990
        %v5001 = vmul.f32 %v4983, %v4990
        %v5002 = vmul.f32 %v4984, %v4990
        %v5003 = vmul.f32 %v4985, %v4990
        %v5004 = vmul.f32 %v4986, %v4990
        %v5005 = vmul.f32 %v4987, %v4990
        %v5006 = vmul.f32 %v4988, %v4990
        %s5007 = sld [smem:[#allocation8 + $0x21]]
        %v5008 = vstv %s5007
        %v5009 = vmul.f32 %v4973, %v5008
        %v5010 = vmul.f32 %v4974, %v5008
        %v5011 = vmul.f32 %v4975, %v5008
        %v5012 = vmul.f32 %v4976, %v5008
        %v5013 = vmul.f32 %v4977, %v5008
        %v5014 = vmul.f32 %v4978, %v5008
        %v5015 = vmul.f32 %v4979, %v5008
        %v5016 = vmul.f32 %v4980, %v5008
        %v5017 = vmul.f32 %v4981, %v5008
        %v5018 = vmul.f32 %v4982, %v5008
        %v5019 = vmul.f32 %v4983, %v5008
        %v5020 = vmul.f32 %v4984, %v5008
        %v5021 = vmul.f32 %v4985, %v5008
        %v5022 = vmul.f32 %v4986, %v5008
        %v5023 = vmul.f32 %v4987, %v5008
        %v5024 = vmul.f32 %v4988, %v5008
        %v5041 = vrot.slane %v5009, 5
        %v5042 = vrot.slane %v5041, 4
        %v5043 = vrot.slane %v5010, 5
        %v5044 = vrot.slane %v5043, 4
        %v5045 = vrot.slane %v5011, 5
        %v5046 = vrot.slane %v5045, 4
        %v5047 = vrot.slane %v5012, 5
        %v5048 = vrot.slane %v5047, 4
        %v5049 = vrot.slane %v5013, 5
        %v5050 = vrot.slane %v5049, 4
        %v5051 = vrot.slane %v5014, 5
        %v5052 = vrot.slane %v5051, 4
        %v5053 = vrot.slane %v5015, 5
        %v5054 = vrot.slane %v5053, 4
        %v5055 = vrot.slane %v5016, 5
        %v5056 = vrot.slane %v5055, 4
        %v5057 = vrot.slane %v5017, 5
        %v5058 = vrot.slane %v5057, 4
        %v5059 = vrot.slane %v5018, 5
        %v5060 = vrot.slane %v5059, 4
        %v5061 = vrot.slane %v5019, 5
        %v5062 = vrot.slane %v5061, 4
        %v5063 = vrot.slane %v5020, 5
        %v5064 = vrot.slane %v5063, 4
        %v5065 = vrot.slane %v5021, 5
        %v5066 = vrot.slane %v5065, 4
        %v5067 = vrot.slane %v5022, 5
        %v5068 = vrot.slane %v5067, 4
        %v5069 = vrot.slane %v5023, 5
        %v5070 = vrot.slane %v5069, 4
        %v5071 = vrot.slane %v5024, 5
        %v5072 = vrot.slane %v5071, 4
        %v5089 = vadd.f32 %v4991, %v5042
        %v5090 = vadd.f32 %v4992, %v5044
        %v5091 = vadd.f32 %v4993, %v5046
        %v5092 = vadd.f32 %v4994, %v5048
        %v5093 = vadd.f32 %v4995, %v5050
        %v5094 = vadd.f32 %v4996, %v5052
        %v5095 = vadd.f32 %v4997, %v5054
        %v5096 = vadd.f32 %v4998, %v5056
        %v5097 = vadd.f32 %v4999, %v5058
        %v5098 = vadd.f32 %v5000, %v5060
        %v5099 = vadd.f32 %v5001, %v5062
        %v5100 = vadd.f32 %v5002, %v5064
        %v5101 = vadd.f32 %v5003, %v5066
        %v5102 = vadd.f32 %v5004, %v5068
        %v5103 = vadd.f32 %v5005, %v5070
        %v5104 = vadd.f32 %v5006, %v5072
        %s5105 = sld [smem:[#allocation8 + $0x22]]
        %v5106 = vstv %s5105
        %v5107 = vmul.f32 %v4973, %v5106
        %v5108 = vmul.f32 %v4974, %v5106
        %v5109 = vmul.f32 %v4975, %v5106
        %v5110 = vmul.f32 %v4976, %v5106
        %v5111 = vmul.f32 %v4977, %v5106
        %v5112 = vmul.f32 %v4978, %v5106
        %v5113 = vmul.f32 %v4979, %v5106
        %v5114 = vmul.f32 %v4980, %v5106
        %v5115 = vmul.f32 %v4981, %v5106
        %v5116 = vmul.f32 %v4982, %v5106
        %v5117 = vmul.f32 %v4983, %v5106
        %v5118 = vmul.f32 %v4984, %v5106
        %v5119 = vmul.f32 %v4985, %v5106
        %v5120 = vmul.f32 %v4986, %v5106
        %v5121 = vmul.f32 %v4987, %v5106
        %v5122 = vmul.f32 %v4988, %v5106
        %v5139 = vrot.slane %v5107, 6
        %v5140 = vrot.slane %v5139, 4
        %v5141 = vrot.slane %v5108, 6
        %v5142 = vrot.slane %v5141, 4
        %v5143 = vrot.slane %v5109, 6
        %v5144 = vrot.slane %v5143, 4
        %v5145 = vrot.slane %v5110, 6
        %v5146 = vrot.slane %v5145, 4
        %v5147 = vrot.slane %v5111, 6
        %v5148 = vrot.slane %v5147, 4
        %v5149 = vrot.slane %v5112, 6
        %v5150 = vrot.slane %v5149, 4
        %v5151 = vrot.slane %v5113, 6
        %v5152 = vrot.slane %v5151, 4
        %v5153 = vrot.slane %v5114, 6
        %v5154 = vrot.slane %v5153, 4
        %v5155 = vrot.slane %v5115, 6
        %v5156 = vrot.slane %v5155, 4
        %v5157 = vrot.slane %v5116, 6
        %v5158 = vrot.slane %v5157, 4
        %v5159 = vrot.slane %v5117, 6
        %v5160 = vrot.slane %v5159, 4
        %v5161 = vrot.slane %v5118, 6
        %v5162 = vrot.slane %v5161, 4
        %v5163 = vrot.slane %v5119, 6
        %v5164 = vrot.slane %v5163, 4
        %v5165 = vrot.slane %v5120, 6
        %v5166 = vrot.slane %v5165, 4
        %v5167 = vrot.slane %v5121, 6
        %v5168 = vrot.slane %v5167, 4
        %v5169 = vrot.slane %v5122, 6
        %v5170 = vrot.slane %v5169, 4
        %v5187 = vadd.f32 %v5089, %v5140
        %v5188 = vadd.f32 %v5090, %v5142
        %v5189 = vadd.f32 %v5091, %v5144
        %v5190 = vadd.f32 %v5092, %v5146
        %v5191 = vadd.f32 %v5093, %v5148
        %v5192 = vadd.f32 %v5094, %v5150
        %v5193 = vadd.f32 %v5095, %v5152
        %v5194 = vadd.f32 %v5096, %v5154
        %v5195 = vadd.f32 %v5097, %v5156
        %v5196 = vadd.f32 %v5098, %v5158
        %v5197 = vadd.f32 %v5099, %v5160
        %v5198 = vadd.f32 %v5100, %v5162
        %v5199 = vadd.f32 %v5101, %v5164
        %v5200 = vadd.f32 %v5102, %v5166
        %v5201 = vadd.f32 %v5103, %v5168
        %v5202 = vadd.f32 %v5104, %v5170
        %s5203 = sld [smem:[#allocation8 + $0x23]]
        %v5204 = vstv %s5203
        %v5205 = vmul.f32 %v4973, %v5204
        %v5206 = vmul.f32 %v4974, %v5204
        %v5207 = vmul.f32 %v4975, %v5204
        %v5208 = vmul.f32 %v4976, %v5204
        %v5209 = vmul.f32 %v4977, %v5204
        %v5210 = vmul.f32 %v4978, %v5204
        %v5211 = vmul.f32 %v4979, %v5204
        %v5212 = vmul.f32 %v4980, %v5204
        %v5213 = vmul.f32 %v4981, %v5204
        %v5214 = vmul.f32 %v4982, %v5204
        %v5215 = vmul.f32 %v4983, %v5204
        %v5216 = vmul.f32 %v4984, %v5204
        %v5217 = vmul.f32 %v4985, %v5204
        %v5218 = vmul.f32 %v4986, %v5204
        %v5219 = vmul.f32 %v4987, %v5204
        %v5220 = vmul.f32 %v4988, %v5204
        %v5237 = vrot.slane %v5205, 7
        %v5238 = vrot.slane %v5237, 4
        %v5239 = vrot.slane %v5206, 7
        %v5240 = vrot.slane %v5239, 4
        %v5241 = vrot.slane %v5207, 7
        %v5242 = vrot.slane %v5241, 4
        %v5243 = vrot.slane %v5208, 7
        %v5244 = vrot.slane %v5243, 4
        %v5245 = vrot.slane %v5209, 7
        %v5246 = vrot.slane %v5245, 4
        %v5247 = vrot.slane %v5210, 7
        %v5248 = vrot.slane %v5247, 4
        %v5249 = vrot.slane %v5211, 7
        %v5250 = vrot.slane %v5249, 4
        %v5251 = vrot.slane %v5212, 7
        %v5252 = vrot.slane %v5251, 4
        %v5253 = vrot.slane %v5213, 7
        %v5254 = vrot.slane %v5253, 4
        %v5255 = vrot.slane %v5214, 7
        %v5256 = vrot.slane %v5255, 4
        %v5257 = vrot.slane %v5215, 7
        %v5258 = vrot.slane %v5257, 4
        %v5259 = vrot.slane %v5216, 7
        %v5260 = vrot.slane %v5259, 4
        %v5261 = vrot.slane %v5217, 7
        %v5262 = vrot.slane %v5261, 4
        %v5263 = vrot.slane %v5218, 7
        %v5264 = vrot.slane %v5263, 4
        %v5265 = vrot.slane %v5219, 7
        %v5266 = vrot.slane %v5265, 4
        %v5267 = vrot.slane %v5220, 7
        %v5268 = vrot.slane %v5267, 4
        %v5285 = vadd.f32 %v5187, %v5238
        %v5286 = vadd.f32 %v5188, %v5240
        %v5287 = vadd.f32 %v5189, %v5242
        %v5288 = vadd.f32 %v5190, %v5244
        %v5289 = vadd.f32 %v5191, %v5246
        %v5290 = vadd.f32 %v5192, %v5248
        %v5291 = vadd.f32 %v5193, %v5250
        %v5292 = vadd.f32 %v5194, %v5252
        %v5293 = vadd.f32 %v5195, %v5254
        %v5294 = vadd.f32 %v5196, %v5256
        %v5295 = vadd.f32 %v5197, %v5258
        %v5296 = vadd.f32 %v5198, %v5260
        %v5297 = vadd.f32 %v5199, %v5262
        %v5298 = vadd.f32 %v5200, %v5264
        %v5299 = vadd.f32 %v5201, %v5266
        %v5300 = vadd.f32 %v5202, %v5268
        %s5301 = sld [smem:[#allocation8 + $0x24]]
        %v5302 = vstv %s5301
        %v5303 = vmul.f32 %v4973, %v5302
        %v5304 = vmul.f32 %v4974, %v5302
        %v5305 = vmul.f32 %v4975, %v5302
        %v5306 = vmul.f32 %v4976, %v5302
        %v5307 = vmul.f32 %v4977, %v5302
        %v5308 = vmul.f32 %v4978, %v5302
        %v5309 = vmul.f32 %v4979, %v5302
        %v5310 = vmul.f32 %v4980, %v5302
        %v5311 = vmul.f32 %v4981, %v5302
        %v5312 = vmul.f32 %v4982, %v5302
        %v5313 = vmul.f32 %v4983, %v5302
        %v5314 = vmul.f32 %v4984, %v5302
        %v5315 = vmul.f32 %v4985, %v5302
        %v5316 = vmul.f32 %v4986, %v5302
        %v5317 = vmul.f32 %v4987, %v5302
        %v5318 = vmul.f32 %v4988, %v5302
        %s5319 = sld [smem:[#allocation8 + $0x25]]
        %v5320 = vstv %s5319
        %v5321 = vmul.f32 %v4973, %v5320
        %v5322 = vmul.f32 %v4974, %v5320
        %v5323 = vmul.f32 %v4975, %v5320
        %v5324 = vmul.f32 %v4976, %v5320
        %v5325 = vmul.f32 %v4977, %v5320
        %v5326 = vmul.f32 %v4978, %v5320
        %v5327 = vmul.f32 %v4979, %v5320
        %v5328 = vmul.f32 %v4980, %v5320
        %v5329 = vmul.f32 %v4981, %v5320
        %v5330 = vmul.f32 %v4982, %v5320
        %v5331 = vmul.f32 %v4983, %v5320
        %v5332 = vmul.f32 %v4984, %v5320
        %v5333 = vmul.f32 %v4985, %v5320
        %v5334 = vmul.f32 %v4986, %v5320
        %v5335 = vmul.f32 %v4987, %v5320
        %v5336 = vmul.f32 %v4988, %v5320
        %v5353 = vrot.slane %v5321, 5
        %v5354 = vrot.slane %v5353, 4
        %v5355 = vrot.slane %v5322, 5
        %v5356 = vrot.slane %v5355, 4
        %v5357 = vrot.slane %v5323, 5
        %v5358 = vrot.slane %v5357, 4
        %v5359 = vrot.slane %v5324, 5
        %v5360 = vrot.slane %v5359, 4
        %v5361 = vrot.slane %v5325, 5
        %v5362 = vrot.slane %v5361, 4
        %v5363 = vrot.slane %v5326, 5
        %v5364 = vrot.slane %v5363, 4
        %v5365 = vrot.slane %v5327, 5
        %v5366 = vrot.slane %v5365, 4
        %v5367 = vrot.slane %v5328, 5
        %v5368 = vrot.slane %v5367, 4
        %v5369 = vrot.slane %v5329, 5
        %v5370 = vrot.slane %v5369, 4
        %v5371 = vrot.slane %v5330, 5
        %v5372 = vrot.slane %v5371, 4
        %v5373 = vrot.slane %v5331, 5
        %v5374 = vrot.slane %v5373, 4
        %v5375 = vrot.slane %v5332, 5
        %v5376 = vrot.slane %v5375, 4
        %v5377 = vrot.slane %v5333, 5
        %v5378 = vrot.slane %v5377, 4
        %v5379 = vrot.slane %v5334, 5
        %v5380 = vrot.slane %v5379, 4
        %v5381 = vrot.slane %v5335, 5
        %v5382 = vrot.slane %v5381, 4
        %v5383 = vrot.slane %v5336, 5
        %v5384 = vrot.slane %v5383, 4
        %v5401 = vadd.f32 %v5303, %v5354
        %v5402 = vadd.f32 %v5304, %v5356
        %v5403 = vadd.f32 %v5305, %v5358
        %v5404 = vadd.f32 %v5306, %v5360
        %v5405 = vadd.f32 %v5307, %v5362
        %v5406 = vadd.f32 %v5308, %v5364
        %v5407 = vadd.f32 %v5309, %v5366
        %v5408 = vadd.f32 %v5310, %v5368
        %v5409 = vadd.f32 %v5311, %v5370
        %v5410 = vadd.f32 %v5312, %v5372
        %v5411 = vadd.f32 %v5313, %v5374
        %v5412 = vadd.f32 %v5314, %v5376
        %v5413 = vadd.f32 %v5315, %v5378
        %v5414 = vadd.f32 %v5316, %v5380
        %v5415 = vadd.f32 %v5317, %v5382
        %v5416 = vadd.f32 %v5318, %v5384
        %s5417 = sld [smem:[#allocation8 + $0x26]]
        %v5418 = vstv %s5417
        %v5419 = vmul.f32 %v4973, %v5418
        %v5420 = vmul.f32 %v4974, %v5418
        %v5421 = vmul.f32 %v4975, %v5418
        %v5422 = vmul.f32 %v4976, %v5418
        %v5423 = vmul.f32 %v4977, %v5418
        %v5424 = vmul.f32 %v4978, %v5418
        %v5425 = vmul.f32 %v4979, %v5418
        %v5426 = vmul.f32 %v4980, %v5418
        %v5427 = vmul.f32 %v4981, %v5418
        %v5428 = vmul.f32 %v4982, %v5418
        %v5429 = vmul.f32 %v4983, %v5418
        %v5430 = vmul.f32 %v4984, %v5418
        %v5431 = vmul.f32 %v4985, %v5418
        %v5432 = vmul.f32 %v4986, %v5418
        %v5433 = vmul.f32 %v4987, %v5418
        %v5434 = vmul.f32 %v4988, %v5418
        %v5451 = vrot.slane %v5419, 6
        %v5452 = vrot.slane %v5451, 4
        %v5453 = vrot.slane %v5420, 6
        %v5454 = vrot.slane %v5453, 4
        %v5455 = vrot.slane %v5421, 6
        %v5456 = vrot.slane %v5455, 4
        %v5457 = vrot.slane %v5422, 6
        %v5458 = vrot.slane %v5457, 4
        %v5459 = vrot.slane %v5423, 6
        %v5460 = vrot.slane %v5459, 4
        %v5461 = vrot.slane %v5424, 6
        %v5462 = vrot.slane %v5461, 4
        %v5463 = vrot.slane %v5425, 6
        %v5464 = vrot.slane %v5463, 4
        %v5465 = vrot.slane %v5426, 6
        %v5466 = vrot.slane %v5465, 4
        %v5467 = vrot.slane %v5427, 6
        %v5468 = vrot.slane %v5467, 4
        %v5469 = vrot.slane %v5428, 6
        %v5470 = vrot.slane %v5469, 4
        %v5471 = vrot.slane %v5429, 6
        %v5472 = vrot.slane %v5471, 4
        %v5473 = vrot.slane %v5430, 6
        %v5474 = vrot.slane %v5473, 4
        %v5475 = vrot.slane %v5431, 6
        %v5476 = vrot.slane %v5475, 4
        %v5477 = vrot.slane %v5432, 6
        %v5478 = vrot.slane %v5477, 4
        %v5479 = vrot.slane %v5433, 6
        %v5480 = vrot.slane %v5479, 4
        %v5481 = vrot.slane %v5434, 6
        %v5482 = vrot.slane %v5481, 4
        %v5499 = vadd.f32 %v5401, %v5452
        %v5500 = vadd.f32 %v5402, %v5454
        %v5501 = vadd.f32 %v5403, %v5456
        %v5502 = vadd.f32 %v5404, %v5458
        %v5503 = vadd.f32 %v5405, %v5460
        %v5504 = vadd.f32 %v5406, %v5462
        %v5505 = vadd.f32 %v5407, %v5464
        %v5506 = vadd.f32 %v5408, %v5466
        %v5507 = vadd.f32 %v5409, %v5468
        %v5508 = vadd.f32 %v5410, %v5470
        %v5509 = vadd.f32 %v5411, %v5472
        %v5510 = vadd.f32 %v5412, %v5474
        %v5511 = vadd.f32 %v5413, %v5476
        %v5512 = vadd.f32 %v5414, %v5478
        %v5513 = vadd.f32 %v5415, %v5480
        %v5514 = vadd.f32 %v5416, %v5482
        %s5515 = sld [smem:[#allocation8 + $0x27]]
        %v5516 = vstv %s5515
        %v5517 = vmul.f32 %v4973, %v5516
        %v5518 = vmul.f32 %v4974, %v5516
        %v5519 = vmul.f32 %v4975, %v5516
        %v5520 = vmul.f32 %v4976, %v5516
        %v5521 = vmul.f32 %v4977, %v5516
        %v5522 = vmul.f32 %v4978, %v5516
        %v5523 = vmul.f32 %v4979, %v5516
        %v5524 = vmul.f32 %v4980, %v5516
        %v5525 = vmul.f32 %v4981, %v5516
        %v5526 = vmul.f32 %v4982, %v5516
        %v5527 = vmul.f32 %v4983, %v5516
        %v5528 = vmul.f32 %v4984, %v5516
        %v5529 = vmul.f32 %v4985, %v5516
        %v5530 = vmul.f32 %v4986, %v5516
        %v5531 = vmul.f32 %v4987, %v5516
        %v5532 = vmul.f32 %v4988, %v5516
        %v5549 = vrot.slane %v5517, 7
        %v5550 = vrot.slane %v5549, 4
        %v5551 = vrot.slane %v5518, 7
        %v5552 = vrot.slane %v5551, 4
        %v5553 = vrot.slane %v5519, 7
        %v5554 = vrot.slane %v5553, 4
        %v5555 = vrot.slane %v5520, 7
        %v5556 = vrot.slane %v5555, 4
        %v5557 = vrot.slane %v5521, 7
        %v5558 = vrot.slane %v5557, 4
        %v5559 = vrot.slane %v5522, 7
        %v5560 = vrot.slane %v5559, 4
        %v5561 = vrot.slane %v5523, 7
        %v5562 = vrot.slane %v5561, 4
        %v5563 = vrot.slane %v5524, 7
        %v5564 = vrot.slane %v5563, 4
        %v5565 = vrot.slane %v5525, 7
        %v5566 = vrot.slane %v5565, 4
        %v5567 = vrot.slane %v5526, 7
        %v5568 = vrot.slane %v5567, 4
        %v5569 = vrot.slane %v5527, 7
        %v5570 = vrot.slane %v5569, 4
        %v5571 = vrot.slane %v5528, 7
        %v5572 = vrot.slane %v5571, 4
        %v5573 = vrot.slane %v5529, 7
        %v5574 = vrot.slane %v5573, 4
        %v5575 = vrot.slane %v5530, 7
        %v5576 = vrot.slane %v5575, 4
        %v5577 = vrot.slane %v5531, 7
        %v5578 = vrot.slane %v5577, 4
        %v5579 = vrot.slane %v5532, 7
        %v5580 = vrot.slane %v5579, 4
        %v5597 = vadd.f32 %v5499, %v5550
        %v5598 = vadd.f32 %v5500, %v5552
        %v5599 = vadd.f32 %v5501, %v5554
        %v5600 = vadd.f32 %v5502, %v5556
        %v5601 = vadd.f32 %v5503, %v5558
        %v5602 = vadd.f32 %v5504, %v5560
        %v5603 = vadd.f32 %v5505, %v5562
        %v5604 = vadd.f32 %v5506, %v5564
        %v5605 = vadd.f32 %v5507, %v5566
        %v5606 = vadd.f32 %v5508, %v5568
        %v5607 = vadd.f32 %v5509, %v5570
        %v5608 = vadd.f32 %v5510, %v5572
        %v5609 = vadd.f32 %v5511, %v5574
        %v5610 = vadd.f32 %v5512, %v5576
        %v5611 = vadd.f32 %v5513, %v5578
        %v5612 = vadd.f32 %v5514, %v5580
        %s5613 = sld [smem:[#allocation8 + $0x28]]
        %v5614 = vstv %s5613
        %v5615 = vmul.f32 %v4973, %v5614
        %v5616 = vmul.f32 %v4974, %v5614
        %v5617 = vmul.f32 %v4975, %v5614
        %v5618 = vmul.f32 %v4976, %v5614
        %v5619 = vmul.f32 %v4977, %v5614
        %v5620 = vmul.f32 %v4978, %v5614
        %v5621 = vmul.f32 %v4979, %v5614
        %v5622 = vmul.f32 %v4980, %v5614
        %v5623 = vmul.f32 %v4981, %v5614
        %v5624 = vmul.f32 %v4982, %v5614
        %v5625 = vmul.f32 %v4983, %v5614
        %v5626 = vmul.f32 %v4984, %v5614
        %v5627 = vmul.f32 %v4985, %v5614
        %v5628 = vmul.f32 %v4986, %v5614
        %v5629 = vmul.f32 %v4987, %v5614
        %v5630 = vmul.f32 %v4988, %v5614
        %s5631 = sld [smem:[#allocation8 + $0x29]]
        %v5632 = vstv %s5631
        %v5633 = vmul.f32 %v4973, %v5632
        %v5634 = vmul.f32 %v4974, %v5632
        %v5635 = vmul.f32 %v4975, %v5632
        %v5636 = vmul.f32 %v4976, %v5632
        %v5637 = vmul.f32 %v4977, %v5632
        %v5638 = vmul.f32 %v4978, %v5632
        %v5639 = vmul.f32 %v4979, %v5632
        %v5640 = vmul.f32 %v4980, %v5632
        %v5641 = vmul.f32 %v4981, %v5632
        %v5642 = vmul.f32 %v4982, %v5632
        %v5643 = vmul.f32 %v4983, %v5632
        %v5644 = vmul.f32 %v4984, %v5632
        %v5645 = vmul.f32 %v4985, %v5632
        %v5646 = vmul.f32 %v4986, %v5632
        %v5647 = vmul.f32 %v4987, %v5632
        %v5648 = vmul.f32 %v4988, %v5632
        %v5665 = vrot.slane %v5633, 5
        %v5666 = vrot.slane %v5665, 4
        %v5667 = vrot.slane %v5634, 5
        %v5668 = vrot.slane %v5667, 4
        %v5669 = vrot.slane %v5635, 5
        %v5670 = vrot.slane %v5669, 4
        %v5671 = vrot.slane %v5636, 5
        %v5672 = vrot.slane %v5671, 4
        %v5673 = vrot.slane %v5637, 5
        %v5674 = vrot.slane %v5673, 4
        %v5675 = vrot.slane %v5638, 5
        %v5676 = vrot.slane %v5675, 4
        %v5677 = vrot.slane %v5639, 5
        %v5678 = vrot.slane %v5677, 4
        %v5679 = vrot.slane %v5640, 5
        %v5680 = vrot.slane %v5679, 4
        %v5681 = vrot.slane %v5641, 5
        %v5682 = vrot.slane %v5681, 4
        %v5683 = vrot.slane %v5642, 5
        %v5684 = vrot.slane %v5683, 4
        %v5685 = vrot.slane %v5643, 5
        %v5686 = vrot.slane %v5685, 4
        %v5687 = vrot.slane %v5644, 5
        %v5688 = vrot.slane %v5687, 4
        %v5689 = vrot.slane %v5645, 5
        %v5690 = vrot.slane %v5689, 4
        %v5691 = vrot.slane %v5646, 5
        %v5692 = vrot.slane %v5691, 4
        %v5693 = vrot.slane %v5647, 5
        %v5694 = vrot.slane %v5693, 4
        %v5695 = vrot.slane %v5648, 5
        %v5696 = vrot.slane %v5695, 4
        %v5713 = vadd.f32 %v5615, %v5666
        %v5714 = vadd.f32 %v5616, %v5668
        %v5715 = vadd.f32 %v5617, %v5670
        %v5716 = vadd.f32 %v5618, %v5672
        %v5717 = vadd.f32 %v5619, %v5674
        %v5718 = vadd.f32 %v5620, %v5676
        %v5719 = vadd.f32 %v5621, %v5678
        %v5720 = vadd.f32 %v5622, %v5680
        %v5721 = vadd.f32 %v5623, %v5682
        %v5722 = vadd.f32 %v5624, %v5684
        %v5723 = vadd.f32 %v5625, %v5686
        %v5724 = vadd.f32 %v5626, %v5688
        %v5725 = vadd.f32 %v5627, %v5690
        %v5726 = vadd.f32 %v5628, %v5692
        %v5727 = vadd.f32 %v5629, %v5694
        %v5728 = vadd.f32 %v5630, %v5696
        %s5729 = sld [smem:[#allocation8 + $0x2a]]
        %v5730 = vstv %s5729
        %v5731 = vmul.f32 %v4973, %v5730
        %v5732 = vmul.f32 %v4974, %v5730
        %v5733 = vmul.f32 %v4975, %v5730
        %v5734 = vmul.f32 %v4976, %v5730
        %v5735 = vmul.f32 %v4977, %v5730
        %v5736 = vmul.f32 %v4978, %v5730
        %v5737 = vmul.f32 %v4979, %v5730
        %v5738 = vmul.f32 %v4980, %v5730
        %v5739 = vmul.f32 %v4981, %v5730
        %v5740 = vmul.f32 %v4982, %v5730
        %v5741 = vmul.f32 %v4983, %v5730
        %v5742 = vmul.f32 %v4984, %v5730
        %v5743 = vmul.f32 %v4985, %v5730
        %v5744 = vmul.f32 %v4986, %v5730
        %v5745 = vmul.f32 %v4987, %v5730
        %v5746 = vmul.f32 %v4988, %v5730
        %v5763 = vrot.slane %v5731, 6
        %v5764 = vrot.slane %v5763, 4
        %v5765 = vrot.slane %v5732, 6
        %v5766 = vrot.slane %v5765, 4
        %v5767 = vrot.slane %v5733, 6
        %v5768 = vrot.slane %v5767, 4
        %v5769 = vrot.slane %v5734, 6
        %v5770 = vrot.slane %v5769, 4
        %v5771 = vrot.slane %v5735, 6
        %v5772 = vrot.slane %v5771, 4
        %v5773 = vrot.slane %v5736, 6
        %v5774 = vrot.slane %v5773, 4
        %v5775 = vrot.slane %v5737, 6
        %v5776 = vrot.slane %v5775, 4
        %v5777 = vrot.slane %v5738, 6
        %v5778 = vrot.slane %v5777, 4
        %v5779 = vrot.slane %v5739, 6
        %v5780 = vrot.slane %v5779, 4
        %v5781 = vrot.slane %v5740, 6
        %v5782 = vrot.slane %v5781, 4
        %v5783 = vrot.slane %v5741, 6
        %v5784 = vrot.slane %v5783, 4
        %v5785 = vrot.slane %v5742, 6
        %v5786 = vrot.slane %v5785, 4
        %v5787 = vrot.slane %v5743, 6
        %v5788 = vrot.slane %v5787, 4
        %v5789 = vrot.slane %v5744, 6
        %v5790 = vrot.slane %v5789, 4
        %v5791 = vrot.slane %v5745, 6
        %v5792 = vrot.slane %v5791, 4
        %v5793 = vrot.slane %v5746, 6
        %v5794 = vrot.slane %v5793, 4
        %v5811 = vadd.f32 %v5713, %v5764
        %v5812 = vadd.f32 %v5714, %v5766
        %v5813 = vadd.f32 %v5715, %v5768
        %v5814 = vadd.f32 %v5716, %v5770
        %v5815 = vadd.f32 %v5717, %v5772
        %v5816 = vadd.f32 %v5718, %v5774
        %v5817 = vadd.f32 %v5719, %v5776
        %v5818 = vadd.f32 %v5720, %v5778
        %v5819 = vadd.f32 %v5721, %v5780
        %v5820 = vadd.f32 %v5722, %v5782
        %v5821 = vadd.f32 %v5723, %v5784
        %v5822 = vadd.f32 %v5724, %v5786
        %v5823 = vadd.f32 %v5725, %v5788
        %v5824 = vadd.f32 %v5726, %v5790
        %v5825 = vadd.f32 %v5727, %v5792
        %v5826 = vadd.f32 %v5728, %v5794
        %s5827 = sld [smem:[#allocation8 + $0x2b]]
        %v5828 = vstv %s5827
        %v5829 = vmul.f32 %v4973, %v5828
        %v5830 = vmul.f32 %v4974, %v5828
        %v5831 = vmul.f32 %v4975, %v5828
        %v5832 = vmul.f32 %v4976, %v5828
        %v5833 = vmul.f32 %v4977, %v5828
        %v5834 = vmul.f32 %v4978, %v5828
        %v5835 = vmul.f32 %v4979, %v5828
        %v5836 = vmul.f32 %v4980, %v5828
        %v5837 = vmul.f32 %v4981, %v5828
        %v5838 = vmul.f32 %v4982, %v5828
        %v5839 = vmul.f32 %v4983, %v5828
        %v5840 = vmul.f32 %v4984, %v5828
        %v5841 = vmul.f32 %v4985, %v5828
        %v5842 = vmul.f32 %v4986, %v5828
        %v5843 = vmul.f32 %v4987, %v5828
        %v5844 = vmul.f32 %v4988, %v5828
        %v5861 = vrot.slane %v5829, 7
        %v5862 = vrot.slane %v5861, 4
        %v5863 = vrot.slane %v5830, 7
        %v5864 = vrot.slane %v5863, 4
        %v5865 = vrot.slane %v5831, 7
        %v5866 = vrot.slane %v5865, 4
        %v5867 = vrot.slane %v5832, 7
        %v5868 = vrot.slane %v5867, 4
        %v5869 = vrot.slane %v5833, 7
        %v5870 = vrot.slane %v5869, 4
        %v5871 = vrot.slane %v5834, 7
        %v5872 = vrot.slane %v5871, 4
        %v5873 = vrot.slane %v5835, 7
        %v5874 = vrot.slane %v5873, 4
        %v5875 = vrot.slane %v5836, 7
        %v5876 = vrot.slane %v5875, 4
        %v5877 = vrot.slane %v5837, 7
        %v5878 = vrot.slane %v5877, 4
        %v5879 = vrot.slane %v5838, 7
        %v5880 = vrot.slane %v5879, 4
        %v5881 = vrot.slane %v5839, 7
        %v5882 = vrot.slane %v5881, 4
        %v5883 = vrot.slane %v5840, 7
        %v5884 = vrot.slane %v5883, 4
        %v5885 = vrot.slane %v5841, 7
        %v5886 = vrot.slane %v5885, 4
        %v5887 = vrot.slane %v5842, 7
        %v5888 = vrot.slane %v5887, 4
        %v5889 = vrot.slane %v5843, 7
        %v5890 = vrot.slane %v5889, 4
        %v5891 = vrot.slane %v5844, 7
        %v5892 = vrot.slane %v5891, 4
        %v5909 = vadd.f32 %v5811, %v5862
        %v5910 = vadd.f32 %v5812, %v5864
        %v5911 = vadd.f32 %v5813, %v5866
        %v5912 = vadd.f32 %v5814, %v5868
        %v5913 = vadd.f32 %v5815, %v5870
        %v5914 = vadd.f32 %v5816, %v5872
        %v5915 = vadd.f32 %v5817, %v5874
        %v5916 = vadd.f32 %v5818, %v5876
        %v5917 = vadd.f32 %v5819, %v5878
        %v5918 = vadd.f32 %v5820, %v5880
        %v5919 = vadd.f32 %v5821, %v5882
        %v5920 = vadd.f32 %v5822, %v5884
        %v5921 = vadd.f32 %v5823, %v5886
        %v5922 = vadd.f32 %v5824, %v5888
        %v5923 = vadd.f32 %v5825, %v5890
        %v5924 = vadd.f32 %v5826, %v5892
        %s5925 = sld [smem:[#allocation8 + $0x2c]]
        %v5926 = vstv %s5925
        %v5927 = vmul.f32 %v4973, %v5926
        %v5928 = vmul.f32 %v4974, %v5926
        %v5929 = vmul.f32 %v4975, %v5926
        %v5930 = vmul.f32 %v4976, %v5926
        %v5931 = vmul.f32 %v4977, %v5926
        %v5932 = vmul.f32 %v4978, %v5926
        %v5933 = vmul.f32 %v4979, %v5926
        %v5934 = vmul.f32 %v4980, %v5926
        %v5935 = vmul.f32 %v4981, %v5926
        %v5936 = vmul.f32 %v4982, %v5926
        %v5937 = vmul.f32 %v4983, %v5926
        %v5938 = vmul.f32 %v4984, %v5926
        %v5939 = vmul.f32 %v4985, %v5926
        %v5940 = vmul.f32 %v4986, %v5926
        %v5941 = vmul.f32 %v4987, %v5926
        %v5942 = vmul.f32 %v4988, %v5926
        %s5943 = sld [smem:[#allocation8 + $0x2d]]
        %v5944 = vstv %s5943
        %v5945 = vmul.f32 %v4973, %v5944
        %v5946 = vmul.f32 %v4974, %v5944
        %v5947 = vmul.f32 %v4975, %v5944
        %v5948 = vmul.f32 %v4976, %v5944
        %v5949 = vmul.f32 %v4977, %v5944
        %v5950 = vmul.f32 %v4978, %v5944
        %v5951 = vmul.f32 %v4979, %v5944
        %v5952 = vmul.f32 %v4980, %v5944
        %v5953 = vmul.f32 %v4981, %v5944
        %v5954 = vmul.f32 %v4982, %v5944
        %v5955 = vmul.f32 %v4983, %v5944
        %v5956 = vmul.f32 %v4984, %v5944
        %v5957 = vmul.f32 %v4985, %v5944
        %v5958 = vmul.f32 %v4986, %v5944
        %v5959 = vmul.f32 %v4987, %v5944
        %v5960 = vmul.f32 %v4988, %v5944
        %v5977 = vrot.slane %v5945, 5
        %v5978 = vrot.slane %v5977, 4
        %v5979 = vrot.slane %v5946, 5
        %v5980 = vrot.slane %v5979, 4
        %v5981 = vrot.slane %v5947, 5
        %v5982 = vrot.slane %v5981, 4
        %v5983 = vrot.slane %v5948, 5
        %v5984 = vrot.slane %v5983, 4
        %v5985 = vrot.slane %v5949, 5
        %v5986 = vrot.slane %v5985, 4
        %v5987 = vrot.slane %v5950, 5
        %v5988 = vrot.slane %v5987, 4
        %v5989 = vrot.slane %v5951, 5
        %v5990 = vrot.slane %v5989, 4
        %v5991 = vrot.slane %v5952, 5
        %v5992 = vrot.slane %v5991, 4
        %v5993 = vrot.slane %v5953, 5
        %v5994 = vrot.slane %v5993, 4
        %v5995 = vrot.slane %v5954, 5
        %v5996 = vrot.slane %v5995, 4
        %v5997 = vrot.slane %v5955, 5
        %v5998 = vrot.slane %v5997, 4
        %v5999 = vrot.slane %v5956, 5
        %v6000 = vrot.slane %v5999, 4
        %v6001 = vrot.slane %v5957, 5
        %v6002 = vrot.slane %v6001, 4
        %v6003 = vrot.slane %v5958, 5
        %v6004 = vrot.slane %v6003, 4
        %v6005 = vrot.slane %v5959, 5
        %v6006 = vrot.slane %v6005, 4
        %v6007 = vrot.slane %v5960, 5
        %v6008 = vrot.slane %v6007, 4
        %v6025 = vadd.f32 %v5927, %v5978
        %v6026 = vadd.f32 %v5928, %v5980
        %v6027 = vadd.f32 %v5929, %v5982
        %v6028 = vadd.f32 %v5930, %v5984
        %v6029 = vadd.f32 %v5931, %v5986
        %v6030 = vadd.f32 %v5932, %v5988
        %v6031 = vadd.f32 %v5933, %v5990
        %v6032 = vadd.f32 %v5934, %v5992
        %v6033 = vadd.f32 %v5935, %v5994
        %v6034 = vadd.f32 %v5936, %v5996
        %v6035 = vadd.f32 %v5937, %v5998
        %v6036 = vadd.f32 %v5938, %v6000
        %v6037 = vadd.f32 %v5939, %v6002
        %v6038 = vadd.f32 %v5940, %v6004
        %v6039 = vadd.f32 %v5941, %v6006
        %v6040 = vadd.f32 %v5942, %v6008
        %s6041 = sld [smem:[#allocation8 + $0x2e]]
        %v6042 = vstv %s6041
        %v6043 = vmul.f32 %v4973, %v6042
        %v6044 = vmul.f32 %v4974, %v6042
        %v6045 = vmul.f32 %v4975, %v6042
        %v6046 = vmul.f32 %v4976, %v6042
        %v6047 = vmul.f32 %v4977, %v6042
        %v6048 = vmul.f32 %v4978, %v6042
        %v6049 = vmul.f32 %v4979, %v6042
        %v6050 = vmul.f32 %v4980, %v6042
        %v6051 = vmul.f32 %v4981, %v6042
        %v6052 = vmul.f32 %v4982, %v6042
        %v6053 = vmul.f32 %v4983, %v6042
        %v6054 = vmul.f32 %v4984, %v6042
        %v6055 = vmul.f32 %v4985, %v6042
        %v6056 = vmul.f32 %v4986, %v6042
        %v6057 = vmul.f32 %v4987, %v6042
        %v6058 = vmul.f32 %v4988, %v6042
        %v6075 = vrot.slane %v6043, 6
        %v6076 = vrot.slane %v6075, 4
        %v6077 = vrot.slane %v6044, 6
        %v6078 = vrot.slane %v6077, 4
        %v6079 = vrot.slane %v6045, 6
        %v6080 = vrot.slane %v6079, 4
        %v6081 = vrot.slane %v6046, 6
        %v6082 = vrot.slane %v6081, 4
        %v6083 = vrot.slane %v6047, 6
        %v6084 = vrot.slane %v6083, 4
        %v6085 = vrot.slane %v6048, 6
        %v6086 = vrot.slane %v6085, 4
        %v6087 = vrot.slane %v6049, 6
        %v6088 = vrot.slane %v6087, 4
        %v6089 = vrot.slane %v6050, 6
        %v6090 = vrot.slane %v6089, 4
        %v6091 = vrot.slane %v6051, 6
        %v6092 = vrot.slane %v6091, 4
        %v6093 = vrot.slane %v6052, 6
        %v6094 = vrot.slane %v6093, 4
        %v6095 = vrot.slane %v6053, 6
        %v6096 = vrot.slane %v6095, 4
        %v6097 = vrot.slane %v6054, 6
        %v6098 = vrot.slane %v6097, 4
        %v6099 = vrot.slane %v6055, 6
        %v6100 = vrot.slane %v6099, 4
        %v6101 = vrot.slane %v6056, 6
        %v6102 = vrot.slane %v6101, 4
        %v6103 = vrot.slane %v6057, 6
        %v6104 = vrot.slane %v6103, 4
        %v6105 = vrot.slane %v6058, 6
        %v6106 = vrot.slane %v6105, 4
        %v6123 = vadd.f32 %v6025, %v6076
        %v6124 = vadd.f32 %v6026, %v6078
        %v6125 = vadd.f32 %v6027, %v6080
        %v6126 = vadd.f32 %v6028, %v6082
        %v6127 = vadd.f32 %v6029, %v6084
        %v6128 = vadd.f32 %v6030, %v6086
        %v6129 = vadd.f32 %v6031, %v6088
        %v6130 = vadd.f32 %v6032, %v6090
        %v6131 = vadd.f32 %v6033, %v6092
        %v6132 = vadd.f32 %v6034, %v6094
        %v6133 = vadd.f32 %v6035, %v6096
        %v6134 = vadd.f32 %v6036, %v6098
        %v6135 = vadd.f32 %v6037, %v6100
        %v6136 = vadd.f32 %v6038, %v6102
        %v6137 = vadd.f32 %v6039, %v6104
        %v6138 = vadd.f32 %v6040, %v6106
        %s6139 = sld [smem:[#allocation8 + $0x2f]]
        %v6140 = vstv %s6139
        %v6141 = vmul.f32 %v4973, %v6140
        %v6142 = vmul.f32 %v4974, %v6140
        %v6143 = vmul.f32 %v4975, %v6140
        %v6144 = vmul.f32 %v4976, %v6140
        %v6145 = vmul.f32 %v4977, %v6140
        %v6146 = vmul.f32 %v4978, %v6140
        %v6147 = vmul.f32 %v4979, %v6140
        %v6148 = vmul.f32 %v4980, %v6140
        %v6149 = vmul.f32 %v4981, %v6140
        %v6150 = vmul.f32 %v4982, %v6140
        %v6151 = vmul.f32 %v4983, %v6140
        %v6152 = vmul.f32 %v4984, %v6140
        %v6153 = vmul.f32 %v4985, %v6140
        %v6154 = vmul.f32 %v4986, %v6140
        %v6155 = vmul.f32 %v4987, %v6140
        %v6156 = vmul.f32 %v4988, %v6140
        %v6173 = vrot.slane %v6141, 7
        %v6174 = vrot.slane %v6173, 4
        %v6175 = vrot.slane %v6142, 7
        %v6176 = vrot.slane %v6175, 4
        %v6177 = vrot.slane %v6143, 7
        %v6178 = vrot.slane %v6177, 4
        %v6179 = vrot.slane %v6144, 7
        %v6180 = vrot.slane %v6179, 4
        %v6181 = vrot.slane %v6145, 7
        %v6182 = vrot.slane %v6181, 4
        %v6183 = vrot.slane %v6146, 7
        %v6184 = vrot.slane %v6183, 4
        %v6185 = vrot.slane %v6147, 7
        %v6186 = vrot.slane %v6185, 4
        %v6187 = vrot.slane %v6148, 7
        %v6188 = vrot.slane %v6187, 4
        %v6189 = vrot.slane %v6149, 7
        %v6190 = vrot.slane %v6189, 4
        %v6191 = vrot.slane %v6150, 7
        %v6192 = vrot.slane %v6191, 4
        %v6193 = vrot.slane %v6151, 7
        %v6194 = vrot.slane %v6193, 4
        %v6195 = vrot.slane %v6152, 7
        %v6196 = vrot.slane %v6195, 4
        %v6197 = vrot.slane %v6153, 7
        %v6198 = vrot.slane %v6197, 4
        %v6199 = vrot.slane %v6154, 7
        %v6200 = vrot.slane %v6199, 4
        %v6201 = vrot.slane %v6155, 7
        %v6202 = vrot.slane %v6201, 4
        %v6203 = vrot.slane %v6156, 7
        %v6204 = vrot.slane %v6203, 4
        %v6221 = vadd.f32 %v6123, %v6174
        %v6222 = vadd.f32 %v6124, %v6176
        %v6223 = vadd.f32 %v6125, %v6178
        %v6224 = vadd.f32 %v6126, %v6180
        %v6225 = vadd.f32 %v6127, %v6182
        %v6226 = vadd.f32 %v6128, %v6184
        %v6227 = vadd.f32 %v6129, %v6186
        %v6228 = vadd.f32 %v6130, %v6188
        %v6229 = vadd.f32 %v6131, %v6190
        %v6230 = vadd.f32 %v6132, %v6192
        %v6231 = vadd.f32 %v6133, %v6194
        %v6232 = vadd.f32 %v6134, %v6196
        %v6233 = vadd.f32 %v6135, %v6198
        %v6234 = vadd.f32 %v6136, %v6200
        %v6235 = vadd.f32 %v6137, %v6202
        %v6236 = vadd.f32 %v6138, %v6204
        %s6237 = sld [smem:[#allocation9]]
        %v6270 = vrot.slane %v1453, 7
        %vm6271 = vcmask 1041409
        %v6272 = vsel %vm6271, %v6270, %v1437
        %v6273 = vrot.slane %v1454, 7
        %v6274 = vsel %vm6271, %v6273, %v1438
        %v6275 = vrot.slane %v1455, 7
        %v6276 = vsel %vm6271, %v6275, %v1439
        %v6277 = vrot.slane %v1456, 7
        %v6278 = vsel %vm6271, %v6277, %v1440
        %v6279 = vrot.slane %v1457, 7
        %v6280 = vsel %vm6271, %v6279, %v1441
        %v6281 = vrot.slane %v1458, 7
        %v6282 = vsel %vm6271, %v6281, %v1442
        %v6283 = vrot.slane %v1459, 7
        %v6284 = vsel %vm6271, %v6283, %v1443
        %v6285 = vrot.slane %v1460, 7
        %v6286 = vsel %vm6271, %v6285, %v1444
        %v6287 = vrot.slane %v1461, 7
        %v6288 = vsel %vm6271, %v6287, %v1445
        %v6289 = vrot.slane %v1462, 7
        %v6290 = vsel %vm6271, %v6289, %v1446
        %v6291 = vrot.slane %v1463, 7
        %v6292 = vsel %vm6271, %v6291, %v1447
        %v6293 = vrot.slane %v1464, 7
        %v6294 = vsel %vm6271, %v6293, %v1448
        %v6295 = vrot.slane %v1465, 7
        %v6296 = vsel %vm6271, %v6295, %v1449
        %v6297 = vrot.slane %v1466, 7
        %v6298 = vsel %vm6271, %v6297, %v1450
        %v6299 = vrot.slane %v1467, 7
        %v6300 = vsel %vm6271, %v6299, %v1451
        %v6301 = vrot.slane %v1468, 7
        %v6302 = vsel %vm6271, %v6301, %v1452
        %vm6319 = vcmask 1041408
        %v6320 = vsel %vm6319, %v6272, 0.0
        %v6321 = vsel %vm6319, %v6274, 0.0
        %v6322 = vadd.f32 %v6320, %v6321
        %v6323 = vsel %vm6319, %v6276, 0.0
        %v6324 = vadd.f32 %v6322, %v6323
        %v6325 = vsel %vm6319, %v6278, 0.0
        %v6326 = vadd.f32 %v6324, %v6325
        %v6327 = vsel %vm6319, %v6280, 0.0
        %v6328 = vadd.f32 %v6326, %v6327
        %v6329 = vsel %vm6319, %v6282, 0.0
        %v6330 = vadd.f32 %v6328, %v6329
        %v6331 = vsel %vm6319, %v6284, 0.0
        %v6332 = vadd.f32 %v6330, %v6331
        %v6333 = vsel %vm6319, %v6286, 0.0
        %v6334 = vadd.f32 %v6332, %v6333
        %v6335 = vsel %vm6319, %v6288, 0.0
        %v6336 = vadd.f32 %v6334, %v6335
        %v6337 = vsel %vm6319, %v6290, 0.0
        %v6338 = vadd.f32 %v6336, %v6337
        %v6339 = vsel %vm6319, %v6292, 0.0
        %v6340 = vadd.f32 %v6338, %v6339
        %v6341 = vsel %vm6319, %v6294, 0.0
        %v6342 = vadd.f32 %v6340, %v6341
        %v6343 = vsel %vm6319, %v6296, 0.0
        %v6344 = vadd.f32 %v6342, %v6343
        %v6345 = vsel %vm6319, %v6298, 0.0
        %v6346 = vadd.f32 %v6344, %v6345
        %v6347 = vsel %vm6319, %v6300, 0.0
        %v6348 = vadd.f32 %v6346, %v6347
        %v6349 = vsel %vm6319, %v6302, 0.0
        %v6350 = vadd.f32 %v6348, %v6349
        %6351 = vadd.xlane.f32.xlu0 %v6350
        %v6352 = vpop.xlane.xlu0 %6351
        %v6353 = vrot.slane %v6352, 4
        %v6354 = vadd.f32 %v6352, %v6353
        %v6355 = vrot.slane %v6354, 2
        %v6356 = vadd.f32 %v6354, %v6355
        %v6357 = vrot.slane %v6356, 1
        %v6358 = vadd.f32 %v6356, %v6357
        %s6359 = vtos %v6358
        %s6360 = sadd.f32 %s6237, %s6359
        %s6361 = scalar_lea.smem [#allocation9], 0
        %6362 = sst [smem:[%s6361]] %s6360
        %s6363 = sld [smem:[#allocation9 + $0x4]]
        %v6364 = vmul.f32 %v1437, %v1437
        %v6365 = vmul.f32 %v1438, %v1438
        %v6366 = vmul.f32 %v1439, %v1439
        %v6367 = vmul.f32 %v1440, %v1440
        %v6368 = vmul.f32 %v1441, %v1441
        %v6369 = vmul.f32 %v1442, %v1442
        %v6370 = vmul.f32 %v1443, %v1443
        %v6371 = vmul.f32 %v1444, %v1444
        %v6372 = vmul.f32 %v1445, %v1445
        %v6373 = vmul.f32 %v1446, %v1446
        %v6374 = vmul.f32 %v1447, %v1447
        %v6375 = vmul.f32 %v1448, %v1448
        %v6376 = vmul.f32 %v1449, %v1449
        %v6377 = vmul.f32 %v1450, %v1450
        %v6378 = vmul.f32 %v1451, %v1451
        %v6379 = vmul.f32 %v1452, %v1452
        %v6380 = vmul.f32 %v1453, %v1453
        %v6381 = vmul.f32 %v1454, %v1454
        %v6382 = vmul.f32 %v1455, %v1455
        %v6383 = vmul.f32 %v1456, %v1456
        %v6384 = vmul.f32 %v1457, %v1457
        %v6385 = vmul.f32 %v1458, %v1458
        %v6386 = vmul.f32 %v1459, %v1459
        %v6387 = vmul.f32 %v1460, %v1460
        %v6388 = vmul.f32 %v1461, %v1461
        %v6389 = vmul.f32 %v1462, %v1462
        %v6390 = vmul.f32 %v1463, %v1463
        %v6391 = vmul.f32 %v1464, %v1464
        %v6392 = vmul.f32 %v1465, %v1465
        %v6393 = vmul.f32 %v1466, %v1466
        %v6394 = vmul.f32 %v1467, %v1467
        %v6395 = vmul.f32 %v1468, %v1468
        %v6428 = vrot.slane %v6380, 7
        %v6429 = vsel %vm6271, %v6428, %v6364
        %v6430 = vrot.slane %v6381, 7
        %v6431 = vsel %vm6271, %v6430, %v6365
        %v6432 = vrot.slane %v6382, 7
        %v6433 = vsel %vm6271, %v6432, %v6366
        %v6434 = vrot.slane %v6383, 7
        %v6435 = vsel %vm6271, %v6434, %v6367
        %v6436 = vrot.slane %v6384, 7
        %v6437 = vsel %vm6271, %v6436, %v6368
        %v6438 = vrot.slane %v6385, 7
        %v6439 = vsel %vm6271, %v6438, %v6369
        %v6440 = vrot.slane %v6386, 7
        %v6441 = vsel %vm6271, %v6440, %v6370
        %v6442 = vrot.slane %v6387, 7
        %v6443 = vsel %vm6271, %v6442, %v6371
        %v6444 = vrot.slane %v6388, 7
        %v6445 = vsel %vm6271, %v6444, %v6372
        %v6446 = vrot.slane %v6389, 7
        %v6447 = vsel %vm6271, %v6446, %v6373
        %v6448 = vrot.slane %v6390, 7
        %v6449 = vsel %vm6271, %v6448, %v6374
        %v6450 = vrot.slane %v6391, 7
        %v6451 = vsel %vm6271, %v6450, %v6375
        %v6452 = vrot.slane %v6392, 7
        %v6453 = vsel %vm6271, %v6452, %v6376
        %v6454 = vrot.slane %v6393, 7
        %v6455 = vsel %vm6271, %v6454, %v6377
        %v6456 = vrot.slane %v6394, 7
        %v6457 = vsel %vm6271, %v6456, %v6378
        %v6458 = vrot.slane %v6395, 7
        %v6459 = vsel %vm6271, %v6458, %v6379
        %v6476 = vsel %vm6319, %v6429, 0.0
        %v6477 = vsel %vm6319, %v6431, 0.0
        %v6478 = vadd.f32 %v6476, %v6477
        %v6479 = vsel %vm6319, %v6433, 0.0
        %v6480 = vadd.f32 %v6478, %v6479
        %v6481 = vsel %vm6319, %v6435, 0.0
        %v6482 = vadd.f32 %v6480, %v6481
        %v6483 = vsel %vm6319, %v6437, 0.0
        %v6484 = vadd.f32 %v6482, %v6483
        %v6485 = vsel %vm6319, %v6439, 0.0
        %v6486 = vadd.f32 %v6484, %v6485
        %v6487 = vsel %vm6319, %v6441, 0.0
        %v6488 = vadd.f32 %v6486, %v6487
        %v6489 = vsel %vm6319, %v6443, 0.0
        %v6490 = vadd.f32 %v6488, %v6489
        %v6491 = vsel %vm6319, %v6445, 0.0
        %v6492 = vadd.f32 %v6490, %v6491
        %v6493 = vsel %vm6319, %v6447, 0.0
        %v6494 = vadd.f32 %v6492, %v6493
        %v6495 = vsel %vm6319, %v6449, 0.0
        %v6496 = vadd.f32 %v6494, %v6495
        %v6497 = vsel %vm6319, %v6451, 0.0
        %v6498 = vadd.f32 %v6496, %v6497
        %v6499 = vsel %vm6319, %v6453, 0.0
        %v6500 = vadd.f32 %v6498, %v6499
        %v6501 = vsel %vm6319, %v6455, 0.0
        %v6502 = vadd.f32 %v6500, %v6501
        %v6503 = vsel %vm6319, %v6457, 0.0
        %v6504 = vadd.f32 %v6502, %v6503
        %v6505 = vsel %vm6319, %v6459, 0.0
        %v6506 = vadd.f32 %v6504, %v6505
        %6507 = vadd.xlane.f32.xlu0 %v6506
        %v6508 = vpop.xlane.xlu0 %6507
        %v6509 = vrot.slane %v6508, 4
        %v6510 = vadd.f32 %v6508, %v6509
        %v6511 = vrot.slane %v6510, 2
        %v6512 = vadd.f32 %v6510, %v6511
        %v6513 = vrot.slane %v6512, 1
        %v6514 = vadd.f32 %v6512, %v6513
        %s6515 = vtos %v6514
        %s6516 = sadd.f32 %s6363, %s6515
        %s6517 = scalar_lea.smem [#allocation9], 4
        %6518 = sst [smem:[%s6517]] %s6516
        %s6519 = sld [smem:[#allocation9 + $0x8]]
        %v6536 = vlaneseq
        %v6537 = vshrl.u32 %v6536, 7
        %v6538 = vsub.s32 0, %v6537
        %v6539 = vrot.slane %v5285, %v6538
        %v6540 = vlaneseq
        %v6541 = vshrl.u32 %v6540, 7
        %v6542 = vsub.s32 4, %v6541
        %v6543 = vrot.slane %v5285, %v6542
        %v6544 = vlaneseq
        %v6545 = vshrl.u32 %v6544, 7
        %v6546 = vsub.s32 0, %v6545
        %v6547 = vrot.slane %v5286, %v6546
        %v6548 = vlaneseq
        %v6549 = vshrl.u32 %v6548, 7
        %v6550 = vsub.s32 4, %v6549
        %v6551 = vrot.slane %v5286, %v6550
        %v6552 = vlaneseq
        %v6553 = vshrl.u32 %v6552, 7
        %v6554 = vsub.s32 0, %v6553
        %v6555 = vrot.slane %v5287, %v6554
        %v6556 = vlaneseq
        %v6557 = vshrl.u32 %v6556, 7
        %v6558 = vsub.s32 4, %v6557
        %v6559 = vrot.slane %v5287, %v6558
        %v6560 = vlaneseq
        %v6561 = vshrl.u32 %v6560, 7
        %v6562 = vsub.s32 0, %v6561
        %v6563 = vrot.slane %v5288, %v6562
        %v6564 = vlaneseq
        %v6565 = vshrl.u32 %v6564, 7
        %v6566 = vsub.s32 4, %v6565
        %v6567 = vrot.slane %v5288, %v6566
        %v6568 = vlaneseq
        %v6569 = vshrl.u32 %v6568, 7
        %v6570 = vsub.s32 0, %v6569
        %v6571 = vrot.slane %v5289, %v6570
        %v6572 = vlaneseq
        %v6573 = vshrl.u32 %v6572, 7
        %v6574 = vsub.s32 4, %v6573
        %v6575 = vrot.slane %v5289, %v6574
        %v6576 = vlaneseq
        %v6577 = vshrl.u32 %v6576, 7
        %v6578 = vsub.s32 0, %v6577
        %v6579 = vrot.slane %v5290, %v6578
        %v6580 = vlaneseq
        %v6581 = vshrl.u32 %v6580, 7
        %v6582 = vsub.s32 4, %v6581
        %v6583 = vrot.slane %v5290, %v6582
        %v6584 = vlaneseq
        %v6585 = vshrl.u32 %v6584, 7
        %v6586 = vsub.s32 0, %v6585
        %v6587 = vrot.slane %v5291, %v6586
        %v6588 = vlaneseq
        %v6589 = vshrl.u32 %v6588, 7
        %v6590 = vsub.s32 4, %v6589
        %v6591 = vrot.slane %v5291, %v6590
        %v6592 = vlaneseq
        %v6593 = vshrl.u32 %v6592, 7
        %v6594 = vsub.s32 0, %v6593
        %v6595 = vrot.slane %v5292, %v6594
        %v6596 = vlaneseq
        %v6597 = vshrl.u32 %v6596, 7
        %v6598 = vsub.s32 4, %v6597
        %v6599 = vrot.slane %v5292, %v6598
        %v6600 = vlaneseq
        %v6601 = vshrl.u32 %v6600, 7
        %v6602 = vsub.s32 0, %v6601
        %v6603 = vrot.slane %v5293, %v6602
        %v6604 = vlaneseq
        %v6605 = vshrl.u32 %v6604, 7
        %v6606 = vsub.s32 4, %v6605
        %v6607 = vrot.slane %v5293, %v6606
        %v6608 = vlaneseq
        %v6609 = vshrl.u32 %v6608, 7
        %v6610 = vsub.s32 0, %v6609
        %v6611 = vrot.slane %v5294, %v6610
        %v6612 = vlaneseq
        %v6613 = vshrl.u32 %v6612, 7
        %v6614 = vsub.s32 4, %v6613
        %v6615 = vrot.slane %v5294, %v6614
        %v6616 = vlaneseq
        %v6617 = vshrl.u32 %v6616, 7
        %v6618 = vsub.s32 0, %v6617
        %v6619 = vrot.slane %v5295, %v6618
        %v6620 = vlaneseq
        %v6621 = vshrl.u32 %v6620, 7
        %v6622 = vsub.s32 4, %v6621
        %v6623 = vrot.slane %v5295, %v6622
        %v6624 = vlaneseq
        %v6625 = vshrl.u32 %v6624, 7
        %v6626 = vsub.s32 0, %v6625
        %v6627 = vrot.slane %v5296, %v6626
        %v6628 = vlaneseq
        %v6629 = vshrl.u32 %v6628, 7
        %v6630 = vsub.s32 4, %v6629
        %v6631 = vrot.slane %v5296, %v6630
        %v6632 = vlaneseq
        %v6633 = vshrl.u32 %v6632, 7
        %v6634 = vsub.s32 0, %v6633
        %v6635 = vrot.slane %v5297, %v6634
        %v6636 = vlaneseq
        %v6637 = vshrl.u32 %v6636, 7
        %v6638 = vsub.s32 4, %v6637
        %v6639 = vrot.slane %v5297, %v6638
        %v6640 = vlaneseq
        %v6641 = vshrl.u32 %v6640, 7
        %v6642 = vsub.s32 0, %v6641
        %v6643 = vrot.slane %v5298, %v6642
        %v6644 = vlaneseq
        %v6645 = vshrl.u32 %v6644, 7
        %v6646 = vsub.s32 4, %v6645
        %v6647 = vrot.slane %v5298, %v6646
        %v6648 = vlaneseq
        %v6649 = vshrl.u32 %v6648, 7
        %v6650 = vsub.s32 0, %v6649
        %v6651 = vrot.slane %v5299, %v6650
        %v6652 = vlaneseq
        %v6653 = vshrl.u32 %v6652, 7
        %v6654 = vsub.s32 4, %v6653
        %v6655 = vrot.slane %v5299, %v6654
        %v6656 = vlaneseq
        %v6657 = vshrl.u32 %v6656, 7
        %v6658 = vsub.s32 0, %v6657
        %v6659 = vrot.slane %v5300, %v6658
        %v6660 = vlaneseq
        %v6661 = vshrl.u32 %v6660, 7
        %v6662 = vsub.s32 4, %v6661
        %v6663 = vrot.slane %v5300, %v6662
        %v6664 = vsel %vm6271, %v6603, %v6539
        %v6665 = vsel %vm6271, %v6607, %v6543
        %v6666 = vsel %vm6271, %v6611, %v6547
        %v6667 = vsel %vm6271, %v6615, %v6551
        %v6668 = vsel %vm6271, %v6619, %v6555
        %v6669 = vsel %vm6271, %v6623, %v6559
        %v6670 = vsel %vm6271, %v6627, %v6563
        %v6671 = vsel %vm6271, %v6631, %v6567
        %v6672 = vsel %vm6271, %v6635, %v6571
        %v6673 = vsel %vm6271, %v6639, %v6575
        %v6674 = vsel %vm6271, %v6643, %v6579
        %v6675 = vsel %vm6271, %v6647, %v6583
        %v6676 = vsel %vm6271, %v6651, %v6587
        %v6677 = vsel %vm6271, %v6655, %v6591
        %v6678 = vsel %vm6271, %v6659, %v6595
        %v6679 = vsel %vm6271, %v6663, %v6599
        %v6696 = vsel %vm6319, %v6664, 0.0
        %v6697 = vsel %vm6319, %v6665, 0.0
        %v6698 = vadd.f32 %v6696, %v6697
        %v6699 = vsel %vm6319, %v6666, 0.0
        %v6700 = vadd.f32 %v6698, %v6699
        %v6701 = vsel %vm6319, %v6667, 0.0
        %v6702 = vadd.f32 %v6700, %v6701
        %v6703 = vsel %vm6319, %v6668, 0.0
        %v6704 = vadd.f32 %v6702, %v6703
        %v6705 = vsel %vm6319, %v6669, 0.0
        %v6706 = vadd.f32 %v6704, %v6705
        %v6707 = vsel %vm6319, %v6670, 0.0
        %v6708 = vadd.f32 %v6706, %v6707
        %v6709 = vsel %vm6319, %v6671, 0.0
        %v6710 = vadd.f32 %v6708, %v6709
        %v6711 = vsel %vm6319, %v6672, 0.0
        %v6712 = vadd.f32 %v6710, %v6711
        %v6713 = vsel %vm6319, %v6673, 0.0
        %v6714 = vadd.f32 %v6712, %v6713
        %v6715 = vsel %vm6319, %v6674, 0.0
        %v6716 = vadd.f32 %v6714, %v6715
        %v6717 = vsel %vm6319, %v6675, 0.0
        %v6718 = vadd.f32 %v6716, %v6717
        %v6719 = vsel %vm6319, %v6676, 0.0
        %v6720 = vadd.f32 %v6718, %v6719
        %v6721 = vsel %vm6319, %v6677, 0.0
        %v6722 = vadd.f32 %v6720, %v6721
        %v6723 = vsel %vm6319, %v6678, 0.0
        %v6724 = vadd.f32 %v6722, %v6723
        %v6725 = vsel %vm6319, %v6679, 0.0
        %v6726 = vadd.f32 %v6724, %v6725
        %6727 = vadd.xlane.f32.xlu0 %v6726
        %v6728 = vpop.xlane.xlu0 %6727
        %v6729 = vrot.slane %v6728, 4
        %v6730 = vadd.f32 %v6728, %v6729
        %v6731 = vrot.slane %v6730, 2
        %v6732 = vadd.f32 %v6730, %v6731
        %v6733 = vrot.slane %v6732, 1
        %v6734 = vadd.f32 %v6732, %v6733
        %s6735 = vtos %v6734
        %s6736 = sadd.f32 %s6519, %s6735
        %s6737 = scalar_lea.smem [#allocation9], 8
        %6738 = sst [smem:[%s6737]] %s6736
        %s6739 = sld [smem:[#allocation9 + $0xc]]
        %v6740 = vmul.f32 %v5285, %v5285
        %v6741 = vmul.f32 %v5286, %v5286
        %v6742 = vmul.f32 %v5287, %v5287
        %v6743 = vmul.f32 %v5288, %v5288
        %v6744 = vmul.f32 %v5289, %v5289
        %v6745 = vmul.f32 %v5290, %v5290
        %v6746 = vmul.f32 %v5291, %v5291
        %v6747 = vmul.f32 %v5292, %v5292
        %v6748 = vmul.f32 %v5293, %v5293
        %v6749 = vmul.f32 %v5294, %v5294
        %v6750 = vmul.f32 %v5295, %v5295
        %v6751 = vmul.f32 %v5296, %v5296
        %v6752 = vmul.f32 %v5297, %v5297
        %v6753 = vmul.f32 %v5298, %v5298
        %v6754 = vmul.f32 %v5299, %v5299
        %v6755 = vmul.f32 %v5300, %v5300
        %v6772 = vlaneseq
        %v6773 = vshrl.u32 %v6772, 7
        %v6774 = vsub.s32 0, %v6773
        %v6775 = vrot.slane %v6740, %v6774
        %v6776 = vlaneseq
        %v6777 = vshrl.u32 %v6776, 7
        %v6778 = vsub.s32 4, %v6777
        %v6779 = vrot.slane %v6740, %v6778
        %v6780 = vlaneseq
        %v6781 = vshrl.u32 %v6780, 7
        %v6782 = vsub.s32 0, %v6781
        %v6783 = vrot.slane %v6741, %v6782
        %v6784 = vlaneseq
        %v6785 = vshrl.u32 %v6784, 7
        %v6786 = vsub.s32 4, %v6785
        %v6787 = vrot.slane %v6741, %v6786
        %v6788 = vlaneseq
        %v6789 = vshrl.u32 %v6788, 7
        %v6790 = vsub.s32 0, %v6789
        %v6791 = vrot.slane %v6742, %v6790
        %v6792 = vlaneseq
        %v6793 = vshrl.u32 %v6792, 7
        %v6794 = vsub.s32 4, %v6793
        %v6795 = vrot.slane %v6742, %v6794
        %v6796 = vlaneseq
        %v6797 = vshrl.u32 %v6796, 7
        %v6798 = vsub.s32 0, %v6797
        %v6799 = vrot.slane %v6743, %v6798
        %v6800 = vlaneseq
        %v6801 = vshrl.u32 %v6800, 7
        %v6802 = vsub.s32 4, %v6801
        %v6803 = vrot.slane %v6743, %v6802
        %v6804 = vlaneseq
        %v6805 = vshrl.u32 %v6804, 7
        %v6806 = vsub.s32 0, %v6805
        %v6807 = vrot.slane %v6744, %v6806
        %v6808 = vlaneseq
        %v6809 = vshrl.u32 %v6808, 7
        %v6810 = vsub.s32 4, %v6809
        %v6811 = vrot.slane %v6744, %v6810
        %v6812 = vlaneseq
        %v6813 = vshrl.u32 %v6812, 7
        %v6814 = vsub.s32 0, %v6813
        %v6815 = vrot.slane %v6745, %v6814
        %v6816 = vlaneseq
        %v6817 = vshrl.u32 %v6816, 7
        %v6818 = vsub.s32 4, %v6817
        %v6819 = vrot.slane %v6745, %v6818
        %v6820 = vlaneseq
        %v6821 = vshrl.u32 %v6820, 7
        %v6822 = vsub.s32 0, %v6821
        %v6823 = vrot.slane %v6746, %v6822
        %v6824 = vlaneseq
        %v6825 = vshrl.u32 %v6824, 7
        %v6826 = vsub.s32 4, %v6825
        %v6827 = vrot.slane %v6746, %v6826
        %v6828 = vlaneseq
        %v6829 = vshrl.u32 %v6828, 7
        %v6830 = vsub.s32 0, %v6829
        %v6831 = vrot.slane %v6747, %v6830
        %v6832 = vlaneseq
        %v6833 = vshrl.u32 %v6832, 7
        %v6834 = vsub.s32 4, %v6833
        %v6835 = vrot.slane %v6747, %v6834
        %v6836 = vlaneseq
        %v6837 = vshrl.u32 %v6836, 7
        %v6838 = vsub.s32 0, %v6837
        %v6839 = vrot.slane %v6748, %v6838
        %v6840 = vlaneseq
        %v6841 = vshrl.u32 %v6840, 7
        %v6842 = vsub.s32 4, %v6841
        %v6843 = vrot.slane %v6748, %v6842
        %v6844 = vlaneseq
        %v6845 = vshrl.u32 %v6844, 7
        %v6846 = vsub.s32 0, %v6845
        %v6847 = vrot.slane %v6749, %v6846
        %v6848 = vlaneseq
        %v6849 = vshrl.u32 %v6848, 7
        %v6850 = vsub.s32 4, %v6849
        %v6851 = vrot.slane %v6749, %v6850
        %v6852 = vlaneseq
        %v6853 = vshrl.u32 %v6852, 7
        %v6854 = vsub.s32 0, %v6853
        %v6855 = vrot.slane %v6750, %v6854
        %v6856 = vlaneseq
        %v6857 = vshrl.u32 %v6856, 7
        %v6858 = vsub.s32 4, %v6857
        %v6859 = vrot.slane %v6750, %v6858
        %v6860 = vlaneseq
        %v6861 = vshrl.u32 %v6860, 7
        %v6862 = vsub.s32 0, %v6861
        %v6863 = vrot.slane %v6751, %v6862
        %v6864 = vlaneseq
        %v6865 = vshrl.u32 %v6864, 7
        %v6866 = vsub.s32 4, %v6865
        %v6867 = vrot.slane %v6751, %v6866
        %v6868 = vlaneseq
        %v6869 = vshrl.u32 %v6868, 7
        %v6870 = vsub.s32 0, %v6869
        %v6871 = vrot.slane %v6752, %v6870
        %v6872 = vlaneseq
        %v6873 = vshrl.u32 %v6872, 7
        %v6874 = vsub.s32 4, %v6873
        %v6875 = vrot.slane %v6752, %v6874
        %v6876 = vlaneseq
        %v6877 = vshrl.u32 %v6876, 7
        %v6878 = vsub.s32 0, %v6877
        %v6879 = vrot.slane %v6753, %v6878
        %v6880 = vlaneseq
        %v6881 = vshrl.u32 %v6880, 7
        %v6882 = vsub.s32 4, %v6881
        %v6883 = vrot.slane %v6753, %v6882
        %v6884 = vlaneseq
        %v6885 = vshrl.u32 %v6884, 7
        %v6886 = vsub.s32 0, %v6885
        %v6887 = vrot.slane %v6754, %v6886
        %v6888 = vlaneseq
        %v6889 = vshrl.u32 %v6888, 7
        %v6890 = vsub.s32 4, %v6889
        %v6891 = vrot.slane %v6754, %v6890
        %v6892 = vlaneseq
        %v6893 = vshrl.u32 %v6892, 7
        %v6894 = vsub.s32 0, %v6893
        %v6895 = vrot.slane %v6755, %v6894
        %v6896 = vlaneseq
        %v6897 = vshrl.u32 %v6896, 7
        %v6898 = vsub.s32 4, %v6897
        %v6899 = vrot.slane %v6755, %v6898
        %v6900 = vsel %vm6271, %v6839, %v6775
        %v6901 = vsel %vm6271, %v6843, %v6779
        %v6902 = vsel %vm6271, %v6847, %v6783
        %v6903 = vsel %vm6271, %v6851, %v6787
        %v6904 = vsel %vm6271, %v6855, %v6791
        %v6905 = vsel %vm6271, %v6859, %v6795
        %v6906 = vsel %vm6271, %v6863, %v6799
        %v6907 = vsel %vm6271, %v6867, %v6803
        %v6908 = vsel %vm6271, %v6871, %v6807
        %v6909 = vsel %vm6271, %v6875, %v6811
        %v6910 = vsel %vm6271, %v6879, %v6815
        %v6911 = vsel %vm6271, %v6883, %v6819
        %v6912 = vsel %vm6271, %v6887, %v6823
        %v6913 = vsel %vm6271, %v6891, %v6827
        %v6914 = vsel %vm6271, %v6895, %v6831
        %v6915 = vsel %vm6271, %v6899, %v6835
        %v6932 = vsel %vm6319, %v6900, 0.0
        %v6933 = vsel %vm6319, %v6901, 0.0
        %v6934 = vadd.f32 %v6932, %v6933
        %v6935 = vsel %vm6319, %v6902, 0.0
        %v6936 = vadd.f32 %v6934, %v6935
        %v6937 = vsel %vm6319, %v6903, 0.0
        %v6938 = vadd.f32 %v6936, %v6937
        %v6939 = vsel %vm6319, %v6904, 0.0
        %v6940 = vadd.f32 %v6938, %v6939
        %v6941 = vsel %vm6319, %v6905, 0.0
        %v6942 = vadd.f32 %v6940, %v6941
        %v6943 = vsel %vm6319, %v6906, 0.0
        %v6944 = vadd.f32 %v6942, %v6943
        %v6945 = vsel %vm6319, %v6907, 0.0
        %v6946 = vadd.f32 %v6944, %v6945
        %v6947 = vsel %vm6319, %v6908, 0.0
        %v6948 = vadd.f32 %v6946, %v6947
        %v6949 = vsel %vm6319, %v6909, 0.0
        %v6950 = vadd.f32 %v6948, %v6949
        %v6951 = vsel %vm6319, %v6910, 0.0
        %v6952 = vadd.f32 %v6950, %v6951
        %v6953 = vsel %vm6319, %v6911, 0.0
        %v6954 = vadd.f32 %v6952, %v6953
        %v6955 = vsel %vm6319, %v6912, 0.0
        %v6956 = vadd.f32 %v6954, %v6955
        %v6957 = vsel %vm6319, %v6913, 0.0
        %v6958 = vadd.f32 %v6956, %v6957
        %v6959 = vsel %vm6319, %v6914, 0.0
        %v6960 = vadd.f32 %v6958, %v6959
        %v6961 = vsel %vm6319, %v6915, 0.0
        %v6962 = vadd.f32 %v6960, %v6961
        %6963 = vadd.xlane.f32.xlu0 %v6962
        %v6964 = vpop.xlane.xlu0 %6963
        %v6965 = vrot.slane %v6964, 4
        %v6966 = vadd.f32 %v6964, %v6965
        %v6967 = vrot.slane %v6966, 2
        %v6968 = vadd.f32 %v6966, %v6967
        %v6969 = vrot.slane %v6968, 1
        %v6970 = vadd.f32 %v6968, %v6969
        %s6971 = vtos %v6970
        %s6972 = sadd.f32 %s6739, %s6971
        %s6973 = scalar_lea.smem [#allocation9], 12
        %6974 = sst [smem:[%s6973]] %s6972
        %s6975 = sld [smem:[#allocation9 + $0x1]]
        %v7008 = vrot.slane %v2621, 7
        %v7009 = vsel %vm6271, %v7008, %v2605
        %v7010 = vrot.slane %v2622, 7
        %v7011 = vsel %vm6271, %v7010, %v2606
        %v7012 = vrot.slane %v2623, 7
        %v7013 = vsel %vm6271, %v7012, %v2607
        %v7014 = vrot.slane %v2624, 7
        %v7015 = vsel %vm6271, %v7014, %v2608
        %v7016 = vrot.slane %v2625, 7
        %v7017 = vsel %vm6271, %v7016, %v2609
        %v7018 = vrot.slane %v2626, 7
        %v7019 = vsel %vm6271, %v7018, %v2610
        %v7020 = vrot.slane %v2627, 7
        %v7021 = vsel %vm6271, %v7020, %v2611
        %v7022 = vrot.slane %v2628, 7
        %v7023 = vsel %vm6271, %v7022, %v2612
        %v7024 = vrot.slane %v2629, 7
        %v7025 = vsel %vm6271, %v7024, %v2613
        %v7026 = vrot.slane %v2630, 7
        %v7027 = vsel %vm6271, %v7026, %v2614
        %v7028 = vrot.slane %v2631, 7
        %v7029 = vsel %vm6271, %v7028, %v2615
        %v7030 = vrot.slane %v2632, 7
        %v7031 = vsel %vm6271, %v7030, %v2616
        %v7032 = vrot.slane %v2633, 7
        %v7033 = vsel %vm6271, %v7032, %v2617
        %v7034 = vrot.slane %v2634, 7
        %v7035 = vsel %vm6271, %v7034, %v2618
        %v7036 = vrot.slane %v2635, 7
        %v7037 = vsel %vm6271, %v7036, %v2619
        %v7038 = vrot.slane %v2636, 7
        %v7039 = vsel %vm6271, %v7038, %v2620
        %v7056 = vsel %vm6319, %v7009, 0.0
        %v7057 = vsel %vm6319, %v7011, 0.0
        %v7058 = vadd.f32 %v7056, %v7057
        %v7059 = vsel %vm6319, %v7013, 0.0
        %v7060 = vadd.f32 %v7058, %v7059
        %v7061 = vsel %vm6319, %v7015, 0.0
        %v7062 = vadd.f32 %v7060, %v7061
        %v7063 = vsel %vm6319, %v7017, 0.0
        %v7064 = vadd.f32 %v7062, %v7063
        %v7065 = vsel %vm6319, %v7019, 0.0
        %v7066 = vadd.f32 %v7064, %v7065
        %v7067 = vsel %vm6319, %v7021, 0.0
        %v7068 = vadd.f32 %v7066, %v7067
        %v7069 = vsel %vm6319, %v7023, 0.0
        %v7070 = vadd.f32 %v7068, %v7069
        %v7071 = vsel %vm6319, %v7025, 0.0
        %v7072 = vadd.f32 %v7070, %v7071
        %v7073 = vsel %vm6319, %v7027, 0.0
        %v7074 = vadd.f32 %v7072, %v7073
        %v7075 = vsel %vm6319, %v7029, 0.0
        %v7076 = vadd.f32 %v7074, %v7075
        %v7077 = vsel %vm6319, %v7031, 0.0
        %v7078 = vadd.f32 %v7076, %v7077
        %v7079 = vsel %vm6319, %v7033, 0.0
        %v7080 = vadd.f32 %v7078, %v7079
        %v7081 = vsel %vm6319, %v7035, 0.0
        %v7082 = vadd.f32 %v7080, %v7081
        %v7083 = vsel %vm6319, %v7037, 0.0
        %v7084 = vadd.f32 %v7082, %v7083
        %v7085 = vsel %vm6319, %v7039, 0.0
        %v7086 = vadd.f32 %v7084, %v7085
        %7087 = vadd.xlane.f32.xlu0 %v7086
        %v7088 = vpop.xlane.xlu0 %7087
        %v7089 = vrot.slane %v7088, 4
        %v7090 = vadd.f32 %v7088, %v7089
        %v7091 = vrot.slane %v7090, 2
        %v7092 = vadd.f32 %v7090, %v7091
        %v7093 = vrot.slane %v7092, 1
        %v7094 = vadd.f32 %v7092, %v7093
        %s7095 = vtos %v7094
        %s7096 = sadd.f32 %s6975, %s7095
        %s7097 = scalar_lea.smem [#allocation9], 1
        %7098 = sst [smem:[%s7097]] %s7096
        %s7099 = sld [smem:[#allocation9 + $0x5]]
        %v7100 = vmul.f32 %v2605, %v2605
        %v7101 = vmul.f32 %v2606, %v2606
        %v7102 = vmul.f32 %v2607, %v2607
        %v7103 = vmul.f32 %v2608, %v2608
        %v7104 = vmul.f32 %v2609, %v2609
        %v7105 = vmul.f32 %v2610, %v2610
        %v7106 = vmul.f32 %v2611, %v2611
        %v7107 = vmul.f32 %v2612, %v2612
        %v7108 = vmul.f32 %v2613, %v2613
        %v7109 = vmul.f32 %v2614, %v2614
        %v7110 = vmul.f32 %v2615, %v2615
        %v7111 = vmul.f32 %v2616, %v2616
        %v7112 = vmul.f32 %v2617, %v2617
        %v7113 = vmul.f32 %v2618, %v2618
        %v7114 = vmul.f32 %v2619, %v2619
        %v7115 = vmul.f32 %v2620, %v2620
        %v7116 = vmul.f32 %v2621, %v2621
        %v7117 = vmul.f32 %v2622, %v2622
        %v7118 = vmul.f32 %v2623, %v2623
        %v7119 = vmul.f32 %v2624, %v2624
        %v7120 = vmul.f32 %v2625, %v2625
        %v7121 = vmul.f32 %v2626, %v2626
        %v7122 = vmul.f32 %v2627, %v2627
        %v7123 = vmul.f32 %v2628, %v2628
        %v7124 = vmul.f32 %v2629, %v2629
        %v7125 = vmul.f32 %v2630, %v2630
        %v7126 = vmul.f32 %v2631, %v2631
        %v7127 = vmul.f32 %v2632, %v2632
        %v7128 = vmul.f32 %v2633, %v2633
        %v7129 = vmul.f32 %v2634, %v2634
        %v7130 = vmul.f32 %v2635, %v2635
        %v7131 = vmul.f32 %v2636, %v2636
        %v7164 = vrot.slane %v7116, 7
        %v7165 = vsel %vm6271, %v7164, %v7100
        %v7166 = vrot.slane %v7117, 7
        %v7167 = vsel %vm6271, %v7166, %v7101
        %v7168 = vrot.slane %v7118, 7
        %v7169 = vsel %vm6271, %v7168, %v7102
        %v7170 = vrot.slane %v7119, 7
        %v7171 = vsel %vm6271, %v7170, %v7103
        %v7172 = vrot.slane %v7120, 7
        %v7173 = vsel %vm6271, %v7172, %v7104
        %v7174 = vrot.slane %v7121, 7
        %v7175 = vsel %vm6271, %v7174, %v7105
        %v7176 = vrot.slane %v7122, 7
        %v7177 = vsel %vm6271, %v7176, %v7106
        %v7178 = vrot.slane %v7123, 7
        %v7179 = vsel %vm6271, %v7178, %v7107
        %v7180 = vrot.slane %v7124, 7
        %v7181 = vsel %vm6271, %v7180, %v7108
        %v7182 = vrot.slane %v7125, 7
        %v7183 = vsel %vm6271, %v7182, %v7109
        %v7184 = vrot.slane %v7126, 7
        %v7185 = vsel %vm6271, %v7184, %v7110
        %v7186 = vrot.slane %v7127, 7
        %v7187 = vsel %vm6271, %v7186, %v7111
        %v7188 = vrot.slane %v7128, 7
        %v7189 = vsel %vm6271, %v7188, %v7112
        %v7190 = vrot.slane %v7129, 7
        %v7191 = vsel %vm6271, %v7190, %v7113
        %v7192 = vrot.slane %v7130, 7
        %v7193 = vsel %vm6271, %v7192, %v7114
        %v7194 = vrot.slane %v7131, 7
        %v7195 = vsel %vm6271, %v7194, %v7115
        %v7212 = vsel %vm6319, %v7165, 0.0
        %v7213 = vsel %vm6319, %v7167, 0.0
        %v7214 = vadd.f32 %v7212, %v7213
        %v7215 = vsel %vm6319, %v7169, 0.0
        %v7216 = vadd.f32 %v7214, %v7215
        %v7217 = vsel %vm6319, %v7171, 0.0
        %v7218 = vadd.f32 %v7216, %v7217
        %v7219 = vsel %vm6319, %v7173, 0.0
        %v7220 = vadd.f32 %v7218, %v7219
        %v7221 = vsel %vm6319, %v7175, 0.0
        %v7222 = vadd.f32 %v7220, %v7221
        %v7223 = vsel %vm6319, %v7177, 0.0
        %v7224 = vadd.f32 %v7222, %v7223
        %v7225 = vsel %vm6319, %v7179, 0.0
        %v7226 = vadd.f32 %v7224, %v7225
        %v7227 = vsel %vm6319, %v7181, 0.0
        %v7228 = vadd.f32 %v7226, %v7227
        %v7229 = vsel %vm6319, %v7183, 0.0
        %v7230 = vadd.f32 %v7228, %v7229
        %v7231 = vsel %vm6319, %v7185, 0.0
        %v7232 = vadd.f32 %v7230, %v7231
        %v7233 = vsel %vm6319, %v7187, 0.0
        %v7234 = vadd.f32 %v7232, %v7233
        %v7235 = vsel %vm6319, %v7189, 0.0
        %v7236 = vadd.f32 %v7234, %v7235
        %v7237 = vsel %vm6319, %v7191, 0.0
        %v7238 = vadd.f32 %v7236, %v7237
        %v7239 = vsel %vm6319, %v7193, 0.0
        %v7240 = vadd.f32 %v7238, %v7239
        %v7241 = vsel %vm6319, %v7195, 0.0
        %v7242 = vadd.f32 %v7240, %v7241
        %7243 = vadd.xlane.f32.xlu0 %v7242
        %v7244 = vpop.xlane.xlu0 %7243
        %v7245 = vrot.slane %v7244, 4
        %v7246 = vadd.f32 %v7244, %v7245
        %v7247 = vrot.slane %v7246, 2
        %v7248 = vadd.f32 %v7246, %v7247
        %v7249 = vrot.slane %v7248, 1
        %v7250 = vadd.f32 %v7248, %v7249
        %s7251 = vtos %v7250
        %s7252 = sadd.f32 %s7099, %s7251
        %s7253 = scalar_lea.smem [#allocation9], 5
        %7254 = sst [smem:[%s7253]] %s7252
        %s7255 = sld [smem:[#allocation9 + $0x9]]
        %v7272 = vlaneseq
        %v7273 = vshrl.u32 %v7272, 7
        %v7274 = vsub.s32 0, %v7273
        %v7275 = vrot.slane %v5597, %v7274
        %v7276 = vlaneseq
        %v7277 = vshrl.u32 %v7276, 7
        %v7278 = vsub.s32 4, %v7277
        %v7279 = vrot.slane %v5597, %v7278
        %v7280 = vlaneseq
        %v7281 = vshrl.u32 %v7280, 7
        %v7282 = vsub.s32 0, %v7281
        %v7283 = vrot.slane %v5598, %v7282
        %v7284 = vlaneseq
        %v7285 = vshrl.u32 %v7284, 7
        %v7286 = vsub.s32 4, %v7285
        %v7287 = vrot.slane %v5598, %v7286
        %v7288 = vlaneseq
        %v7289 = vshrl.u32 %v7288, 7
        %v7290 = vsub.s32 0, %v7289
        %v7291 = vrot.slane %v5599, %v7290
        %v7292 = vlaneseq
        %v7293 = vshrl.u32 %v7292, 7
        %v7294 = vsub.s32 4, %v7293
        %v7295 = vrot.slane %v5599, %v7294
        %v7296 = vlaneseq
        %v7297 = vshrl.u32 %v7296, 7
        %v7298 = vsub.s32 0, %v7297
        %v7299 = vrot.slane %v5600, %v7298
        %v7300 = vlaneseq
        %v7301 = vshrl.u32 %v7300, 7
        %v7302 = vsub.s32 4, %v7301
        %v7303 = vrot.slane %v5600, %v7302
        %v7304 = vlaneseq
        %v7305 = vshrl.u32 %v7304, 7
        %v7306 = vsub.s32 0, %v7305
        %v7307 = vrot.slane %v5601, %v7306
        %v7308 = vlaneseq
        %v7309 = vshrl.u32 %v7308, 7
        %v7310 = vsub.s32 4, %v7309
        %v7311 = vrot.slane %v5601, %v7310
        %v7312 = vlaneseq
        %v7313 = vshrl.u32 %v7312, 7
        %v7314 = vsub.s32 0, %v7313
        %v7315 = vrot.slane %v5602, %v7314
        %v7316 = vlaneseq
        %v7317 = vshrl.u32 %v7316, 7
        %v7318 = vsub.s32 4, %v7317
        %v7319 = vrot.slane %v5602, %v7318
        %v7320 = vlaneseq
        %v7321 = vshrl.u32 %v7320, 7
        %v7322 = vsub.s32 0, %v7321
        %v7323 = vrot.slane %v5603, %v7322
        %v7324 = vlaneseq
        %v7325 = vshrl.u32 %v7324, 7
        %v7326 = vsub.s32 4, %v7325
        %v7327 = vrot.slane %v5603, %v7326
        %v7328 = vlaneseq
        %v7329 = vshrl.u32 %v7328, 7
        %v7330 = vsub.s32 0, %v7329
        %v7331 = vrot.slane %v5604, %v7330
        %v7332 = vlaneseq
        %v7333 = vshrl.u32 %v7332, 7
        %v7334 = vsub.s32 4, %v7333
        %v7335 = vrot.slane %v5604, %v7334
        %v7336 = vlaneseq
        %v7337 = vshrl.u32 %v7336, 7
        %v7338 = vsub.s32 0, %v7337
        %v7339 = vrot.slane %v5605, %v7338
        %v7340 = vlaneseq
        %v7341 = vshrl.u32 %v7340, 7
        %v7342 = vsub.s32 4, %v7341
        %v7343 = vrot.slane %v5605, %v7342
        %v7344 = vlaneseq
        %v7345 = vshrl.u32 %v7344, 7
        %v7346 = vsub.s32 0, %v7345
        %v7347 = vrot.slane %v5606, %v7346
        %v7348 = vlaneseq
        %v7349 = vshrl.u32 %v7348, 7
        %v7350 = vsub.s32 4, %v7349
        %v7351 = vrot.slane %v5606, %v7350
        %v7352 = vlaneseq
        %v7353 = vshrl.u32 %v7352, 7
        %v7354 = vsub.s32 0, %v7353
        %v7355 = vrot.slane %v5607, %v7354
        %v7356 = vlaneseq
        %v7357 = vshrl.u32 %v7356, 7
        %v7358 = vsub.s32 4, %v7357
        %v7359 = vrot.slane %v5607, %v7358
        %v7360 = vlaneseq
        %v7361 = vshrl.u32 %v7360, 7
        %v7362 = vsub.s32 0, %v7361
        %v7363 = vrot.slane %v5608, %v7362
        %v7364 = vlaneseq
        %v7365 = vshrl.u32 %v7364, 7
        %v7366 = vsub.s32 4, %v7365
        %v7367 = vrot.slane %v5608, %v7366
        %v7368 = vlaneseq
        %v7369 = vshrl.u32 %v7368, 7
        %v7370 = vsub.s32 0, %v7369
        %v7371 = vrot.slane %v5609, %v7370
        %v7372 = vlaneseq
        %v7373 = vshrl.u32 %v7372, 7
        %v7374 = vsub.s32 4, %v7373
        %v7375 = vrot.slane %v5609, %v7374
        %v7376 = vlaneseq
        %v7377 = vshrl.u32 %v7376, 7
        %v7378 = vsub.s32 0, %v7377
        %v7379 = vrot.slane %v5610, %v7378
        %v7380 = vlaneseq
        %v7381 = vshrl.u32 %v7380, 7
        %v7382 = vsub.s32 4, %v7381
        %v7383 = vrot.slane %v5610, %v7382
        %v7384 = vlaneseq
        %v7385 = vshrl.u32 %v7384, 7
        %v7386 = vsub.s32 0, %v7385
        %v7387 = vrot.slane %v5611, %v7386
        %v7388 = vlaneseq
        %v7389 = vshrl.u32 %v7388, 7
        %v7390 = vsub.s32 4, %v7389
        %v7391 = vrot.slane %v5611, %v7390
        %v7392 = vlaneseq
        %v7393 = vshrl.u32 %v7392, 7
        %v7394 = vsub.s32 0, %v7393
        %v7395 = vrot.slane %v5612, %v7394
        %v7396 = vlaneseq
        %v7397 = vshrl.u32 %v7396, 7
        %v7398 = vsub.s32 4, %v7397
        %v7399 = vrot.slane %v5612, %v7398
        %v7400 = vsel %vm6271, %v7339, %v7275
        %v7401 = vsel %vm6271, %v7343, %v7279
        %v7402 = vsel %vm6271, %v7347, %v7283
        %v7403 = vsel %vm6271, %v7351, %v7287
        %v7404 = vsel %vm6271, %v7355, %v7291
        %v7405 = vsel %vm6271, %v7359, %v7295
        %v7406 = vsel %vm6271, %v7363, %v7299
        %v7407 = vsel %vm6271, %v7367, %v7303
        %v7408 = vsel %vm6271, %v7371, %v7307
        %v7409 = vsel %vm6271, %v7375, %v7311
        %v7410 = vsel %vm6271, %v7379, %v7315
        %v7411 = vsel %vm6271, %v7383, %v7319
        %v7412 = vsel %vm6271, %v7387, %v7323
        %v7413 = vsel %vm6271, %v7391, %v7327
        %v7414 = vsel %vm6271, %v7395, %v7331
        %v7415 = vsel %vm6271, %v7399, %v7335
        %v7432 = vsel %vm6319, %v7400, 0.0
        %v7433 = vsel %vm6319, %v7401, 0.0
        %v7434 = vadd.f32 %v7432, %v7433
        %v7435 = vsel %vm6319, %v7402, 0.0
        %v7436 = vadd.f32 %v7434, %v7435
        %v7437 = vsel %vm6319, %v7403, 0.0
        %v7438 = vadd.f32 %v7436, %v7437
        %v7439 = vsel %vm6319, %v7404, 0.0
        %v7440 = vadd.f32 %v7438, %v7439
        %v7441 = vsel %vm6319, %v7405, 0.0
        %v7442 = vadd.f32 %v7440, %v7441
        %v7443 = vsel %vm6319, %v7406, 0.0
        %v7444 = vadd.f32 %v7442, %v7443
        %v7445 = vsel %vm6319, %v7407, 0.0
        %v7446 = vadd.f32 %v7444, %v7445
        %v7447 = vsel %vm6319, %v7408, 0.0
        %v7448 = vadd.f32 %v7446, %v7447
        %v7449 = vsel %vm6319, %v7409, 0.0
        %v7450 = vadd.f32 %v7448, %v7449
        %v7451 = vsel %vm6319, %v7410, 0.0
        %v7452 = vadd.f32 %v7450, %v7451
        %v7453 = vsel %vm6319, %v7411, 0.0
        %v7454 = vadd.f32 %v7452, %v7453
        %v7455 = vsel %vm6319, %v7412, 0.0
        %v7456 = vadd.f32 %v7454, %v7455
        %v7457 = vsel %vm6319, %v7413, 0.0
        %v7458 = vadd.f32 %v7456, %v7457
        %v7459 = vsel %vm6319, %v7414, 0.0
        %v7460 = vadd.f32 %v7458, %v7459
        %v7461 = vsel %vm6319, %v7415, 0.0
        %v7462 = vadd.f32 %v7460, %v7461
        %7463 = vadd.xlane.f32.xlu0 %v7462
        %v7464 = vpop.xlane.xlu0 %7463
        %v7465 = vrot.slane %v7464, 4
        %v7466 = vadd.f32 %v7464, %v7465
        %v7467 = vrot.slane %v7466, 2
        %v7468 = vadd.f32 %v7466, %v7467
        %v7469 = vrot.slane %v7468, 1
        %v7470 = vadd.f32 %v7468, %v7469
        %s7471 = vtos %v7470
        %s7472 = sadd.f32 %s7255, %s7471
        %s7473 = scalar_lea.smem [#allocation9], 9
        %7474 = sst [smem:[%s7473]] %s7472
        %s7475 = sld [smem:[#allocation9 + $0xd]]
        %v7476 = vmul.f32 %v5597, %v5597
        %v7477 = vmul.f32 %v5598, %v5598
        %v7478 = vmul.f32 %v5599, %v5599
        %v7479 = vmul.f32 %v5600, %v5600
        %v7480 = vmul.f32 %v5601, %v5601
        %v7481 = vmul.f32 %v5602, %v5602
        %v7482 = vmul.f32 %v5603, %v5603
        %v7483 = vmul.f32 %v5604, %v5604
        %v7484 = vmul.f32 %v5605, %v5605
        %v7485 = vmul.f32 %v5606, %v5606
        %v7486 = vmul.f32 %v5607, %v5607
        %v7487 = vmul.f32 %v5608, %v5608
        %v7488 = vmul.f32 %v5609, %v5609
        %v7489 = vmul.f32 %v5610, %v5610
        %v7490 = vmul.f32 %v5611, %v5611
        %v7491 = vmul.f32 %v5612, %v5612
        %v7508 = vlaneseq
        %v7509 = vshrl.u32 %v7508, 7
        %v7510 = vsub.s32 0, %v7509
        %v7511 = vrot.slane %v7476, %v7510
        %v7512 = vlaneseq
        %v7513 = vshrl.u32 %v7512, 7
        %v7514 = vsub.s32 4, %v7513
        %v7515 = vrot.slane %v7476, %v7514
        %v7516 = vlaneseq
        %v7517 = vshrl.u32 %v7516, 7
        %v7518 = vsub.s32 0, %v7517
        %v7519 = vrot.slane %v7477, %v7518
        %v7520 = vlaneseq
        %v7521 = vshrl.u32 %v7520, 7
        %v7522 = vsub.s32 4, %v7521
        %v7523 = vrot.slane %v7477, %v7522
        %v7524 = vlaneseq
        %v7525 = vshrl.u32 %v7524, 7
        %v7526 = vsub.s32 0, %v7525
        %v7527 = vrot.slane %v7478, %v7526
        %v7528 = vlaneseq
        %v7529 = vshrl.u32 %v7528, 7
        %v7530 = vsub.s32 4, %v7529
        %v7531 = vrot.slane %v7478, %v7530
        %v7532 = vlaneseq
        %v7533 = vshrl.u32 %v7532, 7
        %v7534 = vsub.s32 0, %v7533
        %v7535 = vrot.slane %v7479, %v7534
        %v7536 = vlaneseq
        %v7537 = vshrl.u32 %v7536, 7
        %v7538 = vsub.s32 4, %v7537
        %v7539 = vrot.slane %v7479, %v7538
        %v7540 = vlaneseq
        %v7541 = vshrl.u32 %v7540, 7
        %v7542 = vsub.s32 0, %v7541
        %v7543 = vrot.slane %v7480, %v7542
        %v7544 = vlaneseq
        %v7545 = vshrl.u32 %v7544, 7
        %v7546 = vsub.s32 4, %v7545
        %v7547 = vrot.slane %v7480, %v7546
        %v7548 = vlaneseq
        %v7549 = vshrl.u32 %v7548, 7
        %v7550 = vsub.s32 0, %v7549
        %v7551 = vrot.slane %v7481, %v7550
        %v7552 = vlaneseq
        %v7553 = vshrl.u32 %v7552, 7
        %v7554 = vsub.s32 4, %v7553
        %v7555 = vrot.slane %v7481, %v7554
        %v7556 = vlaneseq
        %v7557 = vshrl.u32 %v7556, 7
        %v7558 = vsub.s32 0, %v7557
        %v7559 = vrot.slane %v7482, %v7558
        %v7560 = vlaneseq
        %v7561 = vshrl.u32 %v7560, 7
        %v7562 = vsub.s32 4, %v7561
        %v7563 = vrot.slane %v7482, %v7562
        %v7564 = vlaneseq
        %v7565 = vshrl.u32 %v7564, 7
        %v7566 = vsub.s32 0, %v7565
        %v7567 = vrot.slane %v7483, %v7566
        %v7568 = vlaneseq
        %v7569 = vshrl.u32 %v7568, 7
        %v7570 = vsub.s32 4, %v7569
        %v7571 = vrot.slane %v7483, %v7570
        %v7572 = vlaneseq
        %v7573 = vshrl.u32 %v7572, 7
        %v7574 = vsub.s32 0, %v7573
        %v7575 = vrot.slane %v7484, %v7574
        %v7576 = vlaneseq
        %v7577 = vshrl.u32 %v7576, 7
        %v7578 = vsub.s32 4, %v7577
        %v7579 = vrot.slane %v7484, %v7578
        %v7580 = vlaneseq
        %v7581 = vshrl.u32 %v7580, 7
        %v7582 = vsub.s32 0, %v7581
        %v7583 = vrot.slane %v7485, %v7582
        %v7584 = vlaneseq
        %v7585 = vshrl.u32 %v7584, 7
        %v7586 = vsub.s32 4, %v7585
        %v7587 = vrot.slane %v7485, %v7586
        %v7588 = vlaneseq
        %v7589 = vshrl.u32 %v7588, 7
        %v7590 = vsub.s32 0, %v7589
        %v7591 = vrot.slane %v7486, %v7590
        %v7592 = vlaneseq
        %v7593 = vshrl.u32 %v7592, 7
        %v7594 = vsub.s32 4, %v7593
        %v7595 = vrot.slane %v7486, %v7594
        %v7596 = vlaneseq
        %v7597 = vshrl.u32 %v7596, 7
        %v7598 = vsub.s32 0, %v7597
        %v7599 = vrot.slane %v7487, %v7598
        %v7600 = vlaneseq
        %v7601 = vshrl.u32 %v7600, 7
        %v7602 = vsub.s32 4, %v7601
        %v7603 = vrot.slane %v7487, %v7602
        %v7604 = vlaneseq
        %v7605 = vshrl.u32 %v7604, 7
        %v7606 = vsub.s32 0, %v7605
        %v7607 = vrot.slane %v7488, %v7606
        %v7608 = vlaneseq
        %v7609 = vshrl.u32 %v7608, 7
        %v7610 = vsub.s32 4, %v7609
        %v7611 = vrot.slane %v7488, %v7610
        %v7612 = vlaneseq
        %v7613 = vshrl.u32 %v7612, 7
        %v7614 = vsub.s32 0, %v7613
        %v7615 = vrot.slane %v7489, %v7614
        %v7616 = vlaneseq
        %v7617 = vshrl.u32 %v7616, 7
        %v7618 = vsub.s32 4, %v7617
        %v7619 = vrot.slane %v7489, %v7618
        %v7620 = vlaneseq
        %v7621 = vshrl.u32 %v7620, 7
        %v7622 = vsub.s32 0, %v7621
        %v7623 = vrot.slane %v7490, %v7622
        %v7624 = vlaneseq
        %v7625 = vshrl.u32 %v7624, 7
        %v7626 = vsub.s32 4, %v7625
        %v7627 = vrot.slane %v7490, %v7626
        %v7628 = vlaneseq
        %v7629 = vshrl.u32 %v7628, 7
        %v7630 = vsub.s32 0, %v7629
        %v7631 = vrot.slane %v7491, %v7630
        %v7632 = vlaneseq
        %v7633 = vshrl.u32 %v7632, 7
        %v7634 = vsub.s32 4, %v7633
        %v7635 = vrot.slane %v7491, %v7634
        %v7636 = vsel %vm6271, %v7575, %v7511
        %v7637 = vsel %vm6271, %v7579, %v7515
        %v7638 = vsel %vm6271, %v7583, %v7519
        %v7639 = vsel %vm6271, %v7587, %v7523
        %v7640 = vsel %vm6271, %v7591, %v7527
        %v7641 = vsel %vm6271, %v7595, %v7531
        %v7642 = vsel %vm6271, %v7599, %v7535
        %v7643 = vsel %vm6271, %v7603, %v7539
        %v7644 = vsel %vm6271, %v7607, %v7543
        %v7645 = vsel %vm6271, %v7611, %v7547
        %v7646 = vsel %vm6271, %v7615, %v7551
        %v7647 = vsel %vm6271, %v7619, %v7555
        %v7648 = vsel %vm6271, %v7623, %v7559
        %v7649 = vsel %vm6271, %v7627, %v7563
        %v7650 = vsel %vm6271, %v7631, %v7567
        %v7651 = vsel %vm6271, %v7635, %v7571
        %v7668 = vsel %vm6319, %v7636, 0.0
        %v7669 = vsel %vm6319, %v7637, 0.0
        %v7670 = vadd.f32 %v7668, %v7669
        %v7671 = vsel %vm6319, %v7638, 0.0
        %v7672 = vadd.f32 %v7670, %v7671
        %v7673 = vsel %vm6319, %v7639, 0.0
        %v7674 = vadd.f32 %v7672, %v7673
        %v7675 = vsel %vm6319, %v7640, 0.0
        %v7676 = vadd.f32 %v7674, %v7675
        %v7677 = vsel %vm6319, %v7641, 0.0
        %v7678 = vadd.f32 %v7676, %v7677
        %v7679 = vsel %vm6319, %v7642, 0.0
        %v7680 = vadd.f32 %v7678, %v7679
        %v7681 = vsel %vm6319, %v7643, 0.0
        %v7682 = vadd.f32 %v7680, %v7681
        %v7683 = vsel %vm6319, %v7644, 0.0
        %v7684 = vadd.f32 %v7682, %v7683
        %v7685 = vsel %vm6319, %v7645, 0.0
        %v7686 = vadd.f32 %v7684, %v7685
        %v7687 = vsel %vm6319, %v7646, 0.0
        %v7688 = vadd.f32 %v7686, %v7687
        %v7689 = vsel %vm6319, %v7647, 0.0
        %v7690 = vadd.f32 %v7688, %v7689
        %v7691 = vsel %vm6319, %v7648, 0.0
        %v7692 = vadd.f32 %v7690, %v7691
        %v7693 = vsel %vm6319, %v7649, 0.0
        %v7694 = vadd.f32 %v7692, %v7693
        %v7695 = vsel %vm6319, %v7650, 0.0
        %v7696 = vadd.f32 %v7694, %v7695
        %v7697 = vsel %vm6319, %v7651, 0.0
        %v7698 = vadd.f32 %v7696, %v7697
        %7699 = vadd.xlane.f32.xlu0 %v7698
        %v7700 = vpop.xlane.xlu0 %7699
        %v7701 = vrot.slane %v7700, 4
        %v7702 = vadd.f32 %v7700, %v7701
        %v7703 = vrot.slane %v7702, 2
        %v7704 = vadd.f32 %v7702, %v7703
        %v7705 = vrot.slane %v7704, 1
        %v7706 = vadd.f32 %v7704, %v7705
        %s7707 = vtos %v7706
        %s7708 = sadd.f32 %s7475, %s7707
        %s7709 = scalar_lea.smem [#allocation9], 13
        %7710 = sst [smem:[%s7709]] %s7708
        %s7711 = sld [smem:[#allocation9 + $0x2]]
        %v7744 = vrot.slane %v3789, 7
        %v7745 = vsel %vm6271, %v7744, %v3773
        %v7746 = vrot.slane %v3790, 7
        %v7747 = vsel %vm6271, %v7746, %v3774
        %v7748 = vrot.slane %v3791, 7
        %v7749 = vsel %vm6271, %v7748, %v3775
        %v7750 = vrot.slane %v3792, 7
        %v7751 = vsel %vm6271, %v7750, %v3776
        %v7752 = vrot.slane %v3793, 7
        %v7753 = vsel %vm6271, %v7752, %v3777
        %v7754 = vrot.slane %v3794, 7
        %v7755 = vsel %vm6271, %v7754, %v3778
        %v7756 = vrot.slane %v3795, 7
        %v7757 = vsel %vm6271, %v7756, %v3779
        %v7758 = vrot.slane %v3796, 7
        %v7759 = vsel %vm6271, %v7758, %v3780
        %v7760 = vrot.slane %v3797, 7
        %v7761 = vsel %vm6271, %v7760, %v3781
        %v7762 = vrot.slane %v3798, 7
        %v7763 = vsel %vm6271, %v7762, %v3782
        %v7764 = vrot.slane %v3799, 7
        %v7765 = vsel %vm6271, %v7764, %v3783
        %v7766 = vrot.slane %v3800, 7
        %v7767 = vsel %vm6271, %v7766, %v3784
        %v7768 = vrot.slane %v3801, 7
        %v7769 = vsel %vm6271, %v7768, %v3785
        %v7770 = vrot.slane %v3802, 7
        %v7771 = vsel %vm6271, %v7770, %v3786
        %v7772 = vrot.slane %v3803, 7
        %v7773 = vsel %vm6271, %v7772, %v3787
        %v7774 = vrot.slane %v3804, 7
        %v7775 = vsel %vm6271, %v7774, %v3788
        %v7792 = vsel %vm6319, %v7745, 0.0
        %v7793 = vsel %vm6319, %v7747, 0.0
        %v7794 = vadd.f32 %v7792, %v7793
        %v7795 = vsel %vm6319, %v7749, 0.0
        %v7796 = vadd.f32 %v7794, %v7795
        %v7797 = vsel %vm6319, %v7751, 0.0
        %v7798 = vadd.f32 %v7796, %v7797
        %v7799 = vsel %vm6319, %v7753, 0.0
        %v7800 = vadd.f32 %v7798, %v7799
        %v7801 = vsel %vm6319, %v7755, 0.0
        %v7802 = vadd.f32 %v7800, %v7801
        %v7803 = vsel %vm6319, %v7757, 0.0
        %v7804 = vadd.f32 %v7802, %v7803
        %v7805 = vsel %vm6319, %v7759, 0.0
        %v7806 = vadd.f32 %v7804, %v7805
        %v7807 = vsel %vm6319, %v7761, 0.0
        %v7808 = vadd.f32 %v7806, %v7807
        %v7809 = vsel %vm6319, %v7763, 0.0
        %v7810 = vadd.f32 %v7808, %v7809
        %v7811 = vsel %vm6319, %v7765, 0.0
        %v7812 = vadd.f32 %v7810, %v7811
        %v7813 = vsel %vm6319, %v7767, 0.0
        %v7814 = vadd.f32 %v7812, %v7813
        %v7815 = vsel %vm6319, %v7769, 0.0
        %v7816 = vadd.f32 %v7814, %v7815
        %v7817 = vsel %vm6319, %v7771, 0.0
        %v7818 = vadd.f32 %v7816, %v7817
        %v7819 = vsel %vm6319, %v7773, 0.0
        %v7820 = vadd.f32 %v7818, %v7819
        %v7821 = vsel %vm6319, %v7775, 0.0
        %v7822 = vadd.f32 %v7820, %v7821
        %7823 = vadd.xlane.f32.xlu0 %v7822
        %v7824 = vpop.xlane.xlu0 %7823
        %v7825 = vrot.slane %v7824, 4
        %v7826 = vadd.f32 %v7824, %v7825
        %v7827 = vrot.slane %v7826, 2
        %v7828 = vadd.f32 %v7826, %v7827
        %v7829 = vrot.slane %v7828, 1
        %v7830 = vadd.f32 %v7828, %v7829
        %s7831 = vtos %v7830
        %s7832 = sadd.f32 %s7711, %s7831
        %s7833 = scalar_lea.smem [#allocation9], 2
        %7834 = sst [smem:[%s7833]] %s7832
        %s7835 = sld [smem:[#allocation9 + $0x6]]
        %v7836 = vmul.f32 %v3773, %v3773
        %v7837 = vmul.f32 %v3774, %v3774
        %v7838 = vmul.f32 %v3775, %v3775
        %v7839 = vmul.f32 %v3776, %v3776
        %v7840 = vmul.f32 %v3777, %v3777
        %v7841 = vmul.f32 %v3778, %v3778
        %v7842 = vmul.f32 %v3779, %v3779
        %v7843 = vmul.f32 %v3780, %v3780
        %v7844 = vmul.f32 %v3781, %v3781
        %v7845 = vmul.f32 %v3782, %v3782
        %v7846 = vmul.f32 %v3783, %v3783
        %v7847 = vmul.f32 %v3784, %v3784
        %v7848 = vmul.f32 %v3785, %v3785
        %v7849 = vmul.f32 %v3786, %v3786
        %v7850 = vmul.f32 %v3787, %v3787
        %v7851 = vmul.f32 %v3788, %v3788
        %v7852 = vmul.f32 %v3789, %v3789
        %v7853 = vmul.f32 %v3790, %v3790
        %v7854 = vmul.f32 %v3791, %v3791
        %v7855 = vmul.f32 %v3792, %v3792
        %v7856 = vmul.f32 %v3793, %v3793
        %v7857 = vmul.f32 %v3794, %v3794
        %v7858 = vmul.f32 %v3795, %v3795
        %v7859 = vmul.f32 %v3796, %v3796
        %v7860 = vmul.f32 %v3797, %v3797
        %v7861 = vmul.f32 %v3798, %v3798
        %v7862 = vmul.f32 %v3799, %v3799
        %v7863 = vmul.f32 %v3800, %v3800
        %v7864 = vmul.f32 %v3801, %v3801
        %v7865 = vmul.f32 %v3802, %v3802
        %v7866 = vmul.f32 %v3803, %v3803
        %v7867 = vmul.f32 %v3804, %v3804
        %v7900 = vrot.slane %v7852, 7
        %v7901 = vsel %vm6271, %v7900, %v7836
        %v7902 = vrot.slane %v7853, 7
        %v7903 = vsel %vm6271, %v7902, %v7837
        %v7904 = vrot.slane %v7854, 7
        %v7905 = vsel %vm6271, %v7904, %v7838
        %v7906 = vrot.slane %v7855, 7
        %v7907 = vsel %vm6271, %v7906, %v7839
        %v7908 = vrot.slane %v7856, 7
        %v7909 = vsel %vm6271, %v7908, %v7840
        %v7910 = vrot.slane %v7857, 7
        %v7911 = vsel %vm6271, %v7910, %v7841
        %v7912 = vrot.slane %v7858, 7
        %v7913 = vsel %vm6271, %v7912, %v7842
        %v7914 = vrot.slane %v7859, 7
        %v7915 = vsel %vm6271, %v7914, %v7843
        %v7916 = vrot.slane %v7860, 7
        %v7917 = vsel %vm6271, %v7916, %v7844
        %v7918 = vrot.slane %v7861, 7
        %v7919 = vsel %vm6271, %v7918, %v7845
        %v7920 = vrot.slane %v7862, 7
        %v7921 = vsel %vm6271, %v7920, %v7846
        %v7922 = vrot.slane %v7863, 7
        %v7923 = vsel %vm6271, %v7922, %v7847
        %v7924 = vrot.slane %v7864, 7
        %v7925 = vsel %vm6271, %v7924, %v7848
        %v7926 = vrot.slane %v7865, 7
        %v7927 = vsel %vm6271, %v7926, %v7849
        %v7928 = vrot.slane %v7866, 7
        %v7929 = vsel %vm6271, %v7928, %v7850
        %v7930 = vrot.slane %v7867, 7
        %v7931 = vsel %vm6271, %v7930, %v7851
        %v7948 = vsel %vm6319, %v7901, 0.0
        %v7949 = vsel %vm6319, %v7903, 0.0
        %v7950 = vadd.f32 %v7948, %v7949
        %v7951 = vsel %vm6319, %v7905, 0.0
        %v7952 = vadd.f32 %v7950, %v7951
        %v7953 = vsel %vm6319, %v7907, 0.0
        %v7954 = vadd.f32 %v7952, %v7953
        %v7955 = vsel %vm6319, %v7909, 0.0
        %v7956 = vadd.f32 %v7954, %v7955
        %v7957 = vsel %vm6319, %v7911, 0.0
        %v7958 = vadd.f32 %v7956, %v7957
        %v7959 = vsel %vm6319, %v7913, 0.0
        %v7960 = vadd.f32 %v7958, %v7959
        %v7961 = vsel %vm6319, %v7915, 0.0
        %v7962 = vadd.f32 %v7960, %v7961
        %v7963 = vsel %vm6319, %v7917, 0.0
        %v7964 = vadd.f32 %v7962, %v7963
        %v7965 = vsel %vm6319, %v7919, 0.0
        %v7966 = vadd.f32 %v7964, %v7965
        %v7967 = vsel %vm6319, %v7921, 0.0
        %v7968 = vadd.f32 %v7966, %v7967
        %v7969 = vsel %vm6319, %v7923, 0.0
        %v7970 = vadd.f32 %v7968, %v7969
        %v7971 = vsel %vm6319, %v7925, 0.0
        %v7972 = vadd.f32 %v7970, %v7971
        %v7973 = vsel %vm6319, %v7927, 0.0
        %v7974 = vadd.f32 %v7972, %v7973
        %v7975 = vsel %vm6319, %v7929, 0.0
        %v7976 = vadd.f32 %v7974, %v7975
        %v7977 = vsel %vm6319, %v7931, 0.0
        %v7978 = vadd.f32 %v7976, %v7977
        %7979 = vadd.xlane.f32.xlu0 %v7978
        %v7980 = vpop.xlane.xlu0 %7979
        %v7981 = vrot.slane %v7980, 4
        %v7982 = vadd.f32 %v7980, %v7981
        %v7983 = vrot.slane %v7982, 2
        %v7984 = vadd.f32 %v7982, %v7983
        %v7985 = vrot.slane %v7984, 1
        %v7986 = vadd.f32 %v7984, %v7985
        %s7987 = vtos %v7986
        %s7988 = sadd.f32 %s7835, %s7987
        %s7989 = scalar_lea.smem [#allocation9], 6
        %7990 = sst [smem:[%s7989]] %s7988
        %s7991 = sld [smem:[#allocation9 + $0xa]]
        %v8008 = vlaneseq
        %v8009 = vshrl.u32 %v8008, 7
        %v8010 = vsub.s32 0, %v8009
        %v8011 = vrot.slane %v5909, %v8010
        %v8012 = vlaneseq
        %v8013 = vshrl.u32 %v8012, 7
        %v8014 = vsub.s32 4, %v8013
        %v8015 = vrot.slane %v5909, %v8014
        %v8016 = vlaneseq
        %v8017 = vshrl.u32 %v8016, 7
        %v8018 = vsub.s32 0, %v8017
        %v8019 = vrot.slane %v5910, %v8018
        %v8020 = vlaneseq
        %v8021 = vshrl.u32 %v8020, 7
        %v8022 = vsub.s32 4, %v8021
        %v8023 = vrot.slane %v5910, %v8022
        %v8024 = vlaneseq
        %v8025 = vshrl.u32 %v8024, 7
        %v8026 = vsub.s32 0, %v8025
        %v8027 = vrot.slane %v5911, %v8026
        %v8028 = vlaneseq
        %v8029 = vshrl.u32 %v8028, 7
        %v8030 = vsub.s32 4, %v8029
        %v8031 = vrot.slane %v5911, %v8030
        %v8032 = vlaneseq
        %v8033 = vshrl.u32 %v8032, 7
        %v8034 = vsub.s32 0, %v8033
        %v8035 = vrot.slane %v5912, %v8034
        %v8036 = vlaneseq
        %v8037 = vshrl.u32 %v8036, 7
        %v8038 = vsub.s32 4, %v8037
        %v8039 = vrot.slane %v5912, %v8038
        %v8040 = vlaneseq
        %v8041 = vshrl.u32 %v8040, 7
        %v8042 = vsub.s32 0, %v8041
        %v8043 = vrot.slane %v5913, %v8042
        %v8044 = vlaneseq
        %v8045 = vshrl.u32 %v8044, 7
        %v8046 = vsub.s32 4, %v8045
        %v8047 = vrot.slane %v5913, %v8046
        %v8048 = vlaneseq
        %v8049 = vshrl.u32 %v8048, 7
        %v8050 = vsub.s32 0, %v8049
        %v8051 = vrot.slane %v5914, %v8050
        %v8052 = vlaneseq
        %v8053 = vshrl.u32 %v8052, 7
        %v8054 = vsub.s32 4, %v8053
        %v8055 = vrot.slane %v5914, %v8054
        %v8056 = vlaneseq
        %v8057 = vshrl.u32 %v8056, 7
        %v8058 = vsub.s32 0, %v8057
        %v8059 = vrot.slane %v5915, %v8058
        %v8060 = vlaneseq
        %v8061 = vshrl.u32 %v8060, 7
        %v8062 = vsub.s32 4, %v8061
        %v8063 = vrot.slane %v5915, %v8062
        %v8064 = vlaneseq
        %v8065 = vshrl.u32 %v8064, 7
        %v8066 = vsub.s32 0, %v8065
        %v8067 = vrot.slane %v5916, %v8066
        %v8068 = vlaneseq
        %v8069 = vshrl.u32 %v8068, 7
        %v8070 = vsub.s32 4, %v8069
        %v8071 = vrot.slane %v5916, %v8070
        %v8072 = vlaneseq
        %v8073 = vshrl.u32 %v8072, 7
        %v8074 = vsub.s32 0, %v8073
        %v8075 = vrot.slane %v5917, %v8074
        %v8076 = vlaneseq
        %v8077 = vshrl.u32 %v8076, 7
        %v8078 = vsub.s32 4, %v8077
        %v8079 = vrot.slane %v5917, %v8078
        %v8080 = vlaneseq
        %v8081 = vshrl.u32 %v8080, 7
        %v8082 = vsub.s32 0, %v8081
        %v8083 = vrot.slane %v5918, %v8082
        %v8084 = vlaneseq
        %v8085 = vshrl.u32 %v8084, 7
        %v8086 = vsub.s32 4, %v8085
        %v8087 = vrot.slane %v5918, %v8086
        %v8088 = vlaneseq
        %v8089 = vshrl.u32 %v8088, 7
        %v8090 = vsub.s32 0, %v8089
        %v8091 = vrot.slane %v5919, %v8090
        %v8092 = vlaneseq
        %v8093 = vshrl.u32 %v8092, 7
        %v8094 = vsub.s32 4, %v8093
        %v8095 = vrot.slane %v5919, %v8094
        %v8096 = vlaneseq
        %v8097 = vshrl.u32 %v8096, 7
        %v8098 = vsub.s32 0, %v8097
        %v8099 = vrot.slane %v5920, %v8098
        %v8100 = vlaneseq
        %v8101 = vshrl.u32 %v8100, 7
        %v8102 = vsub.s32 4, %v8101
        %v8103 = vrot.slane %v5920, %v8102
        %v8104 = vlaneseq
        %v8105 = vshrl.u32 %v8104, 7
        %v8106 = vsub.s32 0, %v8105
        %v8107 = vrot.slane %v5921, %v8106
        %v8108 = vlaneseq
        %v8109 = vshrl.u32 %v8108, 7
        %v8110 = vsub.s32 4, %v8109
        %v8111 = vrot.slane %v5921, %v8110
        %v8112 = vlaneseq
        %v8113 = vshrl.u32 %v8112, 7
        %v8114 = vsub.s32 0, %v8113
        %v8115 = vrot.slane %v5922, %v8114
        %v8116 = vlaneseq
        %v8117 = vshrl.u32 %v8116, 7
        %v8118 = vsub.s32 4, %v8117
        %v8119 = vrot.slane %v5922, %v8118
        %v8120 = vlaneseq
        %v8121 = vshrl.u32 %v8120, 7
        %v8122 = vsub.s32 0, %v8121
        %v8123 = vrot.slane %v5923, %v8122
        %v8124 = vlaneseq
        %v8125 = vshrl.u32 %v8124, 7
        %v8126 = vsub.s32 4, %v8125
        %v8127 = vrot.slane %v5923, %v8126
        %v8128 = vlaneseq
        %v8129 = vshrl.u32 %v8128, 7
        %v8130 = vsub.s32 0, %v8129
        %v8131 = vrot.slane %v5924, %v8130
        %v8132 = vlaneseq
        %v8133 = vshrl.u32 %v8132, 7
        %v8134 = vsub.s32 4, %v8133
        %v8135 = vrot.slane %v5924, %v8134
        %v8136 = vsel %vm6271, %v8075, %v8011
        %v8137 = vsel %vm6271, %v8079, %v8015
        %v8138 = vsel %vm6271, %v8083, %v8019
        %v8139 = vsel %vm6271, %v8087, %v8023
        %v8140 = vsel %vm6271, %v8091, %v8027
        %v8141 = vsel %vm6271, %v8095, %v8031
        %v8142 = vsel %vm6271, %v8099, %v8035
        %v8143 = vsel %vm6271, %v8103, %v8039
        %v8144 = vsel %vm6271, %v8107, %v8043
        %v8145 = vsel %vm6271, %v8111, %v8047
        %v8146 = vsel %vm6271, %v8115, %v8051
        %v8147 = vsel %vm6271, %v8119, %v8055
        %v8148 = vsel %vm6271, %v8123, %v8059
        %v8149 = vsel %vm6271, %v8127, %v8063
        %v8150 = vsel %vm6271, %v8131, %v8067
        %v8151 = vsel %vm6271, %v8135, %v8071
        %v8168 = vsel %vm6319, %v8136, 0.0
        %v8169 = vsel %vm6319, %v8137, 0.0
        %v8170 = vadd.f32 %v8168, %v8169
        %v8171 = vsel %vm6319, %v8138, 0.0
        %v8172 = vadd.f32 %v8170, %v8171
        %v8173 = vsel %vm6319, %v8139, 0.0
        %v8174 = vadd.f32 %v8172, %v8173
        %v8175 = vsel %vm6319, %v8140, 0.0
        %v8176 = vadd.f32 %v8174, %v8175
        %v8177 = vsel %vm6319, %v8141, 0.0
        %v8178 = vadd.f32 %v8176, %v8177
        %v8179 = vsel %vm6319, %v8142, 0.0
        %v8180 = vadd.f32 %v8178, %v8179
        %v8181 = vsel %vm6319, %v8143, 0.0
        %v8182 = vadd.f32 %v8180, %v8181
        %v8183 = vsel %vm6319, %v8144, 0.0
        %v8184 = vadd.f32 %v8182, %v8183
        %v8185 = vsel %vm6319, %v8145, 0.0
        %v8186 = vadd.f32 %v8184, %v8185
        %v8187 = vsel %vm6319, %v8146, 0.0
        %v8188 = vadd.f32 %v8186, %v8187
        %v8189 = vsel %vm6319, %v8147, 0.0
        %v8190 = vadd.f32 %v8188, %v8189
        %v8191 = vsel %vm6319, %v8148, 0.0
        %v8192 = vadd.f32 %v8190, %v8191
        %v8193 = vsel %vm6319, %v8149, 0.0
        %v8194 = vadd.f32 %v8192, %v8193
        %v8195 = vsel %vm6319, %v8150, 0.0
        %v8196 = vadd.f32 %v8194, %v8195
        %v8197 = vsel %vm6319, %v8151, 0.0
        %v8198 = vadd.f32 %v8196, %v8197
        %8199 = vadd.xlane.f32.xlu0 %v8198
        %v8200 = vpop.xlane.xlu0 %8199
        %v8201 = vrot.slane %v8200, 4
        %v8202 = vadd.f32 %v8200, %v8201
        %v8203 = vrot.slane %v8202, 2
        %v8204 = vadd.f32 %v8202, %v8203
        %v8205 = vrot.slane %v8204, 1
        %v8206 = vadd.f32 %v8204, %v8205
        %s8207 = vtos %v8206
        %s8208 = sadd.f32 %s7991, %s8207
        %s8209 = scalar_lea.smem [#allocation9], 10
        %8210 = sst [smem:[%s8209]] %s8208
        %s8211 = sld [smem:[#allocation9 + $0xe]]
        %v8212 = vmul.f32 %v5909, %v5909
        %v8213 = vmul.f32 %v5910, %v5910
        %v8214 = vmul.f32 %v5911, %v5911
        %v8215 = vmul.f32 %v5912, %v5912
        %v8216 = vmul.f32 %v5913, %v5913
        %v8217 = vmul.f32 %v5914, %v5914
        %v8218 = vmul.f32 %v5915, %v5915
        %v8219 = vmul.f32 %v5916, %v5916
        %v8220 = vmul.f32 %v5917, %v5917
        %v8221 = vmul.f32 %v5918, %v5918
        %v8222 = vmul.f32 %v5919, %v5919
        %v8223 = vmul.f32 %v5920, %v5920
        %v8224 = vmul.f32 %v5921, %v5921
        %v8225 = vmul.f32 %v5922, %v5922
        %v8226 = vmul.f32 %v5923, %v5923
        %v8227 = vmul.f32 %v5924, %v5924
        %v8244 = vlaneseq
        %v8245 = vshrl.u32 %v8244, 7
        %v8246 = vsub.s32 0, %v8245
        %v8247 = vrot.slane %v8212, %v8246
        %v8248 = vlaneseq
        %v8249 = vshrl.u32 %v8248, 7
        %v8250 = vsub.s32 4, %v8249
        %v8251 = vrot.slane %v8212, %v8250
        %v8252 = vlaneseq
        %v8253 = vshrl.u32 %v8252, 7
        %v8254 = vsub.s32 0, %v8253
        %v8255 = vrot.slane %v8213, %v8254
        %v8256 = vlaneseq
        %v8257 = vshrl.u32 %v8256, 7
        %v8258 = vsub.s32 4, %v8257
        %v8259 = vrot.slane %v8213, %v8258
        %v8260 = vlaneseq
        %v8261 = vshrl.u32 %v8260, 7
        %v8262 = vsub.s32 0, %v8261
        %v8263 = vrot.slane %v8214, %v8262
        %v8264 = vlaneseq
        %v8265 = vshrl.u32 %v8264, 7
        %v8266 = vsub.s32 4, %v8265
        %v8267 = vrot.slane %v8214, %v8266
        %v8268 = vlaneseq
        %v8269 = vshrl.u32 %v8268, 7
        %v8270 = vsub.s32 0, %v8269
        %v8271 = vrot.slane %v8215, %v8270
        %v8272 = vlaneseq
        %v8273 = vshrl.u32 %v8272, 7
        %v8274 = vsub.s32 4, %v8273
        %v8275 = vrot.slane %v8215, %v8274
        %v8276 = vlaneseq
        %v8277 = vshrl.u32 %v8276, 7
        %v8278 = vsub.s32 0, %v8277
        %v8279 = vrot.slane %v8216, %v8278
        %v8280 = vlaneseq
        %v8281 = vshrl.u32 %v8280, 7
        %v8282 = vsub.s32 4, %v8281
        %v8283 = vrot.slane %v8216, %v8282
        %v8284 = vlaneseq
        %v8285 = vshrl.u32 %v8284, 7
        %v8286 = vsub.s32 0, %v8285
        %v8287 = vrot.slane %v8217, %v8286
        %v8288 = vlaneseq
        %v8289 = vshrl.u32 %v8288, 7
        %v8290 = vsub.s32 4, %v8289
        %v8291 = vrot.slane %v8217, %v8290
        %v8292 = vlaneseq
        %v8293 = vshrl.u32 %v8292, 7
        %v8294 = vsub.s32 0, %v8293
        %v8295 = vrot.slane %v8218, %v8294
        %v8296 = vlaneseq
        %v8297 = vshrl.u32 %v8296, 7
        %v8298 = vsub.s32 4, %v8297
        %v8299 = vrot.slane %v8218, %v8298
        %v8300 = vlaneseq
        %v8301 = vshrl.u32 %v8300, 7
        %v8302 = vsub.s32 0, %v8301
        %v8303 = vrot.slane %v8219, %v8302
        %v8304 = vlaneseq
        %v8305 = vshrl.u32 %v8304, 7
        %v8306 = vsub.s32 4, %v8305
        %v8307 = vrot.slane %v8219, %v8306
        %v8308 = vlaneseq
        %v8309 = vshrl.u32 %v8308, 7
        %v8310 = vsub.s32 0, %v8309
        %v8311 = vrot.slane %v8220, %v8310
        %v8312 = vlaneseq
        %v8313 = vshrl.u32 %v8312, 7
        %v8314 = vsub.s32 4, %v8313
        %v8315 = vrot.slane %v8220, %v8314
        %v8316 = vlaneseq
        %v8317 = vshrl.u32 %v8316, 7
        %v8318 = vsub.s32 0, %v8317
        %v8319 = vrot.slane %v8221, %v8318
        %v8320 = vlaneseq
        %v8321 = vshrl.u32 %v8320, 7
        %v8322 = vsub.s32 4, %v8321
        %v8323 = vrot.slane %v8221, %v8322
        %v8324 = vlaneseq
        %v8325 = vshrl.u32 %v8324, 7
        %v8326 = vsub.s32 0, %v8325
        %v8327 = vrot.slane %v8222, %v8326
        %v8328 = vlaneseq
        %v8329 = vshrl.u32 %v8328, 7
        %v8330 = vsub.s32 4, %v8329
        %v8331 = vrot.slane %v8222, %v8330
        %v8332 = vlaneseq
        %v8333 = vshrl.u32 %v8332, 7
        %v8334 = vsub.s32 0, %v8333
        %v8335 = vrot.slane %v8223, %v8334
        %v8336 = vlaneseq
        %v8337 = vshrl.u32 %v8336, 7
        %v8338 = vsub.s32 4, %v8337
        %v8339 = vrot.slane %v8223, %v8338
        %v8340 = vlaneseq
        %v8341 = vshrl.u32 %v8340, 7
        %v8342 = vsub.s32 0, %v8341
        %v8343 = vrot.slane %v8224, %v8342
        %v8344 = vlaneseq
        %v8345 = vshrl.u32 %v8344, 7
        %v8346 = vsub.s32 4, %v8345
        %v8347 = vrot.slane %v8224, %v8346
        %v8348 = vlaneseq
        %v8349 = vshrl.u32 %v8348, 7
        %v8350 = vsub.s32 0, %v8349
        %v8351 = vrot.slane %v8225, %v8350
        %v8352 = vlaneseq
        %v8353 = vshrl.u32 %v8352, 7
        %v8354 = vsub.s32 4, %v8353
        %v8355 = vrot.slane %v8225, %v8354
        %v8356 = vlaneseq
        %v8357 = vshrl.u32 %v8356, 7
        %v8358 = vsub.s32 0, %v8357
        %v8359 = vrot.slane %v8226, %v8358
        %v8360 = vlaneseq
        %v8361 = vshrl.u32 %v8360, 7
        %v8362 = vsub.s32 4, %v8361
        %v8363 = vrot.slane %v8226, %v8362
        %v8364 = vlaneseq
        %v8365 = vshrl.u32 %v8364, 7
        %v8366 = vsub.s32 0, %v8365
        %v8367 = vrot.slane %v8227, %v8366
        %v8368 = vlaneseq
        %v8369 = vshrl.u32 %v8368, 7
        %v8370 = vsub.s32 4, %v8369
        %v8371 = vrot.slane %v8227, %v8370
        %v8372 = vsel %vm6271, %v8311, %v8247
        %v8373 = vsel %vm6271, %v8315, %v8251
        %v8374 = vsel %vm6271, %v8319, %v8255
        %v8375 = vsel %vm6271, %v8323, %v8259
        %v8376 = vsel %vm6271, %v8327, %v8263
        %v8377 = vsel %vm6271, %v8331, %v8267
        %v8378 = vsel %vm6271, %v8335, %v8271
        %v8379 = vsel %vm6271, %v8339, %v8275
        %v8380 = vsel %vm6271, %v8343, %v8279
        %v8381 = vsel %vm6271, %v8347, %v8283
        %v8382 = vsel %vm6271, %v8351, %v8287
        %v8383 = vsel %vm6271, %v8355, %v8291
        %v8384 = vsel %vm6271, %v8359, %v8295
        %v8385 = vsel %vm6271, %v8363, %v8299
        %v8386 = vsel %vm6271, %v8367, %v8303
        %v8387 = vsel %vm6271, %v8371, %v8307
        %v8404 = vsel %vm6319, %v8372, 0.0
        %v8405 = vsel %vm6319, %v8373, 0.0
        %v8406 = vadd.f32 %v8404, %v8405
        %v8407 = vsel %vm6319, %v8374, 0.0
        %v8408 = vadd.f32 %v8406, %v8407
        %v8409 = vsel %vm6319, %v8375, 0.0
        %v8410 = vadd.f32 %v8408, %v8409
        %v8411 = vsel %vm6319, %v8376, 0.0
        %v8412 = vadd.f32 %v8410, %v8411
        %v8413 = vsel %vm6319, %v8377, 0.0
        %v8414 = vadd.f32 %v8412, %v8413
        %v8415 = vsel %vm6319, %v8378, 0.0
        %v8416 = vadd.f32 %v8414, %v8415
        %v8417 = vsel %vm6319, %v8379, 0.0
        %v8418 = vadd.f32 %v8416, %v8417
        %v8419 = vsel %vm6319, %v8380, 0.0
        %v8420 = vadd.f32 %v8418, %v8419
        %v8421 = vsel %vm6319, %v8381, 0.0
        %v8422 = vadd.f32 %v8420, %v8421
        %v8423 = vsel %vm6319, %v8382, 0.0
        %v8424 = vadd.f32 %v8422, %v8423
        %v8425 = vsel %vm6319, %v8383, 0.0
        %v8426 = vadd.f32 %v8424, %v8425
        %v8427 = vsel %vm6319, %v8384, 0.0
        %v8428 = vadd.f32 %v8426, %v8427
        %v8429 = vsel %vm6319, %v8385, 0.0
        %v8430 = vadd.f32 %v8428, %v8429
        %v8431 = vsel %vm6319, %v8386, 0.0
        %v8432 = vadd.f32 %v8430, %v8431
        %v8433 = vsel %vm6319, %v8387, 0.0
        %v8434 = vadd.f32 %v8432, %v8433
        %8435 = vadd.xlane.f32.xlu0 %v8434
        %v8436 = vpop.xlane.xlu0 %8435
        %v8437 = vrot.slane %v8436, 4
        %v8438 = vadd.f32 %v8436, %v8437
        %v8439 = vrot.slane %v8438, 2
        %v8440 = vadd.f32 %v8438, %v8439
        %v8441 = vrot.slane %v8440, 1
        %v8442 = vadd.f32 %v8440, %v8441
        %s8443 = vtos %v8442
        %s8444 = sadd.f32 %s8211, %s8443
        %s8445 = scalar_lea.smem [#allocation9], 14
        %8446 = sst [smem:[%s8445]] %s8444
        %s8447 = sld [smem:[#allocation9 + $0x3]]
        %v8480 = vrot.slane %v4957, 7
        %v8481 = vsel %vm6271, %v8480, %v4941
        %v8482 = vrot.slane %v4958, 7
        %v8483 = vsel %vm6271, %v8482, %v4942
        %v8484 = vrot.slane %v4959, 7
        %v8485 = vsel %vm6271, %v8484, %v4943
        %v8486 = vrot.slane %v4960, 7
        %v8487 = vsel %vm6271, %v8486, %v4944
        %v8488 = vrot.slane %v4961, 7
        %v8489 = vsel %vm6271, %v8488, %v4945
        %v8490 = vrot.slane %v4962, 7
        %v8491 = vsel %vm6271, %v8490, %v4946
        %v8492 = vrot.slane %v4963, 7
        %v8493 = vsel %vm6271, %v8492, %v4947
        %v8494 = vrot.slane %v4964, 7
        %v8495 = vsel %vm6271, %v8494, %v4948
        %v8496 = vrot.slane %v4965, 7
        %v8497 = vsel %vm6271, %v8496, %v4949
        %v8498 = vrot.slane %v4966, 7
        %v8499 = vsel %vm6271, %v8498, %v4950
        %v8500 = vrot.slane %v4967, 7
        %v8501 = vsel %vm6271, %v8500, %v4951
        %v8502 = vrot.slane %v4968, 7
        %v8503 = vsel %vm6271, %v8502, %v4952
        %v8504 = vrot.slane %v4969, 7
        %v8505 = vsel %vm6271, %v8504, %v4953
        %v8506 = vrot.slane %v4970, 7
        %v8507 = vsel %vm6271, %v8506, %v4954
        %v8508 = vrot.slane %v4971, 7
        %v8509 = vsel %vm6271, %v8508, %v4955
        %v8510 = vrot.slane %v4972, 7
        %v8511 = vsel %vm6271, %v8510, %v4956
        %v8528 = vsel %vm6319, %v8481, 0.0
        %v8529 = vsel %vm6319, %v8483, 0.0
        %v8530 = vadd.f32 %v8528, %v8529
        %v8531 = vsel %vm6319, %v8485, 0.0
        %v8532 = vadd.f32 %v8530, %v8531
        %v8533 = vsel %vm6319, %v8487, 0.0
        %v8534 = vadd.f32 %v8532, %v8533
        %v8535 = vsel %vm6319, %v8489, 0.0
        %v8536 = vadd.f32 %v8534, %v8535
        %v8537 = vsel %vm6319, %v8491, 0.0
        %v8538 = vadd.f32 %v8536, %v8537
        %v8539 = vsel %vm6319, %v8493, 0.0
        %v8540 = vadd.f32 %v8538, %v8539
        %v8541 = vsel %vm6319, %v8495, 0.0
        %v8542 = vadd.f32 %v8540, %v8541
        %v8543 = vsel %vm6319, %v8497, 0.0
        %v8544 = vadd.f32 %v8542, %v8543
        %v8545 = vsel %vm6319, %v8499, 0.0
        %v8546 = vadd.f32 %v8544, %v8545
        %v8547 = vsel %vm6319, %v8501, 0.0
        %v8548 = vadd.f32 %v8546, %v8547
        %v8549 = vsel %vm6319, %v8503, 0.0
        %v8550 = vadd.f32 %v8548, %v8549
        %v8551 = vsel %vm6319, %v8505, 0.0
        %v8552 = vadd.f32 %v8550, %v8551
        %v8553 = vsel %vm6319, %v8507, 0.0
        %v8554 = vadd.f32 %v8552, %v8553
        %v8555 = vsel %vm6319, %v8509, 0.0
        %v8556 = vadd.f32 %v8554, %v8555
        %v8557 = vsel %vm6319, %v8511, 0.0
        %v8558 = vadd.f32 %v8556, %v8557
        %8559 = vadd.xlane.f32.xlu0 %v8558
        %v8560 = vpop.xlane.xlu0 %8559
        %v8561 = vrot.slane %v8560, 4
        %v8562 = vadd.f32 %v8560, %v8561
        %v8563 = vrot.slane %v8562, 2
        %v8564 = vadd.f32 %v8562, %v8563
        %v8565 = vrot.slane %v8564, 1
        %v8566 = vadd.f32 %v8564, %v8565
        %s8567 = vtos %v8566
        %s8568 = sadd.f32 %s8447, %s8567
        %s8569 = scalar_lea.smem [#allocation9], 3
        %8570 = sst [smem:[%s8569]] %s8568
        %s8571 = sld [smem:[#allocation9 + $0x7]]
        %v8572 = vmul.f32 %v4941, %v4941
        %v8573 = vmul.f32 %v4942, %v4942
        %v8574 = vmul.f32 %v4943, %v4943
        %v8575 = vmul.f32 %v4944, %v4944
        %v8576 = vmul.f32 %v4945, %v4945
        %v8577 = vmul.f32 %v4946, %v4946
        %v8578 = vmul.f32 %v4947, %v4947
        %v8579 = vmul.f32 %v4948, %v4948
        %v8580 = vmul.f32 %v4949, %v4949
        %v8581 = vmul.f32 %v4950, %v4950
        %v8582 = vmul.f32 %v4951, %v4951
        %v8583 = vmul.f32 %v4952, %v4952
        %v8584 = vmul.f32 %v4953, %v4953
        %v8585 = vmul.f32 %v4954, %v4954
        %v8586 = vmul.f32 %v4955, %v4955
        %v8587 = vmul.f32 %v4956, %v4956
        %v8588 = vmul.f32 %v4957, %v4957
        %v8589 = vmul.f32 %v4958, %v4958
        %v8590 = vmul.f32 %v4959, %v4959
        %v8591 = vmul.f32 %v4960, %v4960
        %v8592 = vmul.f32 %v4961, %v4961
        %v8593 = vmul.f32 %v4962, %v4962
        %v8594 = vmul.f32 %v4963, %v4963
        %v8595 = vmul.f32 %v4964, %v4964
        %v8596 = vmul.f32 %v4965, %v4965
        %v8597 = vmul.f32 %v4966, %v4966
        %v8598 = vmul.f32 %v4967, %v4967
        %v8599 = vmul.f32 %v4968, %v4968
        %v8600 = vmul.f32 %v4969, %v4969
        %v8601 = vmul.f32 %v4970, %v4970
        %v8602 = vmul.f32 %v4971, %v4971
        %v8603 = vmul.f32 %v4972, %v4972
        %v8636 = vrot.slane %v8588, 7
        %v8637 = vsel %vm6271, %v8636, %v8572
        %v8638 = vrot.slane %v8589, 7
        %v8639 = vsel %vm6271, %v8638, %v8573
        %v8640 = vrot.slane %v8590, 7
        %v8641 = vsel %vm6271, %v8640, %v8574
        %v8642 = vrot.slane %v8591, 7
        %v8643 = vsel %vm6271, %v8642, %v8575
        %v8644 = vrot.slane %v8592, 7
        %v8645 = vsel %vm6271, %v8644, %v8576
        %v8646 = vrot.slane %v8593, 7
        %v8647 = vsel %vm6271, %v8646, %v8577
        %v8648 = vrot.slane %v8594, 7
        %v8649 = vsel %vm6271, %v8648, %v8578
        %v8650 = vrot.slane %v8595, 7
        %v8651 = vsel %vm6271, %v8650, %v8579
        %v8652 = vrot.slane %v8596, 7
        %v8653 = vsel %vm6271, %v8652, %v8580
        %v8654 = vrot.slane %v8597, 7
        %v8655 = vsel %vm6271, %v8654, %v8581
        %v8656 = vrot.slane %v8598, 7
        %v8657 = vsel %vm6271, %v8656, %v8582
        %v8658 = vrot.slane %v8599, 7
        %v8659 = vsel %vm6271, %v8658, %v8583
        %v8660 = vrot.slane %v8600, 7
        %v8661 = vsel %vm6271, %v8660, %v8584
        %v8662 = vrot.slane %v8601, 7
        %v8663 = vsel %vm6271, %v8662, %v8585
        %v8664 = vrot.slane %v8602, 7
        %v8665 = vsel %vm6271, %v8664, %v8586
        %v8666 = vrot.slane %v8603, 7
        %v8667 = vsel %vm6271, %v8666, %v8587
        %v8684 = vsel %vm6319, %v8637, 0.0
        %v8685 = vsel %vm6319, %v8639, 0.0
        %v8686 = vadd.f32 %v8684, %v8685
        %v8687 = vsel %vm6319, %v8641, 0.0
        %v8688 = vadd.f32 %v8686, %v8687
        %v8689 = vsel %vm6319, %v8643, 0.0
        %v8690 = vadd.f32 %v8688, %v8689
        %v8691 = vsel %vm6319, %v8645, 0.0
        %v8692 = vadd.f32 %v8690, %v8691
        %v8693 = vsel %vm6319, %v8647, 0.0
        %v8694 = vadd.f32 %v8692, %v8693
        %v8695 = vsel %vm6319, %v8649, 0.0
        %v8696 = vadd.f32 %v8694, %v8695
        %v8697 = vsel %vm6319, %v8651, 0.0
        %v8698 = vadd.f32 %v8696, %v8697
        %v8699 = vsel %vm6319, %v8653, 0.0
        %v8700 = vadd.f32 %v8698, %v8699
        %v8701 = vsel %vm6319, %v8655, 0.0
        %v8702 = vadd.f32 %v8700, %v8701
        %v8703 = vsel %vm6319, %v8657, 0.0
        %v8704 = vadd.f32 %v8702, %v8703
        %v8705 = vsel %vm6319, %v8659, 0.0
        %v8706 = vadd.f32 %v8704, %v8705
        %v8707 = vsel %vm6319, %v8661, 0.0
        %v8708 = vadd.f32 %v8706, %v8707
        %v8709 = vsel %vm6319, %v8663, 0.0
        %v8710 = vadd.f32 %v8708, %v8709
        %v8711 = vsel %vm6319, %v8665, 0.0
        %v8712 = vadd.f32 %v8710, %v8711
        %v8713 = vsel %vm6319, %v8667, 0.0
        %v8714 = vadd.f32 %v8712, %v8713
        %8715 = vadd.xlane.f32.xlu0 %v8714
        %v8716 = vpop.xlane.xlu0 %8715
        %v8717 = vrot.slane %v8716, 4
        %v8718 = vadd.f32 %v8716, %v8717
        %v8719 = vrot.slane %v8718, 2
        %v8720 = vadd.f32 %v8718, %v8719
        %v8721 = vrot.slane %v8720, 1
        %v8722 = vadd.f32 %v8720, %v8721
        %s8723 = vtos %v8722
        %s8724 = sadd.f32 %s8571, %s8723
        %s8725 = scalar_lea.smem [#allocation9], 7
        %8726 = sst [smem:[%s8725]] %s8724
        %s8727 = sld [smem:[#allocation9 + $0xb]]
        %v8744 = vlaneseq
        %v8745 = vshrl.u32 %v8744, 7
        %v8746 = vsub.s32 0, %v8745
        %v8747 = vrot.slane %v6221, %v8746
        %v8748 = vlaneseq
        %v8749 = vshrl.u32 %v8748, 7
        %v8750 = vsub.s32 4, %v8749
        %v8751 = vrot.slane %v6221, %v8750
        %v8752 = vlaneseq
        %v8753 = vshrl.u32 %v8752, 7
        %v8754 = vsub.s32 0, %v8753
        %v8755 = vrot.slane %v6222, %v8754
        %v8756 = vlaneseq
        %v8757 = vshrl.u32 %v8756, 7
        %v8758 = vsub.s32 4, %v8757
        %v8759 = vrot.slane %v6222, %v8758
        %v8760 = vlaneseq
        %v8761 = vshrl.u32 %v8760, 7
        %v8762 = vsub.s32 0, %v8761
        %v8763 = vrot.slane %v6223, %v8762
        %v8764 = vlaneseq
        %v8765 = vshrl.u32 %v8764, 7
        %v8766 = vsub.s32 4, %v8765
        %v8767 = vrot.slane %v6223, %v8766
        %v8768 = vlaneseq
        %v8769 = vshrl.u32 %v8768, 7
        %v8770 = vsub.s32 0, %v8769
        %v8771 = vrot.slane %v6224, %v8770
        %v8772 = vlaneseq
        %v8773 = vshrl.u32 %v8772, 7
        %v8774 = vsub.s32 4, %v8773
        %v8775 = vrot.slane %v6224, %v8774
        %v8776 = vlaneseq
        %v8777 = vshrl.u32 %v8776, 7
        %v8778 = vsub.s32 0, %v8777
        %v8779 = vrot.slane %v6225, %v8778
        %v8780 = vlaneseq
        %v8781 = vshrl.u32 %v8780, 7
        %v8782 = vsub.s32 4, %v8781
        %v8783 = vrot.slane %v6225, %v8782
        %v8784 = vlaneseq
        %v8785 = vshrl.u32 %v8784, 7
        %v8786 = vsub.s32 0, %v8785
        %v8787 = vrot.slane %v6226, %v8786
        %v8788 = vlaneseq
        %v8789 = vshrl.u32 %v8788, 7
        %v8790 = vsub.s32 4, %v8789
        %v8791 = vrot.slane %v6226, %v8790
        %v8792 = vlaneseq
        %v8793 = vshrl.u32 %v8792, 7
        %v8794 = vsub.s32 0, %v8793
        %v8795 = vrot.slane %v6227, %v8794
        %v8796 = vlaneseq
        %v8797 = vshrl.u32 %v8796, 7
        %v8798 = vsub.s32 4, %v8797
        %v8799 = vrot.slane %v6227, %v8798
        %v8800 = vlaneseq
        %v8801 = vshrl.u32 %v8800, 7
        %v8802 = vsub.s32 0, %v8801
        %v8803 = vrot.slane %v6228, %v8802
        %v8804 = vlaneseq
        %v8805 = vshrl.u32 %v8804, 7
        %v8806 = vsub.s32 4, %v8805
        %v8807 = vrot.slane %v6228, %v8806
        %v8808 = vlaneseq
        %v8809 = vshrl.u32 %v8808, 7
        %v8810 = vsub.s32 0, %v8809
        %v8811 = vrot.slane %v6229, %v8810
        %v8812 = vlaneseq
        %v8813 = vshrl.u32 %v8812, 7
        %v8814 = vsub.s32 4, %v8813
        %v8815 = vrot.slane %v6229, %v8814
        %v8816 = vlaneseq
        %v8817 = vshrl.u32 %v8816, 7
        %v8818 = vsub.s32 0, %v8817
        %v8819 = vrot.slane %v6230, %v8818
        %v8820 = vlaneseq
        %v8821 = vshrl.u32 %v8820, 7
        %v8822 = vsub.s32 4, %v8821
        %v8823 = vrot.slane %v6230, %v8822
        %v8824 = vlaneseq
        %v8825 = vshrl.u32 %v8824, 7
        %v8826 = vsub.s32 0, %v8825
        %v8827 = vrot.slane %v6231, %v8826
        %v8828 = vlaneseq
        %v8829 = vshrl.u32 %v8828, 7
        %v8830 = vsub.s32 4, %v8829
        %v8831 = vrot.slane %v6231, %v8830
        %v8832 = vlaneseq
        %v8833 = vshrl.u32 %v8832, 7
        %v8834 = vsub.s32 0, %v8833
        %v8835 = vrot.slane %v6232, %v8834
        %v8836 = vlaneseq
        %v8837 = vshrl.u32 %v8836, 7
        %v8838 = vsub.s32 4, %v8837
        %v8839 = vrot.slane %v6232, %v8838
        %v8840 = vlaneseq
        %v8841 = vshrl.u32 %v8840, 7
        %v8842 = vsub.s32 0, %v8841
        %v8843 = vrot.slane %v6233, %v8842
        %v8844 = vlaneseq
        %v8845 = vshrl.u32 %v8844, 7
        %v8846 = vsub.s32 4, %v8845
        %v8847 = vrot.slane %v6233, %v8846
        %v8848 = vlaneseq
        %v8849 = vshrl.u32 %v8848, 7
        %v8850 = vsub.s32 0, %v8849
        %v8851 = vrot.slane %v6234, %v8850
        %v8852 = vlaneseq
        %v8853 = vshrl.u32 %v8852, 7
        %v8854 = vsub.s32 4, %v8853
        %v8855 = vrot.slane %v6234, %v8854
        %v8856 = vlaneseq
        %v8857 = vshrl.u32 %v8856, 7
        %v8858 = vsub.s32 0, %v8857
        %v8859 = vrot.slane %v6235, %v8858
        %v8860 = vlaneseq
        %v8861 = vshrl.u32 %v8860, 7
        %v8862 = vsub.s32 4, %v8861
        %v8863 = vrot.slane %v6235, %v8862
        %v8864 = vlaneseq
        %v8865 = vshrl.u32 %v8864, 7
        %v8866 = vsub.s32 0, %v8865
        %v8867 = vrot.slane %v6236, %v8866
        %v8868 = vlaneseq
        %v8869 = vshrl.u32 %v8868, 7
        %v8870 = vsub.s32 4, %v8869
        %v8871 = vrot.slane %v6236, %v8870
        %v8872 = vsel %vm6271, %v8811, %v8747
        %v8873 = vsel %vm6271, %v8815, %v8751
        %v8874 = vsel %vm6271, %v8819, %v8755
        %v8875 = vsel %vm6271, %v8823, %v8759
        %v8876 = vsel %vm6271, %v8827, %v8763
        %v8877 = vsel %vm6271, %v8831, %v8767
        %v8878 = vsel %vm6271, %v8835, %v8771
        %v8879 = vsel %vm6271, %v8839, %v8775
        %v8880 = vsel %vm6271, %v8843, %v8779
        %v8881 = vsel %vm6271, %v8847, %v8783
        %v8882 = vsel %vm6271, %v8851, %v8787
        %v8883 = vsel %vm6271, %v8855, %v8791
        %v8884 = vsel %vm6271, %v8859, %v8795
        %v8885 = vsel %vm6271, %v8863, %v8799
        %v8886 = vsel %vm6271, %v8867, %v8803
        %v8887 = vsel %vm6271, %v8871, %v8807
        %v8904 = vsel %vm6319, %v8872, 0.0
        %v8905 = vsel %vm6319, %v8873, 0.0
        %v8906 = vadd.f32 %v8904, %v8905
        %v8907 = vsel %vm6319, %v8874, 0.0
        %v8908 = vadd.f32 %v8906, %v8907
        %v8909 = vsel %vm6319, %v8875, 0.0
        %v8910 = vadd.f32 %v8908, %v8909
        %v8911 = vsel %vm6319, %v8876, 0.0
        %v8912 = vadd.f32 %v8910, %v8911
        %v8913 = vsel %vm6319, %v8877, 0.0
        %v8914 = vadd.f32 %v8912, %v8913
        %v8915 = vsel %vm6319, %v8878, 0.0
        %v8916 = vadd.f32 %v8914, %v8915
        %v8917 = vsel %vm6319, %v8879, 0.0
        %v8918 = vadd.f32 %v8916, %v8917
        %v8919 = vsel %vm6319, %v8880, 0.0
        %v8920 = vadd.f32 %v8918, %v8919
        %v8921 = vsel %vm6319, %v8881, 0.0
        %v8922 = vadd.f32 %v8920, %v8921
        %v8923 = vsel %vm6319, %v8882, 0.0
        %v8924 = vadd.f32 %v8922, %v8923
        %v8925 = vsel %vm6319, %v8883, 0.0
        %v8926 = vadd.f32 %v8924, %v8925
        %v8927 = vsel %vm6319, %v8884, 0.0
        %v8928 = vadd.f32 %v8926, %v8927
        %v8929 = vsel %vm6319, %v8885, 0.0
        %v8930 = vadd.f32 %v8928, %v8929
        %v8931 = vsel %vm6319, %v8886, 0.0
        %v8932 = vadd.f32 %v8930, %v8931
        %v8933 = vsel %vm6319, %v8887, 0.0
        %v8934 = vadd.f32 %v8932, %v8933
        %8935 = vadd.xlane.f32.xlu0 %v8934
        %v8936 = vpop.xlane.xlu0 %8935
        %v8937 = vrot.slane %v8936, 4
        %v8938 = vadd.f32 %v8936, %v8937
        %v8939 = vrot.slane %v8938, 2
        %v8940 = vadd.f32 %v8938, %v8939
        %v8941 = vrot.slane %v8940, 1
        %v8942 = vadd.f32 %v8940, %v8941
        %s8943 = vtos %v8942
        %s8944 = sadd.f32 %s8727, %s8943
        %s8945 = scalar_lea.smem [#allocation9], 11
        %8946 = sst [smem:[%s8945]] %s8944
        %s8947 = sld [smem:[#allocation9 + $0xf]]
        %v8948 = vmul.f32 %v6221, %v6221
        %v8949 = vmul.f32 %v6222, %v6222
        %v8950 = vmul.f32 %v6223, %v6223
        %v8951 = vmul.f32 %v6224, %v6224
        %v8952 = vmul.f32 %v6225, %v6225
        %v8953 = vmul.f32 %v6226, %v6226
        %v8954 = vmul.f32 %v6227, %v6227
        %v8955 = vmul.f32 %v6228, %v6228
        %v8956 = vmul.f32 %v6229, %v6229
        %v8957 = vmul.f32 %v6230, %v6230
        %v8958 = vmul.f32 %v6231, %v6231
        %v8959 = vmul.f32 %v6232, %v6232
        %v8960 = vmul.f32 %v6233, %v6233
        %v8961 = vmul.f32 %v6234, %v6234
        %v8962 = vmul.f32 %v6235, %v6235
        %v8963 = vmul.f32 %v6236, %v6236
        %v8980 = vlaneseq
        %v8981 = vshrl.u32 %v8980, 7
        %v8982 = vsub.s32 0, %v8981
        %v8983 = vrot.slane %v8948, %v8982
        %v8984 = vlaneseq
        %v8985 = vshrl.u32 %v8984, 7
        %v8986 = vsub.s32 4, %v8985
        %v8987 = vrot.slane %v8948, %v8986
        %v8988 = vlaneseq
        %v8989 = vshrl.u32 %v8988, 7
        %v8990 = vsub.s32 0, %v8989
        %v8991 = vrot.slane %v8949, %v8990
        %v8992 = vlaneseq
        %v8993 = vshrl.u32 %v8992, 7
        %v8994 = vsub.s32 4, %v8993
        %v8995 = vrot.slane %v8949, %v8994
        %v8996 = vlaneseq
        %v8997 = vshrl.u32 %v8996, 7
        %v8998 = vsub.s32 0, %v8997
        %v8999 = vrot.slane %v8950, %v8998
        %v9000 = vlaneseq
        %v9001 = vshrl.u32 %v9000, 7
        %v9002 = vsub.s32 4, %v9001
        %v9003 = vrot.slane %v8950, %v9002
        %v9004 = vlaneseq
        %v9005 = vshrl.u32 %v9004, 7
        %v9006 = vsub.s32 0, %v9005
        %v9007 = vrot.slane %v8951, %v9006
        %v9008 = vlaneseq
        %v9009 = vshrl.u32 %v9008, 7
        %v9010 = vsub.s32 4, %v9009
        %v9011 = vrot.slane %v8951, %v9010
        %v9012 = vlaneseq
        %v9013 = vshrl.u32 %v9012, 7
        %v9014 = vsub.s32 0, %v9013
        %v9015 = vrot.slane %v8952, %v9014
        %v9016 = vlaneseq
        %v9017 = vshrl.u32 %v9016, 7
        %v9018 = vsub.s32 4, %v9017
        %v9019 = vrot.slane %v8952, %v9018
        %v9020 = vlaneseq
        %v9021 = vshrl.u32 %v9020, 7
        %v9022 = vsub.s32 0, %v9021
        %v9023 = vrot.slane %v8953, %v9022
        %v9024 = vlaneseq
        %v9025 = vshrl.u32 %v9024, 7
        %v9026 = vsub.s32 4, %v9025
        %v9027 = vrot.slane %v8953, %v9026
        %v9028 = vlaneseq
        %v9029 = vshrl.u32 %v9028, 7
        %v9030 = vsub.s32 0, %v9029
        %v9031 = vrot.slane %v8954, %v9030
        %v9032 = vlaneseq
        %v9033 = vshrl.u32 %v9032, 7
        %v9034 = vsub.s32 4, %v9033
        %v9035 = vrot.slane %v8954, %v9034
        %v9036 = vlaneseq
        %v9037 = vshrl.u32 %v9036, 7
        %v9038 = vsub.s32 0, %v9037
        %v9039 = vrot.slane %v8955, %v9038
        %v9040 = vlaneseq
        %v9041 = vshrl.u32 %v9040, 7
        %v9042 = vsub.s32 4, %v9041
        %v9043 = vrot.slane %v8955, %v9042
        %v9044 = vlaneseq
        %v9045 = vshrl.u32 %v9044, 7
        %v9046 = vsub.s32 0, %v9045
        %v9047 = vrot.slane %v8956, %v9046
        %v9048 = vlaneseq
        %v9049 = vshrl.u32 %v9048, 7
        %v9050 = vsub.s32 4, %v9049
        %v9051 = vrot.slane %v8956, %v9050
        %v9052 = vlaneseq
        %v9053 = vshrl.u32 %v9052, 7
        %v9054 = vsub.s32 0, %v9053
        %v9055 = vrot.slane %v8957, %v9054
        %v9056 = vlaneseq
        %v9057 = vshrl.u32 %v9056, 7
        %v9058 = vsub.s32 4, %v9057
        %v9059 = vrot.slane %v8957, %v9058
        %v9060 = vlaneseq
        %v9061 = vshrl.u32 %v9060, 7
        %v9062 = vsub.s32 0, %v9061
        %v9063 = vrot.slane %v8958, %v9062
        %v9064 = vlaneseq
        %v9065 = vshrl.u32 %v9064, 7
        %v9066 = vsub.s32 4, %v9065
        %v9067 = vrot.slane %v8958, %v9066
        %v9068 = vlaneseq
        %v9069 = vshrl.u32 %v9068, 7
        %v9070 = vsub.s32 0, %v9069
        %v9071 = vrot.slane %v8959, %v9070
        %v9072 = vlaneseq
        %v9073 = vshrl.u32 %v9072, 7
        %v9074 = vsub.s32 4, %v9073
        %v9075 = vrot.slane %v8959, %v9074
        %v9076 = vlaneseq
        %v9077 = vshrl.u32 %v9076, 7
        %v9078 = vsub.s32 0, %v9077
        %v9079 = vrot.slane %v8960, %v9078
        %v9080 = vlaneseq
        %v9081 = vshrl.u32 %v9080, 7
        %v9082 = vsub.s32 4, %v9081
        %v9083 = vrot.slane %v8960, %v9082
        %v9084 = vlaneseq
        %v9085 = vshrl.u32 %v9084, 7
        %v9086 = vsub.s32 0, %v9085
        %v9087 = vrot.slane %v8961, %v9086
        %v9088 = vlaneseq
        %v9089 = vshrl.u32 %v9088, 7
        %v9090 = vsub.s32 4, %v9089
        %v9091 = vrot.slane %v8961, %v9090
        %v9092 = vlaneseq
        %v9093 = vshrl.u32 %v9092, 7
        %v9094 = vsub.s32 0, %v9093
        %v9095 = vrot.slane %v8962, %v9094
        %v9096 = vlaneseq
        %v9097 = vshrl.u32 %v9096, 7
        %v9098 = vsub.s32 4, %v9097
        %v9099 = vrot.slane %v8962, %v9098
        %v9100 = vlaneseq
        %v9101 = vshrl.u32 %v9100, 7
        %v9102 = vsub.s32 0, %v9101
        %v9103 = vrot.slane %v8963, %v9102
        %v9104 = vlaneseq
        %v9105 = vshrl.u32 %v9104, 7
        %v9106 = vsub.s32 4, %v9105
        %v9107 = vrot.slane %v8963, %v9106
        %v9108 = vsel %vm6271, %v9047, %v8983
        %v9109 = vsel %vm6271, %v9051, %v8987
        %v9110 = vsel %vm6271, %v9055, %v8991
        %v9111 = vsel %vm6271, %v9059, %v8995
        %v9112 = vsel %vm6271, %v9063, %v8999
        %v9113 = vsel %vm6271, %v9067, %v9003
        %v9114 = vsel %vm6271, %v9071, %v9007
        %v9115 = vsel %vm6271, %v9075, %v9011
        %v9116 = vsel %vm6271, %v9079, %v9015
        %v9117 = vsel %vm6271, %v9083, %v9019
        %v9118 = vsel %vm6271, %v9087, %v9023
        %v9119 = vsel %vm6271, %v9091, %v9027
        %v9120 = vsel %vm6271, %v9095, %v9031
        %v9121 = vsel %vm6271, %v9099, %v9035
        %v9122 = vsel %vm6271, %v9103, %v9039
        %v9123 = vsel %vm6271, %v9107, %v9043
        %v9140 = vsel %vm6319, %v9108, 0.0
        %v9141 = vsel %vm6319, %v9109, 0.0
        %v9142 = vadd.f32 %v9140, %v9141
        %v9143 = vsel %vm6319, %v9110, 0.0
        %v9144 = vadd.f32 %v9142, %v9143
        %v9145 = vsel %vm6319, %v9111, 0.0
        %v9146 = vadd.f32 %v9144, %v9145
        %v9147 = vsel %vm6319, %v9112, 0.0
        %v9148 = vadd.f32 %v9146, %v9147
        %v9149 = vsel %vm6319, %v9113, 0.0
        %v9150 = vadd.f32 %v9148, %v9149
        %v9151 = vsel %vm6319, %v9114, 0.0
        %v9152 = vadd.f32 %v9150, %v9151
        %v9153 = vsel %vm6319, %v9115, 0.0
        %v9154 = vadd.f32 %v9152, %v9153
        %v9155 = vsel %vm6319, %v9116, 0.0
        %v9156 = vadd.f32 %v9154, %v9155
        %v9157 = vsel %vm6319, %v9117, 0.0
        %v9158 = vadd.f32 %v9156, %v9157
        %v9159 = vsel %vm6319, %v9118, 0.0
        %v9160 = vadd.f32 %v9158, %v9159
        %v9161 = vsel %vm6319, %v9119, 0.0
        %v9162 = vadd.f32 %v9160, %v9161
        %v9163 = vsel %vm6319, %v9120, 0.0
        %v9164 = vadd.f32 %v9162, %v9163
        %v9165 = vsel %vm6319, %v9121, 0.0
        %v9166 = vadd.f32 %v9164, %v9165
        %v9167 = vsel %vm6319, %v9122, 0.0
        %v9168 = vadd.f32 %v9166, %v9167
        %v9169 = vsel %vm6319, %v9123, 0.0
        %v9170 = vadd.f32 %v9168, %v9169
        %9171 = vadd.xlane.f32.xlu0 %v9170
        %v9172 = vpop.xlane.xlu0 %9171
        %v9173 = vrot.slane %v9172, 4
        %v9174 = vadd.f32 %v9172, %v9173
        %v9175 = vrot.slane %v9174, 2
        %v9176 = vadd.f32 %v9174, %v9175
        %v9177 = vrot.slane %v9176, 1
        %v9178 = vadd.f32 %v9176, %v9177
        %s9179 = vtos %v9178
        %s9180 = sadd.f32 %s8947, %s9179
        %s9181 = scalar_lea.smem [#allocation9], 15
        %9182 = sst [smem:[%s9181]] %s9180
        // Predicated region
        $region49: #{tpu_custom_call.1} parent=31 // pred_check
          %p9183 = pneg %p108
        $region50: #{tpu_custom_call.1} parent=31 // pred_check_branch
          %9185 = sbr.rel (%p9183) target = $region52
        $region51: #{tpu_custom_call.1} parent=31 // pred_region
          %s9187 = ssub.s32 16, 16
          %9188 = vsyncadd [#allocation4], %s9187
          %9191 = dma.smem_to_hbm [#allocation9], 16, %s3, [#allocation4]
        $region52: #{tpu_custom_call.1} parent=31 // pred_fallthru
          _
        // Predicated region
        $region53: #{tpu_custom_call.1} parent=31 // pred_check
          %p9192 = pneg %p108
        $region54: #{tpu_custom_call.1} parent=31 // pred_check_branch
          %9194 = sbr.rel (%p9192) target = $region56
        $region55: #{tpu_custom_call.1} parent=31 // pred_region
          %9195 = dma.done [#allocation4], 16
        $region56: #{tpu_custom_call.1} parent=31 // pred_fallthru
          _
        %9196 = sfence
      $region32: #{tpu_custom_call.1} parent=5 // pred_fallthru
        _
      %p9197 = scmp.le.s32.totalorder 2, %s17
      // Predicated region
      $region57: #{tpu_custom_call.1} parent=5 // pred_check
        %p9198 = pneg %p9197
      $region58: #{tpu_custom_call.1} parent=5 // pred_check_branch
        %9200 = sbr.rel (%p9198) target = $region60
      $region59: #{tpu_custom_call.1} parent=5 // pred_region
        %s9201 = ssub.s32 %s17, 2
      $region60: #{tpu_custom_call.1} parent=5 // pred_fallthru
        _
    $region6: #{tpu_custom_call.1} parent=1 // loop_footer
      %s21 = sadd.s32 1, %s17
    $region7: #{tpu_custom_call.1} parent=1 // loop_footer_branch
      %16 = sbr.rel target = $region3
    $region8: #{tpu_custom_call.1} parent=1 // loop_exit
      _
    %9202 = vsyncpa [#allocation3], 1
    %s9203 = scalar_lea.sflag [#allocation3], 1
    %9204 = vsyncpa %s9203, 1
    %9205 = vsyncpa [#allocation7], 1
    %s9206 = scalar_lea.sflag [#allocation7], 1
    %9207 = vsyncpa %s9206, 1
    %9208 = vsyncpa [#allocation4], 1
    %s9209 = scalar_lea.sflag [#allocation4], 1
    %9210 = vsyncpa %s9209, 1
    %9211 = vsyncpa [#allocation5], 1
    %s9212 = scalar_lea.sflag [#allocation5], 1
    %9213 = vsyncpa %s9212, 1

</llo_original>
